<compile_context>
chip_gen: v5e
topology: v5e:2x2
jax: 0.10.0
libtpu: 0.0.40
codegen_flags: <defaults>
</compile_context>

<pallas_src>
import functools
import math

import jax
import jax.numpy as jnp
from jax import lax
from jax.experimental import pallas as pl
from jax.experimental.pallas import tpu as pltpu

ENCODER_DIM = 128      # module default; keeps channels lane-dense (128 lanes)
NUM_HEADS = 8          # module default
FF_EXPANSION = 4
DW_KERNEL = 31         # standard Conformer depthwise kernel size
LN_EPS = 1e-5
BN_EPS = 1e-5

# Rows of the packed (Nvec, D) vector slab (LN gamma/beta, biases, BN affine).
VEC_ROWS = (
    "ff1_ln_g", "ff1_ln_b", "ff1_b2",
    "mha_ln_g", "mha_ln_b", "bo",
    "conv_ln_g", "conv_ln_b", "pw1_b_val", "pw1_b_gate", "dw_b",
    "bn_scale", "bn_shift", "pw2_b",
    "ff2_ln_g", "ff2_ln_b", "ff2_b2",
    "fin_ln_g", "fin_ln_b",
)
VEC_IDX = {n: i for i, n in enumerate(VEC_ROWS)}
NVEC = ((len(VEC_ROWS) + 7) // 8) * 8   # sublane-pad row count


# --------------------------------------------------------------------------- #
# Kernel
# --------------------------------------------------------------------------- #
def conformer_kernel(x_ref, pos_ref, vec_d_ref, vec_dh_ref,
                     w_in_ref, w_out_ref, w_dd_ref,
                     w_qkv_ref, attn_b_ref, w_o_ref, dw_ref,
                     o_ref, *, seq_len, batch_per_step, num_heads):
    f32 = jnp.float32
    T = seq_len
    BG = batch_per_step
    H = num_heads

    x = x_ref[...].astype(f32)              # (M, D), M = BG*T, D = 128
    M, D = x.shape
    hd = D // H
    scale = 1.0 / math.sqrt(hd)

    # ---- small helpers (params read at use site) --------------------------
    def vrow(i):                              # (1, D) row of the vector slab
        return vec_d_ref[i:i + 1, :]

    def layer_norm(v, g_row, b_row):
        mean = jnp.mean(v, axis=-1, keepdims=True)
        var = jnp.mean((v - mean) ** 2, axis=-1, keepdims=True)
        return (v - mean) * lax.rsqrt(var + LN_EPS) * vrow(g_row) + vrow(b_row)

    def silu(v):
        return v * jax.nn.sigmoid(v)

    # TODO(synk): exact FeedForward/MHSA/ConvolutionModule sources were not
    # provided; standard Conformer semantics (eval mode, dropout = identity,
    # absolute sinusoidal positions added after the MHSA LayerNorm) are used.
    def feed_forward(v, idx, g_row, b_row, b2_row):
        h = layer_norm(v, g_row, b_row)
        h = jnp.dot(h, w_in_ref[idx], preferred_element_type=f32) \
            + vec_dh_ref[idx:idx + 1, :]
        h = silu(h)
        h = jnp.dot(h, w_out_ref[idx], preferred_element_type=f32) + vrow(b2_row)
        return h

    # ---------------- FeedForward 1 (full residual, as in the spec) --------
    x = feed_forward(x, 0, VEC_IDX["ff1_ln_g"], VEC_IDX["ff1_ln_b"],
                     VEC_IDX["ff1_b2"]) + x

    # ---------------- Multi-head self-attention ----------------------------
    h = layer_norm(x, VEC_IDX["mha_ln_g"], VEC_IDX["mha_ln_b"]) \
        + pos_ref[...].astype(f32)

    qkT_dims = (((1,), (1,)), ((), ()))       # A @ B^T without explicit transpose
    head_acc = [None] * BG
    for hi in range(H):
        wq = w_qkv_ref[0, hi]                 # (D, hd)
        wk = w_qkv_ref[1, hi]
        wv = w_qkv_ref[2, hi]
        wo_h = w_o_ref[hi]                    # (hd, D)
        q = jnp.dot(h, wq, preferred_element_type=f32) + attn_b_ref[0, hi]
        k = jnp.dot(h, wk, preferred_element_type=f32) + attn_b_ref[1, hi]
        v = jnp.dot(h, wv, preferred_element_type=f32) + attn_b_ref[2, hi]
        for b in range(BG):                   # sublane-aligned row slices
            r0 = b * T
            qb = q[r0:r0 + T, :]
            kb = k[r0:r0 + T, :]
            vb = v[r0:r0 + T, :]
            s = lax.dot_general(qb, kb, qkT_dims,
                                preferred_element_type=f32) * scale
            s = s - jnp.max(s, axis=-1, keepdims=True)
            e = jnp.exp(s)
            a = e * pl.reciprocal(jnp.sum(e, axis=-1, keepdims=True), approx=True)
            ob = jnp.dot(a, vb, preferred_element_type=f32)          # (T, hd)
            contrib = jnp.dot(ob, wo_h, preferred_element_type=f32)  # (T, D)
            head_acc[b] = contrib if head_acc[b] is None else head_acc[b] + contrib
    attn = jnp.concatenate(head_acc, axis=0) + vrow(VEC_IDX["bo"])
    x = attn + x

    # ---------------- Convolution module ------------------------------------
    h = layer_norm(x, VEC_IDX["conv_ln_g"], VEC_IDX["conv_ln_b"])
    val = jnp.dot(h, w_dd_ref[0], preferred_element_type=f32) \
        + vrow(VEC_IDX["pw1_b_val"])
    gate = jnp.dot(h, w_dd_ref[1], preferred_element_type=f32) \
        + vrow(VEC_IDX["pw1_b_gate"])
    h = val * jax.nn.sigmoid(gate)                                    # GLU

    # Depthwise conv over time, 'same' zero padding; one pltpu.roll per tap.
    pad = (DW_KERNEL - 1) // 2
    TP = ((T + pad + 7) // 8) * 8            # per-batch padded length (>= T + pad)
    zpad = jnp.zeros((TP - T, D), f32)
    hp = jnp.concatenate(
        [jnp.concatenate([h[b * T:(b + 1) * T, :], zpad], axis=0)
         for b in range(BG)], axis=0)        # (BG*TP, D); pads absorb roll wrap
    dw = dw_ref[...]                          # (K, D)
    acc = jnp.zeros((BG * TP, D), f32)
    for kk in range(DW_KERNEL):
        shift = (pad - kk) % (BG * TP)
        shifted = hp if shift == 0 else pltpu.roll(hp, shift=shift, axis=0)
        acc = acc + shifted * dw[kk:kk + 1, :]
    h = jnp.concatenate([acc[b * TP:b * TP + T, :] for b in range(BG)], axis=0) \
        + vrow(VEC_IDX["dw_b"])
    # BatchNorm1d (eval) folded into per-channel affine host-side.
    h = h * vrow(VEC_IDX["bn_scale"]) + vrow(VEC_IDX["bn_shift"])
    h = silu(h)
    h = jnp.dot(h, w_dd_ref[2], preferred_element_type=f32) + vrow(VEC_IDX["pw2_b"])
    x = h + x

    # ---------------- FeedForward 2 + final LayerNorm -----------------------
    x = feed_forward(x, 1, VEC_IDX["ff2_ln_g"], VEC_IDX["ff2_ln_b"],
                     VEC_IDX["ff2_b2"]) + x
    x = layer_norm(x, VEC_IDX["fin_ln_g"], VEC_IDX["fin_ln_b"])
    o_ref[...] = x.astype(o_ref.dtype)


# --------------------------------------------------------------------------- #
# Parameter init / packing (host side)
# --------------------------------------------------------------------------- #
def init_params(key, d=ENCODER_DIM, expansion=FF_EXPANSION, kdw=DW_KERNEL):
    """Synthetic params, right-multiply convention: y = x @ W + b."""
    dh = d * expansion
    keys = jax.random.split(key, 16)
    w = lambda k, shape: (0.02 * jax.random.normal(k, shape)).astype(jnp.float32)
    ones = lambda shape: jnp.ones(shape, jnp.float32)
    zeros = lambda shape: jnp.zeros(shape, jnp.float32)
    return {
        "ff1_ln_g": ones((d,)), "ff1_ln_b": zeros((d,)),
        "ff1_w1": w(keys[0], (d, dh)), "ff1_b1": zeros((dh,)),
        "ff1_w2": w(keys[1], (dh, d)), "ff1_b2": zeros((d,)),

        "mha_ln_g": ones((d,)), "mha_ln_b": zeros((d,)),
        "wq": w(keys[2], (d, d)), "bq": zeros((d,)),
        "wk": w(keys[3], (d, d)), "bk": zeros((d,)),
        "wv": w(keys[4], (d, d)), "bv": zeros((d,)),
        "wo": w(keys[5], (d, d)), "bo": zeros((d,)),

        "conv_ln_g": ones((d,)), "conv_ln_b": zeros((d,)),
        "pw1_w": w(keys[6], (d, 2 * d)), "pw1_b": zeros((2 * d,)),
        "dw_w": w(keys[7], (kdw, d)),             # PyTorch (D,1,K) -> (K, D)
        "dw_b": zeros((d,)),
        "bn_g": ones((d,)), "bn_b": zeros((d,)),
        "bn_m": zeros((d,)), "bn_v": ones((d,)),
        "pw2_w": w(keys[8], (d, d)), "pw2_b": zeros((d,)),

        "ff2_ln_g": ones((d,)), "ff2_ln_b": zeros((d,)),
        "ff2_w1": w(keys[9], (d, dh)), "ff2_b1": zeros((dh,)),
        "ff2_w2": w(keys[10], (dh, d)), "ff2_b2": zeros((d,)),

        "fin_ln_g": ones((d,)), "fin_ln_b": zeros((d,)),
    }


def pack_params(p, d=ENCODER_DIM, expansion=FF_EXPANSION, num_heads=NUM_HEADS):
    """Pack ~36 small params into 9 DMA-friendly slabs (one-time, host side)."""
    dh = d * expansion
    hd = d // num_heads
    bn_scale = p["bn_g"] / jnp.sqrt(p["bn_v"] + BN_EPS)
    bn_shift = p["bn_b"] - p["bn_m"] * bn_scale
    rows = {
        "ff1_ln_g": p["ff1_ln_g"], "ff1_ln_b": p["ff1_ln_b"], "ff1_b2": p["ff1_b2"],
        "mha_ln_g": p["mha_ln_g"], "mha_ln_b": p["mha_ln_b"], "bo": p["bo"],
        "conv_ln_g": p["conv_ln_g"], "conv_ln_b": p["conv_ln_b"],
        "pw1_b_val": p["pw1_b"][:d], "pw1_b_gate": p["pw1_b"][d:], "dw_b": p["dw_b"],
        "bn_scale": bn_scale, "bn_shift": bn_shift, "pw2_b": p["pw2_b"],
        "ff2_ln_g": p["ff2_ln_g"], "ff2_ln_b": p["ff2_ln_b"], "ff2_b2": p["ff2_b2"],
        "fin_ln_g": p["fin_ln_g"], "fin_ln_b": p["fin_ln_b"],
    }
    vec_d = jnp.zeros((NVEC, d), jnp.float32)
    for name, i in VEC_IDX.items():
        vec_d = vec_d.at[i].set(rows[name])

    def split_cols(w):                         # (d, d) -> (H, d, hd)
        return w.reshape(d, num_heads, hd).transpose(1, 0, 2)

    return {
        "vec_d": vec_d,                                                     # (Nvec, D)
        "vec_dh": jnp.stack([p["ff1_b1"], p["ff2_b1"]], axis=0),            # (2, 4D)
        "w_in": jnp.stack([p["ff1_w1"], p["ff2_w1"]], axis=0),              # (2, D, 4D)
        "w_out": jnp.stack([p["ff1_w2"], p["ff2_w2"]], axis=0),             # (2, 4D, D)
        "w_dd": jnp.stack([p["pw1_w"][:, :d], p["pw1_w"][:, d:],            # (3, D, D)
                           p["pw2_w"]], axis=0),
        "w_qkv": jnp.stack([split_cols(p["wq"]), split_cols(p["wk"]),       # (3, H, D, hd)
                            split_cols(p["wv"])], axis=0),
        "attn_b": jnp.stack([p["bq"].reshape(num_heads, 1, hd),             # (3, H, 1, hd)
                             p["bk"].reshape(num_heads, 1, hd),
                             p["bv"].reshape(num_heads, 1, hd)], axis=0),
        "w_o": p["wo"].reshape(num_heads, hd, d),                           # (H, hd, D)
        "dw_w": p["dw_w"],                                                  # (K, D)
    }


def sinusoidal_pos_embed(seq_len, d):
    pos = jnp.arange(seq_len, dtype=jnp.float32)[:, None]
    i = jnp.arange(0, d, 2, dtype=jnp.float32)
    angle = pos / jnp.power(10000.0, i / d)
    pe = jnp.zeros((seq_len, d), jnp.float32)
    pe = pe.at[:, 0::2].set(jnp.sin(angle))
    pe = pe.at[:, 1::2].set(jnp.cos(angle))
    return pe


# --------------------------------------------------------------------------- #
# Wrapper
# --------------------------------------------------------------------------- #
PACKED_ORDER = ("vec_d", "vec_dh", "w_in", "w_out", "w_dd",
                "w_qkv", "attn_b", "w_o", "dw_w")


@jax.jit
def conformer_block(x, pos, packed):
    B, T, D = x.shape
    assert D == ENCODER_DIM and D % 128 == 0 and T % 8 == 0
    NG = 2 if B % 2 == 0 else 1              # >=2 grid steps -> both v7x TCs busy
    BG = B // NG
    M = BG * T                               # rows per grid step (folded batch)

    x2 = x.reshape(B * T, D)                 # lane-dense (last dim 128) I/O slab
    pos_tiled = jnp.tile(pos, (BG, 1))       # (M, D), identical for every step

    def full_spec(arr):
        nd = arr.ndim
        return pl.BlockSpec(arr.shape, lambda g, _nd=nd: (0,) * _nd)

    in_specs = [
        pl.BlockSpec((M, D), lambda g: (g, 0)),        # x slab, per batch group
        pl.BlockSpec((M, D), lambda g: (0, 0)),        # positional embedding
    ] + [full_spec(packed[name]) for name in PACKED_ORDER]

    # Advisory cost estimate for XLA's scheduler.
    hd = D // NUM_HEADS
    dh = D * FF_EXPANSION
    flops_step = (8 * M * D * dh                      # two FeedForwards
                  + 8 * M * D * D                     # attention qkv + out proj
                  + 4 * NUM_HEADS * BG * T * T * hd   # scores + attn @ V
                  + 6 * M * D * D                     # conv pointwise x3
                  + 2 * M * D * DW_KERNEL)            # depthwise taps
    transc_step = 2 * M * dh + 3 * M * D + NUM_HEADS * BG * T * T
    param_bytes = sum(int(packed[name].size) * 4 for name in PACKED_ORDER)
    cost = pl.CostEstimate(
        flops=int(flops_step * NG),
        transcendentals=int(transc_step * NG),
        bytes_accessed=int(2 * B * T * D * 4 + param_bytes),
    )

    kernel = functools.partial(conformer_kernel, seq_len=T,
                               batch_per_step=BG, num_heads=NUM_HEADS)
    out = pl.pallas_call(
        kernel,
        out_shape=jax.ShapeDtypeStruct((B * T, D), jnp.float32),
        grid=(NG,),
        in_specs=in_specs,
        out_specs=pl.BlockSpec((M, D), lambda g: (g, 0)),
        compiler_params=pltpu.CompilerParams(
            dimension_semantics=("parallel",)),
        cost_estimate=cost,
    )(x2, pos_tiled, *[packed[name] for name in PACKED_ORDER])
    return out.reshape(B, T, D)


# --------------------------------------------------------------------------- #
if __name__ == "__main__":
    B, T, D = 4, 16, ENCODER_DIM
    key = jax.random.PRNGKey(0)
    kx, kp = jax.random.split(key)
    x = jax.random.normal(kx, (B, T, D), dtype=jnp.float32)
    params = init_params(kp)
    packed = pack_params(params)
    pos = sinusoidal_pos_embed(T, D)

    y = conformer_block(x, pos, packed)
    jax.block_until_ready(y)
    assert y.shape == (B, T, D)
    assert bool(jnp.all(jnp.isfinite(y)))
    print("KERNEL_OK")
</pallas_src>

<mosaic_0001>
module attributes {stable_mosaic.version = 11 : i64} {
  func.func @conformer_kernel(%arg0: i32, %arg1: memref<32x128xf32, #tpu.memory_space<vmem>>, %arg2: memref<32x128xf32, #tpu.memory_space<vmem>>, %arg3: memref<24x128xf32, #tpu.memory_space<vmem>>, %arg4: memref<2x512xf32, #tpu.memory_space<vmem>>, %arg5: memref<2x128x512xf32, #tpu.memory_space<vmem>>, %arg6: memref<2x512x128xf32, #tpu.memory_space<vmem>>, %arg7: memref<3x128x128xf32, #tpu.memory_space<vmem>>, %arg8: memref<3x8x128x16xf32, #tpu.memory_space<vmem>>, %arg9: memref<3x8x1x16xf32, #tpu.memory_space<vmem>>, %arg10: memref<8x16x128xf32, #tpu.memory_space<vmem>>, %arg11: memref<31x128xf32, #tpu.memory_space<vmem>>, %arg12: memref<32x128xf32, #tpu.memory_space<vmem>>) attributes {dimension_semantics = [#tpu.dimension_semantics<parallel>], iteration_bounds = array<i64: 2>, scalar_prefetch = 0 : i64, scratch_operands = 0 : i64, tpu.core_type = #tpu.core_type<tc>, window_params = [{transform_indices = @transform_0, window_bounds = array<i64: 32, 128>}, {pipeline_mode = #tpu.pipeline_mode<synchronous>, transform_indices = @transform_1, window_bounds = array<i64: 32, 128>}, {pipeline_mode = #tpu.pipeline_mode<synchronous>, transform_indices = @transform_2, window_bounds = array<i64: 24, 128>}, {pipeline_mode = #tpu.pipeline_mode<synchronous>, transform_indices = @transform_3, window_bounds = array<i64: 2, 512>}, {pipeline_mode = #tpu.pipeline_mode<synchronous>, transform_indices = @transform_4, window_bounds = array<i64: 2, 128, 512>}, {pipeline_mode = #tpu.pipeline_mode<synchronous>, transform_indices = @transform_5, window_bounds = array<i64: 2, 512, 128>}, {pipeline_mode = #tpu.pipeline_mode<synchronous>, transform_indices = @transform_6, window_bounds = array<i64: 3, 128, 128>}, {pipeline_mode = #tpu.pipeline_mode<synchronous>, transform_indices = @transform_7, window_bounds = array<i64: 3, 8, 128, 16>}, {pipeline_mode = #tpu.pipeline_mode<synchronous>, transform_indices = @transform_8, window_bounds = array<i64: 3, 8, 1, 16>}, {pipeline_mode = #tpu.pipeline_mode<synchronous>, transform_indices = @transform_9, window_bounds = array<i64: 8, 16, 128>}, {pipeline_mode = #tpu.pipeline_mode<synchronous>, transform_indices = @transform_10, window_bounds = array<i64: 31, 128>}, {transform_indices = @transform_11, window_bounds = array<i64: 32, 128>}]} {
    %c0 = arith.constant 0 : index
    %c0_0 = arith.constant 0 : index
    %0 = vector.load %arg1[%c0, %c0_0] : memref<32x128xf32, #tpu.memory_space<vmem>>, vector<32x128xf32>
    %cst = arith.constant dense<0.000000e+00> : vector<32xf32>
    %1 = vector.multi_reduction <add>, %0, %cst [1] : vector<32x128xf32> to vector<32xf32>
    %2 = vector.shape_cast %1 : vector<32xf32> to vector<32x1xf32>
    %cst_1 = arith.constant 1.280000e+02 : f32
    %3 = vector.broadcast %cst_1 : f32 to vector<32x1xf32>
    %4 = arith.divf %2, %3 : vector<32x1xf32>
    %5 = vector.broadcast %4 : vector<32x1xf32> to vector<32x128xf32>
    %6 = arith.subf %0, %5 : vector<32x128xf32>
    %7 = arith.mulf %6, %6 : vector<32x128xf32>
    %cst_2 = arith.constant dense<0.000000e+00> : vector<32xf32>
    %8 = vector.multi_reduction <add>, %7, %cst_2 [1] : vector<32x128xf32> to vector<32xf32>
    %9 = vector.shape_cast %8 : vector<32xf32> to vector<32x1xf32>
    %cst_3 = arith.constant 1.280000e+02 : f32
    %10 = vector.broadcast %cst_3 : f32 to vector<32x1xf32>
    %11 = arith.divf %9, %10 : vector<32x1xf32>
    %12 = vector.broadcast %4 : vector<32x1xf32> to vector<32x128xf32>
    %13 = arith.subf %0, %12 : vector<32x128xf32>
    %cst_4 = arith.constant 9.99999974E-6 : f32
    %14 = vector.broadcast %cst_4 : f32 to vector<32x1xf32>
    %15 = arith.addf %11, %14 : vector<32x1xf32>
    %16 = math.rsqrt %15 : vector<32x1xf32>
    %17 = vector.broadcast %16 : vector<32x1xf32> to vector<32x128xf32>
    %18 = arith.mulf %13, %17 : vector<32x128xf32>
    %c0_5 = arith.constant 0 : index
    %c0_6 = arith.constant 0 : index
    %19 = vector.load %arg3[%c0_5, %c0_6] : memref<24x128xf32, #tpu.memory_space<vmem>>, vector<1x128xf32>
    %20 = vector.broadcast %19 : vector<1x128xf32> to vector<32x128xf32>
    %21 = arith.mulf %18, %20 : vector<32x128xf32>
    %c1 = arith.constant 1 : index
    %c0_7 = arith.constant 0 : index
    %22 = vector.load %arg3[%c1, %c0_7] : memref<24x128xf32, #tpu.memory_space<vmem>>, vector<1x128xf32>
    %23 = vector.broadcast %22 : vector<1x128xf32> to vector<32x128xf32>
    %24 = arith.addf %21, %23 : vector<32x128xf32>
    %c0_8 = arith.constant 0 : index
    %c0_9 = arith.constant 0 : index
    %c0_10 = arith.constant 0 : index
    %25 = vector.load %arg5[%c0_8, %c0_9, %c0_10] : memref<2x128x512xf32, #tpu.memory_space<vmem>>, vector<1x128x512xf32>
    %26 = vector.shape_cast %25 : vector<1x128x512xf32> to vector<128x512xf32>
    %cst_11 = arith.constant dense<0.000000e+00> : vector<32x512xf32>
    %27 = tpu.matmul %24, %26, %cst_11 {dimension_numbers = #tpu.dot_dimension_numbers<[1], [0], [0], [1], [0, 0, 1, 1], [], []>} : vector<32x128xf32>, vector<128x512xf32>, vector<32x512xf32> -> vector<32x512xf32>
    %c0_12 = arith.constant 0 : index
    %c0_13 = arith.constant 0 : index
    %28 = vector.load %arg4[%c0_12, %c0_13] : memref<2x512xf32, #tpu.memory_space<vmem>>, vector<1x512xf32>
    %29 = vector.broadcast %28 : vector<1x512xf32> to vector<32x512xf32>
    %30 = arith.addf %27, %29 : vector<32x512xf32>
    %31 = arith.negf %30 : vector<32x512xf32>
    %32 = math.exp %31 : vector<32x512xf32>
    %cst_14 = arith.constant 1.000000e+00 : f32
    %33 = vector.broadcast %cst_14 : f32 to vector<32x512xf32>
    %34 = arith.addf %33, %32 : vector<32x512xf32>
    %35 = arith.divf %33, %34 : vector<32x512xf32>
    %36 = arith.mulf %30, %35 : vector<32x512xf32>
    %c0_15 = arith.constant 0 : index
    %c0_16 = arith.constant 0 : index
    %c0_17 = arith.constant 0 : index
    %37 = vector.load %arg6[%c0_15, %c0_16, %c0_17] : memref<2x512x128xf32, #tpu.memory_space<vmem>>, vector<1x512x128xf32>
    %38 = vector.shape_cast %37 : vector<1x512x128xf32> to vector<512x128xf32>
    %cst_18 = arith.constant dense<0.000000e+00> : vector<32x128xf32>
    %39 = tpu.matmul %36, %38, %cst_18 {dimension_numbers = #tpu.dot_dimension_numbers<[1], [0], [0], [1], [0, 0, 1, 1], [], []>} : vector<32x512xf32>, vector<512x128xf32>, vector<32x128xf32> -> vector<32x128xf32>
    %c2 = arith.constant 2 : index
    %c0_19 = arith.constant 0 : index
    %40 = vector.load %arg3[%c2, %c0_19] : memref<24x128xf32, #tpu.memory_space<vmem>>, vector<1x128xf32>
    %41 = vector.broadcast %40 : vector<1x128xf32> to vector<32x128xf32>
    %42 = arith.addf %39, %41 : vector<32x128xf32>
    %43 = arith.addf %42, %0 : vector<32x128xf32>
    %cst_20 = arith.constant dense<0.000000e+00> : vector<32xf32>
    %44 = vector.multi_reduction <add>, %43, %cst_20 [1] : vector<32x128xf32> to vector<32xf32>
    %45 = vector.shape_cast %44 : vector<32xf32> to vector<32x1xf32>
    %cst_21 = arith.constant 1.280000e+02 : f32
    %46 = vector.broadcast %cst_21 : f32 to vector<32x1xf32>
    %47 = arith.divf %45, %46 : vector<32x1xf32>
    %48 = vector.broadcast %47 : vector<32x1xf32> to vector<32x128xf32>
    %49 = arith.subf %43, %48 : vector<32x128xf32>
    %50 = arith.mulf %49, %49 : vector<32x128xf32>
    %cst_22 = arith.constant dense<0.000000e+00> : vector<32xf32>
    %51 = vector.multi_reduction <add>, %50, %cst_22 [1] : vector<32x128xf32> to vector<32xf32>
    %52 = vector.shape_cast %51 : vector<32xf32> to vector<32x1xf32>
    %cst_23 = arith.constant 1.280000e+02 : f32
    %53 = vector.broadcast %cst_23 : f32 to vector<32x1xf32>
    %54 = arith.divf %52, %53 : vector<32x1xf32>
    %55 = vector.broadcast %47 : vector<32x1xf32> to vector<32x128xf32>
    %56 = arith.subf %43, %55 : vector<32x128xf32>
    %cst_24 = arith.constant 9.99999974E-6 : f32
    %57 = vector.broadcast %cst_24 : f32 to vector<32x1xf32>
    %58 = arith.addf %54, %57 : vector<32x1xf32>
    %59 = math.rsqrt %58 : vector<32x1xf32>
    %60 = vector.broadcast %59 : vector<32x1xf32> to vector<32x128xf32>
    %61 = arith.mulf %56, %60 : vector<32x128xf32>
    %c3 = arith.constant 3 : index
    %c0_25 = arith.constant 0 : index
    %62 = vector.load %arg3[%c3, %c0_25] : memref<24x128xf32, #tpu.memory_space<vmem>>, vector<1x128xf32>
    %63 = vector.broadcast %62 : vector<1x128xf32> to vector<32x128xf32>
    %64 = arith.mulf %61, %63 : vector<32x128xf32>
    %c4 = arith.constant 4 : index
    %c0_26 = arith.constant 0 : index
    %65 = vector.load %arg3[%c4, %c0_26] : memref<24x128xf32, #tpu.memory_space<vmem>>, vector<1x128xf32>
    %66 = vector.broadcast %65 : vector<1x128xf32> to vector<32x128xf32>
    %67 = arith.addf %64, %66 : vector<32x128xf32>
    %c0_27 = arith.constant 0 : index
    %c0_28 = arith.constant 0 : index
    %68 = vector.load %arg2[%c0_27, %c0_28] : memref<32x128xf32, #tpu.memory_space<vmem>>, vector<32x128xf32>
    %69 = arith.addf %67, %68 : vector<32x128xf32>
    %c0_29 = arith.constant 0 : index
    %c0_30 = arith.constant 0 : index
    %c0_31 = arith.constant 0 : index
    %c0_32 = arith.constant 0 : index
    %70 = vector.load %arg8[%c0_29, %c0_30, %c0_31, %c0_32] : memref<3x8x128x16xf32, #tpu.memory_space<vmem>>, vector<1x1x128x16xf32>
    %71 = vector.shape_cast %70 : vector<1x1x128x16xf32> to vector<128x16xf32>
    %c1_33 = arith.constant 1 : index
    %c0_34 = arith.constant 0 : index
    %c0_35 = arith.constant 0 : index
    %c0_36 = arith.constant 0 : index
    %72 = vector.load %arg8[%c1_33, %c0_34, %c0_35, %c0_36] : memref<3x8x128x16xf32, #tpu.memory_space<vmem>>, vector<1x1x128x16xf32>
    %73 = vector.shape_cast %72 : vector<1x1x128x16xf32> to vector<128x16xf32>
    %c2_37 = arith.constant 2 : index
    %c0_38 = arith.constant 0 : index
    %c0_39 = arith.constant 0 : index
    %c0_40 = arith.constant 0 : index
    %74 = vector.load %arg8[%c2_37, %c0_38, %c0_39, %c0_40] : memref<3x8x128x16xf32, #tpu.memory_space<vmem>>, vector<1x1x128x16xf32>
    %75 = vector.shape_cast %74 : vector<1x1x128x16xf32> to vector<128x16xf32>
    %c0_41 = arith.constant 0 : index
    %c0_42 = arith.constant 0 : index
    %c0_43 = arith.constant 0 : index
    %76 = vector.load %arg10[%c0_41, %c0_42, %c0_43] : memref<8x16x128xf32, #tpu.memory_space<vmem>>, vector<1x16x128xf32>
    %77 = vector.shape_cast %76 : vector<1x16x128xf32> to vector<16x128xf32>
    %cst_44 = arith.constant dense<0.000000e+00> : vector<32x16xf32>
    %78 = tpu.matmul %69, %71, %cst_44 {dimension_numbers = #tpu.dot_dimension_numbers<[1], [0], [0], [1], [0, 0, 1, 1], [], []>} : vector<32x128xf32>, vector<128x16xf32>, vector<32x16xf32> -> vector<32x16xf32>
    %c0_45 = arith.constant 0 : index
    %c0_46 = arith.constant 0 : index
    %c0_47 = arith.constant 0 : index
    %c0_48 = arith.constant 0 : index
    %79 = vector.load %arg9[%c0_45, %c0_46, %c0_47, %c0_48] : memref<3x8x1x16xf32, #tpu.memory_space<vmem>>, vector<1x1x1x16xf32>
    %80 = vector.shape_cast %79 : vector<1x1x1x16xf32> to vector<1x16xf32>
    %81 = vector.broadcast %80 : vector<1x16xf32> to vector<32x16xf32>
    %82 = arith.addf %78, %81 : vector<32x16xf32>
    %cst_49 = arith.constant dense<0.000000e+00> : vector<32x16xf32>
    %83 = tpu.matmul %69, %73, %cst_49 {dimension_numbers = #tpu.dot_dimension_numbers<[1], [0], [0], [1], [0, 0, 1, 1], [], []>} : vector<32x128xf32>, vector<128x16xf32>, vector<32x16xf32> -> vector<32x16xf32>
    %c1_50 = arith.constant 1 : index
    %c0_51 = arith.constant 0 : index
    %c0_52 = arith.constant 0 : index
    %c0_53 = arith.constant 0 : index
    %84 = vector.load %arg9[%c1_50, %c0_51, %c0_52, %c0_53] : memref<3x8x1x16xf32, #tpu.memory_space<vmem>>, vector<1x1x1x16xf32>
    %85 = vector.shape_cast %84 : vector<1x1x1x16xf32> to vector<1x16xf32>
    %86 = vector.broadcast %85 : vector<1x16xf32> to vector<32x16xf32>
    %87 = arith.addf %83, %86 : vector<32x16xf32>
    %cst_54 = arith.constant dense<0.000000e+00> : vector<32x16xf32>
    %88 = tpu.matmul %69, %75, %cst_54 {dimension_numbers = #tpu.dot_dimension_numbers<[1], [0], [0], [1], [0, 0, 1, 1], [], []>} : vector<32x128xf32>, vector<128x16xf32>, vector<32x16xf32> -> vector<32x16xf32>
    %c2_55 = arith.constant 2 : index
    %c0_56 = arith.constant 0 : index
    %c0_57 = arith.constant 0 : index
    %c0_58 = arith.constant 0 : index
    %89 = vector.load %arg9[%c2_55, %c0_56, %c0_57, %c0_58] : memref<3x8x1x16xf32, #tpu.memory_space<vmem>>, vector<1x1x1x16xf32>
    %90 = vector.shape_cast %89 : vector<1x1x1x16xf32> to vector<1x16xf32>
    %91 = vector.broadcast %90 : vector<1x16xf32> to vector<32x16xf32>
    %92 = arith.addf %88, %91 : vector<32x16xf32>
    %93 = vector.extract_strided_slice %82 {offsets = [0, 0], sizes = [16, 16], strides = [1, 1]} : vector<32x16xf32> to vector<16x16xf32>
    %94 = vector.extract_strided_slice %87 {offsets = [0, 0], sizes = [16, 16], strides = [1, 1]} : vector<32x16xf32> to vector<16x16xf32>
    %95 = vector.extract_strided_slice %92 {offsets = [0, 0], sizes = [16, 16], strides = [1, 1]} : vector<32x16xf32> to vector<16x16xf32>
    %cst_59 = arith.constant dense<0.000000e+00> : vector<16x16xf32>
    %96 = tpu.matmul %93, %94, %cst_59 {dimension_numbers = #tpu.dot_dimension_numbers<[1], [1], [0], [0], [0, 0, 1, 0], [], []>} : vector<16x16xf32>, vector<16x16xf32>, vector<16x16xf32> -> vector<16x16xf32>
    %cst_60 = arith.constant 2.500000e-01 : f32
    %97 = vector.broadcast %cst_60 : f32 to vector<16x16xf32>
    %98 = arith.mulf %96, %97 : vector<16x16xf32>
    %cst_61 = arith.constant dense<0xFF800000> : vector<16xf32>
    %99 = vector.multi_reduction <maximumf>, %98, %cst_61 [1] : vector<16x16xf32> to vector<16xf32>
    %100 = vector.shape_cast %99 : vector<16xf32> to vector<16x1xf32>
    %101 = vector.broadcast %100 : vector<16x1xf32> to vector<16x16xf32>
    %102 = arith.subf %98, %101 : vector<16x16xf32>
    %103 = math.exp %102 : vector<16x16xf32>
    %cst_62 = arith.constant dense<0.000000e+00> : vector<16xf32>
    %104 = vector.multi_reduction <add>, %103, %cst_62 [1] : vector<16x16xf32> to vector<16xf32>
    %105 = vector.shape_cast %104 : vector<16xf32> to vector<16x1xf32>
    %106 = tpu.reciprocal %105 {approx = true} : vector<16x1xf32> -> vector<16x1xf32>
    %107 = vector.broadcast %106 : vector<16x1xf32> to vector<16x16xf32>
    %108 = arith.mulf %103, %107 : vector<16x16xf32>
    %cst_63 = arith.constant dense<0.000000e+00> : vector<16x16xf32>
    %109 = tpu.matmul %108, %95, %cst_63 {dimension_numbers = #tpu.dot_dimension_numbers<[1], [0], [0], [1], [0, 0, 1, 1], [], []>} : vector<16x16xf32>, vector<16x16xf32>, vector<16x16xf32> -> vector<16x16xf32>
    %cst_64 = arith.constant dense<0.000000e+00> : vector<16x128xf32>
    %110 = tpu.matmul %109, %77, %cst_64 {dimension_numbers = #tpu.dot_dimension_numbers<[1], [0], [0], [1], [0, 0, 1, 1], [], []>} : vector<16x16xf32>, vector<16x128xf32>, vector<16x128xf32> -> vector<16x128xf32>
    %111 = vector.extract_strided_slice %82 {offsets = [16, 0], sizes = [16, 16], strides = [1, 1]} : vector<32x16xf32> to vector<16x16xf32>
    %112 = vector.extract_strided_slice %87 {offsets = [16, 0], sizes = [16, 16], strides = [1, 1]} : vector<32x16xf32> to vector<16x16xf32>
    %113 = vector.extract_strided_slice %92 {offsets = [16, 0], sizes = [16, 16], strides = [1, 1]} : vector<32x16xf32> to vector<16x16xf32>
    %cst_65 = arith.constant dense<0.000000e+00> : vector<16x16xf32>
    %114 = tpu.matmul %111, %112, %cst_65 {dimension_numbers = #tpu.dot_dimension_numbers<[1], [1], [0], [0], [0, 0, 1, 0], [], []>} : vector<16x16xf32>, vector<16x16xf32>, vector<16x16xf32> -> vector<16x16xf32>
    %cst_66 = arith.constant 2.500000e-01 : f32
    %115 = vector.broadcast %cst_66 : f32 to vector<16x16xf32>
    %116 = arith.mulf %114, %115 : vector<16x16xf32>
    %cst_67 = arith.constant dense<0xFF800000> : vector<16xf32>
    %117 = vector.multi_reduction <maximumf>, %116, %cst_67 [1] : vector<16x16xf32> to vector<16xf32>
    %118 = vector.shape_cast %117 : vector<16xf32> to vector<16x1xf32>
    %119 = vector.broadcast %118 : vector<16x1xf32> to vector<16x16xf32>
    %120 = arith.subf %116, %119 : vector<16x16xf32>
    %121 = math.exp %120 : vector<16x16xf32>
    %cst_68 = arith.constant dense<0.000000e+00> : vector<16xf32>
    %122 = vector.multi_reduction <add>, %121, %cst_68 [1] : vector<16x16xf32> to vector<16xf32>
    %123 = vector.shape_cast %122 : vector<16xf32> to vector<16x1xf32>
    %124 = tpu.reciprocal %123 {approx = true} : vector<16x1xf32> -> vector<16x1xf32>
    %125 = vector.broadcast %124 : vector<16x1xf32> to vector<16x16xf32>
    %126 = arith.mulf %121, %125 : vector<16x16xf32>
    %cst_69 = arith.constant dense<0.000000e+00> : vector<16x16xf32>
    %127 = tpu.matmul %126, %113, %cst_69 {dimension_numbers = #tpu.dot_dimension_numbers<[1], [0], [0], [1], [0, 0, 1, 1], [], []>} : vector<16x16xf32>, vector<16x16xf32>, vector<16x16xf32> -> vector<16x16xf32>
    %cst_70 = arith.constant dense<0.000000e+00> : vector<16x128xf32>
    %128 = tpu.matmul %127, %77, %cst_70 {dimension_numbers = #tpu.dot_dimension_numbers<[1], [0], [0], [1], [0, 0, 1, 1], [], []>} : vector<16x16xf32>, vector<16x128xf32>, vector<16x128xf32> -> vector<16x128xf32>
    %c0_71 = arith.constant 0 : index
    %c1_72 = arith.constant 1 : index
    %c0_73 = arith.constant 0 : index
    %c0_74 = arith.constant 0 : index
    %129 = vector.load %arg8[%c0_71, %c1_72, %c0_73, %c0_74] : memref<3x8x128x16xf32, #tpu.memory_space<vmem>>, vector<1x1x128x16xf32>
    %130 = vector.shape_cast %129 : vector<1x1x128x16xf32> to vector<128x16xf32>
    %c1_75 = arith.constant 1 : index
    %c1_76 = arith.constant 1 : index
    %c0_77 = arith.constant 0 : index
    %c0_78 = arith.constant 0 : index
    %131 = vector.load %arg8[%c1_75, %c1_76, %c0_77, %c0_78] : memref<3x8x128x16xf32, #tpu.memory_space<vmem>>, vector<1x1x128x16xf32>
    %132 = vector.shape_cast %131 : vector<1x1x128x16xf32> to vector<128x16xf32>
    %c2_79 = arith.constant 2 : index
    %c1_80 = arith.constant 1 : index
    %c0_81 = arith.constant 0 : index
    %c0_82 = arith.constant 0 : index
    %133 = vector.load %arg8[%c2_79, %c1_80, %c0_81, %c0_82] : memref<3x8x128x16xf32, #tpu.memory_space<vmem>>, vector<1x1x128x16xf32>
    %134 = vector.shape_cast %133 : vector<1x1x128x16xf32> to vector<128x16xf32>
    %c1_83 = arith.constant 1 : index
    %c0_84 = arith.constant 0 : index
    %c0_85 = arith.constant 0 : index
    %135 = vector.load %arg10[%c1_83, %c0_84, %c0_85] : memref<8x16x128xf32, #tpu.memory_space<vmem>>, vector<1x16x128xf32>
    %136 = vector.shape_cast %135 : vector<1x16x128xf32> to vector<16x128xf32>
    %cst_86 = arith.constant dense<0.000000e+00> : vector<32x16xf32>
    %137 = tpu.matmul %69, %130, %cst_86 {dimension_numbers = #tpu.dot_dimension_numbers<[1], [0], [0], [1], [0, 0, 1, 1], [], []>} : vector<32x128xf32>, vector<128x16xf32>, vector<32x16xf32> -> vector<32x16xf32>
    %c0_87 = arith.constant 0 : index
    %c1_88 = arith.constant 1 : index
    %c0_89 = arith.constant 0 : index
    %c0_90 = arith.constant 0 : index
    %138 = vector.load %arg9[%c0_87, %c1_88, %c0_89, %c0_90] : memref<3x8x1x16xf32, #tpu.memory_space<vmem>>, vector<1x1x1x16xf32>
    %139 = vector.shape_cast %138 : vector<1x1x1x16xf32> to vector<1x16xf32>
    %140 = vector.broadcast %139 : vector<1x16xf32> to vector<32x16xf32>
    %141 = arith.addf %137, %140 : vector<32x16xf32>
    %cst_91 = arith.constant dense<0.000000e+00> : vector<32x16xf32>
    %142 = tpu.matmul %69, %132, %cst_91 {dimension_numbers = #tpu.dot_dimension_numbers<[1], [0], [0], [1], [0, 0, 1, 1], [], []>} : vector<32x128xf32>, vector<128x16xf32>, vector<32x16xf32> -> vector<32x16xf32>
    %c1_92 = arith.constant 1 : index
    %c1_93 = arith.constant 1 : index
    %c0_94 = arith.constant 0 : index
    %c0_95 = arith.constant 0 : index
    %143 = vector.load %arg9[%c1_92, %c1_93, %c0_94, %c0_95] : memref<3x8x1x16xf32, #tpu.memory_space<vmem>>, vector<1x1x1x16xf32>
    %144 = vector.shape_cast %143 : vector<1x1x1x16xf32> to vector<1x16xf32>
    %145 = vector.broadcast %144 : vector<1x16xf32> to vector<32x16xf32>
    %146 = arith.addf %142, %145 : vector<32x16xf32>
    %cst_96 = arith.constant dense<0.000000e+00> : vector<32x16xf32>
    %147 = tpu.matmul %69, %134, %cst_96 {dimension_numbers = #tpu.dot_dimension_numbers<[1], [0], [0], [1], [0, 0, 1, 1], [], []>} : vector<32x128xf32>, vector<128x16xf32>, vector<32x16xf32> -> vector<32x16xf32>
    %c2_97 = arith.constant 2 : index
    %c1_98 = arith.constant 1 : index
    %c0_99 = arith.constant 0 : index
    %c0_100 = arith.constant 0 : index
    %148 = vector.load %arg9[%c2_97, %c1_98, %c0_99, %c0_100] : memref<3x8x1x16xf32, #tpu.memory_space<vmem>>, vector<1x1x1x16xf32>
    %149 = vector.shape_cast %148 : vector<1x1x1x16xf32> to vector<1x16xf32>
    %150 = vector.broadcast %149 : vector<1x16xf32> to vector<32x16xf32>
    %151 = arith.addf %147, %150 : vector<32x16xf32>
    %152 = vector.extract_strided_slice %141 {offsets = [0, 0], sizes = [16, 16], strides = [1, 1]} : vector<32x16xf32> to vector<16x16xf32>
    %153 = vector.extract_strided_slice %146 {offsets = [0, 0], sizes = [16, 16], strides = [1, 1]} : vector<32x16xf32> to vector<16x16xf32>
    %154 = vector.extract_strided_slice %151 {offsets = [0, 0], sizes = [16, 16], strides = [1, 1]} : vector<32x16xf32> to vector<16x16xf32>
    %cst_101 = arith.constant dense<0.000000e+00> : vector<16x16xf32>
    %155 = tpu.matmul %152, %153, %cst_101 {dimension_numbers = #tpu.dot_dimension_numbers<[1], [1], [0], [0], [0, 0, 1, 0], [], []>} : vector<16x16xf32>, vector<16x16xf32>, vector<16x16xf32> -> vector<16x16xf32>
    %cst_102 = arith.constant 2.500000e-01 : f32
    %156 = vector.broadcast %cst_102 : f32 to vector<16x16xf32>
    %157 = arith.mulf %155, %156 : vector<16x16xf32>
    %cst_103 = arith.constant dense<0xFF800000> : vector<16xf32>
    %158 = vector.multi_reduction <maximumf>, %157, %cst_103 [1] : vector<16x16xf32> to vector<16xf32>
    %159 = vector.shape_cast %158 : vector<16xf32> to vector<16x1xf32>
    %160 = vector.broadcast %159 : vector<16x1xf32> to vector<16x16xf32>
    %161 = arith.subf %157, %160 : vector<16x16xf32>
    %162 = math.exp %161 : vector<16x16xf32>
    %cst_104 = arith.constant dense<0.000000e+00> : vector<16xf32>
    %163 = vector.multi_reduction <add>, %162, %cst_104 [1] : vector<16x16xf32> to vector<16xf32>
    %164 = vector.shape_cast %163 : vector<16xf32> to vector<16x1xf32>
    %165 = tpu.reciprocal %164 {approx = true} : vector<16x1xf32> -> vector<16x1xf32>
    %166 = vector.broadcast %165 : vector<16x1xf32> to vector<16x16xf32>
    %167 = arith.mulf %162, %166 : vector<16x16xf32>
    %cst_105 = arith.constant dense<0.000000e+00> : vector<16x16xf32>
    %168 = tpu.matmul %167, %154, %cst_105 {dimension_numbers = #tpu.dot_dimension_numbers<[1], [0], [0], [1], [0, 0, 1, 1], [], []>} : vector<16x16xf32>, vector<16x16xf32>, vector<16x16xf32> -> vector<16x16xf32>
    %cst_106 = arith.constant dense<0.000000e+00> : vector<16x128xf32>
    %169 = tpu.matmul %168, %136, %cst_106 {dimension_numbers = #tpu.dot_dimension_numbers<[1], [0], [0], [1], [0, 0, 1, 1], [], []>} : vector<16x16xf32>, vector<16x128xf32>, vector<16x128xf32> -> vector<16x128xf32>
    %170 = arith.addf %110, %169 : vector<16x128xf32>
    %171 = vector.extract_strided_slice %141 {offsets = [16, 0], sizes = [16, 16], strides = [1, 1]} : vector<32x16xf32> to vector<16x16xf32>
    %172 = vector.extract_strided_slice %146 {offsets = [16, 0], sizes = [16, 16], strides = [1, 1]} : vector<32x16xf32> to vector<16x16xf32>
    %173 = vector.extract_strided_slice %151 {offsets = [16, 0], sizes = [16, 16], strides = [1, 1]} : vector<32x16xf32> to vector<16x16xf32>
    %cst_107 = arith.constant dense<0.000000e+00> : vector<16x16xf32>
    %174 = tpu.matmul %171, %172, %cst_107 {dimension_numbers = #tpu.dot_dimension_numbers<[1], [1], [0], [0], [0, 0, 1, 0], [], []>} : vector<16x16xf32>, vector<16x16xf32>, vector<16x16xf32> -> vector<16x16xf32>
    %cst_108 = arith.constant 2.500000e-01 : f32
    %175 = vector.broadcast %cst_108 : f32 to vector<16x16xf32>
    %176 = arith.mulf %174, %175 : vector<16x16xf32>
    %cst_109 = arith.constant dense<0xFF800000> : vector<16xf32>
    %177 = vector.multi_reduction <maximumf>, %176, %cst_109 [1] : vector<16x16xf32> to vector<16xf32>
    %178 = vector.shape_cast %177 : vector<16xf32> to vector<16x1xf32>
    %179 = vector.broadcast %178 : vector<16x1xf32> to vector<16x16xf32>
    %180 = arith.subf %176, %179 : vector<16x16xf32>
    %181 = math.exp %180 : vector<16x16xf32>
    %cst_110 = arith.constant dense<0.000000e+00> : vector<16xf32>
    %182 = vector.multi_reduction <add>, %181, %cst_110 [1] : vector<16x16xf32> to vector<16xf32>
    %183 = vector.shape_cast %182 : vector<16xf32> to vector<16x1xf32>
    %184 = tpu.reciprocal %183 {approx = true} : vector<16x1xf32> -> vector<16x1xf32>
    %185 = vector.broadcast %184 : vector<16x1xf32> to vector<16x16xf32>
    %186 = arith.mulf %181, %185 : vector<16x16xf32>
    %cst_111 = arith.constant dense<0.000000e+00> : vector<16x16xf32>
    %187 = tpu.matmul %186, %173, %cst_111 {dimension_numbers = #tpu.dot_dimension_numbers<[1], [0], [0], [1], [0, 0, 1, 1], [], []>} : vector<16x16xf32>, vector<16x16xf32>, vector<16x16xf32> -> vector<16x16xf32>
    %cst_112 = arith.constant dense<0.000000e+00> : vector<16x128xf32>
    %188 = tpu.matmul %187, %136, %cst_112 {dimension_numbers = #tpu.dot_dimension_numbers<[1], [0], [0], [1], [0, 0, 1, 1], [], []>} : vector<16x16xf32>, vector<16x128xf32>, vector<16x128xf32> -> vector<16x128xf32>
    %189 = arith.addf %128, %188 : vector<16x128xf32>
    %c0_113 = arith.constant 0 : index
    %c2_114 = arith.constant 2 : index
    %c0_115 = arith.constant 0 : index
    %c0_116 = arith.constant 0 : index
    %190 = vector.load %arg8[%c0_113, %c2_114, %c0_115, %c0_116] : memref<3x8x128x16xf32, #tpu.memory_space<vmem>>, vector<1x1x128x16xf32>
    %191 = vector.shape_cast %190 : vector<1x1x128x16xf32> to vector<128x16xf32>
    %c1_117 = arith.constant 1 : index
    %c2_118 = arith.constant 2 : index
    %c0_119 = arith.constant 0 : index
    %c0_120 = arith.constant 0 : index
    %192 = vector.load %arg8[%c1_117, %c2_118, %c0_119, %c0_120] : memref<3x8x128x16xf32, #tpu.memory_space<vmem>>, vector<1x1x128x16xf32>
    %193 = vector.shape_cast %192 : vector<1x1x128x16xf32> to vector<128x16xf32>
    %c2_121 = arith.constant 2 : index
    %c2_122 = arith.constant 2 : index
    %c0_123 = arith.constant 0 : index
    %c0_124 = arith.constant 0 : index
    %194 = vector.load %arg8[%c2_121, %c2_122, %c0_123, %c0_124] : memref<3x8x128x16xf32, #tpu.memory_space<vmem>>, vector<1x1x128x16xf32>
    %195 = vector.shape_cast %194 : vector<1x1x128x16xf32> to vector<128x16xf32>
    %c2_125 = arith.constant 2 : index
    %c0_126 = arith.constant 0 : index
    %c0_127 = arith.constant 0 : index
    %196 = vector.load %arg10[%c2_125, %c0_126, %c0_127] : memref<8x16x128xf32, #tpu.memory_space<vmem>>, vector<1x16x128xf32>
    %197 = vector.shape_cast %196 : vector<1x16x128xf32> to vector<16x128xf32>
    %cst_128 = arith.constant dense<0.000000e+00> : vector<32x16xf32>
    %198 = tpu.matmul %69, %191, %cst_128 {dimension_numbers = #tpu.dot_dimension_numbers<[1], [0], [0], [1], [0, 0, 1, 1], [], []>} : vector<32x128xf32>, vector<128x16xf32>, vector<32x16xf32> -> vector<32x16xf32>
    %c0_129 = arith.constant 0 : index
    %c2_130 = arith.constant 2 : index
    %c0_131 = arith.constant 0 : index
    %c0_132 = arith.constant 0 : index
    %199 = vector.load %arg9[%c0_129, %c2_130, %c0_131, %c0_132] : memref<3x8x1x16xf32, #tpu.memory_space<vmem>>, vector<1x1x1x16xf32>
    %200 = vector.shape_cast %199 : vector<1x1x1x16xf32> to vector<1x16xf32>
    %201 = vector.broadcast %200 : vector<1x16xf32> to vector<32x16xf32>
    %202 = arith.addf %198, %201 : vector<32x16xf32>
    %cst_133 = arith.constant dense<0.000000e+00> : vector<32x16xf32>
    %203 = tpu.matmul %69, %193, %cst_133 {dimension_numbers = #tpu.dot_dimension_numbers<[1], [0], [0], [1], [0, 0, 1, 1], [], []>} : vector<32x128xf32>, vector<128x16xf32>, vector<32x16xf32> -> vector<32x16xf32>
    %c1_134 = arith.constant 1 : index
    %c2_135 = arith.constant 2 : index
    %c0_136 = arith.constant 0 : index
    %c0_137 = arith.constant 0 : index
    %204 = vector.load %arg9[%c1_134, %c2_135, %c0_136, %c0_137] : memref<3x8x1x16xf32, #tpu.memory_space<vmem>>, vector<1x1x1x16xf32>
    %205 = vector.shape_cast %204 : vector<1x1x1x16xf32> to vector<1x16xf32>
    %206 = vector.broadcast %205 : vector<1x16xf32> to vector<32x16xf32>
    %207 = arith.addf %203, %206 : vector<32x16xf32>
    %cst_138 = arith.constant dense<0.000000e+00> : vector<32x16xf32>
    %208 = tpu.matmul %69, %195, %cst_138 {dimension_numbers = #tpu.dot_dimension_numbers<[1], [0], [0], [1], [0, 0, 1, 1], [], []>} : vector<32x128xf32>, vector<128x16xf32>, vector<32x16xf32> -> vector<32x16xf32>
    %c2_139 = arith.constant 2 : index
    %c2_140 = arith.constant 2 : index
    %c0_141 = arith.constant 0 : index
    %c0_142 = arith.constant 0 : index
    %209 = vector.load %arg9[%c2_139, %c2_140, %c0_141, %c0_142] : memref<3x8x1x16xf32, #tpu.memory_space<vmem>>, vector<1x1x1x16xf32>
    %210 = vector.shape_cast %209 : vector<1x1x1x16xf32> to vector<1x16xf32>
    %211 = vector.broadcast %210 : vector<1x16xf32> to vector<32x16xf32>
    %212 = arith.addf %208, %211 : vector<32x16xf32>
    %213 = vector.extract_strided_slice %202 {offsets = [0, 0], sizes = [16, 16], strides = [1, 1]} : vector<32x16xf32> to vector<16x16xf32>
    %214 = vector.extract_strided_slice %207 {offsets = [0, 0], sizes = [16, 16], strides = [1, 1]} : vector<32x16xf32> to vector<16x16xf32>
    %215 = vector.extract_strided_slice %212 {offsets = [0, 0], sizes = [16, 16], strides = [1, 1]} : vector<32x16xf32> to vector<16x16xf32>
    %cst_143 = arith.constant dense<0.000000e+00> : vector<16x16xf32>
    %216 = tpu.matmul %213, %214, %cst_143 {dimension_numbers = #tpu.dot_dimension_numbers<[1], [1], [0], [0], [0, 0, 1, 0], [], []>} : vector<16x16xf32>, vector<16x16xf32>, vector<16x16xf32> -> vector<16x16xf32>
    %cst_144 = arith.constant 2.500000e-01 : f32
    %217 = vector.broadcast %cst_144 : f32 to vector<16x16xf32>
    %218 = arith.mulf %216, %217 : vector<16x16xf32>
    %cst_145 = arith.constant dense<0xFF800000> : vector<16xf32>
    %219 = vector.multi_reduction <maximumf>, %218, %cst_145 [1] : vector<16x16xf32> to vector<16xf32>
    %220 = vector.shape_cast %219 : vector<16xf32> to vector<16x1xf32>
    %221 = vector.broadcast %220 : vector<16x1xf32> to vector<16x16xf32>
    %222 = arith.subf %218, %221 : vector<16x16xf32>
    %223 = math.exp %222 : vector<16x16xf32>
    %cst_146 = arith.constant dense<0.000000e+00> : vector<16xf32>
    %224 = vector.multi_reduction <add>, %223, %cst_146 [1] : vector<16x16xf32> to vector<16xf32>
    %225 = vector.shape_cast %224 : vector<16xf32> to vector<16x1xf32>
    %226 = tpu.reciprocal %225 {approx = true} : vector<16x1xf32> -> vector<16x1xf32>
    %227 = vector.broadcast %226 : vector<16x1xf32> to vector<16x16xf32>
    %228 = arith.mulf %223, %227 : vector<16x16xf32>
    %cst_147 = arith.constant dense<0.000000e+00> : vector<16x16xf32>
    %229 = tpu.matmul %228, %215, %cst_147 {dimension_numbers = #tpu.dot_dimension_numbers<[1], [0], [0], [1], [0, 0, 1, 1], [], []>} : vector<16x16xf32>, vector<16x16xf32>, vector<16x16xf32> -> vector<16x16xf32>
    %cst_148 = arith.constant dense<0.000000e+00> : vector<16x128xf32>
    %230 = tpu.matmul %229, %197, %cst_148 {dimension_numbers = #tpu.dot_dimension_numbers<[1], [0], [0], [1], [0, 0, 1, 1], [], []>} : vector<16x16xf32>, vector<16x128xf32>, vector<16x128xf32> -> vector<16x128xf32>
    %231 = arith.addf %170, %230 : vector<16x128xf32>
    %232 = vector.extract_strided_slice %202 {offsets = [16, 0], sizes = [16, 16], strides = [1, 1]} : vector<32x16xf32> to vector<16x16xf32>
    %233 = vector.extract_strided_slice %207 {offsets = [16, 0], sizes = [16, 16], strides = [1, 1]} : vector<32x16xf32> to vector<16x16xf32>
    %234 = vector.extract_strided_slice %212 {offsets = [16, 0], sizes = [16, 16], strides = [1, 1]} : vector<32x16xf32> to vector<16x16xf32>
    %cst_149 = arith.constant dense<0.000000e+00> : vector<16x16xf32>
    %235 = tpu.matmul %232, %233, %cst_149 {dimension_numbers = #tpu.dot_dimension_numbers<[1], [1], [0], [0], [0, 0, 1, 0], [], []>} : vector<16x16xf32>, vector<16x16xf32>, vector<16x16xf32> -> vector<16x16xf32>
    %cst_150 = arith.constant 2.500000e-01 : f32
    %236 = vector.broadcast %cst_150 : f32 to vector<16x16xf32>
    %237 = arith.mulf %235, %236 : vector<16x16xf32>
    %cst_151 = arith.constant dense<0xFF800000> : vector<16xf32>
    %238 = vector.multi_reduction <maximumf>, %237, %cst_151 [1] : vector<16x16xf32> to vector<16xf32>
    %239 = vector.shape_cast %238 : vector<16xf32> to vector<16x1xf32>
    %240 = vector.broadcast %239 : vector<16x1xf32> to vector<16x16xf32>
    %241 = arith.subf %237, %240 : vector<16x16xf32>
    %242 = math.exp %241 : vector<16x16xf32>
    %cst_152 = arith.constant dense<0.000000e+00> : vector<16xf32>
    %243 = vector.multi_reduction <add>, %242, %cst_152 [1] : vector<16x16xf32> to vector<16xf32>
    %244 = vector.shape_cast %243 : vector<16xf32> to vector<16x1xf32>
    %245 = tpu.reciprocal %244 {approx = true} : vector<16x1xf32> -> vector<16x1xf32>
    %246 = vector.broadcast %245 : vector<16x1xf32> to vector<16x16xf32>
    %247 = arith.mulf %242, %246 : vector<16x16xf32>
    %cst_153 = arith.constant dense<0.000000e+00> : vector<16x16xf32>
    %248 = tpu.matmul %247, %234, %cst_153 {dimension_numbers = #tpu.dot_dimension_numbers<[1], [0], [0], [1], [0, 0, 1, 1], [], []>} : vector<16x16xf32>, vector<16x16xf32>, vector<16x16xf32> -> vector<16x16xf32>
    %cst_154 = arith.constant dense<0.000000e+00> : vector<16x128xf32>
    %249 = tpu.matmul %248, %197, %cst_154 {dimension_numbers = #tpu.dot_dimension_numbers<[1], [0], [0], [1], [0, 0, 1, 1], [], []>} : vector<16x16xf32>, vector<16x128xf32>, vector<16x128xf32> -> vector<16x128xf32>
    %250 = arith.addf %189, %249 : vector<16x128xf32>
    %c0_155 = arith.constant 0 : index
    %c3_156 = arith.constant 3 : index
    %c0_157 = arith.constant 0 : index
    %c0_158 = arith.constant 0 : index
    %251 = vector.load %arg8[%c0_155, %c3_156, %c0_157, %c0_158] : memref<3x8x128x16xf32, #tpu.memory_space<vmem>>, vector<1x1x128x16xf32>
    %252 = vector.shape_cast %251 : vector<1x1x128x16xf32> to vector<128x16xf32>
    %c1_159 = arith.constant 1 : index
    %c3_160 = arith.constant 3 : index
    %c0_161 = arith.constant 0 : index
    %c0_162 = arith.constant 0 : index
    %253 = vector.load %arg8[%c1_159, %c3_160, %c0_161, %c0_162] : memref<3x8x128x16xf32, #tpu.memory_space<vmem>>, vector<1x1x128x16xf32>
    %254 = vector.shape_cast %253 : vector<1x1x128x16xf32> to vector<128x16xf32>
    %c2_163 = arith.constant 2 : index
    %c3_164 = arith.constant 3 : index
    %c0_165 = arith.constant 0 : index
    %c0_166 = arith.constant 0 : index
    %255 = vector.load %arg8[%c2_163, %c3_164, %c0_165, %c0_166] : memref<3x8x128x16xf32, #tpu.memory_space<vmem>>, vector<1x1x128x16xf32>
    %256 = vector.shape_cast %255 : vector<1x1x128x16xf32> to vector<128x16xf32>
    %c3_167 = arith.constant 3 : index
    %c0_168 = arith.constant 0 : index
    %c0_169 = arith.constant 0 : index
    %257 = vector.load %arg10[%c3_167, %c0_168, %c0_169] : memref<8x16x128xf32, #tpu.memory_space<vmem>>, vector<1x16x128xf32>
    %258 = vector.shape_cast %257 : vector<1x16x128xf32> to vector<16x128xf32>
    %cst_170 = arith.constant dense<0.000000e+00> : vector<32x16xf32>
    %259 = tpu.matmul %69, %252, %cst_170 {dimension_numbers = #tpu.dot_dimension_numbers<[1], [0], [0], [1], [0, 0, 1, 1], [], []>} : vector<32x128xf32>, vector<128x16xf32>, vector<32x16xf32> -> vector<32x16xf32>
    %c0_171 = arith.constant 0 : index
    %c3_172 = arith.constant 3 : index
    %c0_173 = arith.constant 0 : index
    %c0_174 = arith.constant 0 : index
    %260 = vector.load %arg9[%c0_171, %c3_172, %c0_173, %c0_174] : memref<3x8x1x16xf32, #tpu.memory_space<vmem>>, vector<1x1x1x16xf32>
    %261 = vector.shape_cast %260 : vector<1x1x1x16xf32> to vector<1x16xf32>
    %262 = vector.broadcast %261 : vector<1x16xf32> to vector<32x16xf32>
    %263 = arith.addf %259, %262 : vector<32x16xf32>
    %cst_175 = arith.constant dense<0.000000e+00> : vector<32x16xf32>
    %264 = tpu.matmul %69, %254, %cst_175 {dimension_numbers = #tpu.dot_dimension_numbers<[1], [0], [0], [1], [0, 0, 1, 1], [], []>} : vector<32x128xf32>, vector<128x16xf32>, vector<32x16xf32> -> vector<32x16xf32>
    %c1_176 = arith.constant 1 : index
    %c3_177 = arith.constant 3 : index
    %c0_178 = arith.constant 0 : index
    %c0_179 = arith.constant 0 : index
    %265 = vector.load %arg9[%c1_176, %c3_177, %c0_178, %c0_179] : memref<3x8x1x16xf32, #tpu.memory_space<vmem>>, vector<1x1x1x16xf32>
    %266 = vector.shape_cast %265 : vector<1x1x1x16xf32> to vector<1x16xf32>
    %267 = vector.broadcast %266 : vector<1x16xf32> to vector<32x16xf32>
    %268 = arith.addf %264, %267 : vector<32x16xf32>
    %cst_180 = arith.constant dense<0.000000e+00> : vector<32x16xf32>
    %269 = tpu.matmul %69, %256, %cst_180 {dimension_numbers = #tpu.dot_dimension_numbers<[1], [0], [0], [1], [0, 0, 1, 1], [], []>} : vector<32x128xf32>, vector<128x16xf32>, vector<32x16xf32> -> vector<32x16xf32>
    %c2_181 = arith.constant 2 : index
    %c3_182 = arith.constant 3 : index
    %c0_183 = arith.constant 0 : index
    %c0_184 = arith.constant 0 : index
    %270 = vector.load %arg9[%c2_181, %c3_182, %c0_183, %c0_184] : memref<3x8x1x16xf32, #tpu.memory_space<vmem>>, vector<1x1x1x16xf32>
    %271 = vector.shape_cast %270 : vector<1x1x1x16xf32> to vector<1x16xf32>
    %272 = vector.broadcast %271 : vector<1x16xf32> to vector<32x16xf32>
    %273 = arith.addf %269, %272 : vector<32x16xf32>
    %274 = vector.extract_strided_slice %263 {offsets = [0, 0], sizes = [16, 16], strides = [1, 1]} : vector<32x16xf32> to vector<16x16xf32>
    %275 = vector.extract_strided_slice %268 {offsets = [0, 0], sizes = [16, 16], strides = [1, 1]} : vector<32x16xf32> to vector<16x16xf32>
    %276 = vector.extract_strided_slice %273 {offsets = [0, 0], sizes = [16, 16], strides = [1, 1]} : vector<32x16xf32> to vector<16x16xf32>
    %cst_185 = arith.constant dense<0.000000e+00> : vector<16x16xf32>
    %277 = tpu.matmul %274, %275, %cst_185 {dimension_numbers = #tpu.dot_dimension_numbers<[1], [1], [0], [0], [0, 0, 1, 0], [], []>} : vector<16x16xf32>, vector<16x16xf32>, vector<16x16xf32> -> vector<16x16xf32>
    %cst_186 = arith.constant 2.500000e-01 : f32
    %278 = vector.broadcast %cst_186 : f32 to vector<16x16xf32>
    %279 = arith.mulf %277, %278 : vector<16x16xf32>
    %cst_187 = arith.constant dense<0xFF800000> : vector<16xf32>
    %280 = vector.multi_reduction <maximumf>, %279, %cst_187 [1] : vector<16x16xf32> to vector<16xf32>
    %281 = vector.shape_cast %280 : vector<16xf32> to vector<16x1xf32>
    %282 = vector.broadcast %281 : vector<16x1xf32> to vector<16x16xf32>
    %283 = arith.subf %279, %282 : vector<16x16xf32>
    %284 = math.exp %283 : vector<16x16xf32>
    %cst_188 = arith.constant dense<0.000000e+00> : vector<16xf32>
    %285 = vector.multi_reduction <add>, %284, %cst_188 [1] : vector<16x16xf32> to vector<16xf32>
    %286 = vector.shape_cast %285 : vector<16xf32> to vector<16x1xf32>
    %287 = tpu.reciprocal %286 {approx = true} : vector<16x1xf32> -> vector<16x1xf32>
    %288 = vector.broadcast %287 : vector<16x1xf32> to vector<16x16xf32>
    %289 = arith.mulf %284, %288 : vector<16x16xf32>
    %cst_189 = arith.constant dense<0.000000e+00> : vector<16x16xf32>
    %290 = tpu.matmul %289, %276, %cst_189 {dimension_numbers = #tpu.dot_dimension_numbers<[1], [0], [0], [1], [0, 0, 1, 1], [], []>} : vector<16x16xf32>, vector<16x16xf32>, vector<16x16xf32> -> vector<16x16xf32>
    %cst_190 = arith.constant dense<0.000000e+00> : vector<16x128xf32>
    %291 = tpu.matmul %290, %258, %cst_190 {dimension_numbers = #tpu.dot_dimension_numbers<[1], [0], [0], [1], [0, 0, 1, 1], [], []>} : vector<16x16xf32>, vector<16x128xf32>, vector<16x128xf32> -> vector<16x128xf32>
    %292 = arith.addf %231, %291 : vector<16x128xf32>
    %293 = vector.extract_strided_slice %263 {offsets = [16, 0], sizes = [16, 16], strides = [1, 1]} : vector<32x16xf32> to vector<16x16xf32>
    %294 = vector.extract_strided_slice %268 {offsets = [16, 0], sizes = [16, 16], strides = [1, 1]} : vector<32x16xf32> to vector<16x16xf32>
    %295 = vector.extract_strided_slice %273 {offsets = [16, 0], sizes = [16, 16], strides = [1, 1]} : vector<32x16xf32> to vector<16x16xf32>
    %cst_191 = arith.constant dense<0.000000e+00> : vector<16x16xf32>
    %296 = tpu.matmul %293, %294, %cst_191 {dimension_numbers = #tpu.dot_dimension_numbers<[1], [1], [0], [0], [0, 0, 1, 0], [], []>} : vector<16x16xf32>, vector<16x16xf32>, vector<16x16xf32> -> vector<16x16xf32>
    %cst_192 = arith.constant 2.500000e-01 : f32
    %297 = vector.broadcast %cst_192 : f32 to vector<16x16xf32>
    %298 = arith.mulf %296, %297 : vector<16x16xf32>
    %cst_193 = arith.constant dense<0xFF800000> : vector<16xf32>
    %299 = vector.multi_reduction <maximumf>, %298, %cst_193 [1] : vector<16x16xf32> to vector<16xf32>
    %300 = vector.shape_cast %299 : vector<16xf32> to vector<16x1xf32>
    %301 = vector.broadcast %300 : vector<16x1xf32> to vector<16x16xf32>
    %302 = arith.subf %298, %301 : vector<16x16xf32>
    %303 = math.exp %302 : vector<16x16xf32>
    %cst_194 = arith.constant dense<0.000000e+00> : vector<16xf32>
    %304 = vector.multi_reduction <add>, %303, %cst_194 [1] : vector<16x16xf32> to vector<16xf32>
    %305 = vector.shape_cast %304 : vector<16xf32> to vector<16x1xf32>
    %306 = tpu.reciprocal %305 {approx = true} : vector<16x1xf32> -> vector<16x1xf32>
    %307 = vector.broadcast %306 : vector<16x1xf32> to vector<16x16xf32>
    %308 = arith.mulf %303, %307 : vector<16x16xf32>
    %cst_195 = arith.constant dense<0.000000e+00> : vector<16x16xf32>
    %309 = tpu.matmul %308, %295, %cst_195 {dimension_numbers = #tpu.dot_dimension_numbers<[1], [0], [0], [1], [0, 0, 1, 1], [], []>} : vector<16x16xf32>, vector<16x16xf32>, vector<16x16xf32> -> vector<16x16xf32>
    %cst_196 = arith.constant dense<0.000000e+00> : vector<16x128xf32>
    %310 = tpu.matmul %309, %258, %cst_196 {dimension_numbers = #tpu.dot_dimension_numbers<[1], [0], [0], [1], [0, 0, 1, 1], [], []>} : vector<16x16xf32>, vector<16x128xf32>, vector<16x128xf32> -> vector<16x128xf32>
    %311 = arith.addf %250, %310 : vector<16x128xf32>
    %c0_197 = arith.constant 0 : index
    %c4_198 = arith.constant 4 : index
    %c0_199 = arith.constant 0 : index
    %c0_200 = arith.constant 0 : index
    %312 = vector.load %arg8[%c0_197, %c4_198, %c0_199, %c0_200] : memref<3x8x128x16xf32, #tpu.memory_space<vmem>>, vector<1x1x128x16xf32>
    %313 = vector.shape_cast %312 : vector<1x1x128x16xf32> to vector<128x16xf32>
    %c1_201 = arith.constant 1 : index
    %c4_202 = arith.constant 4 : index
    %c0_203 = arith.constant 0 : index
    %c0_204 = arith.constant 0 : index
    %314 = vector.load %arg8[%c1_201, %c4_202, %c0_203, %c0_204] : memref<3x8x128x16xf32, #tpu.memory_space<vmem>>, vector<1x1x128x16xf32>
    %315 = vector.shape_cast %314 : vector<1x1x128x16xf32> to vector<128x16xf32>
    %c2_205 = arith.constant 2 : index
    %c4_206 = arith.constant 4 : index
    %c0_207 = arith.constant 0 : index
    %c0_208 = arith.constant 0 : index
    %316 = vector.load %arg8[%c2_205, %c4_206, %c0_207, %c0_208] : memref<3x8x128x16xf32, #tpu.memory_space<vmem>>, vector<1x1x128x16xf32>
    %317 = vector.shape_cast %316 : vector<1x1x128x16xf32> to vector<128x16xf32>
    %c4_209 = arith.constant 4 : index
    %c0_210 = arith.constant 0 : index
    %c0_211 = arith.constant 0 : index
    %318 = vector.load %arg10[%c4_209, %c0_210, %c0_211] : memref<8x16x128xf32, #tpu.memory_space<vmem>>, vector<1x16x128xf32>
    %319 = vector.shape_cast %318 : vector<1x16x128xf32> to vector<16x128xf32>
    %cst_212 = arith.constant dense<0.000000e+00> : vector<32x16xf32>
    %320 = tpu.matmul %69, %313, %cst_212 {dimension_numbers = #tpu.dot_dimension_numbers<[1], [0], [0], [1], [0, 0, 1, 1], [], []>} : vector<32x128xf32>, vector<128x16xf32>, vector<32x16xf32> -> vector<32x16xf32>
    %c0_213 = arith.constant 0 : index
    %c4_214 = arith.constant 4 : index
    %c0_215 = arith.constant 0 : index
    %c0_216 = arith.constant 0 : index
    %321 = vector.load %arg9[%c0_213, %c4_214, %c0_215, %c0_216] : memref<3x8x1x16xf32, #tpu.memory_space<vmem>>, vector<1x1x1x16xf32>
    %322 = vector.shape_cast %321 : vector<1x1x1x16xf32> to vector<1x16xf32>
    %323 = vector.broadcast %322 : vector<1x16xf32> to vector<32x16xf32>
    %324 = arith.addf %320, %323 : vector<32x16xf32>
    %cst_217 = arith.constant dense<0.000000e+00> : vector<32x16xf32>
    %325 = tpu.matmul %69, %315, %cst_217 {dimension_numbers = #tpu.dot_dimension_numbers<[1], [0], [0], [1], [0, 0, 1, 1], [], []>} : vector<32x128xf32>, vector<128x16xf32>, vector<32x16xf32> -> vector<32x16xf32>
    %c1_218 = arith.constant 1 : index
    %c4_219 = arith.constant 4 : index
    %c0_220 = arith.constant 0 : index
    %c0_221 = arith.constant 0 : index
    %326 = vector.load %arg9[%c1_218, %c4_219, %c0_220, %c0_221] : memref<3x8x1x16xf32, #tpu.memory_space<vmem>>, vector<1x1x1x16xf32>
    %327 = vector.shape_cast %326 : vector<1x1x1x16xf32> to vector<1x16xf32>
    %328 = vector.broadcast %327 : vector<1x16xf32> to vector<32x16xf32>
    %329 = arith.addf %325, %328 : vector<32x16xf32>
    %cst_222 = arith.constant dense<0.000000e+00> : vector<32x16xf32>
    %330 = tpu.matmul %69, %317, %cst_222 {dimension_numbers = #tpu.dot_dimension_numbers<[1], [0], [0], [1], [0, 0, 1, 1], [], []>} : vector<32x128xf32>, vector<128x16xf32>, vector<32x16xf32> -> vector<32x16xf32>
    %c2_223 = arith.constant 2 : index
    %c4_224 = arith.constant 4 : index
    %c0_225 = arith.constant 0 : index
    %c0_226 = arith.constant 0 : index
    %331 = vector.load %arg9[%c2_223, %c4_224, %c0_225, %c0_226] : memref<3x8x1x16xf32, #tpu.memory_space<vmem>>, vector<1x1x1x16xf32>
    %332 = vector.shape_cast %331 : vector<1x1x1x16xf32> to vector<1x16xf32>
    %333 = vector.broadcast %332 : vector<1x16xf32> to vector<32x16xf32>
    %334 = arith.addf %330, %333 : vector<32x16xf32>
    %335 = vector.extract_strided_slice %324 {offsets = [0, 0], sizes = [16, 16], strides = [1, 1]} : vector<32x16xf32> to vector<16x16xf32>
    %336 = vector.extract_strided_slice %329 {offsets = [0, 0], sizes = [16, 16], strides = [1, 1]} : vector<32x16xf32> to vector<16x16xf32>
    %337 = vector.extract_strided_slice %334 {offsets = [0, 0], sizes = [16, 16], strides = [1, 1]} : vector<32x16xf32> to vector<16x16xf32>
    %cst_227 = arith.constant dense<0.000000e+00> : vector<16x16xf32>
    %338 = tpu.matmul %335, %336, %cst_227 {dimension_numbers = #tpu.dot_dimension_numbers<[1], [1], [0], [0], [0, 0, 1, 0], [], []>} : vector<16x16xf32>, vector<16x16xf32>, vector<16x16xf32> -> vector<16x16xf32>
    %cst_228 = arith.constant 2.500000e-01 : f32
    %339 = vector.broadcast %cst_228 : f32 to vector<16x16xf32>
    %340 = arith.mulf %338, %339 : vector<16x16xf32>
    %cst_229 = arith.constant dense<0xFF800000> : vector<16xf32>
    %341 = vector.multi_reduction <maximumf>, %340, %cst_229 [1] : vector<16x16xf32> to vector<16xf32>
    %342 = vector.shape_cast %341 : vector<16xf32> to vector<16x1xf32>
    %343 = vector.broadcast %342 : vector<16x1xf32> to vector<16x16xf32>
    %344 = arith.subf %340, %343 : vector<16x16xf32>
    %345 = math.exp %344 : vector<16x16xf32>
    %cst_230 = arith.constant dense<0.000000e+00> : vector<16xf32>
    %346 = vector.multi_reduction <add>, %345, %cst_230 [1] : vector<16x16xf32> to vector<16xf32>
    %347 = vector.shape_cast %346 : vector<16xf32> to vector<16x1xf32>
    %348 = tpu.reciprocal %347 {approx = true} : vector<16x1xf32> -> vector<16x1xf32>
    %349 = vector.broadcast %348 : vector<16x1xf32> to vector<16x16xf32>
    %350 = arith.mulf %345, %349 : vector<16x16xf32>
    %cst_231 = arith.constant dense<0.000000e+00> : vector<16x16xf32>
    %351 = tpu.matmul %350, %337, %cst_231 {dimension_numbers = #tpu.dot_dimension_numbers<[1], [0], [0], [1], [0, 0, 1, 1], [], []>} : vector<16x16xf32>, vector<16x16xf32>, vector<16x16xf32> -> vector<16x16xf32>
    %cst_232 = arith.constant dense<0.000000e+00> : vector<16x128xf32>
    %352 = tpu.matmul %351, %319, %cst_232 {dimension_numbers = #tpu.dot_dimension_numbers<[1], [0], [0], [1], [0, 0, 1, 1], [], []>} : vector<16x16xf32>, vector<16x128xf32>, vector<16x128xf32> -> vector<16x128xf32>
    %353 = arith.addf %292, %352 : vector<16x128xf32>
    %354 = vector.extract_strided_slice %324 {offsets = [16, 0], sizes = [16, 16], strides = [1, 1]} : vector<32x16xf32> to vector<16x16xf32>
    %355 = vector.extract_strided_slice %329 {offsets = [16, 0], sizes = [16, 16], strides = [1, 1]} : vector<32x16xf32> to vector<16x16xf32>
    %356 = vector.extract_strided_slice %334 {offsets = [16, 0], sizes = [16, 16], strides = [1, 1]} : vector<32x16xf32> to vector<16x16xf32>
    %cst_233 = arith.constant dense<0.000000e+00> : vector<16x16xf32>
    %357 = tpu.matmul %354, %355, %cst_233 {dimension_numbers = #tpu.dot_dimension_numbers<[1], [1], [0], [0], [0, 0, 1, 0], [], []>} : vector<16x16xf32>, vector<16x16xf32>, vector<16x16xf32> -> vector<16x16xf32>
    %cst_234 = arith.constant 2.500000e-01 : f32
    %358 = vector.broadcast %cst_234 : f32 to vector<16x16xf32>
    %359 = arith.mulf %357, %358 : vector<16x16xf32>
    %cst_235 = arith.constant dense<0xFF800000> : vector<16xf32>
    %360 = vector.multi_reduction <maximumf>, %359, %cst_235 [1] : vector<16x16xf32> to vector<16xf32>
    %361 = vector.shape_cast %360 : vector<16xf32> to vector<16x1xf32>
    %362 = vector.broadcast %361 : vector<16x1xf32> to vector<16x16xf32>
    %363 = arith.subf %359, %362 : vector<16x16xf32>
    %364 = math.exp %363 : vector<16x16xf32>
    %cst_236 = arith.constant dense<0.000000e+00> : vector<16xf32>
    %365 = vector.multi_reduction <add>, %364, %cst_236 [1] : vector<16x16xf32> to vector<16xf32>
    %366 = vector.shape_cast %365 : vector<16xf32> to vector<16x1xf32>
    %367 = tpu.reciprocal %366 {approx = true} : vector<16x1xf32> -> vector<16x1xf32>
    %368 = vector.broadcast %367 : vector<16x1xf32> to vector<16x16xf32>
    %369 = arith.mulf %364, %368 : vector<16x16xf32>
    %cst_237 = arith.constant dense<0.000000e+00> : vector<16x16xf32>
    %370 = tpu.matmul %369, %356, %cst_237 {dimension_numbers = #tpu.dot_dimension_numbers<[1], [0], [0], [1], [0, 0, 1, 1], [], []>} : vector<16x16xf32>, vector<16x16xf32>, vector<16x16xf32> -> vector<16x16xf32>
    %cst_238 = arith.constant dense<0.000000e+00> : vector<16x128xf32>
    %371 = tpu.matmul %370, %319, %cst_238 {dimension_numbers = #tpu.dot_dimension_numbers<[1], [0], [0], [1], [0, 0, 1, 1], [], []>} : vector<16x16xf32>, vector<16x128xf32>, vector<16x128xf32> -> vector<16x128xf32>
    %372 = arith.addf %311, %371 : vector<16x128xf32>
    %c0_239 = arith.constant 0 : index
    %c5 = arith.constant 5 : index
    %c0_240 = arith.constant 0 : index
    %c0_241 = arith.constant 0 : index
    %373 = vector.load %arg8[%c0_239, %c5, %c0_240, %c0_241] : memref<3x8x128x16xf32, #tpu.memory_space<vmem>>, vector<1x1x128x16xf32>
    %374 = vector.shape_cast %373 : vector<1x1x128x16xf32> to vector<128x16xf32>
    %c1_242 = arith.constant 1 : index
    %c5_243 = arith.constant 5 : index
    %c0_244 = arith.constant 0 : index
    %c0_245 = arith.constant 0 : index
    %375 = vector.load %arg8[%c1_242, %c5_243, %c0_244, %c0_245] : memref<3x8x128x16xf32, #tpu.memory_space<vmem>>, vector<1x1x128x16xf32>
    %376 = vector.shape_cast %375 : vector<1x1x128x16xf32> to vector<128x16xf32>
    %c2_246 = arith.constant 2 : index
    %c5_247 = arith.constant 5 : index
    %c0_248 = arith.constant 0 : index
    %c0_249 = arith.constant 0 : index
    %377 = vector.load %arg8[%c2_246, %c5_247, %c0_248, %c0_249] : memref<3x8x128x16xf32, #tpu.memory_space<vmem>>, vector<1x1x128x16xf32>
    %378 = vector.shape_cast %377 : vector<1x1x128x16xf32> to vector<128x16xf32>
    %c5_250 = arith.constant 5 : index
    %c0_251 = arith.constant 0 : index
    %c0_252 = arith.constant 0 : index
    %379 = vector.load %arg10[%c5_250, %c0_251, %c0_252] : memref<8x16x128xf32, #tpu.memory_space<vmem>>, vector<1x16x128xf32>
    %380 = vector.shape_cast %379 : vector<1x16x128xf32> to vector<16x128xf32>
    %cst_253 = arith.constant dense<0.000000e+00> : vector<32x16xf32>
    %381 = tpu.matmul %69, %374, %cst_253 {dimension_numbers = #tpu.dot_dimension_numbers<[1], [0], [0], [1], [0, 0, 1, 1], [], []>} : vector<32x128xf32>, vector<128x16xf32>, vector<32x16xf32> -> vector<32x16xf32>
    %c0_254 = arith.constant 0 : index
    %c5_255 = arith.constant 5 : index
    %c0_256 = arith.constant 0 : index
    %c0_257 = arith.constant 0 : index
    %382 = vector.load %arg9[%c0_254, %c5_255, %c0_256, %c0_257] : memref<3x8x1x16xf32, #tpu.memory_space<vmem>>, vector<1x1x1x16xf32>
    %383 = vector.shape_cast %382 : vector<1x1x1x16xf32> to vector<1x16xf32>
    %384 = vector.broadcast %383 : vector<1x16xf32> to vector<32x16xf32>
    %385 = arith.addf %381, %384 : vector<32x16xf32>
    %cst_258 = arith.constant dense<0.000000e+00> : vector<32x16xf32>
    %386 = tpu.matmul %69, %376, %cst_258 {dimension_numbers = #tpu.dot_dimension_numbers<[1], [0], [0], [1], [0, 0, 1, 1], [], []>} : vector<32x128xf32>, vector<128x16xf32>, vector<32x16xf32> -> vector<32x16xf32>
    %c1_259 = arith.constant 1 : index
    %c5_260 = arith.constant 5 : index
    %c0_261 = arith.constant 0 : index
    %c0_262 = arith.constant 0 : index
    %387 = vector.load %arg9[%c1_259, %c5_260, %c0_261, %c0_262] : memref<3x8x1x16xf32, #tpu.memory_space<vmem>>, vector<1x1x1x16xf32>
    %388 = vector.shape_cast %387 : vector<1x1x1x16xf32> to vector<1x16xf32>
    %389 = vector.broadcast %388 : vector<1x16xf32> to vector<32x16xf32>
    %390 = arith.addf %386, %389 : vector<32x16xf32>
    %cst_263 = arith.constant dense<0.000000e+00> : vector<32x16xf32>
    %391 = tpu.matmul %69, %378, %cst_263 {dimension_numbers = #tpu.dot_dimension_numbers<[1], [0], [0], [1], [0, 0, 1, 1], [], []>} : vector<32x128xf32>, vector<128x16xf32>, vector<32x16xf32> -> vector<32x16xf32>
    %c2_264 = arith.constant 2 : index
    %c5_265 = arith.constant 5 : index
    %c0_266 = arith.constant 0 : index
    %c0_267 = arith.constant 0 : index
    %392 = vector.load %arg9[%c2_264, %c5_265, %c0_266, %c0_267] : memref<3x8x1x16xf32, #tpu.memory_space<vmem>>, vector<1x1x1x16xf32>
    %393 = vector.shape_cast %392 : vector<1x1x1x16xf32> to vector<1x16xf32>
    %394 = vector.broadcast %393 : vector<1x16xf32> to vector<32x16xf32>
    %395 = arith.addf %391, %394 : vector<32x16xf32>
    %396 = vector.extract_strided_slice %385 {offsets = [0, 0], sizes = [16, 16], strides = [1, 1]} : vector<32x16xf32> to vector<16x16xf32>
    %397 = vector.extract_strided_slice %390 {offsets = [0, 0], sizes = [16, 16], strides = [1, 1]} : vector<32x16xf32> to vector<16x16xf32>
    %398 = vector.extract_strided_slice %395 {offsets = [0, 0], sizes = [16, 16], strides = [1, 1]} : vector<32x16xf32> to vector<16x16xf32>
    %cst_268 = arith.constant dense<0.000000e+00> : vector<16x16xf32>
    %399 = tpu.matmul %396, %397, %cst_268 {dimension_numbers = #tpu.dot_dimension_numbers<[1], [1], [0], [0], [0, 0, 1, 0], [], []>} : vector<16x16xf32>, vector<16x16xf32>, vector<16x16xf32> -> vector<16x16xf32>
    %cst_269 = arith.constant 2.500000e-01 : f32
    %400 = vector.broadcast %cst_269 : f32 to vector<16x16xf32>
    %401 = arith.mulf %399, %400 : vector<16x16xf32>
    %cst_270 = arith.constant dense<0xFF800000> : vector<16xf32>
    %402 = vector.multi_reduction <maximumf>, %401, %cst_270 [1] : vector<16x16xf32> to vector<16xf32>
    %403 = vector.shape_cast %402 : vector<16xf32> to vector<16x1xf32>
    %404 = vector.broadcast %403 : vector<16x1xf32> to vector<16x16xf32>
    %405 = arith.subf %401, %404 : vector<16x16xf32>
    %406 = math.exp %405 : vector<16x16xf32>
    %cst_271 = arith.constant dense<0.000000e+00> : vector<16xf32>
    %407 = vector.multi_reduction <add>, %406, %cst_271 [1] : vector<16x16xf32> to vector<16xf32>
    %408 = vector.shape_cast %407 : vector<16xf32> to vector<16x1xf32>
    %409 = tpu.reciprocal %408 {approx = true} : vector<16x1xf32> -> vector<16x1xf32>
    %410 = vector.broadcast %409 : vector<16x1xf32> to vector<16x16xf32>
    %411 = arith.mulf %406, %410 : vector<16x16xf32>
    %cst_272 = arith.constant dense<0.000000e+00> : vector<16x16xf32>
    %412 = tpu.matmul %411, %398, %cst_272 {dimension_numbers = #tpu.dot_dimension_numbers<[1], [0], [0], [1], [0, 0, 1, 1], [], []>} : vector<16x16xf32>, vector<16x16xf32>, vector<16x16xf32> -> vector<16x16xf32>
    %cst_273 = arith.constant dense<0.000000e+00> : vector<16x128xf32>
    %413 = tpu.matmul %412, %380, %cst_273 {dimension_numbers = #tpu.dot_dimension_numbers<[1], [0], [0], [1], [0, 0, 1, 1], [], []>} : vector<16x16xf32>, vector<16x128xf32>, vector<16x128xf32> -> vector<16x128xf32>
    %414 = arith.addf %353, %413 : vector<16x128xf32>
    %415 = vector.extract_strided_slice %385 {offsets = [16, 0], sizes = [16, 16], strides = [1, 1]} : vector<32x16xf32> to vector<16x16xf32>
    %416 = vector.extract_strided_slice %390 {offsets = [16, 0], sizes = [16, 16], strides = [1, 1]} : vector<32x16xf32> to vector<16x16xf32>
    %417 = vector.extract_strided_slice %395 {offsets = [16, 0], sizes = [16, 16], strides = [1, 1]} : vector<32x16xf32> to vector<16x16xf32>
    %cst_274 = arith.constant dense<0.000000e+00> : vector<16x16xf32>
    %418 = tpu.matmul %415, %416, %cst_274 {dimension_numbers = #tpu.dot_dimension_numbers<[1], [1], [0], [0], [0, 0, 1, 0], [], []>} : vector<16x16xf32>, vector<16x16xf32>, vector<16x16xf32> -> vector<16x16xf32>
    %cst_275 = arith.constant 2.500000e-01 : f32
    %419 = vector.broadcast %cst_275 : f32 to vector<16x16xf32>
    %420 = arith.mulf %418, %419 : vector<16x16xf32>
    %cst_276 = arith.constant dense<0xFF800000> : vector<16xf32>
    %421 = vector.multi_reduction <maximumf>, %420, %cst_276 [1] : vector<16x16xf32> to vector<16xf32>
    %422 = vector.shape_cast %421 : vector<16xf32> to vector<16x1xf32>
    %423 = vector.broadcast %422 : vector<16x1xf32> to vector<16x16xf32>
    %424 = arith.subf %420, %423 : vector<16x16xf32>
    %425 = math.exp %424 : vector<16x16xf32>
    %cst_277 = arith.constant dense<0.000000e+00> : vector<16xf32>
    %426 = vector.multi_reduction <add>, %425, %cst_277 [1] : vector<16x16xf32> to vector<16xf32>
    %427 = vector.shape_cast %426 : vector<16xf32> to vector<16x1xf32>
    %428 = tpu.reciprocal %427 {approx = true} : vector<16x1xf32> -> vector<16x1xf32>
    %429 = vector.broadcast %428 : vector<16x1xf32> to vector<16x16xf32>
    %430 = arith.mulf %425, %429 : vector<16x16xf32>
    %cst_278 = arith.constant dense<0.000000e+00> : vector<16x16xf32>
    %431 = tpu.matmul %430, %417, %cst_278 {dimension_numbers = #tpu.dot_dimension_numbers<[1], [0], [0], [1], [0, 0, 1, 1], [], []>} : vector<16x16xf32>, vector<16x16xf32>, vector<16x16xf32> -> vector<16x16xf32>
    %cst_279 = arith.constant dense<0.000000e+00> : vector<16x128xf32>
    %432 = tpu.matmul %431, %380, %cst_279 {dimension_numbers = #tpu.dot_dimension_numbers<[1], [0], [0], [1], [0, 0, 1, 1], [], []>} : vector<16x16xf32>, vector<16x128xf32>, vector<16x128xf32> -> vector<16x128xf32>
    %433 = arith.addf %372, %432 : vector<16x128xf32>
    %c0_280 = arith.constant 0 : index
    %c6 = arith.constant 6 : index
    %c0_281 = arith.constant 0 : index
    %c0_282 = arith.constant 0 : index
    %434 = vector.load %arg8[%c0_280, %c6, %c0_281, %c0_282] : memref<3x8x128x16xf32, #tpu.memory_space<vmem>>, vector<1x1x128x16xf32>
    %435 = vector.shape_cast %434 : vector<1x1x128x16xf32> to vector<128x16xf32>
    %c1_283 = arith.constant 1 : index
    %c6_284 = arith.constant 6 : index
    %c0_285 = arith.constant 0 : index
    %c0_286 = arith.constant 0 : index
    %436 = vector.load %arg8[%c1_283, %c6_284, %c0_285, %c0_286] : memref<3x8x128x16xf32, #tpu.memory_space<vmem>>, vector<1x1x128x16xf32>
    %437 = vector.shape_cast %436 : vector<1x1x128x16xf32> to vector<128x16xf32>
    %c2_287 = arith.constant 2 : index
    %c6_288 = arith.constant 6 : index
    %c0_289 = arith.constant 0 : index
    %c0_290 = arith.constant 0 : index
    %438 = vector.load %arg8[%c2_287, %c6_288, %c0_289, %c0_290] : memref<3x8x128x16xf32, #tpu.memory_space<vmem>>, vector<1x1x128x16xf32>
    %439 = vector.shape_cast %438 : vector<1x1x128x16xf32> to vector<128x16xf32>
    %c6_291 = arith.constant 6 : index
    %c0_292 = arith.constant 0 : index
    %c0_293 = arith.constant 0 : index
    %440 = vector.load %arg10[%c6_291, %c0_292, %c0_293] : memref<8x16x128xf32, #tpu.memory_space<vmem>>, vector<1x16x128xf32>
    %441 = vector.shape_cast %440 : vector<1x16x128xf32> to vector<16x128xf32>
    %cst_294 = arith.constant dense<0.000000e+00> : vector<32x16xf32>
    %442 = tpu.matmul %69, %435, %cst_294 {dimension_numbers = #tpu.dot_dimension_numbers<[1], [0], [0], [1], [0, 0, 1, 1], [], []>} : vector<32x128xf32>, vector<128x16xf32>, vector<32x16xf32> -> vector<32x16xf32>
    %c0_295 = arith.constant 0 : index
    %c6_296 = arith.constant 6 : index
    %c0_297 = arith.constant 0 : index
    %c0_298 = arith.constant 0 : index
    %443 = vector.load %arg9[%c0_295, %c6_296, %c0_297, %c0_298] : memref<3x8x1x16xf32, #tpu.memory_space<vmem>>, vector<1x1x1x16xf32>
    %444 = vector.shape_cast %443 : vector<1x1x1x16xf32> to vector<1x16xf32>
    %445 = vector.broadcast %444 : vector<1x16xf32> to vector<32x16xf32>
    %446 = arith.addf %442, %445 : vector<32x16xf32>
    %cst_299 = arith.constant dense<0.000000e+00> : vector<32x16xf32>
    %447 = tpu.matmul %69, %437, %cst_299 {dimension_numbers = #tpu.dot_dimension_numbers<[1], [0], [0], [1], [0, 0, 1, 1], [], []>} : vector<32x128xf32>, vector<128x16xf32>, vector<32x16xf32> -> vector<32x16xf32>
    %c1_300 = arith.constant 1 : index
    %c6_301 = arith.constant 6 : index
    %c0_302 = arith.constant 0 : index
    %c0_303 = arith.constant 0 : index
    %448 = vector.load %arg9[%c1_300, %c6_301, %c0_302, %c0_303] : memref<3x8x1x16xf32, #tpu.memory_space<vmem>>, vector<1x1x1x16xf32>
    %449 = vector.shape_cast %448 : vector<1x1x1x16xf32> to vector<1x16xf32>
    %450 = vector.broadcast %449 : vector<1x16xf32> to vector<32x16xf32>
    %451 = arith.addf %447, %450 : vector<32x16xf32>
    %cst_304 = arith.constant dense<0.000000e+00> : vector<32x16xf32>
    %452 = tpu.matmul %69, %439, %cst_304 {dimension_numbers = #tpu.dot_dimension_numbers<[1], [0], [0], [1], [0, 0, 1, 1], [], []>} : vector<32x128xf32>, vector<128x16xf32>, vector<32x16xf32> -> vector<32x16xf32>
    %c2_305 = arith.constant 2 : index
    %c6_306 = arith.constant 6 : index
    %c0_307 = arith.constant 0 : index
    %c0_308 = arith.constant 0 : index
    %453 = vector.load %arg9[%c2_305, %c6_306, %c0_307, %c0_308] : memref<3x8x1x16xf32, #tpu.memory_space<vmem>>, vector<1x1x1x16xf32>
    %454 = vector.shape_cast %453 : vector<1x1x1x16xf32> to vector<1x16xf32>
    %455 = vector.broadcast %454 : vector<1x16xf32> to vector<32x16xf32>
    %456 = arith.addf %452, %455 : vector<32x16xf32>
    %457 = vector.extract_strided_slice %446 {offsets = [0, 0], sizes = [16, 16], strides = [1, 1]} : vector<32x16xf32> to vector<16x16xf32>
    %458 = vector.extract_strided_slice %451 {offsets = [0, 0], sizes = [16, 16], strides = [1, 1]} : vector<32x16xf32> to vector<16x16xf32>
    %459 = vector.extract_strided_slice %456 {offsets = [0, 0], sizes = [16, 16], strides = [1, 1]} : vector<32x16xf32> to vector<16x16xf32>
    %cst_309 = arith.constant dense<0.000000e+00> : vector<16x16xf32>
    %460 = tpu.matmul %457, %458, %cst_309 {dimension_numbers = #tpu.dot_dimension_numbers<[1], [1], [0], [0], [0, 0, 1, 0], [], []>} : vector<16x16xf32>, vector<16x16xf32>, vector<16x16xf32> -> vector<16x16xf32>
    %cst_310 = arith.constant 2.500000e-01 : f32
    %461 = vector.broadcast %cst_310 : f32 to vector<16x16xf32>
    %462 = arith.mulf %460, %461 : vector<16x16xf32>
    %cst_311 = arith.constant dense<0xFF800000> : vector<16xf32>
    %463 = vector.multi_reduction <maximumf>, %462, %cst_311 [1] : vector<16x16xf32> to vector<16xf32>
    %464 = vector.shape_cast %463 : vector<16xf32> to vector<16x1xf32>
    %465 = vector.broadcast %464 : vector<16x1xf32> to vector<16x16xf32>
    %466 = arith.subf %462, %465 : vector<16x16xf32>
    %467 = math.exp %466 : vector<16x16xf32>
    %cst_312 = arith.constant dense<0.000000e+00> : vector<16xf32>
    %468 = vector.multi_reduction <add>, %467, %cst_312 [1] : vector<16x16xf32> to vector<16xf32>
    %469 = vector.shape_cast %468 : vector<16xf32> to vector<16x1xf32>
    %470 = tpu.reciprocal %469 {approx = true} : vector<16x1xf32> -> vector<16x1xf32>
    %471 = vector.broadcast %470 : vector<16x1xf32> to vector<16x16xf32>
    %472 = arith.mulf %467, %471 : vector<16x16xf32>
    %cst_313 = arith.constant dense<0.000000e+00> : vector<16x16xf32>
    %473 = tpu.matmul %472, %459, %cst_313 {dimension_numbers = #tpu.dot_dimension_numbers<[1], [0], [0], [1], [0, 0, 1, 1], [], []>} : vector<16x16xf32>, vector<16x16xf32>, vector<16x16xf32> -> vector<16x16xf32>
    %cst_314 = arith.constant dense<0.000000e+00> : vector<16x128xf32>
    %474 = tpu.matmul %473, %441, %cst_314 {dimension_numbers = #tpu.dot_dimension_numbers<[1], [0], [0], [1], [0, 0, 1, 1], [], []>} : vector<16x16xf32>, vector<16x128xf32>, vector<16x128xf32> -> vector<16x128xf32>
    %475 = arith.addf %414, %474 : vector<16x128xf32>
    %476 = vector.extract_strided_slice %446 {offsets = [16, 0], sizes = [16, 16], strides = [1, 1]} : vector<32x16xf32> to vector<16x16xf32>
    %477 = vector.extract_strided_slice %451 {offsets = [16, 0], sizes = [16, 16], strides = [1, 1]} : vector<32x16xf32> to vector<16x16xf32>
    %478 = vector.extract_strided_slice %456 {offsets = [16, 0], sizes = [16, 16], strides = [1, 1]} : vector<32x16xf32> to vector<16x16xf32>
    %cst_315 = arith.constant dense<0.000000e+00> : vector<16x16xf32>
    %479 = tpu.matmul %476, %477, %cst_315 {dimension_numbers = #tpu.dot_dimension_numbers<[1], [1], [0], [0], [0, 0, 1, 0], [], []>} : vector<16x16xf32>, vector<16x16xf32>, vector<16x16xf32> -> vector<16x16xf32>
    %cst_316 = arith.constant 2.500000e-01 : f32
    %480 = vector.broadcast %cst_316 : f32 to vector<16x16xf32>
    %481 = arith.mulf %479, %480 : vector<16x16xf32>
    %cst_317 = arith.constant dense<0xFF800000> : vector<16xf32>
    %482 = vector.multi_reduction <maximumf>, %481, %cst_317 [1] : vector<16x16xf32> to vector<16xf32>
    %483 = vector.shape_cast %482 : vector<16xf32> to vector<16x1xf32>
    %484 = vector.broadcast %483 : vector<16x1xf32> to vector<16x16xf32>
    %485 = arith.subf %481, %484 : vector<16x16xf32>
    %486 = math.exp %485 : vector<16x16xf32>
    %cst_318 = arith.constant dense<0.000000e+00> : vector<16xf32>
    %487 = vector.multi_reduction <add>, %486, %cst_318 [1] : vector<16x16xf32> to vector<16xf32>
    %488 = vector.shape_cast %487 : vector<16xf32> to vector<16x1xf32>
    %489 = tpu.reciprocal %488 {approx = true} : vector<16x1xf32> -> vector<16x1xf32>
    %490 = vector.broadcast %489 : vector<16x1xf32> to vector<16x16xf32>
    %491 = arith.mulf %486, %490 : vector<16x16xf32>
    %cst_319 = arith.constant dense<0.000000e+00> : vector<16x16xf32>
    %492 = tpu.matmul %491, %478, %cst_319 {dimension_numbers = #tpu.dot_dimension_numbers<[1], [0], [0], [1], [0, 0, 1, 1], [], []>} : vector<16x16xf32>, vector<16x16xf32>, vector<16x16xf32> -> vector<16x16xf32>
    %cst_320 = arith.constant dense<0.000000e+00> : vector<16x128xf32>
    %493 = tpu.matmul %492, %441, %cst_320 {dimension_numbers = #tpu.dot_dimension_numbers<[1], [0], [0], [1], [0, 0, 1, 1], [], []>} : vector<16x16xf32>, vector<16x128xf32>, vector<16x128xf32> -> vector<16x128xf32>
    %494 = arith.addf %433, %493 : vector<16x128xf32>
    %c0_321 = arith.constant 0 : index
    %c7 = arith.constant 7 : index
    %c0_322 = arith.constant 0 : index
    %c0_323 = arith.constant 0 : index
    %495 = vector.load %arg8[%c0_321, %c7, %c0_322, %c0_323] : memref<3x8x128x16xf32, #tpu.memory_space<vmem>>, vector<1x1x128x16xf32>
    %496 = vector.shape_cast %495 : vector<1x1x128x16xf32> to vector<128x16xf32>
    %c1_324 = arith.constant 1 : index
    %c7_325 = arith.constant 7 : index
    %c0_326 = arith.constant 0 : index
    %c0_327 = arith.constant 0 : index
    %497 = vector.load %arg8[%c1_324, %c7_325, %c0_326, %c0_327] : memref<3x8x128x16xf32, #tpu.memory_space<vmem>>, vector<1x1x128x16xf32>
    %498 = vector.shape_cast %497 : vector<1x1x128x16xf32> to vector<128x16xf32>
    %c2_328 = arith.constant 2 : index
    %c7_329 = arith.constant 7 : index
    %c0_330 = arith.constant 0 : index
    %c0_331 = arith.constant 0 : index
    %499 = vector.load %arg8[%c2_328, %c7_329, %c0_330, %c0_331] : memref<3x8x128x16xf32, #tpu.memory_space<vmem>>, vector<1x1x128x16xf32>
    %500 = vector.shape_cast %499 : vector<1x1x128x16xf32> to vector<128x16xf32>
    %c7_332 = arith.constant 7 : index
    %c0_333 = arith.constant 0 : index
    %c0_334 = arith.constant 0 : index
    %501 = vector.load %arg10[%c7_332, %c0_333, %c0_334] : memref<8x16x128xf32, #tpu.memory_space<vmem>>, vector<1x16x128xf32>
    %502 = vector.shape_cast %501 : vector<1x16x128xf32> to vector<16x128xf32>
    %cst_335 = arith.constant dense<0.000000e+00> : vector<32x16xf32>
    %503 = tpu.matmul %69, %496, %cst_335 {dimension_numbers = #tpu.dot_dimension_numbers<[1], [0], [0], [1], [0, 0, 1, 1], [], []>} : vector<32x128xf32>, vector<128x16xf32>, vector<32x16xf32> -> vector<32x16xf32>
    %c0_336 = arith.constant 0 : index
    %c7_337 = arith.constant 7 : index
    %c0_338 = arith.constant 0 : index
    %c0_339 = arith.constant 0 : index
    %504 = vector.load %arg9[%c0_336, %c7_337, %c0_338, %c0_339] : memref<3x8x1x16xf32, #tpu.memory_space<vmem>>, vector<1x1x1x16xf32>
    %505 = vector.shape_cast %504 : vector<1x1x1x16xf32> to vector<1x16xf32>
    %506 = vector.broadcast %505 : vector<1x16xf32> to vector<32x16xf32>
    %507 = arith.addf %503, %506 : vector<32x16xf32>
    %cst_340 = arith.constant dense<0.000000e+00> : vector<32x16xf32>
    %508 = tpu.matmul %69, %498, %cst_340 {dimension_numbers = #tpu.dot_dimension_numbers<[1], [0], [0], [1], [0, 0, 1, 1], [], []>} : vector<32x128xf32>, vector<128x16xf32>, vector<32x16xf32> -> vector<32x16xf32>
    %c1_341 = arith.constant 1 : index
    %c7_342 = arith.constant 7 : index
    %c0_343 = arith.constant 0 : index
    %c0_344 = arith.constant 0 : index
    %509 = vector.load %arg9[%c1_341, %c7_342, %c0_343, %c0_344] : memref<3x8x1x16xf32, #tpu.memory_space<vmem>>, vector<1x1x1x16xf32>
    %510 = vector.shape_cast %509 : vector<1x1x1x16xf32> to vector<1x16xf32>
    %511 = vector.broadcast %510 : vector<1x16xf32> to vector<32x16xf32>
    %512 = arith.addf %508, %511 : vector<32x16xf32>
    %cst_345 = arith.constant dense<0.000000e+00> : vector<32x16xf32>
    %513 = tpu.matmul %69, %500, %cst_345 {dimension_numbers = #tpu.dot_dimension_numbers<[1], [0], [0], [1], [0, 0, 1, 1], [], []>} : vector<32x128xf32>, vector<128x16xf32>, vector<32x16xf32> -> vector<32x16xf32>
    %c2_346 = arith.constant 2 : index
    %c7_347 = arith.constant 7 : index
    %c0_348 = arith.constant 0 : index
    %c0_349 = arith.constant 0 : index
    %514 = vector.load %arg9[%c2_346, %c7_347, %c0_348, %c0_349] : memref<3x8x1x16xf32, #tpu.memory_space<vmem>>, vector<1x1x1x16xf32>
    %515 = vector.shape_cast %514 : vector<1x1x1x16xf32> to vector<1x16xf32>
    %516 = vector.broadcast %515 : vector<1x16xf32> to vector<32x16xf32>
    %517 = arith.addf %513, %516 : vector<32x16xf32>
    %518 = vector.extract_strided_slice %507 {offsets = [0, 0], sizes = [16, 16], strides = [1, 1]} : vector<32x16xf32> to vector<16x16xf32>
    %519 = vector.extract_strided_slice %512 {offsets = [0, 0], sizes = [16, 16], strides = [1, 1]} : vector<32x16xf32> to vector<16x16xf32>
    %520 = vector.extract_strided_slice %517 {offsets = [0, 0], sizes = [16, 16], strides = [1, 1]} : vector<32x16xf32> to vector<16x16xf32>
    %cst_350 = arith.constant dense<0.000000e+00> : vector<16x16xf32>
    %521 = tpu.matmul %518, %519, %cst_350 {dimension_numbers = #tpu.dot_dimension_numbers<[1], [1], [0], [0], [0, 0, 1, 0], [], []>} : vector<16x16xf32>, vector<16x16xf32>, vector<16x16xf32> -> vector<16x16xf32>
    %cst_351 = arith.constant 2.500000e-01 : f32
    %522 = vector.broadcast %cst_351 : f32 to vector<16x16xf32>
    %523 = arith.mulf %521, %522 : vector<16x16xf32>
    %cst_352 = arith.constant dense<0xFF800000> : vector<16xf32>
    %524 = vector.multi_reduction <maximumf>, %523, %cst_352 [1] : vector<16x16xf32> to vector<16xf32>
    %525 = vector.shape_cast %524 : vector<16xf32> to vector<16x1xf32>
    %526 = vector.broadcast %525 : vector<16x1xf32> to vector<16x16xf32>
    %527 = arith.subf %523, %526 : vector<16x16xf32>
    %528 = math.exp %527 : vector<16x16xf32>
    %cst_353 = arith.constant dense<0.000000e+00> : vector<16xf32>
    %529 = vector.multi_reduction <add>, %528, %cst_353 [1] : vector<16x16xf32> to vector<16xf32>
    %530 = vector.shape_cast %529 : vector<16xf32> to vector<16x1xf32>
    %531 = tpu.reciprocal %530 {approx = true} : vector<16x1xf32> -> vector<16x1xf32>
    %532 = vector.broadcast %531 : vector<16x1xf32> to vector<16x16xf32>
    %533 = arith.mulf %528, %532 : vector<16x16xf32>
    %cst_354 = arith.constant dense<0.000000e+00> : vector<16x16xf32>
    %534 = tpu.matmul %533, %520, %cst_354 {dimension_numbers = #tpu.dot_dimension_numbers<[1], [0], [0], [1], [0, 0, 1, 1], [], []>} : vector<16x16xf32>, vector<16x16xf32>, vector<16x16xf32> -> vector<16x16xf32>
    %cst_355 = arith.constant dense<0.000000e+00> : vector<16x128xf32>
    %535 = tpu.matmul %534, %502, %cst_355 {dimension_numbers = #tpu.dot_dimension_numbers<[1], [0], [0], [1], [0, 0, 1, 1], [], []>} : vector<16x16xf32>, vector<16x128xf32>, vector<16x128xf32> -> vector<16x128xf32>
    %536 = arith.addf %475, %535 : vector<16x128xf32>
    %537 = vector.extract_strided_slice %507 {offsets = [16, 0], sizes = [16, 16], strides = [1, 1]} : vector<32x16xf32> to vector<16x16xf32>
    %538 = vector.extract_strided_slice %512 {offsets = [16, 0], sizes = [16, 16], strides = [1, 1]} : vector<32x16xf32> to vector<16x16xf32>
    %539 = vector.extract_strided_slice %517 {offsets = [16, 0], sizes = [16, 16], strides = [1, 1]} : vector<32x16xf32> to vector<16x16xf32>
    %cst_356 = arith.constant dense<0.000000e+00> : vector<16x16xf32>
    %540 = tpu.matmul %537, %538, %cst_356 {dimension_numbers = #tpu.dot_dimension_numbers<[1], [1], [0], [0], [0, 0, 1, 0], [], []>} : vector<16x16xf32>, vector<16x16xf32>, vector<16x16xf32> -> vector<16x16xf32>
    %cst_357 = arith.constant 2.500000e-01 : f32
    %541 = vector.broadcast %cst_357 : f32 to vector<16x16xf32>
    %542 = arith.mulf %540, %541 : vector<16x16xf32>
    %cst_358 = arith.constant dense<0xFF800000> : vector<16xf32>
    %543 = vector.multi_reduction <maximumf>, %542, %cst_358 [1] : vector<16x16xf32> to vector<16xf32>
    %544 = vector.shape_cast %543 : vector<16xf32> to vector<16x1xf32>
    %545 = vector.broadcast %544 : vector<16x1xf32> to vector<16x16xf32>
    %546 = arith.subf %542, %545 : vector<16x16xf32>
    %547 = math.exp %546 : vector<16x16xf32>
    %cst_359 = arith.constant dense<0.000000e+00> : vector<16xf32>
    %548 = vector.multi_reduction <add>, %547, %cst_359 [1] : vector<16x16xf32> to vector<16xf32>
    %549 = vector.shape_cast %548 : vector<16xf32> to vector<16x1xf32>
    %550 = tpu.reciprocal %549 {approx = true} : vector<16x1xf32> -> vector<16x1xf32>
    %551 = vector.broadcast %550 : vector<16x1xf32> to vector<16x16xf32>
    %552 = arith.mulf %547, %551 : vector<16x16xf32>
    %cst_360 = arith.constant dense<0.000000e+00> : vector<16x16xf32>
    %553 = tpu.matmul %552, %539, %cst_360 {dimension_numbers = #tpu.dot_dimension_numbers<[1], [0], [0], [1], [0, 0, 1, 1], [], []>} : vector<16x16xf32>, vector<16x16xf32>, vector<16x16xf32> -> vector<16x16xf32>
    %cst_361 = arith.constant dense<0.000000e+00> : vector<16x128xf32>
    %554 = tpu.matmul %553, %502, %cst_361 {dimension_numbers = #tpu.dot_dimension_numbers<[1], [0], [0], [1], [0, 0, 1, 1], [], []>} : vector<16x16xf32>, vector<16x128xf32>, vector<16x128xf32> -> vector<16x128xf32>
    %555 = arith.addf %494, %554 : vector<16x128xf32>
    %556 = tpu.concatenate %536, %555 in 0 : vector<16x128xf32>, vector<16x128xf32> -> vector<32x128xf32>
    %c5_362 = arith.constant 5 : index
    %c0_363 = arith.constant 0 : index
    %557 = vector.load %arg3[%c5_362, %c0_363] : memref<24x128xf32, #tpu.memory_space<vmem>>, vector<1x128xf32>
    %558 = vector.broadcast %557 : vector<1x128xf32> to vector<32x128xf32>
    %559 = arith.addf %556, %558 : vector<32x128xf32>
    %560 = arith.addf %559, %43 : vector<32x128xf32>
    %cst_364 = arith.constant dense<0.000000e+00> : vector<32xf32>
    %561 = vector.multi_reduction <add>, %560, %cst_364 [1] : vector<32x128xf32> to vector<32xf32>
    %562 = vector.shape_cast %561 : vector<32xf32> to vector<32x1xf32>
    %cst_365 = arith.constant 1.280000e+02 : f32
    %563 = vector.broadcast %cst_365 : f32 to vector<32x1xf32>
    %564 = arith.divf %562, %563 : vector<32x1xf32>
    %565 = vector.broadcast %564 : vector<32x1xf32> to vector<32x128xf32>
    %566 = arith.subf %560, %565 : vector<32x128xf32>
    %567 = arith.mulf %566, %566 : vector<32x128xf32>
    %cst_366 = arith.constant dense<0.000000e+00> : vector<32xf32>
    %568 = vector.multi_reduction <add>, %567, %cst_366 [1] : vector<32x128xf32> to vector<32xf32>
    %569 = vector.shape_cast %568 : vector<32xf32> to vector<32x1xf32>
    %cst_367 = arith.constant 1.280000e+02 : f32
    %570 = vector.broadcast %cst_367 : f32 to vector<32x1xf32>
    %571 = arith.divf %569, %570 : vector<32x1xf32>
    %572 = vector.broadcast %564 : vector<32x1xf32> to vector<32x128xf32>
    %573 = arith.subf %560, %572 : vector<32x128xf32>
    %cst_368 = arith.constant 9.99999974E-6 : f32
    %574 = vector.broadcast %cst_368 : f32 to vector<32x1xf32>
    %575 = arith.addf %571, %574 : vector<32x1xf32>
    %576 = math.rsqrt %575 : vector<32x1xf32>
    %577 = vector.broadcast %576 : vector<32x1xf32> to vector<32x128xf32>
    %578 = arith.mulf %573, %577 : vector<32x128xf32>
    %c6_369 = arith.constant 6 : index
    %c0_370 = arith.constant 0 : index
    %579 = vector.load %arg3[%c6_369, %c0_370] : memref<24x128xf32, #tpu.memory_space<vmem>>, vector<1x128xf32>
    %580 = vector.broadcast %579 : vector<1x128xf32> to vector<32x128xf32>
    %581 = arith.mulf %578, %580 : vector<32x128xf32>
    %c7_371 = arith.constant 7 : index
    %c0_372 = arith.constant 0 : index
    %582 = vector.load %arg3[%c7_371, %c0_372] : memref<24x128xf32, #tpu.memory_space<vmem>>, vector<1x128xf32>
    %583 = vector.broadcast %582 : vector<1x128xf32> to vector<32x128xf32>
    %584 = arith.addf %581, %583 : vector<32x128xf32>
    %c0_373 = arith.constant 0 : index
    %c0_374 = arith.constant 0 : index
    %c0_375 = arith.constant 0 : index
    %585 = vector.load %arg7[%c0_373, %c0_374, %c0_375] : memref<3x128x128xf32, #tpu.memory_space<vmem>>, vector<1x128x128xf32>
    %586 = vector.shape_cast %585 : vector<1x128x128xf32> to vector<128x128xf32>
    %cst_376 = arith.constant dense<0.000000e+00> : vector<32x128xf32>
    %587 = tpu.matmul %584, %586, %cst_376 {dimension_numbers = #tpu.dot_dimension_numbers<[1], [0], [0], [1], [0, 0, 1, 1], [], []>} : vector<32x128xf32>, vector<128x128xf32>, vector<32x128xf32> -> vector<32x128xf32>
    %c8 = arith.constant 8 : index
    %c0_377 = arith.constant 0 : index
    %588 = vector.load %arg3[%c8, %c0_377] : memref<24x128xf32, #tpu.memory_space<vmem>>, vector<1x128xf32>
    %589 = vector.broadcast %588 : vector<1x128xf32> to vector<32x128xf32>
    %590 = arith.addf %587, %589 : vector<32x128xf32>
    %c1_378 = arith.constant 1 : index
    %c0_379 = arith.constant 0 : index
    %c0_380 = arith.constant 0 : index
    %591 = vector.load %arg7[%c1_378, %c0_379, %c0_380] : memref<3x128x128xf32, #tpu.memory_space<vmem>>, vector<1x128x128xf32>
    %592 = vector.shape_cast %591 : vector<1x128x128xf32> to vector<128x128xf32>
    %cst_381 = arith.constant dense<0.000000e+00> : vector<32x128xf32>
    %593 = tpu.matmul %584, %592, %cst_381 {dimension_numbers = #tpu.dot_dimension_numbers<[1], [0], [0], [1], [0, 0, 1, 1], [], []>} : vector<32x128xf32>, vector<128x128xf32>, vector<32x128xf32> -> vector<32x128xf32>
    %c9 = arith.constant 9 : index
    %c0_382 = arith.constant 0 : index
    %594 = vector.load %arg3[%c9, %c0_382] : memref<24x128xf32, #tpu.memory_space<vmem>>, vector<1x128xf32>
    %595 = vector.broadcast %594 : vector<1x128xf32> to vector<32x128xf32>
    %596 = arith.addf %593, %595 : vector<32x128xf32>
    %597 = arith.negf %596 : vector<32x128xf32>
    %598 = math.exp %597 : vector<32x128xf32>
    %cst_383 = arith.constant 1.000000e+00 : f32
    %599 = vector.broadcast %cst_383 : f32 to vector<32x128xf32>
    %600 = arith.addf %599, %598 : vector<32x128xf32>
    %601 = arith.divf %599, %600 : vector<32x128xf32>
    %602 = arith.mulf %590, %601 : vector<32x128xf32>
    %cst_384 = arith.constant 0.000000e+00 : f32
    %603 = vector.broadcast %cst_384 : f32 to vector<16x128xf32>
    %604 = vector.extract_strided_slice %602 {offsets = [0, 0], sizes = [16, 128], strides = [1, 1]} : vector<32x128xf32> to vector<16x128xf32>
    %605 = tpu.concatenate %604, %603 in 0 : vector<16x128xf32>, vector<16x128xf32> -> vector<32x128xf32>
    %606 = vector.extract_strided_slice %602 {offsets = [16, 0], sizes = [16, 128], strides = [1, 1]} : vector<32x128xf32> to vector<16x128xf32>
    %607 = tpu.concatenate %606, %603 in 0 : vector<16x128xf32>, vector<16x128xf32> -> vector<32x128xf32>
    %608 = tpu.concatenate %605, %607 in 0 : vector<32x128xf32>, vector<32x128xf32> -> vector<64x128xf32>
    %c0_385 = arith.constant 0 : index
    %c0_386 = arith.constant 0 : index
    %609 = vector.load %arg11[%c0_385, %c0_386] : memref<31x128xf32, #tpu.memory_space<vmem>>, vector<31x128xf32>
    %cst_387 = arith.constant 0.000000e+00 : f32
    %610 = vector.broadcast %cst_387 : f32 to vector<64x128xf32>
    %c15_i32 = arith.constant 15 : i32
    %611 = tpu.dynamic_rotate %608 by %c15_i32 dim 0 : vector<64x128xf32>, i32 -> vector<64x128xf32>
    %612 = vector.extract_strided_slice %609 {offsets = [0, 0], sizes = [1, 128], strides = [1, 1]} : vector<31x128xf32> to vector<1x128xf32>
    %613 = vector.broadcast %612 : vector<1x128xf32> to vector<64x128xf32>
    %614 = arith.mulf %611, %613 : vector<64x128xf32>
    %615 = arith.addf %610, %614 : vector<64x128xf32>
    %c14_i32 = arith.constant 14 : i32
    %616 = tpu.dynamic_rotate %608 by %c14_i32 dim 0 : vector<64x128xf32>, i32 -> vector<64x128xf32>
    %617 = vector.extract_strided_slice %609 {offsets = [1, 0], sizes = [1, 128], strides = [1, 1]} : vector<31x128xf32> to vector<1x128xf32>
    %618 = vector.broadcast %617 : vector<1x128xf32> to vector<64x128xf32>
    %619 = arith.mulf %616, %618 : vector<64x128xf32>
    %620 = arith.addf %615, %619 : vector<64x128xf32>
    %c13_i32 = arith.constant 13 : i32
    %621 = tpu.dynamic_rotate %608 by %c13_i32 dim 0 : vector<64x128xf32>, i32 -> vector<64x128xf32>
    %622 = vector.extract_strided_slice %609 {offsets = [2, 0], sizes = [1, 128], strides = [1, 1]} : vector<31x128xf32> to vector<1x128xf32>
    %623 = vector.broadcast %622 : vector<1x128xf32> to vector<64x128xf32>
    %624 = arith.mulf %621, %623 : vector<64x128xf32>
    %625 = arith.addf %620, %624 : vector<64x128xf32>
    %c12_i32 = arith.constant 12 : i32
    %626 = tpu.dynamic_rotate %608 by %c12_i32 dim 0 : vector<64x128xf32>, i32 -> vector<64x128xf32>
    %627 = vector.extract_strided_slice %609 {offsets = [3, 0], sizes = [1, 128], strides = [1, 1]} : vector<31x128xf32> to vector<1x128xf32>
    %628 = vector.broadcast %627 : vector<1x128xf32> to vector<64x128xf32>
    %629 = arith.mulf %626, %628 : vector<64x128xf32>
    %630 = arith.addf %625, %629 : vector<64x128xf32>
    %c11_i32 = arith.constant 11 : i32
    %631 = tpu.dynamic_rotate %608 by %c11_i32 dim 0 : vector<64x128xf32>, i32 -> vector<64x128xf32>
    %632 = vector.extract_strided_slice %609 {offsets = [4, 0], sizes = [1, 128], strides = [1, 1]} : vector<31x128xf32> to vector<1x128xf32>
    %633 = vector.broadcast %632 : vector<1x128xf32> to vector<64x128xf32>
    %634 = arith.mulf %631, %633 : vector<64x128xf32>
    %635 = arith.addf %630, %634 : vector<64x128xf32>
    %c10_i32 = arith.constant 10 : i32
    %636 = tpu.dynamic_rotate %608 by %c10_i32 dim 0 : vector<64x128xf32>, i32 -> vector<64x128xf32>
    %637 = vector.extract_strided_slice %609 {offsets = [5, 0], sizes = [1, 128], strides = [1, 1]} : vector<31x128xf32> to vector<1x128xf32>
    %638 = vector.broadcast %637 : vector<1x128xf32> to vector<64x128xf32>
    %639 = arith.mulf %636, %638 : vector<64x128xf32>
    %640 = arith.addf %635, %639 : vector<64x128xf32>
    %c9_i32 = arith.constant 9 : i32
    %641 = tpu.dynamic_rotate %608 by %c9_i32 dim 0 : vector<64x128xf32>, i32 -> vector<64x128xf32>
    %642 = vector.extract_strided_slice %609 {offsets = [6, 0], sizes = [1, 128], strides = [1, 1]} : vector<31x128xf32> to vector<1x128xf32>
    %643 = vector.broadcast %642 : vector<1x128xf32> to vector<64x128xf32>
    %644 = arith.mulf %641, %643 : vector<64x128xf32>
    %645 = arith.addf %640, %644 : vector<64x128xf32>
    %c8_i32 = arith.constant 8 : i32
    %646 = tpu.dynamic_rotate %608 by %c8_i32 dim 0 : vector<64x128xf32>, i32 -> vector<64x128xf32>
    %647 = vector.extract_strided_slice %609 {offsets = [7, 0], sizes = [1, 128], strides = [1, 1]} : vector<31x128xf32> to vector<1x128xf32>
    %648 = vector.broadcast %647 : vector<1x128xf32> to vector<64x128xf32>
    %649 = arith.mulf %646, %648 : vector<64x128xf32>
    %650 = arith.addf %645, %649 : vector<64x128xf32>
    %c7_i32 = arith.constant 7 : i32
    %651 = tpu.dynamic_rotate %608 by %c7_i32 dim 0 : vector<64x128xf32>, i32 -> vector<64x128xf32>
    %652 = vector.extract_strided_slice %609 {offsets = [8, 0], sizes = [1, 128], strides = [1, 1]} : vector<31x128xf32> to vector<1x128xf32>
    %653 = vector.broadcast %652 : vector<1x128xf32> to vector<64x128xf32>
    %654 = arith.mulf %651, %653 : vector<64x128xf32>
    %655 = arith.addf %650, %654 : vector<64x128xf32>
    %c6_i32 = arith.constant 6 : i32
    %656 = tpu.dynamic_rotate %608 by %c6_i32 dim 0 : vector<64x128xf32>, i32 -> vector<64x128xf32>
    %657 = vector.extract_strided_slice %609 {offsets = [9, 0], sizes = [1, 128], strides = [1, 1]} : vector<31x128xf32> to vector<1x128xf32>
    %658 = vector.broadcast %657 : vector<1x128xf32> to vector<64x128xf32>
    %659 = arith.mulf %656, %658 : vector<64x128xf32>
    %660 = arith.addf %655, %659 : vector<64x128xf32>
    %c5_i32 = arith.constant 5 : i32
    %661 = tpu.dynamic_rotate %608 by %c5_i32 dim 0 : vector<64x128xf32>, i32 -> vector<64x128xf32>
    %662 = vector.extract_strided_slice %609 {offsets = [10, 0], sizes = [1, 128], strides = [1, 1]} : vector<31x128xf32> to vector<1x128xf32>
    %663 = vector.broadcast %662 : vector<1x128xf32> to vector<64x128xf32>
    %664 = arith.mulf %661, %663 : vector<64x128xf32>
    %665 = arith.addf %660, %664 : vector<64x128xf32>
    %c4_i32 = arith.constant 4 : i32
    %666 = tpu.dynamic_rotate %608 by %c4_i32 dim 0 : vector<64x128xf32>, i32 -> vector<64x128xf32>
    %667 = vector.extract_strided_slice %609 {offsets = [11, 0], sizes = [1, 128], strides = [1, 1]} : vector<31x128xf32> to vector<1x128xf32>
    %668 = vector.broadcast %667 : vector<1x128xf32> to vector<64x128xf32>
    %669 = arith.mulf %666, %668 : vector<64x128xf32>
    %670 = arith.addf %665, %669 : vector<64x128xf32>
    %c3_i32 = arith.constant 3 : i32
    %671 = tpu.dynamic_rotate %608 by %c3_i32 dim 0 : vector<64x128xf32>, i32 -> vector<64x128xf32>
    %672 = vector.extract_strided_slice %609 {offsets = [12, 0], sizes = [1, 128], strides = [1, 1]} : vector<31x128xf32> to vector<1x128xf32>
    %673 = vector.broadcast %672 : vector<1x128xf32> to vector<64x128xf32>
    %674 = arith.mulf %671, %673 : vector<64x128xf32>
    %675 = arith.addf %670, %674 : vector<64x128xf32>
    %c2_i32 = arith.constant 2 : i32
    %676 = tpu.dynamic_rotate %608 by %c2_i32 dim 0 : vector<64x128xf32>, i32 -> vector<64x128xf32>
    %677 = vector.extract_strided_slice %609 {offsets = [13, 0], sizes = [1, 128], strides = [1, 1]} : vector<31x128xf32> to vector<1x128xf32>
    %678 = vector.broadcast %677 : vector<1x128xf32> to vector<64x128xf32>
    %679 = arith.mulf %676, %678 : vector<64x128xf32>
    %680 = arith.addf %675, %679 : vector<64x128xf32>
    %c1_i32 = arith.constant 1 : i32
    %681 = tpu.dynamic_rotate %608 by %c1_i32 dim 0 : vector<64x128xf32>, i32 -> vector<64x128xf32>
    %682 = vector.extract_strided_slice %609 {offsets = [14, 0], sizes = [1, 128], strides = [1, 1]} : vector<31x128xf32> to vector<1x128xf32>
    %683 = vector.broadcast %682 : vector<1x128xf32> to vector<64x128xf32>
    %684 = arith.mulf %681, %683 : vector<64x128xf32>
    %685 = arith.addf %680, %684 : vector<64x128xf32>
    %686 = vector.extract_strided_slice %609 {offsets = [15, 0], sizes = [1, 128], strides = [1, 1]} : vector<31x128xf32> to vector<1x128xf32>
    %687 = vector.broadcast %686 : vector<1x128xf32> to vector<64x128xf32>
    %688 = arith.mulf %608, %687 : vector<64x128xf32>
    %689 = arith.addf %685, %688 : vector<64x128xf32>
    %c63_i32 = arith.constant 63 : i32
    %690 = tpu.dynamic_rotate %608 by %c63_i32 dim 0 : vector<64x128xf32>, i32 -> vector<64x128xf32>
    %691 = vector.extract_strided_slice %609 {offsets = [16, 0], sizes = [1, 128], strides = [1, 1]} : vector<31x128xf32> to vector<1x128xf32>
    %692 = vector.broadcast %691 : vector<1x128xf32> to vector<64x128xf32>
    %693 = arith.mulf %690, %692 : vector<64x128xf32>
    %694 = arith.addf %689, %693 : vector<64x128xf32>
    %c62_i32 = arith.constant 62 : i32
    %695 = tpu.dynamic_rotate %608 by %c62_i32 dim 0 : vector<64x128xf32>, i32 -> vector<64x128xf32>
    %696 = vector.extract_strided_slice %609 {offsets = [17, 0], sizes = [1, 128], strides = [1, 1]} : vector<31x128xf32> to vector<1x128xf32>
    %697 = vector.broadcast %696 : vector<1x128xf32> to vector<64x128xf32>
    %698 = arith.mulf %695, %697 : vector<64x128xf32>
    %699 = arith.addf %694, %698 : vector<64x128xf32>
    %c61_i32 = arith.constant 61 : i32
    %700 = tpu.dynamic_rotate %608 by %c61_i32 dim 0 : vector<64x128xf32>, i32 -> vector<64x128xf32>
    %701 = vector.extract_strided_slice %609 {offsets = [18, 0], sizes = [1, 128], strides = [1, 1]} : vector<31x128xf32> to vector<1x128xf32>
    %702 = vector.broadcast %701 : vector<1x128xf32> to vector<64x128xf32>
    %703 = arith.mulf %700, %702 : vector<64x128xf32>
    %704 = arith.addf %699, %703 : vector<64x128xf32>
    %c60_i32 = arith.constant 60 : i32
    %705 = tpu.dynamic_rotate %608 by %c60_i32 dim 0 : vector<64x128xf32>, i32 -> vector<64x128xf32>
    %706 = vector.extract_strided_slice %609 {offsets = [19, 0], sizes = [1, 128], strides = [1, 1]} : vector<31x128xf32> to vector<1x128xf32>
    %707 = vector.broadcast %706 : vector<1x128xf32> to vector<64x128xf32>
    %708 = arith.mulf %705, %707 : vector<64x128xf32>
    %709 = arith.addf %704, %708 : vector<64x128xf32>
    %c59_i32 = arith.constant 59 : i32
    %710 = tpu.dynamic_rotate %608 by %c59_i32 dim 0 : vector<64x128xf32>, i32 -> vector<64x128xf32>
    %711 = vector.extract_strided_slice %609 {offsets = [20, 0], sizes = [1, 128], strides = [1, 1]} : vector<31x128xf32> to vector<1x128xf32>
    %712 = vector.broadcast %711 : vector<1x128xf32> to vector<64x128xf32>
    %713 = arith.mulf %710, %712 : vector<64x128xf32>
    %714 = arith.addf %709, %713 : vector<64x128xf32>
    %c58_i32 = arith.constant 58 : i32
    %715 = tpu.dynamic_rotate %608 by %c58_i32 dim 0 : vector<64x128xf32>, i32 -> vector<64x128xf32>
    %716 = vector.extract_strided_slice %609 {offsets = [21, 0], sizes = [1, 128], strides = [1, 1]} : vector<31x128xf32> to vector<1x128xf32>
    %717 = vector.broadcast %716 : vector<1x128xf32> to vector<64x128xf32>
    %718 = arith.mulf %715, %717 : vector<64x128xf32>
    %719 = arith.addf %714, %718 : vector<64x128xf32>
    %c57_i32 = arith.constant 57 : i32
    %720 = tpu.dynamic_rotate %608 by %c57_i32 dim 0 : vector<64x128xf32>, i32 -> vector<64x128xf32>
    %721 = vector.extract_strided_slice %609 {offsets = [22, 0], sizes = [1, 128], strides = [1, 1]} : vector<31x128xf32> to vector<1x128xf32>
    %722 = vector.broadcast %721 : vector<1x128xf32> to vector<64x128xf32>
    %723 = arith.mulf %720, %722 : vector<64x128xf32>
    %724 = arith.addf %719, %723 : vector<64x128xf32>
    %c56_i32 = arith.constant 56 : i32
    %725 = tpu.dynamic_rotate %608 by %c56_i32 dim 0 : vector<64x128xf32>, i32 -> vector<64x128xf32>
    %726 = vector.extract_strided_slice %609 {offsets = [23, 0], sizes = [1, 128], strides = [1, 1]} : vector<31x128xf32> to vector<1x128xf32>
    %727 = vector.broadcast %726 : vector<1x128xf32> to vector<64x128xf32>
    %728 = arith.mulf %725, %727 : vector<64x128xf32>
    %729 = arith.addf %724, %728 : vector<64x128xf32>
    %c55_i32 = arith.constant 55 : i32
    %730 = tpu.dynamic_rotate %608 by %c55_i32 dim 0 : vector<64x128xf32>, i32 -> vector<64x128xf32>
    %731 = vector.extract_strided_slice %609 {offsets = [24, 0], sizes = [1, 128], strides = [1, 1]} : vector<31x128xf32> to vector<1x128xf32>
    %732 = vector.broadcast %731 : vector<1x128xf32> to vector<64x128xf32>
    %733 = arith.mulf %730, %732 : vector<64x128xf32>
    %734 = arith.addf %729, %733 : vector<64x128xf32>
    %c54_i32 = arith.constant 54 : i32
    %735 = tpu.dynamic_rotate %608 by %c54_i32 dim 0 : vector<64x128xf32>, i32 -> vector<64x128xf32>
    %736 = vector.extract_strided_slice %609 {offsets = [25, 0], sizes = [1, 128], strides = [1, 1]} : vector<31x128xf32> to vector<1x128xf32>
    %737 = vector.broadcast %736 : vector<1x128xf32> to vector<64x128xf32>
    %738 = arith.mulf %735, %737 : vector<64x128xf32>
    %739 = arith.addf %734, %738 : vector<64x128xf32>
    %c53_i32 = arith.constant 53 : i32
    %740 = tpu.dynamic_rotate %608 by %c53_i32 dim 0 : vector<64x128xf32>, i32 -> vector<64x128xf32>
    %741 = vector.extract_strided_slice %609 {offsets = [26, 0], sizes = [1, 128], strides = [1, 1]} : vector<31x128xf32> to vector<1x128xf32>
    %742 = vector.broadcast %741 : vector<1x128xf32> to vector<64x128xf32>
    %743 = arith.mulf %740, %742 : vector<64x128xf32>
    %744 = arith.addf %739, %743 : vector<64x128xf32>
    %c52_i32 = arith.constant 52 : i32
    %745 = tpu.dynamic_rotate %608 by %c52_i32 dim 0 : vector<64x128xf32>, i32 -> vector<64x128xf32>
    %746 = vector.extract_strided_slice %609 {offsets = [27, 0], sizes = [1, 128], strides = [1, 1]} : vector<31x128xf32> to vector<1x128xf32>
    %747 = vector.broadcast %746 : vector<1x128xf32> to vector<64x128xf32>
    %748 = arith.mulf %745, %747 : vector<64x128xf32>
    %749 = arith.addf %744, %748 : vector<64x128xf32>
    %c51_i32 = arith.constant 51 : i32
    %750 = tpu.dynamic_rotate %608 by %c51_i32 dim 0 : vector<64x128xf32>, i32 -> vector<64x128xf32>
    %751 = vector.extract_strided_slice %609 {offsets = [28, 0], sizes = [1, 128], strides = [1, 1]} : vector<31x128xf32> to vector<1x128xf32>
    %752 = vector.broadcast %751 : vector<1x128xf32> to vector<64x128xf32>
    %753 = arith.mulf %750, %752 : vector<64x128xf32>
    %754 = arith.addf %749, %753 : vector<64x128xf32>
    %c50_i32 = arith.constant 50 : i32
    %755 = tpu.dynamic_rotate %608 by %c50_i32 dim 0 : vector<64x128xf32>, i32 -> vector<64x128xf32>
    %756 = vector.extract_strided_slice %609 {offsets = [29, 0], sizes = [1, 128], strides = [1, 1]} : vector<31x128xf32> to vector<1x128xf32>
    %757 = vector.broadcast %756 : vector<1x128xf32> to vector<64x128xf32>
    %758 = arith.mulf %755, %757 : vector<64x128xf32>
    %759 = arith.addf %754, %758 : vector<64x128xf32>
    %c49_i32 = arith.constant 49 : i32
    %760 = tpu.dynamic_rotate %608 by %c49_i32 dim 0 : vector<64x128xf32>, i32 -> vector<64x128xf32>
    %761 = vector.extract_strided_slice %609 {offsets = [30, 0], sizes = [1, 128], strides = [1, 1]} : vector<31x128xf32> to vector<1x128xf32>
    %762 = vector.broadcast %761 : vector<1x128xf32> to vector<64x128xf32>
    %763 = arith.mulf %760, %762 : vector<64x128xf32>
    %764 = arith.addf %759, %763 : vector<64x128xf32>
    %765 = vector.extract_strided_slice %764 {offsets = [0, 0], sizes = [16, 128], strides = [1, 1]} : vector<64x128xf32> to vector<16x128xf32>
    %766 = vector.extract_strided_slice %764 {offsets = [32, 0], sizes = [16, 128], strides = [1, 1]} : vector<64x128xf32> to vector<16x128xf32>
    %767 = tpu.concatenate %765, %766 in 0 : vector<16x128xf32>, vector<16x128xf32> -> vector<32x128xf32>
    %c10 = arith.constant 10 : index
    %c0_388 = arith.constant 0 : index
    %768 = vector.load %arg3[%c10, %c0_388] : memref<24x128xf32, #tpu.memory_space<vmem>>, vector<1x128xf32>
    %769 = vector.broadcast %768 : vector<1x128xf32> to vector<32x128xf32>
    %770 = arith.addf %767, %769 : vector<32x128xf32>
    %c11 = arith.constant 11 : index
    %c0_389 = arith.constant 0 : index
    %771 = vector.load %arg3[%c11, %c0_389] : memref<24x128xf32, #tpu.memory_space<vmem>>, vector<1x128xf32>
    %772 = vector.broadcast %771 : vector<1x128xf32> to vector<32x128xf32>
    %773 = arith.mulf %770, %772 : vector<32x128xf32>
    %c12 = arith.constant 12 : index
    %c0_390 = arith.constant 0 : index
    %774 = vector.load %arg3[%c12, %c0_390] : memref<24x128xf32, #tpu.memory_space<vmem>>, vector<1x128xf32>
    %775 = vector.broadcast %774 : vector<1x128xf32> to vector<32x128xf32>
    %776 = arith.addf %773, %775 : vector<32x128xf32>
    %777 = arith.negf %776 : vector<32x128xf32>
    %778 = math.exp %777 : vector<32x128xf32>
    %cst_391 = arith.constant 1.000000e+00 : f32
    %779 = vector.broadcast %cst_391 : f32 to vector<32x128xf32>
    %780 = arith.addf %779, %778 : vector<32x128xf32>
    %781 = arith.divf %779, %780 : vector<32x128xf32>
    %782 = arith.mulf %776, %781 : vector<32x128xf32>
    %c2_392 = arith.constant 2 : index
    %c0_393 = arith.constant 0 : index
    %c0_394 = arith.constant 0 : index
    %783 = vector.load %arg7[%c2_392, %c0_393, %c0_394] : memref<3x128x128xf32, #tpu.memory_space<vmem>>, vector<1x128x128xf32>
    %784 = vector.shape_cast %783 : vector<1x128x128xf32> to vector<128x128xf32>
    %cst_395 = arith.constant dense<0.000000e+00> : vector<32x128xf32>
    %785 = tpu.matmul %782, %784, %cst_395 {dimension_numbers = #tpu.dot_dimension_numbers<[1], [0], [0], [1], [0, 0, 1, 1], [], []>} : vector<32x128xf32>, vector<128x128xf32>, vector<32x128xf32> -> vector<32x128xf32>
    %c13 = arith.constant 13 : index
    %c0_396 = arith.constant 0 : index
    %786 = vector.load %arg3[%c13, %c0_396] : memref<24x128xf32, #tpu.memory_space<vmem>>, vector<1x128xf32>
    %787 = vector.broadcast %786 : vector<1x128xf32> to vector<32x128xf32>
    %788 = arith.addf %785, %787 : vector<32x128xf32>
    %789 = arith.addf %788, %560 : vector<32x128xf32>
    %cst_397 = arith.constant dense<0.000000e+00> : vector<32xf32>
    %790 = vector.multi_reduction <add>, %789, %cst_397 [1] : vector<32x128xf32> to vector<32xf32>
    %791 = vector.shape_cast %790 : vector<32xf32> to vector<32x1xf32>
    %cst_398 = arith.constant 1.280000e+02 : f32
    %792 = vector.broadcast %cst_398 : f32 to vector<32x1xf32>
    %793 = arith.divf %791, %792 : vector<32x1xf32>
    %794 = vector.broadcast %793 : vector<32x1xf32> to vector<32x128xf32>
    %795 = arith.subf %789, %794 : vector<32x128xf32>
    %796 = arith.mulf %795, %795 : vector<32x128xf32>
    %cst_399 = arith.constant dense<0.000000e+00> : vector<32xf32>
    %797 = vector.multi_reduction <add>, %796, %cst_399 [1] : vector<32x128xf32> to vector<32xf32>
    %798 = vector.shape_cast %797 : vector<32xf32> to vector<32x1xf32>
    %cst_400 = arith.constant 1.280000e+02 : f32
    %799 = vector.broadcast %cst_400 : f32 to vector<32x1xf32>
    %800 = arith.divf %798, %799 : vector<32x1xf32>
    %801 = vector.broadcast %793 : vector<32x1xf32> to vector<32x128xf32>
    %802 = arith.subf %789, %801 : vector<32x128xf32>
    %cst_401 = arith.constant 9.99999974E-6 : f32
    %803 = vector.broadcast %cst_401 : f32 to vector<32x1xf32>
    %804 = arith.addf %800, %803 : vector<32x1xf32>
    %805 = math.rsqrt %804 : vector<32x1xf32>
    %806 = vector.broadcast %805 : vector<32x1xf32> to vector<32x128xf32>
    %807 = arith.mulf %802, %806 : vector<32x128xf32>
    %c14 = arith.constant 14 : index
    %c0_402 = arith.constant 0 : index
    %808 = vector.load %arg3[%c14, %c0_402] : memref<24x128xf32, #tpu.memory_space<vmem>>, vector<1x128xf32>
    %809 = vector.broadcast %808 : vector<1x128xf32> to vector<32x128xf32>
    %810 = arith.mulf %807, %809 : vector<32x128xf32>
    %c15 = arith.constant 15 : index
    %c0_403 = arith.constant 0 : index
    %811 = vector.load %arg3[%c15, %c0_403] : memref<24x128xf32, #tpu.memory_space<vmem>>, vector<1x128xf32>
    %812 = vector.broadcast %811 : vector<1x128xf32> to vector<32x128xf32>
    %813 = arith.addf %810, %812 : vector<32x128xf32>
    %c1_404 = arith.constant 1 : index
    %c0_405 = arith.constant 0 : index
    %c0_406 = arith.constant 0 : index
    %814 = vector.load %arg5[%c1_404, %c0_405, %c0_406] : memref<2x128x512xf32, #tpu.memory_space<vmem>>, vector<1x128x512xf32>
    %815 = vector.shape_cast %814 : vector<1x128x512xf32> to vector<128x512xf32>
    %cst_407 = arith.constant dense<0.000000e+00> : vector<32x512xf32>
    %816 = tpu.matmul %813, %815, %cst_407 {dimension_numbers = #tpu.dot_dimension_numbers<[1], [0], [0], [1], [0, 0, 1, 1], [], []>} : vector<32x128xf32>, vector<128x512xf32>, vector<32x512xf32> -> vector<32x512xf32>
    %c1_408 = arith.constant 1 : index
    %c0_409 = arith.constant 0 : index
    %817 = vector.load %arg4[%c1_408, %c0_409] : memref<2x512xf32, #tpu.memory_space<vmem>>, vector<1x512xf32>
    %818 = vector.broadcast %817 : vector<1x512xf32> to vector<32x512xf32>
    %819 = arith.addf %816, %818 : vector<32x512xf32>
    %820 = arith.negf %819 : vector<32x512xf32>
    %821 = math.exp %820 : vector<32x512xf32>
    %cst_410 = arith.constant 1.000000e+00 : f32
    %822 = vector.broadcast %cst_410 : f32 to vector<32x512xf32>
    %823 = arith.addf %822, %821 : vector<32x512xf32>
    %824 = arith.divf %822, %823 : vector<32x512xf32>
    %825 = arith.mulf %819, %824 : vector<32x512xf32>
    %c1_411 = arith.constant 1 : index
    %c0_412 = arith.constant 0 : index
    %c0_413 = arith.constant 0 : index
    %826 = vector.load %arg6[%c1_411, %c0_412, %c0_413] : memref<2x512x128xf32, #tpu.memory_space<vmem>>, vector<1x512x128xf32>
    %827 = vector.shape_cast %826 : vector<1x512x128xf32> to vector<512x128xf32>
    %cst_414 = arith.constant dense<0.000000e+00> : vector<32x128xf32>
    %828 = tpu.matmul %825, %827, %cst_414 {dimension_numbers = #tpu.dot_dimension_numbers<[1], [0], [0], [1], [0, 0, 1, 1], [], []>} : vector<32x512xf32>, vector<512x128xf32>, vector<32x128xf32> -> vector<32x128xf32>
    %c16 = arith.constant 16 : index
    %c0_415 = arith.constant 0 : index
    %829 = vector.load %arg3[%c16, %c0_415] : memref<24x128xf32, #tpu.memory_space<vmem>>, vector<1x128xf32>
    %830 = vector.broadcast %829 : vector<1x128xf32> to vector<32x128xf32>
    %831 = arith.addf %828, %830 : vector<32x128xf32>
    %832 = arith.addf %831, %789 : vector<32x128xf32>
    %cst_416 = arith.constant dense<0.000000e+00> : vector<32xf32>
    %833 = vector.multi_reduction <add>, %832, %cst_416 [1] : vector<32x128xf32> to vector<32xf32>
    %834 = vector.shape_cast %833 : vector<32xf32> to vector<32x1xf32>
    %cst_417 = arith.constant 1.280000e+02 : f32
    %835 = vector.broadcast %cst_417 : f32 to vector<32x1xf32>
    %836 = arith.divf %834, %835 : vector<32x1xf32>
    %837 = vector.broadcast %836 : vector<32x1xf32> to vector<32x128xf32>
    %838 = arith.subf %832, %837 : vector<32x128xf32>
    %839 = arith.mulf %838, %838 : vector<32x128xf32>
    %cst_418 = arith.constant dense<0.000000e+00> : vector<32xf32>
    %840 = vector.multi_reduction <add>, %839, %cst_418 [1] : vector<32x128xf32> to vector<32xf32>
    %841 = vector.shape_cast %840 : vector<32xf32> to vector<32x1xf32>
    %cst_419 = arith.constant 1.280000e+02 : f32
    %842 = vector.broadcast %cst_419 : f32 to vector<32x1xf32>
    %843 = arith.divf %841, %842 : vector<32x1xf32>
    %844 = vector.broadcast %836 : vector<32x1xf32> to vector<32x128xf32>
    %845 = arith.subf %832, %844 : vector<32x128xf32>
    %cst_420 = arith.constant 9.99999974E-6 : f32
    %846 = vector.broadcast %cst_420 : f32 to vector<32x1xf32>
    %847 = arith.addf %843, %846 : vector<32x1xf32>
    %848 = math.rsqrt %847 : vector<32x1xf32>
    %849 = vector.broadcast %848 : vector<32x1xf32> to vector<32x128xf32>
    %850 = arith.mulf %845, %849 : vector<32x128xf32>
    %c17 = arith.constant 17 : index
    %c0_421 = arith.constant 0 : index
    %851 = vector.load %arg3[%c17, %c0_421] : memref<24x128xf32, #tpu.memory_space<vmem>>, vector<1x128xf32>
    %852 = vector.broadcast %851 : vector<1x128xf32> to vector<32x128xf32>
    %853 = arith.mulf %850, %852 : vector<32x128xf32>
    %c18 = arith.constant 18 : index
    %c0_422 = arith.constant 0 : index
    %854 = vector.load %arg3[%c18, %c0_422] : memref<24x128xf32, #tpu.memory_space<vmem>>, vector<1x128xf32>
    %855 = vector.broadcast %854 : vector<1x128xf32> to vector<32x128xf32>
    %856 = arith.addf %853, %855 : vector<32x128xf32>
    %c0_423 = arith.constant 0 : index
    %c0_424 = arith.constant 0 : index
    %857 = vector.load %arg12[%c0_423, %c0_424] : memref<32x128xf32, #tpu.memory_space<vmem>>, vector<32x128xf32>
    tpu.vector_store %arg12[%c0_423, %c0_424], %856 {strides = array<i32>} : memref<32x128xf32, #tpu.memory_space<vmem>>, vector<32x128xf32>,
    return
  }
  func.func @transform_0(%arg0: i32) -> (i32, i32) {
    %c0_i32 = arith.constant 0 : i32
    %c0_i32_0 = arith.constant 0 : i32
    return %arg0, %c0_i32 : i32, i32
  }
  func.func @transform_1(%arg0: i32) -> (i32, i32) {
    %c0_i32 = arith.constant 0 : i32
    %c0_i32_0 = arith.constant 0 : i32
    %c0_i32_1 = arith.constant 0 : i32
    return %c0_i32, %c0_i32_0 : i32, i32
  }
  func.func @transform_2(%arg0: i32) -> (i32, i32) {
    %c0_i32 = arith.constant 0 : i32
    %c0_i32_0 = arith.constant 0 : i32
    %c0_i32_1 = arith.constant 0 : i32
    return %c0_i32, %c0_i32_0 : i32, i32
  }
  func.func @transform_3(%arg0: i32) -> (i32, i32) {
    %c0_i32 = arith.constant 0 : i32
    %c0_i32_0 = arith.constant 0 : i32
    %c0_i32_1 = arith.constant 0 : i32
    return %c0_i32, %c0_i32_0 : i32, i32
  }
  func.func @transform_4(%arg0: i32) -> (i32, i32, i32) {
    %c0_i32 = arith.constant 0 : i32
    %c0_i32_0 = arith.constant 0 : i32
    %c0_i32_1 = arith.constant 0 : i32
    %c0_i32_2 = arith.constant 0 : i32
    return %c0_i32, %c0_i32_0, %c0_i32_1 : i32, i32, i32
  }
  func.func @transform_5(%arg0: i32) -> (i32, i32, i32) {
    %c0_i32 = arith.constant 0 : i32
    %c0_i32_0 = arith.constant 0 : i32
    %c0_i32_1 = arith.constant 0 : i32
    %c0_i32_2 = arith.constant 0 : i32
    return %c0_i32, %c0_i32_0, %c0_i32_1 : i32, i32, i32
  }
  func.func @transform_6(%arg0: i32) -> (i32, i32, i32) {
    %c0_i32 = arith.constant 0 : i32
    %c0_i32_0 = arith.constant 0 : i32
    %c0_i32_1 = arith.constant 0 : i32
    %c0_i32_2 = arith.constant 0 : i32
    return %c0_i32, %c0_i32_0, %c0_i32_1 : i32, i32, i32
  }
  func.func @transform_7(%arg0: i32) -> (i32, i32, i32, i32) {
    %c0_i32 = arith.constant 0 : i32
    %c0_i32_0 = arith.constant 0 : i32
    %c0_i32_1 = arith.constant 0 : i32
    %c0_i32_2 = arith.constant 0 : i32
    %c0_i32_3 = arith.constant 0 : i32
    return %c0_i32, %c0_i32_0, %c0_i32_1, %c0_i32_2 : i32, i32, i32, i32
  }
  func.func @transform_8(%arg0: i32) -> (i32, i32, i32, i32) {
    %c0_i32 = arith.constant 0 : i32
    %c0_i32_0 = arith.constant 0 : i32
    %c0_i32_1 = arith.constant 0 : i32
    %c0_i32_2 = arith.constant 0 : i32
    %c0_i32_3 = arith.constant 0 : i32
    return %c0_i32, %c0_i32_0, %c0_i32_1, %c0_i32_2 : i32, i32, i32, i32
  }
  func.func @transform_9(%arg0: i32) -> (i32, i32, i32) {
    %c0_i32 = arith.constant 0 : i32
    %c0_i32_0 = arith.constant 0 : i32
    %c0_i32_1 = arith.constant 0 : i32
    %c0_i32_2 = arith.constant 0 : i32
    return %c0_i32, %c0_i32_0, %c0_i32_1 : i32, i32, i32
  }
  func.func @transform_10(%arg0: i32) -> (i32, i32) {
    %c0_i32 = arith.constant 0 : i32
    %c0_i32_0 = arith.constant 0 : i32
    %c0_i32_1 = arith.constant 0 : i32
    return %c0_i32, %c0_i32_0 : i32, i32
  }
  func.func @transform_11(%arg0: i32) -> (i32, i32) {
    %c0_i32 = arith.constant 0 : i32
    %c0_i32_0 = arith.constant 0 : i32
    return %arg0, %c0_i32 : i32, i32
  }
}

</mosaic_0001>

<llo_original>
// kernel: conformer_block.1
$region0: #{conformer_block.1}
  #allocation0 [shape = 'u32[]', space=smem, size = 0x4, offset = 0x4, fixed_abs, tag = 'smem constant byte address 0x4 - core index']
  #allocation1 [shape = 'u32[72,128]{1,0:T(1,128)}', space=vmem, size = 0x9000, scoped, tag = 'internal scratch']
  %s0 = inlined_call_operand.vmem [shape: f32[64,128], index: 0, kind: input, shape index: {}]
  %s1 = inlined_call_operand.vmem [shape: f32[32,128], index: 1, kind: input, shape index: {}]
  %s2 = inlined_call_operand.vmem [shape: f32[24,128], index: 2, kind: input, shape index: {}]
  %s3 = inlined_call_operand.vmem [shape: f32[2,512], index: 3, kind: input, shape index: {}]
  %s4 = inlined_call_operand.vmem [shape: f32[2,128,512], index: 4, kind: input, shape index: {}]
  %s5 = inlined_call_operand.vmem [shape: f32[2,512,128], index: 5, kind: input, shape index: {}]
  %s6 = inlined_call_operand.vmem [shape: f32[3,128,128], index: 6, kind: input, shape index: {}]
  %s7 = inlined_call_operand.vmem [shape: f32[3,8,128,16], index: 7, kind: input, shape index: {}]
  %s8 = inlined_call_operand.vmem [shape: f32[3,8,1,16], index: 8, kind: input, shape index: {}]
  %s9 = inlined_call_operand.vmem [shape: f32[8,16,128], index: 9, kind: input, shape index: {}]
  %s10 = inlined_call_operand.vmem [shape: f32[31,128], index: 10, kind: input, shape index: {}]
  %s11 = inlined_call_operand.hbm [shape: f32[64,128], index: 11, kind: output, shape index: {}]
  %s12 = sld [smem:[#allocation0]]
  $region77: #{conformer_block.1} parent=0
    _
  %s14 = ssub.s32 1, %s12
  %s15 = scalar_select 0, %s14, %s12
  $region1: #{conformer_block.1} parent=0
    #allocation2 [shape = 'u8[32768]{0}', space=vmem, size = 0x8000, scoped, tag = 'output window, operand 0']
    #allocation3 [shape = 's32[2]{0}', space=sflag, size = 0x8, scoped, tag = 'scoped memory for conformer_block.1']
    %16 = vsyncpa [#allocation3], 0
    %s17 = scalar_lea.sflag [#allocation3], 1
    %18 = vsyncpa %s17, 0
    loop: start=0, step=1, limit=4
    $region2: #{conformer_block.1} parent=1 // loop_pre_header
      _
    $region3: #{conformer_block.1} parent=1 // loop_header
      %s20 = sphi 0, %s24
      %p21 = scmp.ge.s32.totalorder %s20, 4
      %s30 = sphi 0, %s32
      %s33 = sphi 0, %s30
      %s34 = sphi 0, %s33
      %s50 = sphi 0, %s34
      %s54 = sphi 0, %s54
      %s56 = sphi 0, %s54
      %s57 = sphi 0, %s56
      %s71 = sphi 0, %s57
      %s75 = sphi 0, %s75
      %s77 = sphi 0, %s75
      %s78 = sphi 0, %s77
      %s92 = sphi 0, %s78
      %s96 = sphi 0, %s96
      %s98 = sphi 0, %s96
      %s99 = sphi 0, %s98
      %s113 = sphi 0, %s99
      %s117 = sphi 0, %s117
      %s119 = sphi 0, %s117
      %s120 = sphi 0, %s119
      %s134 = sphi 0, %s120
      %s138 = sphi 0, %s138
      %s140 = sphi 0, %s138
      %s141 = sphi 0, %s140
      %s155 = sphi 0, %s141
      %s159 = sphi 0, %s159
      %s161 = sphi 0, %s159
      %s162 = sphi 0, %s161
      %s176 = sphi 0, %s162
      %s180 = sphi 0, %s180
      %s182 = sphi 0, %s180
      %s183 = sphi 0, %s182
      %s197 = sphi 0, %s183
      %s201 = sphi 0, %s201
      %s203 = sphi 0, %s201
      %s204 = sphi 0, %s203
      %s218 = sphi 0, %s204
      %s222 = sphi 0, %s222
      %s224 = sphi 0, %s222
      %s225 = sphi 0, %s224
      %s239 = sphi 0, %s225
      %s243 = sphi 0, %s243
      %s245 = sphi 0, %s243
      %s246 = sphi 0, %s245
      %s260 = sphi 0, %s246
      %s266 = sphi 0, %s268
      %s269 = sphi 0, %s266
      %s270 = sphi 0, %s269
      %s286 = sphi 0, %s270
    $region4: #{conformer_block.1} parent=1 // loop_header_branch
      %23 = sbr.rel (%p21) target = $region8
    $region5: #{conformer_block.1} parent=1 // loop_body
      %s25 = ssub.s32 %s20, 1
      %s26 = ssub.s32 %s20, 2
      %s27 = sadd.s32 %s20, 1
      %s28 = ssub.s32 %s20, %s27
      %p29 = scmp.eq.s32.totalorder %s28, 0
      %s31 = sadd.s32 %s30, 1
      %s32 = scalar_select %p29, %s30, %s31
      %p35 = pneg %p29
      %p36 = scmp.eq.s32.totalorder %s20, 1
      %p37 = por %p35, %p36
      %p38 = scmp.ne.s32.totalorder %s30, %s33
      %p39 = scmp.eq.s32.totalorder %s20, 0
      %p40 = por %p38, %p39
      %p41 = scmp.ne.s32.totalorder %s30, %s33
      %p42 = scmp.eq.s32.totalorder %s25, 1
      %p43 = por %p41, %p42
      %p44 = scmp.ne.s32.totalorder %s33, %s34
      %p45 = scmp.eq.s32.totalorder %s25, 0
      %p46 = por %p44, %p45
      %p47 = scmp.ne.s32.totalorder %s33, %s34
      %p48 = scmp.eq.s32.totalorder %s26, 1
      %p49 = por %p47, %p48
      %p51 = scmp.ne.s32.totalorder %s34, %s50
      %p52 = scmp.eq.s32.totalorder %s26, 0
      %p53 = por %p51, %p52
      %s55 = sadd.s32 %s54, 1
      %p58 = scmp.eq.s32.totalorder %s20, 1
      %p59 = scmp.ne.s32.totalorder %s54, %s56
      %p60 = scmp.eq.s32.totalorder %s20, 0
      %p61 = por %p59, %p60
      %p62 = scmp.ne.s32.totalorder %s54, %s56
      %p63 = scmp.eq.s32.totalorder %s25, 1
      %p64 = por %p62, %p63
      %p65 = scmp.ne.s32.totalorder %s56, %s57
      %p66 = scmp.eq.s32.totalorder %s25, 0
      %p67 = por %p65, %p66
      %p68 = scmp.ne.s32.totalorder %s56, %s57
      %p69 = scmp.eq.s32.totalorder %s26, 1
      %p70 = por %p68, %p69
      %p72 = scmp.ne.s32.totalorder %s57, %s71
      %p73 = scmp.eq.s32.totalorder %s26, 0
      %p74 = por %p72, %p73
      %s76 = sadd.s32 %s75, 1
      %p79 = scmp.eq.s32.totalorder %s20, 1
      %p80 = scmp.ne.s32.totalorder %s75, %s77
      %p81 = scmp.eq.s32.totalorder %s20, 0
      %p82 = por %p80, %p81
      %p83 = scmp.ne.s32.totalorder %s75, %s77
      %p84 = scmp.eq.s32.totalorder %s25, 1
      %p85 = por %p83, %p84
      %p86 = scmp.ne.s32.totalorder %s77, %s78
      %p87 = scmp.eq.s32.totalorder %s25, 0
      %p88 = por %p86, %p87
      %p89 = scmp.ne.s32.totalorder %s77, %s78
      %p90 = scmp.eq.s32.totalorder %s26, 1
      %p91 = por %p89, %p90
      %p93 = scmp.ne.s32.totalorder %s78, %s92
      %p94 = scmp.eq.s32.totalorder %s26, 0
      %p95 = por %p93, %p94
      %s97 = sadd.s32 %s96, 1
      %p100 = scmp.eq.s32.totalorder %s20, 1
      %p101 = scmp.ne.s32.totalorder %s96, %s98
      %p102 = scmp.eq.s32.totalorder %s20, 0
      %p103 = por %p101, %p102
      %p104 = scmp.ne.s32.totalorder %s96, %s98
      %p105 = scmp.eq.s32.totalorder %s25, 1
      %p106 = por %p104, %p105
      %p107 = scmp.ne.s32.totalorder %s98, %s99
      %p108 = scmp.eq.s32.totalorder %s25, 0
      %p109 = por %p107, %p108
      %p110 = scmp.ne.s32.totalorder %s98, %s99
      %p111 = scmp.eq.s32.totalorder %s26, 1
      %p112 = por %p110, %p111
      %p114 = scmp.ne.s32.totalorder %s99, %s113
      %p115 = scmp.eq.s32.totalorder %s26, 0
      %p116 = por %p114, %p115
      %s118 = sadd.s32 %s117, 1
      %p121 = scmp.eq.s32.totalorder %s20, 1
      %p122 = scmp.ne.s32.totalorder %s117, %s119
      %p123 = scmp.eq.s32.totalorder %s20, 0
      %p124 = por %p122, %p123
      %p125 = scmp.ne.s32.totalorder %s117, %s119
      %p126 = scmp.eq.s32.totalorder %s25, 1
      %p127 = por %p125, %p126
      %p128 = scmp.ne.s32.totalorder %s119, %s120
      %p129 = scmp.eq.s32.totalorder %s25, 0
      %p130 = por %p128, %p129
      %p131 = scmp.ne.s32.totalorder %s119, %s120
      %p132 = scmp.eq.s32.totalorder %s26, 1
      %p133 = por %p131, %p132
      %p135 = scmp.ne.s32.totalorder %s120, %s134
      %p136 = scmp.eq.s32.totalorder %s26, 0
      %p137 = por %p135, %p136
      %s139 = sadd.s32 %s138, 1
      %p142 = scmp.eq.s32.totalorder %s20, 1
      %p143 = scmp.ne.s32.totalorder %s138, %s140
      %p144 = scmp.eq.s32.totalorder %s20, 0
      %p145 = por %p143, %p144
      %p146 = scmp.ne.s32.totalorder %s138, %s140
      %p147 = scmp.eq.s32.totalorder %s25, 1
      %p148 = por %p146, %p147
      %p149 = scmp.ne.s32.totalorder %s140, %s141
      %p150 = scmp.eq.s32.totalorder %s25, 0
      %p151 = por %p149, %p150
      %p152 = scmp.ne.s32.totalorder %s140, %s141
      %p153 = scmp.eq.s32.totalorder %s26, 1
      %p154 = por %p152, %p153
      %p156 = scmp.ne.s32.totalorder %s141, %s155
      %p157 = scmp.eq.s32.totalorder %s26, 0
      %p158 = por %p156, %p157
      %s160 = sadd.s32 %s159, 1
      %p163 = scmp.eq.s32.totalorder %s20, 1
      %p164 = scmp.ne.s32.totalorder %s159, %s161
      %p165 = scmp.eq.s32.totalorder %s20, 0
      %p166 = por %p164, %p165
      %p167 = scmp.ne.s32.totalorder %s159, %s161
      %p168 = scmp.eq.s32.totalorder %s25, 1
      %p169 = por %p167, %p168
      %p170 = scmp.ne.s32.totalorder %s161, %s162
      %p171 = scmp.eq.s32.totalorder %s25, 0
      %p172 = por %p170, %p171
      %p173 = scmp.ne.s32.totalorder %s161, %s162
      %p174 = scmp.eq.s32.totalorder %s26, 1
      %p175 = por %p173, %p174
      %p177 = scmp.ne.s32.totalorder %s162, %s176
      %p178 = scmp.eq.s32.totalorder %s26, 0
      %p179 = por %p177, %p178
      %s181 = sadd.s32 %s180, 1
      %p184 = scmp.eq.s32.totalorder %s20, 1
      %p185 = scmp.ne.s32.totalorder %s180, %s182
      %p186 = scmp.eq.s32.totalorder %s20, 0
      %p187 = por %p185, %p186
      %p188 = scmp.ne.s32.totalorder %s180, %s182
      %p189 = scmp.eq.s32.totalorder %s25, 1
      %p190 = por %p188, %p189
      %p191 = scmp.ne.s32.totalorder %s182, %s183
      %p192 = scmp.eq.s32.totalorder %s25, 0
      %p193 = por %p191, %p192
      %p194 = scmp.ne.s32.totalorder %s182, %s183
      %p195 = scmp.eq.s32.totalorder %s26, 1
      %p196 = por %p194, %p195
      %p198 = scmp.ne.s32.totalorder %s183, %s197
      %p199 = scmp.eq.s32.totalorder %s26, 0
      %p200 = por %p198, %p199
      %s202 = sadd.s32 %s201, 1
      %p205 = scmp.eq.s32.totalorder %s20, 1
      %p206 = scmp.ne.s32.totalorder %s201, %s203
      %p207 = scmp.eq.s32.totalorder %s20, 0
      %p208 = por %p206, %p207
      %p209 = scmp.ne.s32.totalorder %s201, %s203
      %p210 = scmp.eq.s32.totalorder %s25, 1
      %p211 = por %p209, %p210
      %p212 = scmp.ne.s32.totalorder %s203, %s204
      %p213 = scmp.eq.s32.totalorder %s25, 0
      %p214 = por %p212, %p213
      %p215 = scmp.ne.s32.totalorder %s203, %s204
      %p216 = scmp.eq.s32.totalorder %s26, 1
      %p217 = por %p215, %p216
      %p219 = scmp.ne.s32.totalorder %s204, %s218
      %p220 = scmp.eq.s32.totalorder %s26, 0
      %p221 = por %p219, %p220
      %s223 = sadd.s32 %s222, 1
      %p226 = scmp.eq.s32.totalorder %s20, 1
      %p227 = scmp.ne.s32.totalorder %s222, %s224
      %p228 = scmp.eq.s32.totalorder %s20, 0
      %p229 = por %p227, %p228
      %p230 = scmp.ne.s32.totalorder %s222, %s224
      %p231 = scmp.eq.s32.totalorder %s25, 1
      %p232 = por %p230, %p231
      %p233 = scmp.ne.s32.totalorder %s224, %s225
      %p234 = scmp.eq.s32.totalorder %s25, 0
      %p235 = por %p233, %p234
      %p236 = scmp.ne.s32.totalorder %s224, %s225
      %p237 = scmp.eq.s32.totalorder %s26, 1
      %p238 = por %p236, %p237
      %p240 = scmp.ne.s32.totalorder %s225, %s239
      %p241 = scmp.eq.s32.totalorder %s26, 0
      %p242 = por %p240, %p241
      %s244 = sadd.s32 %s243, 1
      %p247 = scmp.eq.s32.totalorder %s20, 1
      %p248 = scmp.ne.s32.totalorder %s243, %s245
      %p249 = scmp.eq.s32.totalorder %s20, 0
      %p250 = por %p248, %p249
      %p251 = scmp.ne.s32.totalorder %s243, %s245
      %p252 = scmp.eq.s32.totalorder %s25, 1
      %p253 = por %p251, %p252
      %p254 = scmp.ne.s32.totalorder %s245, %s246
      %p255 = scmp.eq.s32.totalorder %s25, 0
      %p256 = por %p254, %p255
      %p257 = scmp.ne.s32.totalorder %s245, %s246
      %p258 = scmp.eq.s32.totalorder %s26, 1
      %p259 = por %p257, %p258
      %p261 = scmp.ne.s32.totalorder %s246, %s260
      %p262 = scmp.eq.s32.totalorder %s26, 0
      %p263 = por %p261, %p262
      %s264 = ssub.s32 %s20, %s27
      %p265 = scmp.eq.s32.totalorder %s264, 0
      %s267 = sadd.s32 %s266, 1
      %s268 = scalar_select %p265, %s266, %s267
      %p271 = pneg %p265
      %p272 = scmp.eq.s32.totalorder %s20, 1
      %p273 = por %p271, %p272
      %p274 = scmp.ne.s32.totalorder %s266, %s269
      %p275 = scmp.eq.s32.totalorder %s20, 0
      %p276 = por %p274, %p275
      %p277 = scmp.ne.s32.totalorder %s266, %s269
      %p278 = scmp.eq.s32.totalorder %s25, 1
      %p279 = por %p277, %p278
      %p280 = scmp.ne.s32.totalorder %s269, %s270
      %p281 = scmp.eq.s32.totalorder %s25, 0
      %p282 = por %p280, %p281
      %p283 = scmp.ne.s32.totalorder %s269, %s270
      %p284 = scmp.eq.s32.totalorder %s26, 1
      %p285 = por %p283, %p284
      %p287 = scmp.ne.s32.totalorder %s270, %s286
      %p288 = scmp.eq.s32.totalorder %s26, 0
      %p289 = por %p287, %p288
      %p290 = scmp.le.s32.totalorder 1, %s20
      %p291 = scmp.lt.s32.totalorder %s20, 3
      %p292 = pnand %p290, %p291
      %p293 = pneg %p292
      // Predicated region
      $region9: #{conformer_block.1} parent=5 // pred_check
        _
      $region10: #{conformer_block.1} parent=5 // pred_check_branch
        %295 = sbr.rel (%p292) target = $region12
      $region11: #{conformer_block.1} parent=5 // pred_region
        %s296 = ssub.s32 %s20, 1
        // Predicated region
        $region13: #{conformer_block.1} parent=11 // pred_check
          %p297 = pneg %p67
        $region14: #{conformer_block.1} parent=11 // pred_check_branch
          %299 = sbr.rel (%p297) target = $region16
        $region15: #{conformer_block.1} parent=11 // pred_region
          _
        $region16: #{conformer_block.1} parent=11 // pred_fallthru
          _
        // Predicated region
        $region17: #{conformer_block.1} parent=11 // pred_check
          %p300 = pneg %p88
        $region18: #{conformer_block.1} parent=11 // pred_check_branch
          %302 = sbr.rel (%p300) target = $region20
        $region19: #{conformer_block.1} parent=11 // pred_region
          _
        $region20: #{conformer_block.1} parent=11 // pred_fallthru
          _
        // Predicated region
        $region21: #{conformer_block.1} parent=11 // pred_check
          %p303 = pneg %p109
        $region22: #{conformer_block.1} parent=11 // pred_check_branch
          %305 = sbr.rel (%p303) target = $region24
        $region23: #{conformer_block.1} parent=11 // pred_region
          _
        $region24: #{conformer_block.1} parent=11 // pred_fallthru
          _
        // Predicated region
        $region25: #{conformer_block.1} parent=11 // pred_check
          %p306 = pneg %p130
        $region26: #{conformer_block.1} parent=11 // pred_check_branch
          %308 = sbr.rel (%p306) target = $region28
        $region27: #{conformer_block.1} parent=11 // pred_region
          _
        $region28: #{conformer_block.1} parent=11 // pred_fallthru
          _
        // Predicated region
        $region29: #{conformer_block.1} parent=11 // pred_check
          %p309 = pneg %p151
        $region30: #{conformer_block.1} parent=11 // pred_check_branch
          %311 = sbr.rel (%p309) target = $region32
        $region31: #{conformer_block.1} parent=11 // pred_region
          _
        $region32: #{conformer_block.1} parent=11 // pred_fallthru
          _
        // Predicated region
        $region33: #{conformer_block.1} parent=11 // pred_check
          %p312 = pneg %p172
        $region34: #{conformer_block.1} parent=11 // pred_check_branch
          %314 = sbr.rel (%p312) target = $region36
        $region35: #{conformer_block.1} parent=11 // pred_region
          _
        $region36: #{conformer_block.1} parent=11 // pred_fallthru
          _
        // Predicated region
        $region37: #{conformer_block.1} parent=11 // pred_check
          %p315 = pneg %p193
        $region38: #{conformer_block.1} parent=11 // pred_check_branch
          %317 = sbr.rel (%p315) target = $region40
        $region39: #{conformer_block.1} parent=11 // pred_region
          _
        $region40: #{conformer_block.1} parent=11 // pred_fallthru
          _
        // Predicated region
        $region41: #{conformer_block.1} parent=11 // pred_check
          %p318 = pneg %p214
        $region42: #{conformer_block.1} parent=11 // pred_check_branch
          %320 = sbr.rel (%p318) target = $region44
        $region43: #{conformer_block.1} parent=11 // pred_region
          _
        $region44: #{conformer_block.1} parent=11 // pred_fallthru
          _
        // Predicated region
        $region45: #{conformer_block.1} parent=11 // pred_check
          %p321 = pneg %p235
        $region46: #{conformer_block.1} parent=11 // pred_check_branch
          %323 = sbr.rel (%p321) target = $region48
        $region47: #{conformer_block.1} parent=11 // pred_region
          _
        $region48: #{conformer_block.1} parent=11 // pred_fallthru
          _
        // Predicated region
        $region49: #{conformer_block.1} parent=11 // pred_check
          %p324 = pneg %p256
        $region50: #{conformer_block.1} parent=11 // pred_check_branch
          %326 = sbr.rel (%p324) target = $region52
        $region51: #{conformer_block.1} parent=11 // pred_region
          _
        $region52: #{conformer_block.1} parent=11 // pred_fallthru
          _
      $region12: #{conformer_block.1} parent=5 // pred_fallthru
        _
      %p327 = scmp.lt.s32.totalorder %s20, 2
      // Predicated region
      $region53: #{conformer_block.1} parent=5 // pred_check
        %p328 = pneg %p327
      $region54: #{conformer_block.1} parent=5 // pred_check_branch
        %330 = sbr.rel (%p328) target = $region56
      $region55: #{conformer_block.1} parent=5 // pred_region
        // Predicated region
        $region57: #{conformer_block.1} parent=55 // pred_check
          %p331 = pneg %p40
        $region58: #{conformer_block.1} parent=55 // pred_check_branch
          %333 = sbr.rel (%p331) target = $region60
        $region59: #{conformer_block.1} parent=55 // pred_region
          %s334 = smul.u32 4, %s20
          %p335 = scmp.lt.s32.totalorder %s334, 7
          %s336 = scalar_select %p335, %s334, 7
          %s337 = smul.addr %s336, 8
          %s338 = scalar_lea.vmem %s0, %s337
          %s339 = smul.u32 4, %s20
        $region60: #{conformer_block.1} parent=55 // pred_fallthru
          _
      $region56: #{conformer_block.1} parent=5 // pred_fallthru
        _
      %p340 = scmp.le.s32.totalorder 1, %s20
      %p341 = scmp.lt.s32.totalorder %s20, 3
      %p342 = pnand %p340, %p341
      %p343 = pneg %p342
      // Predicated region
      $region61: #{conformer_block.1} parent=5 // pred_check
        _
      $region62: #{conformer_block.1} parent=5 // pred_check_branch
        %345 = sbr.rel (%p342) target = $region64
      $region63: #{conformer_block.1} parent=5 // pred_region
        %s346 = ssub.s32 %s20, 1
        %s347 = smul.u32 4, %s25
        %p348 = scmp.lt.s32.totalorder %s347, 7
        %s349 = scalar_select %p348, %s347, 7
        %s350 = smul.addr %s349, 8
        %s351 = scalar_lea.vmem %s0, %s350
        %p352 = pneg %p46
        %p353 = pneg %p43
        %p354 = pneg %p67
        %p355 = pneg %p64
        %p356 = pneg %p88
        %p357 = pneg %p85
        %p358 = pneg %p109
        %p359 = pneg %p106
        %p360 = pneg %p130
        %p361 = pneg %p127
        %p362 = pneg %p151
        %p363 = pneg %p148
        %p364 = pneg %p172
        %p365 = pneg %p169
        %p366 = pneg %p193
        %p367 = pneg %p190
        %p368 = pneg %p214
        %p369 = pneg %p211
        %p370 = pneg %p235
        %p371 = pneg %p232
        %p372 = pneg %p256
        %p373 = pneg %p253
        %p374 = pneg %p282
        %p375 = pneg %p279
        %s376 = sand.u32 %s269, 1
        %s377 = scalar_lea.sflag [#allocation3], %s376
        %s378 = sand.u32 %s269, 1
        %s379 = smul.addr %s378, 32
        %s380 = scalar_lea.vmem [#allocation2], %s379
        %s381 = smul.u32 4, %s25
        %p382 = scmp.lt.s32.totalorder %s381, 7
        %s383 = scalar_select %p382, %s381, 7
        %s384 = smul.addr %s383, 8
        %s385 = scalar_lea.vmem %s0, %s384
        %s386 = smul.u32 4, %s25
        %s387 = smul.u32 4, %s25
        %v388 = vld [vmem:[%s385] sm:$0xff]
        %v389 = vld [vmem:[%s385 + $0x8] sm:$0xff]
        %v390 = vld [vmem:[%s385 + $0x10] sm:$0xff]
        %v391 = vld [vmem:[%s385 + $0x18] sm:$0xff]
        %392 = vadd.xlane.f32.xlu0 %v388
        %v393 = vpop.xlane.xlu0 %392
        %394 = vadd.xlane.f32.xlu0 %v389
        %v395 = vpop.xlane.xlu0 %394
        %396 = vadd.xlane.f32.xlu0 %v390
        %v397 = vpop.xlane.xlu0 %396
        %398 = vadd.xlane.f32.xlu0 %v391
        %v399 = vpop.xlane.xlu0 %398
        %v400 = vrcp.pop 128.0
        %v401 = vmul.f32 128.0, %v400
        %v402 = vsub.f32 1.0, %v401
        %v403 = vmul.f32 %v400, %v402
        %v404 = vadd.f32 %v400, %v403
        %vm405 = vweird.f32 %v400
        %v406 = vsel %vm405, %v400, %v404
        %v407 = vmul.f32 %v393, %v406
        %v408 = vmul.f32 %v395, %v406
        %v409 = vmul.f32 %v397, %v406
        %v410 = vmul.f32 %v399, %v406
        %v411 = vsub.f32 %v388, %v407
        %v412 = vsub.f32 %v389, %v408
        %v413 = vsub.f32 %v390, %v409
        %v414 = vsub.f32 %v391, %v410
        %v415 = vmul.f32 %v411, %v411
        %v416 = vmul.f32 %v412, %v412
        %v417 = vmul.f32 %v413, %v413
        %v418 = vmul.f32 %v414, %v414
        %419 = vadd.xlane.f32.xlu0 %v415
        %v420 = vpop.xlane.xlu0 %419
        %421 = vadd.xlane.f32.xlu0 %v416
        %v422 = vpop.xlane.xlu0 %421
        %423 = vadd.xlane.f32.xlu0 %v417
        %v424 = vpop.xlane.xlu0 %423
        %425 = vadd.xlane.f32.xlu0 %v418
        %v426 = vpop.xlane.xlu0 %425
        %v427 = vmul.f32 %v420, %v406
        %v428 = vmul.f32 %v422, %v406
        %v429 = vmul.f32 %v424, %v406
        %v430 = vmul.f32 %v426, %v406
        %v431 = vadd.f32 %v427, 1e-05
        %v432 = vadd.f32 %v428, 1e-05
        %v433 = vadd.f32 %v429, 1e-05
        %v434 = vadd.f32 %v430, 1e-05
        %v435 = vrsqrt.pop %v431
        %v436 = vmul.f32 %v435, %v431
        %v437 = vmul.f32 %v436, %v435
        %v438 = vmul.f32 0.5, %v437
        %v439 = vsub.f32 1.5, %v438
        %v440 = vmul.f32 %v435, %v439
        %vm441 = vweird.f32 %v431
        %vm442 = vweird.f32 %v435
        %vm443 = vmor %vm441, %vm442
        %v444 = vsel %vm443, %v435, %v440
        %v445 = vrsqrt.pop %v432
        %v446 = vmul.f32 %v445, %v432
        %v447 = vmul.f32 %v446, %v445
        %v448 = vmul.f32 0.5, %v447
        %v449 = vsub.f32 1.5, %v448
        %v450 = vmul.f32 %v445, %v449
        %vm451 = vweird.f32 %v432
        %vm452 = vweird.f32 %v445
        %vm453 = vmor %vm451, %vm452
        %v454 = vsel %vm453, %v445, %v450
        %v455 = vrsqrt.pop %v433
        %v456 = vmul.f32 %v455, %v433
        %v457 = vmul.f32 %v456, %v455
        %v458 = vmul.f32 0.5, %v457
        %v459 = vsub.f32 1.5, %v458
        %v460 = vmul.f32 %v455, %v459
        %vm461 = vweird.f32 %v433
        %vm462 = vweird.f32 %v455
        %vm463 = vmor %vm461, %vm462
        %v464 = vsel %vm463, %v455, %v460
        %v465 = vrsqrt.pop %v434
        %v466 = vmul.f32 %v465, %v434
        %v467 = vmul.f32 %v466, %v465
        %v468 = vmul.f32 0.5, %v467
        %v469 = vsub.f32 1.5, %v468
        %v470 = vmul.f32 %v465, %v469
        %vm471 = vweird.f32 %v434
        %vm472 = vweird.f32 %v465
        %vm473 = vmor %vm471, %vm472
        %v474 = vsel %vm473, %v465, %v470
        %v475 = vmul.f32 %v411, %v444
        %v476 = vmul.f32 %v412, %v454
        %v477 = vmul.f32 %v413, %v464
        %v478 = vmul.f32 %v414, %v474
        %v479 = vld [vmem:[%s2] sm:$0x1]
        %v480 = vperm.slane %v479, 0
        %v481 = vmul.f32 %v475, %v480
        %v482 = vmul.f32 %v476, %v480
        %v483 = vmul.f32 %v477, %v480
        %v484 = vmul.f32 %v478, %v480
        %v485 = vld [vmem:[%s2 + $0x1] sm:$0x1]
        %v486 = vperm.slane %v485, 0
        %v487 = vadd.f32 %v481, %v486
        %v488 = vadd.f32 %v482, %v486
        %v489 = vadd.f32 %v483, %v486
        %v490 = vadd.f32 %v484, %v486
        %v491 = vld [vmem:[%s4] sm:$0xff]
        %v492 = vld [vmem:[%s4 + $0x8] sm:$0xff]
        %v493 = vld [vmem:[%s4 + $0x10] sm:$0xff]
        %v494 = vld [vmem:[%s4 + $0x18] sm:$0xff]
        %v495 = vld [vmem:[%s4 + $0x20] sm:$0xff]
        %v496 = vld [vmem:[%s4 + $0x28] sm:$0xff]
        %v497 = vld [vmem:[%s4 + $0x30] sm:$0xff]
        %v498 = vld [vmem:[%s4 + $0x38] sm:$0xff]
        %v499 = vld [vmem:[%s4 + $0x40] sm:$0xff]
        %v500 = vld [vmem:[%s4 + $0x48] sm:$0xff]
        %v501 = vld [vmem:[%s4 + $0x50] sm:$0xff]
        %v502 = vld [vmem:[%s4 + $0x58] sm:$0xff]
        %v503 = vld [vmem:[%s4 + $0x60] sm:$0xff]
        %v504 = vld [vmem:[%s4 + $0x68] sm:$0xff]
        %v505 = vld [vmem:[%s4 + $0x70] sm:$0xff]
        %v506 = vld [vmem:[%s4 + $0x78] sm:$0xff]
        %v507 = vld [vmem:[%s4 + $0x80] sm:$0xff]
        %v508 = vld [vmem:[%s4 + $0x88] sm:$0xff]
        %v509 = vld [vmem:[%s4 + $0x90] sm:$0xff]
        %v510 = vld [vmem:[%s4 + $0x98] sm:$0xff]
        %v511 = vld [vmem:[%s4 + $0xa0] sm:$0xff]
        %v512 = vld [vmem:[%s4 + $0xa8] sm:$0xff]
        %v513 = vld [vmem:[%s4 + $0xb0] sm:$0xff]
        %v514 = vld [vmem:[%s4 + $0xb8] sm:$0xff]
        %v515 = vld [vmem:[%s4 + $0xc0] sm:$0xff]
        %v516 = vld [vmem:[%s4 + $0xc8] sm:$0xff]
        %v517 = vld [vmem:[%s4 + $0xd0] sm:$0xff]
        %v518 = vld [vmem:[%s4 + $0xd8] sm:$0xff]
        %v519 = vld [vmem:[%s4 + $0xe0] sm:$0xff]
        %v520 = vld [vmem:[%s4 + $0xe8] sm:$0xff]
        %v521 = vld [vmem:[%s4 + $0xf0] sm:$0xff]
        %v522 = vld [vmem:[%s4 + $0xf8] sm:$0xff]
        %v523 = vld [vmem:[%s4 + $0x100] sm:$0xff]
        %v524 = vld [vmem:[%s4 + $0x108] sm:$0xff]
        %v525 = vld [vmem:[%s4 + $0x110] sm:$0xff]
        %v526 = vld [vmem:[%s4 + $0x118] sm:$0xff]
        %v527 = vld [vmem:[%s4 + $0x120] sm:$0xff]
        %v528 = vld [vmem:[%s4 + $0x128] sm:$0xff]
        %v529 = vld [vmem:[%s4 + $0x130] sm:$0xff]
        %v530 = vld [vmem:[%s4 + $0x138] sm:$0xff]
        %v531 = vld [vmem:[%s4 + $0x140] sm:$0xff]
        %v532 = vld [vmem:[%s4 + $0x148] sm:$0xff]
        %v533 = vld [vmem:[%s4 + $0x150] sm:$0xff]
        %v534 = vld [vmem:[%s4 + $0x158] sm:$0xff]
        %v535 = vld [vmem:[%s4 + $0x160] sm:$0xff]
        %v536 = vld [vmem:[%s4 + $0x168] sm:$0xff]
        %v537 = vld [vmem:[%s4 + $0x170] sm:$0xff]
        %v538 = vld [vmem:[%s4 + $0x178] sm:$0xff]
        %v539 = vld [vmem:[%s4 + $0x180] sm:$0xff]
        %v540 = vld [vmem:[%s4 + $0x188] sm:$0xff]
        %v541 = vld [vmem:[%s4 + $0x190] sm:$0xff]
        %v542 = vld [vmem:[%s4 + $0x198] sm:$0xff]
        %v543 = vld [vmem:[%s4 + $0x1a0] sm:$0xff]
        %v544 = vld [vmem:[%s4 + $0x1a8] sm:$0xff]
        %v545 = vld [vmem:[%s4 + $0x1b0] sm:$0xff]
        %v546 = vld [vmem:[%s4 + $0x1b8] sm:$0xff]
        %v547 = vld [vmem:[%s4 + $0x1c0] sm:$0xff]
        %v548 = vld [vmem:[%s4 + $0x1c8] sm:$0xff]
        %v549 = vld [vmem:[%s4 + $0x1d0] sm:$0xff]
        %v550 = vld [vmem:[%s4 + $0x1d8] sm:$0xff]
        %v551 = vld [vmem:[%s4 + $0x1e0] sm:$0xff]
        %v552 = vld [vmem:[%s4 + $0x1e8] sm:$0xff]
        %v553 = vld [vmem:[%s4 + $0x1f0] sm:$0xff]
        %v554 = vld [vmem:[%s4 + $0x1f8] sm:$0xff]
        %v555 = vld [vmem:[%s3] ss:$2 sm:$0xf]
        %v557 = vperm.slane %v555, 0
        %v558 = vperm.slane %v555, 1
        %v559 = vperm.slane %v555, 2
        %v560 = vperm.slane %v555, 3
        %565 = vmatpush.msra.mxu0 %v551
        %566 = vmatpush.msra.mxu0 %v547
        %567 = vmatpush.msra.mxu0 %v543
        %568 = vmatpush.msra.mxu0 %v539
        %569 = vmatpush.msra.mxu0 %v535
        %570 = vmatpush.msra.mxu0 %v531
        %571 = vmatpush.msra.mxu0 %v527
        %572 = vmatpush.msra.mxu0 %v523
        %573 = vmatpush.msra.mxu0 %v519
        %574 = vmatpush.msra.mxu0 %v515
        %575 = vmatpush.msra.mxu0 %v511
        %576 = vmatpush.msra.mxu0 %v507
        %577 = vmatpush.msra.mxu0 %v503
        %578 = vmatpush.msra.mxu0 %v499
        %579 = vmatpush.msra.mxu0 %v495
        %580 = vmatpush.msra.mxu0 %v491
        %581 = vmatmul.f32.gmra.mxu0 %v487
        %v582 = vpop.f32.mrf.mxu0
        %v583 = vadd.f32 %v557, %v582
        %584 = vmatmul.f32.gmra.mxu0 %v488
        %v585 = vpop.f32.mrf.mxu0
        %v586 = vadd.f32 %v557, %v585
        %587 = vmatmul.f32.gmra.mxu0 %v489
        %v588 = vpop.f32.mrf.mxu0
        %v589 = vadd.f32 %v557, %v588
        %590 = vmatmul.f32.gmra.mxu0 %v490
        %v591 = vpop.f32.mrf.mxu0
        %v592 = vadd.f32 %v557, %v591
        %593 = vdwg.mxu0
        %594 = vmatpush.msra.mxu0 %v552
        %595 = vmatpush.msra.mxu0 %v548
        %596 = vmatpush.msra.mxu0 %v544
        %597 = vmatpush.msra.mxu0 %v540
        %598 = vmatpush.msra.mxu0 %v536
        %599 = vmatpush.msra.mxu0 %v532
        %600 = vmatpush.msra.mxu0 %v528
        %601 = vmatpush.msra.mxu0 %v524
        %602 = vmatpush.msra.mxu0 %v520
        %603 = vmatpush.msra.mxu0 %v516
        %604 = vmatpush.msra.mxu0 %v512
        %605 = vmatpush.msra.mxu0 %v508
        %606 = vmatpush.msra.mxu0 %v504
        %607 = vmatpush.msra.mxu0 %v500
        %608 = vmatpush.msra.mxu0 %v496
        %609 = vmatpush.msra.mxu0 %v492
        %610 = vmatmul.f32.gmra.mxu0 %v487
        %v611 = vpop.f32.mrf.mxu0
        %v612 = vadd.f32 %v558, %v611
        %613 = vmatmul.f32.gmra.mxu0 %v488
        %v614 = vpop.f32.mrf.mxu0
        %v615 = vadd.f32 %v558, %v614
        %616 = vmatmul.f32.gmra.mxu0 %v489
        %v617 = vpop.f32.mrf.mxu0
        %v618 = vadd.f32 %v558, %v617
        %619 = vmatmul.f32.gmra.mxu0 %v490
        %v620 = vpop.f32.mrf.mxu0
        %v621 = vadd.f32 %v558, %v620
        %622 = vdwg.mxu0
        %623 = vmatpush.msra.mxu0 %v553
        %624 = vmatpush.msra.mxu0 %v549
        %625 = vmatpush.msra.mxu0 %v545
        %626 = vmatpush.msra.mxu0 %v541
        %627 = vmatpush.msra.mxu0 %v537
        %628 = vmatpush.msra.mxu0 %v533
        %629 = vmatpush.msra.mxu0 %v529
        %630 = vmatpush.msra.mxu0 %v525
        %631 = vmatpush.msra.mxu0 %v521
        %632 = vmatpush.msra.mxu0 %v517
        %633 = vmatpush.msra.mxu0 %v513
        %634 = vmatpush.msra.mxu0 %v509
        %635 = vmatpush.msra.mxu0 %v505
        %636 = vmatpush.msra.mxu0 %v501
        %637 = vmatpush.msra.mxu0 %v497
        %638 = vmatpush.msra.mxu0 %v493
        %639 = vmatmul.f32.gmra.mxu0 %v487
        %v640 = vpop.f32.mrf.mxu0
        %v641 = vadd.f32 %v559, %v640
        %642 = vmatmul.f32.gmra.mxu0 %v488
        %v643 = vpop.f32.mrf.mxu0
        %v644 = vadd.f32 %v559, %v643
        %645 = vmatmul.f32.gmra.mxu0 %v489
        %v646 = vpop.f32.mrf.mxu0
        %v647 = vadd.f32 %v559, %v646
        %648 = vmatmul.f32.gmra.mxu0 %v490
        %v649 = vpop.f32.mrf.mxu0
        %v650 = vadd.f32 %v559, %v649
        %651 = vdwg.mxu0
        %652 = vmatpush.msra.mxu0 %v554
        %653 = vmatpush.msra.mxu0 %v550
        %654 = vmatpush.msra.mxu0 %v546
        %655 = vmatpush.msra.mxu0 %v542
        %656 = vmatpush.msra.mxu0 %v538
        %657 = vmatpush.msra.mxu0 %v534
        %658 = vmatpush.msra.mxu0 %v530
        %659 = vmatpush.msra.mxu0 %v526
        %660 = vmatpush.msra.mxu0 %v522
        %661 = vmatpush.msra.mxu0 %v518
        %662 = vmatpush.msra.mxu0 %v514
        %663 = vmatpush.msra.mxu0 %v510
        %664 = vmatpush.msra.mxu0 %v506
        %665 = vmatpush.msra.mxu0 %v502
        %666 = vmatpush.msra.mxu0 %v498
        %667 = vmatpush.msra.mxu0 %v494
        %668 = vmatmul.f32.gmra.mxu0 %v487
        %v669 = vpop.f32.mrf.mxu0
        %v670 = vadd.f32 %v560, %v669
        %671 = vmatmul.f32.gmra.mxu0 %v488
        %v672 = vpop.f32.mrf.mxu0
        %v673 = vadd.f32 %v560, %v672
        %674 = vmatmul.f32.gmra.mxu0 %v489
        %v675 = vpop.f32.mrf.mxu0
        %v676 = vadd.f32 %v560, %v675
        %677 = vmatmul.f32.gmra.mxu0 %v490
        %v678 = vpop.f32.mrf.mxu0
        %v679 = vadd.f32 %v560, %v678
        %680 = vdwg.mxu0
        %v681 = vxor.u32 %v583, 2147483648
        %v682 = vxor.u32 %v612, 2147483648
        %v683 = vxor.u32 %v641, 2147483648
        %v684 = vxor.u32 %v670, 2147483648
        %v685 = vxor.u32 %v586, 2147483648
        %v686 = vxor.u32 %v615, 2147483648
        %v687 = vxor.u32 %v644, 2147483648
        %v688 = vxor.u32 %v673, 2147483648
        %v689 = vxor.u32 %v589, 2147483648
        %v690 = vxor.u32 %v618, 2147483648
        %v691 = vxor.u32 %v647, 2147483648
        %v692 = vxor.u32 %v676, 2147483648
        %v693 = vxor.u32 %v592, 2147483648
        %v694 = vxor.u32 %v621, 2147483648
        %v695 = vxor.u32 %v650, 2147483648
        %v696 = vxor.u32 %v679, 2147483648
        %v697 = vmul.f32 %v681, 1.442695
        %v698 = vpow.pop %v697
        %v699 = vmul.f32 %v682, 1.442695
        %v700 = vpow.pop %v699
        %v701 = vmul.f32 %v683, 1.442695
        %v702 = vpow.pop %v701
        %v703 = vmul.f32 %v684, 1.442695
        %v704 = vpow.pop %v703
        %v705 = vmul.f32 %v685, 1.442695
        %v706 = vpow.pop %v705
        %v707 = vmul.f32 %v686, 1.442695
        %v708 = vpow.pop %v707
        %v709 = vmul.f32 %v687, 1.442695
        %v710 = vpow.pop %v709
        %v711 = vmul.f32 %v688, 1.442695
        %v712 = vpow.pop %v711
        %v713 = vmul.f32 %v689, 1.442695
        %v714 = vpow.pop %v713
        %v715 = vmul.f32 %v690, 1.442695
        %v716 = vpow.pop %v715
        %v717 = vmul.f32 %v691, 1.442695
        %v718 = vpow.pop %v717
        %v719 = vmul.f32 %v692, 1.442695
        %v720 = vpow.pop %v719
        %v721 = vmul.f32 %v693, 1.442695
        %v722 = vpow.pop %v721
        %v723 = vmul.f32 %v694, 1.442695
        %v724 = vpow.pop %v723
        %v725 = vmul.f32 %v695, 1.442695
        %v726 = vpow.pop %v725
        %v727 = vmul.f32 %v696, 1.442695
        %v728 = vpow.pop %v727
        %v729 = vadd.f32 %v698, 1.0
        %v730 = vadd.f32 %v700, 1.0
        %v731 = vadd.f32 %v702, 1.0
        %v732 = vadd.f32 %v704, 1.0
        %v733 = vadd.f32 %v706, 1.0
        %v734 = vadd.f32 %v708, 1.0
        %v735 = vadd.f32 %v710, 1.0
        %v736 = vadd.f32 %v712, 1.0
        %v737 = vadd.f32 %v714, 1.0
        %v738 = vadd.f32 %v716, 1.0
        %v739 = vadd.f32 %v718, 1.0
        %v740 = vadd.f32 %v720, 1.0
        %v741 = vadd.f32 %v722, 1.0
        %v742 = vadd.f32 %v724, 1.0
        %v743 = vadd.f32 %v726, 1.0
        %v744 = vadd.f32 %v728, 1.0
        %v745 = vrcp.pop %v729
        %v746 = vmul.f32 %v729, %v745
        %v747 = vsub.f32 1.0, %v746
        %v748 = vmul.f32 %v745, %v747
        %v749 = vadd.f32 %v745, %v748
        %vm750 = vweird.f32 %v729
        %vm751 = vweird.f32 %v745
        %vm752 = vmor %vm750, %vm751
        %v753 = vsel %vm752, %v745, %v749
        %v754 = vand.u32 2147483647, %v729
        %vm755 = vcmp.eq.f32.partialorder %v754, 8.507059e+37
        %v756 = vand.u32 %v729, 2147483648
        %v757 = vor.u32 1.1754944e-38, %v756
        %v758 = vsel %vm755, %v757, %v753
        %v759 = vmul.f32 1.0, %v758
        %v760 = vrcp.pop %v730
        %v761 = vmul.f32 %v730, %v760
        %v762 = vsub.f32 1.0, %v761
        %v763 = vmul.f32 %v760, %v762
        %v764 = vadd.f32 %v760, %v763
        %vm765 = vweird.f32 %v730
        %vm766 = vweird.f32 %v760
        %vm767 = vmor %vm765, %vm766
        %v768 = vsel %vm767, %v760, %v764
        %v769 = vand.u32 2147483647, %v730
        %vm770 = vcmp.eq.f32.partialorder %v769, 8.507059e+37
        %v771 = vand.u32 %v730, 2147483648
        %v772 = vor.u32 1.1754944e-38, %v771
        %v773 = vsel %vm770, %v772, %v768
        %v774 = vmul.f32 1.0, %v773
        %v775 = vrcp.pop %v731
        %v776 = vmul.f32 %v731, %v775
        %v777 = vsub.f32 1.0, %v776
        %v778 = vmul.f32 %v775, %v777
        %v779 = vadd.f32 %v775, %v778
        %vm780 = vweird.f32 %v731
        %vm781 = vweird.f32 %v775
        %vm782 = vmor %vm780, %vm781
        %v783 = vsel %vm782, %v775, %v779
        %v784 = vand.u32 2147483647, %v731
        %vm785 = vcmp.eq.f32.partialorder %v784, 8.507059e+37
        %v786 = vand.u32 %v731, 2147483648
        %v787 = vor.u32 1.1754944e-38, %v786
        %v788 = vsel %vm785, %v787, %v783
        %v789 = vmul.f32 1.0, %v788
        %v790 = vrcp.pop %v732
        %v791 = vmul.f32 %v732, %v790
        %v792 = vsub.f32 1.0, %v791
        %v793 = vmul.f32 %v790, %v792
        %v794 = vadd.f32 %v790, %v793
        %vm795 = vweird.f32 %v732
        %vm796 = vweird.f32 %v790
        %vm797 = vmor %vm795, %vm796
        %v798 = vsel %vm797, %v790, %v794
        %v799 = vand.u32 2147483647, %v732
        %vm800 = vcmp.eq.f32.partialorder %v799, 8.507059e+37
        %v801 = vand.u32 %v732, 2147483648
        %v802 = vor.u32 1.1754944e-38, %v801
        %v803 = vsel %vm800, %v802, %v798
        %v804 = vmul.f32 1.0, %v803
        %v805 = vrcp.pop %v733
        %v806 = vmul.f32 %v733, %v805
        %v807 = vsub.f32 1.0, %v806
        %v808 = vmul.f32 %v805, %v807
        %v809 = vadd.f32 %v805, %v808
        %vm810 = vweird.f32 %v733
        %vm811 = vweird.f32 %v805
        %vm812 = vmor %vm810, %vm811
        %v813 = vsel %vm812, %v805, %v809
        %v814 = vand.u32 2147483647, %v733
        %vm815 = vcmp.eq.f32.partialorder %v814, 8.507059e+37
        %v816 = vand.u32 %v733, 2147483648
        %v817 = vor.u32 1.1754944e-38, %v816
        %v818 = vsel %vm815, %v817, %v813
        %v819 = vmul.f32 1.0, %v818
        %v820 = vrcp.pop %v734
        %v821 = vmul.f32 %v734, %v820
        %v822 = vsub.f32 1.0, %v821
        %v823 = vmul.f32 %v820, %v822
        %v824 = vadd.f32 %v820, %v823
        %vm825 = vweird.f32 %v734
        %vm826 = vweird.f32 %v820
        %vm827 = vmor %vm825, %vm826
        %v828 = vsel %vm827, %v820, %v824
        %v829 = vand.u32 2147483647, %v734
        %vm830 = vcmp.eq.f32.partialorder %v829, 8.507059e+37
        %v831 = vand.u32 %v734, 2147483648
        %v832 = vor.u32 1.1754944e-38, %v831
        %v833 = vsel %vm830, %v832, %v828
        %v834 = vmul.f32 1.0, %v833
        %v835 = vrcp.pop %v735
        %v836 = vmul.f32 %v735, %v835
        %v837 = vsub.f32 1.0, %v836
        %v838 = vmul.f32 %v835, %v837
        %v839 = vadd.f32 %v835, %v838
        %vm840 = vweird.f32 %v735
        %vm841 = vweird.f32 %v835
        %vm842 = vmor %vm840, %vm841
        %v843 = vsel %vm842, %v835, %v839
        %v844 = vand.u32 2147483647, %v735
        %vm845 = vcmp.eq.f32.partialorder %v844, 8.507059e+37
        %v846 = vand.u32 %v735, 2147483648
        %v847 = vor.u32 1.1754944e-38, %v846
        %v848 = vsel %vm845, %v847, %v843
        %v849 = vmul.f32 1.0, %v848
        %v850 = vrcp.pop %v736
        %v851 = vmul.f32 %v736, %v850
        %v852 = vsub.f32 1.0, %v851
        %v853 = vmul.f32 %v850, %v852
        %v854 = vadd.f32 %v850, %v853
        %vm855 = vweird.f32 %v736
        %vm856 = vweird.f32 %v850
        %vm857 = vmor %vm855, %vm856
        %v858 = vsel %vm857, %v850, %v854
        %v859 = vand.u32 2147483647, %v736
        %vm860 = vcmp.eq.f32.partialorder %v859, 8.507059e+37
        %v861 = vand.u32 %v736, 2147483648
        %v862 = vor.u32 1.1754944e-38, %v861
        %v863 = vsel %vm860, %v862, %v858
        %v864 = vmul.f32 1.0, %v863
        %v865 = vrcp.pop %v737
        %v866 = vmul.f32 %v737, %v865
        %v867 = vsub.f32 1.0, %v866
        %v868 = vmul.f32 %v865, %v867
        %v869 = vadd.f32 %v865, %v868
        %vm870 = vweird.f32 %v737
        %vm871 = vweird.f32 %v865
        %vm872 = vmor %vm870, %vm871
        %v873 = vsel %vm872, %v865, %v869
        %v874 = vand.u32 2147483647, %v737
        %vm875 = vcmp.eq.f32.partialorder %v874, 8.507059e+37
        %v876 = vand.u32 %v737, 2147483648
        %v877 = vor.u32 1.1754944e-38, %v876
        %v878 = vsel %vm875, %v877, %v873
        %v879 = vmul.f32 1.0, %v878
        %v880 = vrcp.pop %v738
        %v881 = vmul.f32 %v738, %v880
        %v882 = vsub.f32 1.0, %v881
        %v883 = vmul.f32 %v880, %v882
        %v884 = vadd.f32 %v880, %v883
        %vm885 = vweird.f32 %v738
        %vm886 = vweird.f32 %v880
        %vm887 = vmor %vm885, %vm886
        %v888 = vsel %vm887, %v880, %v884
        %v889 = vand.u32 2147483647, %v738
        %vm890 = vcmp.eq.f32.partialorder %v889, 8.507059e+37
        %v891 = vand.u32 %v738, 2147483648
        %v892 = vor.u32 1.1754944e-38, %v891
        %v893 = vsel %vm890, %v892, %v888
        %v894 = vmul.f32 1.0, %v893
        %v895 = vrcp.pop %v739
        %v896 = vmul.f32 %v739, %v895
        %v897 = vsub.f32 1.0, %v896
        %v898 = vmul.f32 %v895, %v897
        %v899 = vadd.f32 %v895, %v898
        %vm900 = vweird.f32 %v739
        %vm901 = vweird.f32 %v895
        %vm902 = vmor %vm900, %vm901
        %v903 = vsel %vm902, %v895, %v899
        %v904 = vand.u32 2147483647, %v739
        %vm905 = vcmp.eq.f32.partialorder %v904, 8.507059e+37
        %v906 = vand.u32 %v739, 2147483648
        %v907 = vor.u32 1.1754944e-38, %v906
        %v908 = vsel %vm905, %v907, %v903
        %v909 = vmul.f32 1.0, %v908
        %v910 = vrcp.pop %v740
        %v911 = vmul.f32 %v740, %v910
        %v912 = vsub.f32 1.0, %v911
        %v913 = vmul.f32 %v910, %v912
        %v914 = vadd.f32 %v910, %v913
        %vm915 = vweird.f32 %v740
        %vm916 = vweird.f32 %v910
        %vm917 = vmor %vm915, %vm916
        %v918 = vsel %vm917, %v910, %v914
        %v919 = vand.u32 2147483647, %v740
        %vm920 = vcmp.eq.f32.partialorder %v919, 8.507059e+37
        %v921 = vand.u32 %v740, 2147483648
        %v922 = vor.u32 1.1754944e-38, %v921
        %v923 = vsel %vm920, %v922, %v918
        %v924 = vmul.f32 1.0, %v923
        %v925 = vrcp.pop %v741
        %v926 = vmul.f32 %v741, %v925
        %v927 = vsub.f32 1.0, %v926
        %v928 = vmul.f32 %v925, %v927
        %v929 = vadd.f32 %v925, %v928
        %vm930 = vweird.f32 %v741
        %vm931 = vweird.f32 %v925
        %vm932 = vmor %vm930, %vm931
        %v933 = vsel %vm932, %v925, %v929
        %v934 = vand.u32 2147483647, %v741
        %vm935 = vcmp.eq.f32.partialorder %v934, 8.507059e+37
        %v936 = vand.u32 %v741, 2147483648
        %v937 = vor.u32 1.1754944e-38, %v936
        %v938 = vsel %vm935, %v937, %v933
        %v939 = vmul.f32 1.0, %v938
        %v940 = vrcp.pop %v742
        %v941 = vmul.f32 %v742, %v940
        %v942 = vsub.f32 1.0, %v941
        %v943 = vmul.f32 %v940, %v942
        %v944 = vadd.f32 %v940, %v943
        %vm945 = vweird.f32 %v742
        %vm946 = vweird.f32 %v940
        %vm947 = vmor %vm945, %vm946
        %v948 = vsel %vm947, %v940, %v944
        %v949 = vand.u32 2147483647, %v742
        %vm950 = vcmp.eq.f32.partialorder %v949, 8.507059e+37
        %v951 = vand.u32 %v742, 2147483648
        %v952 = vor.u32 1.1754944e-38, %v951
        %v953 = vsel %vm950, %v952, %v948
        %v954 = vmul.f32 1.0, %v953
        %v955 = vrcp.pop %v743
        %v956 = vmul.f32 %v743, %v955
        %v957 = vsub.f32 1.0, %v956
        %v958 = vmul.f32 %v955, %v957
        %v959 = vadd.f32 %v955, %v958
        %vm960 = vweird.f32 %v743
        %vm961 = vweird.f32 %v955
        %vm962 = vmor %vm960, %vm961
        %v963 = vsel %vm962, %v955, %v959
        %v964 = vand.u32 2147483647, %v743
        %vm965 = vcmp.eq.f32.partialorder %v964, 8.507059e+37
        %v966 = vand.u32 %v743, 2147483648
        %v967 = vor.u32 1.1754944e-38, %v966
        %v968 = vsel %vm965, %v967, %v963
        %v969 = vmul.f32 1.0, %v968
        %v970 = vrcp.pop %v744
        %v971 = vmul.f32 %v744, %v970
        %v972 = vsub.f32 1.0, %v971
        %v973 = vmul.f32 %v970, %v972
        %v974 = vadd.f32 %v970, %v973
        %vm975 = vweird.f32 %v744
        %vm976 = vweird.f32 %v970
        %vm977 = vmor %vm975, %vm976
        %v978 = vsel %vm977, %v970, %v974
        %v979 = vand.u32 2147483647, %v744
        %vm980 = vcmp.eq.f32.partialorder %v979, 8.507059e+37
        %v981 = vand.u32 %v744, 2147483648
        %v982 = vor.u32 1.1754944e-38, %v981
        %v983 = vsel %vm980, %v982, %v978
        %v984 = vmul.f32 1.0, %v983
        %v985 = vmul.f32 %v583, %v759
        %v986 = vmul.f32 %v612, %v774
        %v987 = vmul.f32 %v641, %v789
        %v988 = vmul.f32 %v670, %v804
        %v989 = vmul.f32 %v586, %v819
        %v990 = vmul.f32 %v615, %v834
        %v991 = vmul.f32 %v644, %v849
        %v992 = vmul.f32 %v673, %v864
        %v993 = vmul.f32 %v589, %v879
        %v994 = vmul.f32 %v618, %v894
        %v995 = vmul.f32 %v647, %v909
        %v996 = vmul.f32 %v676, %v924
        %v997 = vmul.f32 %v592, %v939
        %v998 = vmul.f32 %v621, %v954
        %v999 = vmul.f32 %v650, %v969
        %v1000 = vmul.f32 %v679, %v984
        %v1001 = vld [vmem:[%s5] sm:$0xff]
        %v1002 = vld [vmem:[%s5 + $0x8] sm:$0xff]
        %v1003 = vld [vmem:[%s5 + $0x10] sm:$0xff]
        %v1004 = vld [vmem:[%s5 + $0x18] sm:$0xff]
        %v1005 = vld [vmem:[%s5 + $0x20] sm:$0xff]
        %v1006 = vld [vmem:[%s5 + $0x28] sm:$0xff]
        %v1007 = vld [vmem:[%s5 + $0x30] sm:$0xff]
        %v1008 = vld [vmem:[%s5 + $0x38] sm:$0xff]
        %v1009 = vld [vmem:[%s5 + $0x40] sm:$0xff]
        %v1010 = vld [vmem:[%s5 + $0x48] sm:$0xff]
        %v1011 = vld [vmem:[%s5 + $0x50] sm:$0xff]
        %v1012 = vld [vmem:[%s5 + $0x58] sm:$0xff]
        %v1013 = vld [vmem:[%s5 + $0x60] sm:$0xff]
        %v1014 = vld [vmem:[%s5 + $0x68] sm:$0xff]
        %v1015 = vld [vmem:[%s5 + $0x70] sm:$0xff]
        %v1016 = vld [vmem:[%s5 + $0x78] sm:$0xff]
        %v1017 = vld [vmem:[%s5 + $0x80] sm:$0xff]
        %v1018 = vld [vmem:[%s5 + $0x88] sm:$0xff]
        %v1019 = vld [vmem:[%s5 + $0x90] sm:$0xff]
        %v1020 = vld [vmem:[%s5 + $0x98] sm:$0xff]
        %v1021 = vld [vmem:[%s5 + $0xa0] sm:$0xff]
        %v1022 = vld [vmem:[%s5 + $0xa8] sm:$0xff]
        %v1023 = vld [vmem:[%s5 + $0xb0] sm:$0xff]
        %v1024 = vld [vmem:[%s5 + $0xb8] sm:$0xff]
        %v1025 = vld [vmem:[%s5 + $0xc0] sm:$0xff]
        %v1026 = vld [vmem:[%s5 + $0xc8] sm:$0xff]
        %v1027 = vld [vmem:[%s5 + $0xd0] sm:$0xff]
        %v1028 = vld [vmem:[%s5 + $0xd8] sm:$0xff]
        %v1029 = vld [vmem:[%s5 + $0xe0] sm:$0xff]
        %v1030 = vld [vmem:[%s5 + $0xe8] sm:$0xff]
        %v1031 = vld [vmem:[%s5 + $0xf0] sm:$0xff]
        %v1032 = vld [vmem:[%s5 + $0xf8] sm:$0xff]
        %v1033 = vld [vmem:[%s5 + $0x100] sm:$0xff]
        %v1034 = vld [vmem:[%s5 + $0x108] sm:$0xff]
        %v1035 = vld [vmem:[%s5 + $0x110] sm:$0xff]
        %v1036 = vld [vmem:[%s5 + $0x118] sm:$0xff]
        %v1037 = vld [vmem:[%s5 + $0x120] sm:$0xff]
        %v1038 = vld [vmem:[%s5 + $0x128] sm:$0xff]
        %v1039 = vld [vmem:[%s5 + $0x130] sm:$0xff]
        %v1040 = vld [vmem:[%s5 + $0x138] sm:$0xff]
        %v1041 = vld [vmem:[%s5 + $0x140] sm:$0xff]
        %v1042 = vld [vmem:[%s5 + $0x148] sm:$0xff]
        %v1043 = vld [vmem:[%s5 + $0x150] sm:$0xff]
        %v1044 = vld [vmem:[%s5 + $0x158] sm:$0xff]
        %v1045 = vld [vmem:[%s5 + $0x160] sm:$0xff]
        %v1046 = vld [vmem:[%s5 + $0x168] sm:$0xff]
        %v1047 = vld [vmem:[%s5 + $0x170] sm:$0xff]
        %v1048 = vld [vmem:[%s5 + $0x178] sm:$0xff]
        %v1049 = vld [vmem:[%s5 + $0x180] sm:$0xff]
        %v1050 = vld [vmem:[%s5 + $0x188] sm:$0xff]
        %v1051 = vld [vmem:[%s5 + $0x190] sm:$0xff]
        %v1052 = vld [vmem:[%s5 + $0x198] sm:$0xff]
        %v1053 = vld [vmem:[%s5 + $0x1a0] sm:$0xff]
        %v1054 = vld [vmem:[%s5 + $0x1a8] sm:$0xff]
        %v1055 = vld [vmem:[%s5 + $0x1b0] sm:$0xff]
        %v1056 = vld [vmem:[%s5 + $0x1b8] sm:$0xff]
        %v1057 = vld [vmem:[%s5 + $0x1c0] sm:$0xff]
        %v1058 = vld [vmem:[%s5 + $0x1c8] sm:$0xff]
        %v1059 = vld [vmem:[%s5 + $0x1d0] sm:$0xff]
        %v1060 = vld [vmem:[%s5 + $0x1d8] sm:$0xff]
        %v1061 = vld [vmem:[%s5 + $0x1e0] sm:$0xff]
        %v1062 = vld [vmem:[%s5 + $0x1e8] sm:$0xff]
        %v1063 = vld [vmem:[%s5 + $0x1f0] sm:$0xff]
        %v1064 = vld [vmem:[%s5 + $0x1f8] sm:$0xff]
        %v1065 = vld [vmem:[%s2 + $0x2] sm:$0x1]
        %v1066 = vperm.slane %v1065, 0
        %1067 = vmatpush.msra.mxu0 %v1016
        %1068 = vmatpush.msra.mxu0 %v1015
        %1069 = vmatpush.msra.mxu0 %v1014
        %1070 = vmatpush.msra.mxu0 %v1013
        %1071 = vmatpush.msra.mxu0 %v1012
        %1072 = vmatpush.msra.mxu0 %v1011
        %1073 = vmatpush.msra.mxu0 %v1010
        %1074 = vmatpush.msra.mxu0 %v1009
        %1075 = vmatpush.msra.mxu0 %v1008
        %1076 = vmatpush.msra.mxu0 %v1007
        %1077 = vmatpush.msra.mxu0 %v1006
        %1078 = vmatpush.msra.mxu0 %v1005
        %1079 = vmatpush.msra.mxu0 %v1004
        %1080 = vmatpush.msra.mxu0 %v1003
        %1081 = vmatpush.msra.mxu0 %v1002
        %1082 = vmatpush.msra.mxu0 %v1001
        %1083 = vmatmul.f32.gmra.mxu0 %v985
        %v1084 = vpop.f32.mrf.mxu0
        %v1085 = vadd.f32 %v1066, %v1084
        %1086 = vmatmul.f32.gmra.mxu0 %v989
        %v1087 = vpop.f32.mrf.mxu0
        %v1088 = vadd.f32 %v1066, %v1087
        %1089 = vmatmul.f32.gmra.mxu0 %v993
        %v1090 = vpop.f32.mrf.mxu0
        %v1091 = vadd.f32 %v1066, %v1090
        %1092 = vmatmul.f32.gmra.mxu0 %v997
        %v1093 = vpop.f32.mrf.mxu0
        %v1094 = vadd.f32 %v1066, %v1093
        %1095 = vdwg.mxu0
        %1096 = vmatpush.msra.mxu0 %v1032
        %1097 = vmatpush.msra.mxu0 %v1031
        %1098 = vmatpush.msra.mxu0 %v1030
        %1099 = vmatpush.msra.mxu0 %v1029
        %1100 = vmatpush.msra.mxu0 %v1028
        %1101 = vmatpush.msra.mxu0 %v1027
        %1102 = vmatpush.msra.mxu0 %v1026
        %1103 = vmatpush.msra.mxu0 %v1025
        %1104 = vmatpush.msra.mxu0 %v1024
        %1105 = vmatpush.msra.mxu0 %v1023
        %1106 = vmatpush.msra.mxu0 %v1022
        %1107 = vmatpush.msra.mxu0 %v1021
        %1108 = vmatpush.msra.mxu0 %v1020
        %1109 = vmatpush.msra.mxu0 %v1019
        %1110 = vmatpush.msra.mxu0 %v1018
        %1111 = vmatpush.msra.mxu0 %v1017
        %1112 = vmatmul.f32.gmra.mxu0 %v986
        %v1113 = vpop.f32.mrf.mxu0
        %v1114 = vadd.f32 %v1085, %v1113
        %1115 = vmatmul.f32.gmra.mxu0 %v990
        %v1116 = vpop.f32.mrf.mxu0
        %v1117 = vadd.f32 %v1088, %v1116
        %1118 = vmatmul.f32.gmra.mxu0 %v994
        %v1119 = vpop.f32.mrf.mxu0
        %v1120 = vadd.f32 %v1091, %v1119
        %1121 = vmatmul.f32.gmra.mxu0 %v998
        %v1122 = vpop.f32.mrf.mxu0
        %v1123 = vadd.f32 %v1094, %v1122
        %1124 = vdwg.mxu0
        %1125 = vmatpush.msra.mxu0 %v1048
        %1126 = vmatpush.msra.mxu0 %v1047
        %1127 = vmatpush.msra.mxu0 %v1046
        %1128 = vmatpush.msra.mxu0 %v1045
        %1129 = vmatpush.msra.mxu0 %v1044
        %1130 = vmatpush.msra.mxu0 %v1043
        %1131 = vmatpush.msra.mxu0 %v1042
        %1132 = vmatpush.msra.mxu0 %v1041
        %1133 = vmatpush.msra.mxu0 %v1040
        %1134 = vmatpush.msra.mxu0 %v1039
        %1135 = vmatpush.msra.mxu0 %v1038
        %1136 = vmatpush.msra.mxu0 %v1037
        %1137 = vmatpush.msra.mxu0 %v1036
        %1138 = vmatpush.msra.mxu0 %v1035
        %1139 = vmatpush.msra.mxu0 %v1034
        %1140 = vmatpush.msra.mxu0 %v1033
        %1141 = vmatmul.f32.gmra.mxu0 %v987
        %v1142 = vpop.f32.mrf.mxu0
        %v1143 = vadd.f32 %v1114, %v1142
        %1144 = vmatmul.f32.gmra.mxu0 %v991
        %v1145 = vpop.f32.mrf.mxu0
        %v1146 = vadd.f32 %v1117, %v1145
        %1147 = vmatmul.f32.gmra.mxu0 %v995
        %v1148 = vpop.f32.mrf.mxu0
        %v1149 = vadd.f32 %v1120, %v1148
        %1150 = vmatmul.f32.gmra.mxu0 %v999
        %v1151 = vpop.f32.mrf.mxu0
        %v1152 = vadd.f32 %v1123, %v1151
        %1153 = vdwg.mxu0
        %1154 = vmatpush.msra.mxu0 %v1064
        %1155 = vmatpush.msra.mxu0 %v1063
        %1156 = vmatpush.msra.mxu0 %v1062
        %1157 = vmatpush.msra.mxu0 %v1061
        %1158 = vmatpush.msra.mxu0 %v1060
        %1159 = vmatpush.msra.mxu0 %v1059
        %1160 = vmatpush.msra.mxu0 %v1058
        %1161 = vmatpush.msra.mxu0 %v1057
        %1162 = vmatpush.msra.mxu0 %v1056
        %1163 = vmatpush.msra.mxu0 %v1055
        %1164 = vmatpush.msra.mxu0 %v1054
        %1165 = vmatpush.msra.mxu0 %v1053
        %1166 = vmatpush.msra.mxu0 %v1052
        %1167 = vmatpush.msra.mxu0 %v1051
        %1168 = vmatpush.msra.mxu0 %v1050
        %1169 = vmatpush.msra.mxu0 %v1049
        %1170 = vmatmul.f32.gmra.mxu0 %v988
        %v1171 = vpop.f32.mrf.mxu0
        %v1172 = vadd.f32 %v1143, %v1171
        %1173 = vmatmul.f32.gmra.mxu0 %v992
        %v1174 = vpop.f32.mrf.mxu0
        %v1175 = vadd.f32 %v1146, %v1174
        %1176 = vmatmul.f32.gmra.mxu0 %v996
        %v1177 = vpop.f32.mrf.mxu0
        %v1178 = vadd.f32 %v1149, %v1177
        %1179 = vmatmul.f32.gmra.mxu0 %v1000
        %v1180 = vpop.f32.mrf.mxu0
        %v1181 = vadd.f32 %v1152, %v1180
        %1182 = vdwg.mxu0
        %v1183 = vadd.f32 %v1172, %v388
        %v1184 = vadd.f32 %v1175, %v389
        %v1185 = vadd.f32 %v1178, %v390
        %v1186 = vadd.f32 %v1181, %v391
        %1187 = vadd.xlane.f32.xlu0 %v1183
        %v1188 = vpop.xlane.xlu0 %1187
        %1189 = vadd.xlane.f32.xlu0 %v1184
        %v1190 = vpop.xlane.xlu0 %1189
        %1191 = vadd.xlane.f32.xlu0 %v1185
        %v1192 = vpop.xlane.xlu0 %1191
        %1193 = vadd.xlane.f32.xlu0 %v1186
        %v1194 = vpop.xlane.xlu0 %1193
        %v1195 = vmul.f32 %v1188, %v406
        %v1196 = vmul.f32 %v1190, %v406
        %v1197 = vmul.f32 %v1192, %v406
        %v1198 = vmul.f32 %v1194, %v406
        %v1199 = vsub.f32 %v1183, %v1195
        %v1200 = vsub.f32 %v1184, %v1196
        %v1201 = vsub.f32 %v1185, %v1197
        %v1202 = vsub.f32 %v1186, %v1198
        %v1203 = vmul.f32 %v1199, %v1199
        %v1204 = vmul.f32 %v1200, %v1200
        %v1205 = vmul.f32 %v1201, %v1201
        %v1206 = vmul.f32 %v1202, %v1202
        %1207 = vadd.xlane.f32.xlu0 %v1203
        %v1208 = vpop.xlane.xlu0 %1207
        %1209 = vadd.xlane.f32.xlu0 %v1204
        %v1210 = vpop.xlane.xlu0 %1209
        %1211 = vadd.xlane.f32.xlu0 %v1205
        %v1212 = vpop.xlane.xlu0 %1211
        %1213 = vadd.xlane.f32.xlu0 %v1206
        %v1214 = vpop.xlane.xlu0 %1213
        %v1215 = vmul.f32 %v1208, %v406
        %v1216 = vmul.f32 %v1210, %v406
        %v1217 = vmul.f32 %v1212, %v406
        %v1218 = vmul.f32 %v1214, %v406
        %v1219 = vadd.f32 %v1215, 1e-05
        %v1220 = vadd.f32 %v1216, 1e-05
        %v1221 = vadd.f32 %v1217, 1e-05
        %v1222 = vadd.f32 %v1218, 1e-05
        %v1223 = vrsqrt.pop %v1219
        %v1224 = vmul.f32 %v1223, %v1219
        %v1225 = vmul.f32 %v1224, %v1223
        %v1226 = vmul.f32 0.5, %v1225
        %v1227 = vsub.f32 1.5, %v1226
        %v1228 = vmul.f32 %v1223, %v1227
        %vm1229 = vweird.f32 %v1219
        %vm1230 = vweird.f32 %v1223
        %vm1231 = vmor %vm1229, %vm1230
        %v1232 = vsel %vm1231, %v1223, %v1228
        %v1233 = vrsqrt.pop %v1220
        %v1234 = vmul.f32 %v1233, %v1220
        %v1235 = vmul.f32 %v1234, %v1233
        %v1236 = vmul.f32 0.5, %v1235
        %v1237 = vsub.f32 1.5, %v1236
        %v1238 = vmul.f32 %v1233, %v1237
        %vm1239 = vweird.f32 %v1220
        %vm1240 = vweird.f32 %v1233
        %vm1241 = vmor %vm1239, %vm1240
        %v1242 = vsel %vm1241, %v1233, %v1238
        %v1243 = vrsqrt.pop %v1221
        %v1244 = vmul.f32 %v1243, %v1221
        %v1245 = vmul.f32 %v1244, %v1243
        %v1246 = vmul.f32 0.5, %v1245
        %v1247 = vsub.f32 1.5, %v1246
        %v1248 = vmul.f32 %v1243, %v1247
        %vm1249 = vweird.f32 %v1221
        %vm1250 = vweird.f32 %v1243
        %vm1251 = vmor %vm1249, %vm1250
        %v1252 = vsel %vm1251, %v1243, %v1248
        %v1253 = vrsqrt.pop %v1222
        %v1254 = vmul.f32 %v1253, %v1222
        %v1255 = vmul.f32 %v1254, %v1253
        %v1256 = vmul.f32 0.5, %v1255
        %v1257 = vsub.f32 1.5, %v1256
        %v1258 = vmul.f32 %v1253, %v1257
        %vm1259 = vweird.f32 %v1222
        %vm1260 = vweird.f32 %v1253
        %vm1261 = vmor %vm1259, %vm1260
        %v1262 = vsel %vm1261, %v1253, %v1258
        %v1263 = vmul.f32 %v1199, %v1232
        %v1264 = vmul.f32 %v1200, %v1242
        %v1265 = vmul.f32 %v1201, %v1252
        %v1266 = vmul.f32 %v1202, %v1262
        %v1267 = vld [vmem:[%s2 + $0x3] sm:$0x1]
        %v1268 = vperm.slane %v1267, 0
        %v1269 = vmul.f32 %v1263, %v1268
        %v1270 = vmul.f32 %v1264, %v1268
        %v1271 = vmul.f32 %v1265, %v1268
        %v1272 = vmul.f32 %v1266, %v1268
        %v1273 = vld [vmem:[%s2 + $0x4] sm:$0x1]
        %v1274 = vperm.slane %v1273, 0
        %v1275 = vadd.f32 %v1269, %v1274
        %v1276 = vadd.f32 %v1270, %v1274
        %v1277 = vadd.f32 %v1271, %v1274
        %v1278 = vadd.f32 %v1272, %v1274
        %v1279 = vld [vmem:[%s1] sm:$0xff]
        %v1280 = vld [vmem:[%s1 + $0x8] sm:$0xff]
        %v1281 = vld [vmem:[%s1 + $0x10] sm:$0xff]
        %v1282 = vld [vmem:[%s1 + $0x18] sm:$0xff]
        %v1283 = vadd.f32 %v1275, %v1279
        %v1284 = vadd.f32 %v1276, %v1280
        %v1285 = vadd.f32 %v1277, %v1281
        %v1286 = vadd.f32 %v1278, %v1282
        %v1287 = vld [vmem:[%s7] sm:$0xff]
        %v1288 = vld [vmem:[%s7 + $0x8] sm:$0xff]
        %v1289 = vld [vmem:[%s7 + $0x10] sm:$0xff]
        %v1290 = vld [vmem:[%s7 + $0x18] sm:$0xff]
        %v1291 = vld [vmem:[%s7 + $0x20] sm:$0xff]
        %v1292 = vld [vmem:[%s7 + $0x28] sm:$0xff]
        %v1293 = vld [vmem:[%s7 + $0x30] sm:$0xff]
        %v1294 = vld [vmem:[%s7 + $0x38] sm:$0xff]
        %v1295 = vld [vmem:[%s7 + $0x40] sm:$0xff]
        %v1296 = vld [vmem:[%s7 + $0x48] sm:$0xff]
        %v1297 = vld [vmem:[%s7 + $0x50] sm:$0xff]
        %v1298 = vld [vmem:[%s7 + $0x58] sm:$0xff]
        %v1299 = vld [vmem:[%s7 + $0x60] sm:$0xff]
        %v1300 = vld [vmem:[%s7 + $0x68] sm:$0xff]
        %v1301 = vld [vmem:[%s7 + $0x70] sm:$0xff]
        %v1302 = vld [vmem:[%s7 + $0x78] sm:$0xff]
        %s1303 = scalar_lea.vmem %s7, 1024
        %v1304 = vld [vmem:[%s1303] sm:$0xff]
        %v1305 = vld [vmem:[%s1303 + $0x8] sm:$0xff]
        %v1306 = vld [vmem:[%s1303 + $0x10] sm:$0xff]
        %v1307 = vld [vmem:[%s1303 + $0x18] sm:$0xff]
        %v1308 = vld [vmem:[%s1303 + $0x20] sm:$0xff]
        %v1309 = vld [vmem:[%s1303 + $0x28] sm:$0xff]
        %v1310 = vld [vmem:[%s1303 + $0x30] sm:$0xff]
        %v1311 = vld [vmem:[%s1303 + $0x38] sm:$0xff]
        %v1312 = vld [vmem:[%s1303 + $0x40] sm:$0xff]
        %v1313 = vld [vmem:[%s1303 + $0x48] sm:$0xff]
        %v1314 = vld [vmem:[%s1303 + $0x50] sm:$0xff]
        %v1315 = vld [vmem:[%s1303 + $0x58] sm:$0xff]
        %v1316 = vld [vmem:[%s1303 + $0x60] sm:$0xff]
        %v1317 = vld [vmem:[%s1303 + $0x68] sm:$0xff]
        %v1318 = vld [vmem:[%s1303 + $0x70] sm:$0xff]
        %v1319 = vld [vmem:[%s1303 + $0x78] sm:$0xff]
        %s1320 = scalar_lea.vmem %s7, 2048
        %v1321 = vld [vmem:[%s1320] sm:$0xff]
        %v1322 = vld [vmem:[%s1320 + $0x8] sm:$0xff]
        %v1323 = vld [vmem:[%s1320 + $0x10] sm:$0xff]
        %v1324 = vld [vmem:[%s1320 + $0x18] sm:$0xff]
        %v1325 = vld [vmem:[%s1320 + $0x20] sm:$0xff]
        %v1326 = vld [vmem:[%s1320 + $0x28] sm:$0xff]
        %v1327 = vld [vmem:[%s1320 + $0x30] sm:$0xff]
        %v1328 = vld [vmem:[%s1320 + $0x38] sm:$0xff]
        %v1329 = vld [vmem:[%s1320 + $0x40] sm:$0xff]
        %v1330 = vld [vmem:[%s1320 + $0x48] sm:$0xff]
        %v1331 = vld [vmem:[%s1320 + $0x50] sm:$0xff]
        %v1332 = vld [vmem:[%s1320 + $0x58] sm:$0xff]
        %v1333 = vld [vmem:[%s1320 + $0x60] sm:$0xff]
        %v1334 = vld [vmem:[%s1320 + $0x68] sm:$0xff]
        %v1335 = vld [vmem:[%s1320 + $0x70] sm:$0xff]
        %v1336 = vld [vmem:[%s1320 + $0x78] sm:$0xff]
        %v1337 = vld [vmem:[%s9] sm:$0xff]
        %v1338 = vld [vmem:[%s9 + $0x8] sm:$0xff]
        %v1339 = vld [vmem:[%s8] sm:$0x1]
        %v1341 = vperm.slane %v1339, 0
        %1343 = vmatpush.msra.mxu0 %v1302
        %1344 = vmatpush.msra.mxu0 %v1301
        %1345 = vmatpush.msra.mxu0 %v1300
        %1346 = vmatpush.msra.mxu0 %v1299
        %1347 = vmatpush.msra.mxu0 %v1298
        %1348 = vmatpush.msra.mxu0 %v1297
        %1349 = vmatpush.msra.mxu0 %v1296
        %1350 = vmatpush.msra.mxu0 %v1295
        %1351 = vmatpush.msra.mxu0 %v1294
        %1352 = vmatpush.msra.mxu0 %v1293
        %1353 = vmatpush.msra.mxu0 %v1292
        %1354 = vmatpush.msra.mxu0 %v1291
        %1355 = vmatpush.msra.mxu0 %v1290
        %1356 = vmatpush.msra.mxu0 %v1289
        %1357 = vmatpush.msra.mxu0 %v1288
        %1358 = vmatpush.msra.mxu0 %v1287
        %1359 = vmatmul.f32.gmra.mxu0 %v1283
        %v1360 = vpop.f32.mrf.mxu0
        %v1361 = vadd.f32 %v1341, %v1360
        %1362 = vmatmul.f32.gmra.mxu0 %v1284
        %v1363 = vpop.f32.mrf.mxu0
        %v1364 = vadd.f32 %v1341, %v1363
        %1365 = vmatmul.f32.gmra.mxu0 %v1285
        %v1366 = vpop.f32.mrf.mxu0
        %v1367 = vadd.f32 %v1341, %v1366
        %1368 = vmatmul.f32.gmra.mxu0 %v1286
        %v1369 = vpop.f32.mrf.mxu0
        %v1370 = vadd.f32 %v1341, %v1369
        %1371 = vdwg.mxu0
        %s1372 = scalar_lea.vmem %s8, 8
        %v1373 = vld [vmem:[%s1372] sm:$0x1]
        %v1375 = vperm.slane %v1373, 0
        %1377 = vmatpush.msra.mxu0 %v1319
        %1378 = vmatpush.msra.mxu0 %v1318
        %1379 = vmatpush.msra.mxu0 %v1317
        %1380 = vmatpush.msra.mxu0 %v1316
        %1381 = vmatpush.msra.mxu0 %v1315
        %1382 = vmatpush.msra.mxu0 %v1314
        %1383 = vmatpush.msra.mxu0 %v1313
        %1384 = vmatpush.msra.mxu0 %v1312
        %1385 = vmatpush.msra.mxu0 %v1311
        %1386 = vmatpush.msra.mxu0 %v1310
        %1387 = vmatpush.msra.mxu0 %v1309
        %1388 = vmatpush.msra.mxu0 %v1308
        %1389 = vmatpush.msra.mxu0 %v1307
        %1390 = vmatpush.msra.mxu0 %v1306
        %1391 = vmatpush.msra.mxu0 %v1305
        %1392 = vmatpush.msra.mxu0 %v1304
        %1393 = vmatmul.f32.gmra.mxu0 %v1283
        %v1394 = vpop.f32.mrf.mxu0
        %v1395 = vadd.f32 %v1375, %v1394
        %1396 = vmatmul.f32.gmra.mxu0 %v1284
        %v1397 = vpop.f32.mrf.mxu0
        %v1398 = vadd.f32 %v1375, %v1397
        %1399 = vmatmul.f32.gmra.mxu0 %v1285
        %v1400 = vpop.f32.mrf.mxu0
        %v1401 = vadd.f32 %v1375, %v1400
        %1402 = vmatmul.f32.gmra.mxu0 %v1286
        %v1403 = vpop.f32.mrf.mxu0
        %v1404 = vadd.f32 %v1375, %v1403
        %1405 = vdwg.mxu0
        %s1406 = scalar_lea.vmem %s8, 16
        %v1407 = vld [vmem:[%s1406] sm:$0x1]
        %v1409 = vperm.slane %v1407, 0
        %1411 = vmatpush.msra.mxu0 %v1336
        %1412 = vmatpush.msra.mxu0 %v1335
        %1413 = vmatpush.msra.mxu0 %v1334
        %1414 = vmatpush.msra.mxu0 %v1333
        %1415 = vmatpush.msra.mxu0 %v1332
        %1416 = vmatpush.msra.mxu0 %v1331
        %1417 = vmatpush.msra.mxu0 %v1330
        %1418 = vmatpush.msra.mxu0 %v1329
        %1419 = vmatpush.msra.mxu0 %v1328
        %1420 = vmatpush.msra.mxu0 %v1327
        %1421 = vmatpush.msra.mxu0 %v1326
        %1422 = vmatpush.msra.mxu0 %v1325
        %1423 = vmatpush.msra.mxu0 %v1324
        %1424 = vmatpush.msra.mxu0 %v1323
        %1425 = vmatpush.msra.mxu0 %v1322
        %1426 = vmatpush.msra.mxu0 %v1321
        %1427 = vmatmul.f32.gmra.mxu0 %v1283
        %v1428 = vpop.f32.mrf.mxu0
        %v1429 = vadd.f32 %v1409, %v1428
        %1430 = vmatmul.f32.gmra.mxu0 %v1284
        %v1431 = vpop.f32.mrf.mxu0
        %v1432 = vadd.f32 %v1409, %v1431
        %1433 = vmatmul.f32.gmra.mxu0 %v1285
        %v1434 = vpop.f32.mrf.mxu0
        %v1435 = vadd.f32 %v1409, %v1434
        %1436 = vmatmul.f32.gmra.mxu0 %v1286
        %v1437 = vpop.f32.mrf.mxu0
        %v1438 = vadd.f32 %v1409, %v1437
        %1439 = vdwg.mxu0
        %vm1440 = vcmask 130048
        %v1442 = vsel %vm1440, %v1361, 0
        %v1445 = vsel %vm1440, %v1364, 0
        %v1448 = vsel %vm1440, %v1395, 0
        %v1451 = vsel %vm1440, %v1398, 0
        %1453 = vmatpush.xpose.msra.mxu0 0.0
        %1454 = vmatpush.xpose.msra.mxu0 0.0
        %1455 = vmatpush.xpose.msra.mxu0 0.0
        %1456 = vmatpush.xpose.msra.mxu0 0.0
        %1457 = vmatpush.xpose.msra.mxu0 0.0
        %1458 = vmatpush.xpose.msra.mxu0 0.0
        %1459 = vmatpush.xpose.msra.mxu0 0.0
        %1460 = vmatpush.xpose.msra.mxu0 0.0
        %1461 = vmatpush.xpose.msra.mxu0 0.0
        %1462 = vmatpush.xpose.msra.mxu0 0.0
        %1463 = vmatpush.xpose.msra.mxu0 0.0
        %1464 = vmatpush.xpose.msra.mxu0 0.0
        %1465 = vmatpush.xpose.msra.mxu0 0.0
        %1466 = vmatpush.xpose.msra.mxu0 0.0
        %1467 = vmatpush.xpose.msra.mxu0 %v1451
        %1468 = vmatpush.xpose.msra.mxu0 %v1448
        %1469 = vmatmul.f32.gmra.mxu0 %v1442
        %v1470 = vpop.f32.mrf.mxu0
        %v1471 = vadd.f32 0.0, %v1470
        %1472 = vmatmul.f32.gmra.mxu0 %v1445
        %v1473 = vpop.f32.mrf.mxu0
        %v1474 = vadd.f32 0.0, %v1473
        %1475 = vdwg.mxu0
        %v1476 = vmul.f32 %v1471, 0.25
        %v1477 = vmul.f32 %v1474, 0.25
        %v1478 = vsel %vm1440, %v1476, -inf
        %1479 = vmax.xlane.f32.xlu0 %v1478
        %v1480 = vpop.xlane.xlu0 %1479
        %v1481 = vsel %vm1440, %v1477, -inf
        %1482 = vmax.xlane.f32.xlu0 %v1481
        %v1483 = vpop.xlane.xlu0 %1482
        %v1484 = vsub.f32 %v1476, %v1480
        %v1485 = vsub.f32 %v1477, %v1483
        %v1486 = vmul.f32 %v1484, 1.442695
        %v1487 = vpow.pop %v1486
        %v1488 = vmul.f32 %v1485, 1.442695
        %v1489 = vpow.pop %v1488
        %v1490 = vsel %vm1440, %v1487, 0.0
        %1491 = vadd.xlane.f32.xlu0 %v1490
        %v1492 = vpop.xlane.xlu0 %1491
        %v1493 = vsel %vm1440, %v1489, 0.0
        %1494 = vadd.xlane.f32.xlu0 %v1493
        %v1495 = vpop.xlane.xlu0 %1494
        %v1496 = vrcp.pop %v1492
        %v1497 = vrcp.pop %v1495
        %v1498 = vmul.f32 %v1487, %v1496
        %v1499 = vmul.f32 %v1489, %v1497
        %v1501 = vsel %vm1440, %v1498, 0
        %v1504 = vsel %vm1440, %v1499, 0
        %1506 = vmatpush.msra.mxu0 0.0
        %1507 = vmatpush.msra.mxu0 0.0
        %1508 = vmatpush.msra.mxu0 0.0
        %1509 = vmatpush.msra.mxu0 0.0
        %1510 = vmatpush.msra.mxu0 0.0
        %1511 = vmatpush.msra.mxu0 0.0
        %1512 = vmatpush.msra.mxu0 0.0
        %1513 = vmatpush.msra.mxu0 0.0
        %1514 = vmatpush.msra.mxu0 0.0
        %1515 = vmatpush.msra.mxu0 0.0
        %1516 = vmatpush.msra.mxu0 0.0
        %1517 = vmatpush.msra.mxu0 0.0
        %1518 = vmatpush.msra.mxu0 0.0
        %1519 = vmatpush.msra.mxu0 0.0
        %1520 = vmatpush.msra.mxu0 %v1432
        %1521 = vmatpush.msra.mxu0 %v1429
        %1522 = vmatmul.f32.gmra.mxu0 %v1501
        %v1523 = vpop.f32.mrf.mxu0
        %v1524 = vadd.f32 0.0, %v1523
        %1525 = vmatmul.f32.gmra.mxu0 %v1504
        %v1526 = vpop.f32.mrf.mxu0
        %v1527 = vadd.f32 0.0, %v1526
        %1528 = vdwg.mxu0
        %v1530 = vsel %vm1440, %v1367, 0
        %v1533 = vsel %vm1440, %v1370, 0
        %v1536 = vsel %vm1440, %v1401, 0
        %v1539 = vsel %vm1440, %v1404, 0
        %1541 = vmatpush.xpose.msra.mxu0 0.0
        %1542 = vmatpush.xpose.msra.mxu0 0.0
        %1543 = vmatpush.xpose.msra.mxu0 0.0
        %1544 = vmatpush.xpose.msra.mxu0 0.0
        %1545 = vmatpush.xpose.msra.mxu0 0.0
        %1546 = vmatpush.xpose.msra.mxu0 0.0
        %1547 = vmatpush.xpose.msra.mxu0 0.0
        %1548 = vmatpush.xpose.msra.mxu0 0.0
        %1549 = vmatpush.xpose.msra.mxu0 0.0
        %1550 = vmatpush.xpose.msra.mxu0 0.0
        %1551 = vmatpush.xpose.msra.mxu0 0.0
        %1552 = vmatpush.xpose.msra.mxu0 0.0
        %1553 = vmatpush.xpose.msra.mxu0 0.0
        %1554 = vmatpush.xpose.msra.mxu0 0.0
        %1555 = vmatpush.xpose.msra.mxu0 %v1539
        %1556 = vmatpush.xpose.msra.mxu0 %v1536
        %1557 = vmatmul.f32.gmra.mxu0 %v1530
        %v1558 = vpop.f32.mrf.mxu0
        %v1559 = vadd.f32 0.0, %v1558
        %1560 = vmatmul.f32.gmra.mxu0 %v1533
        %v1561 = vpop.f32.mrf.mxu0
        %v1562 = vadd.f32 0.0, %v1561
        %1563 = vdwg.mxu0
        %v1564 = vmul.f32 %v1559, 0.25
        %v1565 = vmul.f32 %v1562, 0.25
        %v1566 = vsel %vm1440, %v1564, -inf
        %1567 = vmax.xlane.f32.xlu0 %v1566
        %v1568 = vpop.xlane.xlu0 %1567
        %v1569 = vsel %vm1440, %v1565, -inf
        %1570 = vmax.xlane.f32.xlu0 %v1569
        %v1571 = vpop.xlane.xlu0 %1570
        %v1572 = vsub.f32 %v1564, %v1568
        %v1573 = vsub.f32 %v1565, %v1571
        %v1574 = vmul.f32 %v1572, 1.442695
        %v1575 = vpow.pop %v1574
        %v1576 = vmul.f32 %v1573, 1.442695
        %v1577 = vpow.pop %v1576
        %v1578 = vsel %vm1440, %v1575, 0.0
        %1579 = vadd.xlane.f32.xlu0 %v1578
        %v1580 = vpop.xlane.xlu0 %1579
        %v1581 = vsel %vm1440, %v1577, 0.0
        %1582 = vadd.xlane.f32.xlu0 %v1581
        %v1583 = vpop.xlane.xlu0 %1582
        %v1584 = vrcp.pop %v1580
        %v1585 = vrcp.pop %v1583
        %v1586 = vmul.f32 %v1575, %v1584
        %v1587 = vmul.f32 %v1577, %v1585
        %v1589 = vsel %vm1440, %v1586, 0
        %v1592 = vsel %vm1440, %v1587, 0
        %1594 = vmatpush.msra.mxu0 0.0
        %1595 = vmatpush.msra.mxu0 0.0
        %1596 = vmatpush.msra.mxu0 0.0
        %1597 = vmatpush.msra.mxu0 0.0
        %1598 = vmatpush.msra.mxu0 0.0
        %1599 = vmatpush.msra.mxu0 0.0
        %1600 = vmatpush.msra.mxu0 0.0
        %1601 = vmatpush.msra.mxu0 0.0
        %1602 = vmatpush.msra.mxu0 0.0
        %1603 = vmatpush.msra.mxu0 0.0
        %1604 = vmatpush.msra.mxu0 0.0
        %1605 = vmatpush.msra.mxu0 0.0
        %1606 = vmatpush.msra.mxu0 0.0
        %1607 = vmatpush.msra.mxu0 0.0
        %1608 = vmatpush.msra.mxu0 %v1438
        %1609 = vmatpush.msra.mxu0 %v1435
        %1610 = vmatmul.f32.gmra.mxu0 %v1589
        %v1611 = vpop.f32.mrf.mxu0
        %v1612 = vadd.f32 0.0, %v1611
        %1613 = vmatmul.f32.gmra.mxu0 %v1592
        %v1614 = vpop.f32.mrf.mxu0
        %v1615 = vadd.f32 0.0, %v1614
        %1616 = vdwg.mxu0
        %s1617 = scalar_lea.vmem %s7, 128
        %v1618 = vld [vmem:[%s1617] sm:$0xff]
        %v1619 = vld [vmem:[%s1617 + $0x8] sm:$0xff]
        %v1620 = vld [vmem:[%s1617 + $0x10] sm:$0xff]
        %v1621 = vld [vmem:[%s1617 + $0x18] sm:$0xff]
        %v1622 = vld [vmem:[%s1617 + $0x20] sm:$0xff]
        %v1623 = vld [vmem:[%s1617 + $0x28] sm:$0xff]
        %v1624 = vld [vmem:[%s1617 + $0x30] sm:$0xff]
        %v1625 = vld [vmem:[%s1617 + $0x38] sm:$0xff]
        %v1626 = vld [vmem:[%s1617 + $0x40] sm:$0xff]
        %v1627 = vld [vmem:[%s1617 + $0x48] sm:$0xff]
        %v1628 = vld [vmem:[%s1617 + $0x50] sm:$0xff]
        %v1629 = vld [vmem:[%s1617 + $0x58] sm:$0xff]
        %v1630 = vld [vmem:[%s1617 + $0x60] sm:$0xff]
        %v1631 = vld [vmem:[%s1617 + $0x68] sm:$0xff]
        %v1632 = vld [vmem:[%s1617 + $0x70] sm:$0xff]
        %v1633 = vld [vmem:[%s1617 + $0x78] sm:$0xff]
        %s1634 = scalar_lea.vmem %s7, 1152
        %v1635 = vld [vmem:[%s1634] sm:$0xff]
        %v1636 = vld [vmem:[%s1634 + $0x8] sm:$0xff]
        %v1637 = vld [vmem:[%s1634 + $0x10] sm:$0xff]
        %v1638 = vld [vmem:[%s1634 + $0x18] sm:$0xff]
        %v1639 = vld [vmem:[%s1634 + $0x20] sm:$0xff]
        %v1640 = vld [vmem:[%s1634 + $0x28] sm:$0xff]
        %v1641 = vld [vmem:[%s1634 + $0x30] sm:$0xff]
        %v1642 = vld [vmem:[%s1634 + $0x38] sm:$0xff]
        %v1643 = vld [vmem:[%s1634 + $0x40] sm:$0xff]
        %v1644 = vld [vmem:[%s1634 + $0x48] sm:$0xff]
        %v1645 = vld [vmem:[%s1634 + $0x50] sm:$0xff]
        %v1646 = vld [vmem:[%s1634 + $0x58] sm:$0xff]
        %v1647 = vld [vmem:[%s1634 + $0x60] sm:$0xff]
        %v1648 = vld [vmem:[%s1634 + $0x68] sm:$0xff]
        %v1649 = vld [vmem:[%s1634 + $0x70] sm:$0xff]
        %v1650 = vld [vmem:[%s1634 + $0x78] sm:$0xff]
        %s1651 = scalar_lea.vmem %s7, 2176
        %v1652 = vld [vmem:[%s1651] sm:$0xff]
        %v1653 = vld [vmem:[%s1651 + $0x8] sm:$0xff]
        %v1654 = vld [vmem:[%s1651 + $0x10] sm:$0xff]
        %v1655 = vld [vmem:[%s1651 + $0x18] sm:$0xff]
        %v1656 = vld [vmem:[%s1651 + $0x20] sm:$0xff]
        %v1657 = vld [vmem:[%s1651 + $0x28] sm:$0xff]
        %v1658 = vld [vmem:[%s1651 + $0x30] sm:$0xff]
        %v1659 = vld [vmem:[%s1651 + $0x38] sm:$0xff]
        %v1660 = vld [vmem:[%s1651 + $0x40] sm:$0xff]
        %v1661 = vld [vmem:[%s1651 + $0x48] sm:$0xff]
        %v1662 = vld [vmem:[%s1651 + $0x50] sm:$0xff]
        %v1663 = vld [vmem:[%s1651 + $0x58] sm:$0xff]
        %v1664 = vld [vmem:[%s1651 + $0x60] sm:$0xff]
        %v1665 = vld [vmem:[%s1651 + $0x68] sm:$0xff]
        %v1666 = vld [vmem:[%s1651 + $0x70] sm:$0xff]
        %v1667 = vld [vmem:[%s1651 + $0x78] sm:$0xff]
        %s1668 = scalar_lea.vmem %s9, 16
        %v1669 = vld [vmem:[%s1668] sm:$0xff]
        %v1670 = vld [vmem:[%s1668 + $0x8] sm:$0xff]
        %s1671 = scalar_lea.vmem %s8, 1
        %v1672 = vld [vmem:[%s1671] sm:$0x1]
        %v1674 = vperm.slane %v1672, 0
        %1676 = vmatpush.msra.mxu0 %v1633
        %1677 = vmatpush.msra.mxu0 %v1632
        %1678 = vmatpush.msra.mxu0 %v1631
        %1679 = vmatpush.msra.mxu0 %v1630
        %1680 = vmatpush.msra.mxu0 %v1629
        %1681 = vmatpush.msra.mxu0 %v1628
        %1682 = vmatpush.msra.mxu0 %v1627
        %1683 = vmatpush.msra.mxu0 %v1626
        %1684 = vmatpush.msra.mxu0 %v1625
        %1685 = vmatpush.msra.mxu0 %v1624
        %1686 = vmatpush.msra.mxu0 %v1623
        %1687 = vmatpush.msra.mxu0 %v1622
        %1688 = vmatpush.msra.mxu0 %v1621
        %1689 = vmatpush.msra.mxu0 %v1620
        %1690 = vmatpush.msra.mxu0 %v1619
        %1691 = vmatpush.msra.mxu0 %v1618
        %1692 = vmatmul.f32.gmra.mxu0 %v1283
        %v1693 = vpop.f32.mrf.mxu0
        %v1694 = vadd.f32 %v1674, %v1693
        %1695 = vmatmul.f32.gmra.mxu0 %v1284
        %v1696 = vpop.f32.mrf.mxu0
        %v1697 = vadd.f32 %v1674, %v1696
        %1698 = vmatmul.f32.gmra.mxu0 %v1285
        %v1699 = vpop.f32.mrf.mxu0
        %v1700 = vadd.f32 %v1674, %v1699
        %1701 = vmatmul.f32.gmra.mxu0 %v1286
        %v1702 = vpop.f32.mrf.mxu0
        %v1703 = vadd.f32 %v1674, %v1702
        %1704 = vdwg.mxu0
        %s1705 = scalar_lea.vmem %s8, 9
        %v1706 = vld [vmem:[%s1705] sm:$0x1]
        %v1708 = vperm.slane %v1706, 0
        %1710 = vmatpush.msra.mxu0 %v1650
        %1711 = vmatpush.msra.mxu0 %v1649
        %1712 = vmatpush.msra.mxu0 %v1648
        %1713 = vmatpush.msra.mxu0 %v1647
        %1714 = vmatpush.msra.mxu0 %v1646
        %1715 = vmatpush.msra.mxu0 %v1645
        %1716 = vmatpush.msra.mxu0 %v1644
        %1717 = vmatpush.msra.mxu0 %v1643
        %1718 = vmatpush.msra.mxu0 %v1642
        %1719 = vmatpush.msra.mxu0 %v1641
        %1720 = vmatpush.msra.mxu0 %v1640
        %1721 = vmatpush.msra.mxu0 %v1639
        %1722 = vmatpush.msra.mxu0 %v1638
        %1723 = vmatpush.msra.mxu0 %v1637
        %1724 = vmatpush.msra.mxu0 %v1636
        %1725 = vmatpush.msra.mxu0 %v1635
        %1726 = vmatmul.f32.gmra.mxu0 %v1283
        %v1727 = vpop.f32.mrf.mxu0
        %v1728 = vadd.f32 %v1708, %v1727
        %1729 = vmatmul.f32.gmra.mxu0 %v1284
        %v1730 = vpop.f32.mrf.mxu0
        %v1731 = vadd.f32 %v1708, %v1730
        %1732 = vmatmul.f32.gmra.mxu0 %v1285
        %v1733 = vpop.f32.mrf.mxu0
        %v1734 = vadd.f32 %v1708, %v1733
        %1735 = vmatmul.f32.gmra.mxu0 %v1286
        %v1736 = vpop.f32.mrf.mxu0
        %v1737 = vadd.f32 %v1708, %v1736
        %1738 = vdwg.mxu0
        %s1739 = scalar_lea.vmem %s8, 17
        %v1740 = vld [vmem:[%s1739] sm:$0x1]
        %v1742 = vperm.slane %v1740, 0
        %1744 = vmatpush.msra.mxu0 %v1667
        %1745 = vmatpush.msra.mxu0 %v1666
        %1746 = vmatpush.msra.mxu0 %v1665
        %1747 = vmatpush.msra.mxu0 %v1664
        %1748 = vmatpush.msra.mxu0 %v1663
        %1749 = vmatpush.msra.mxu0 %v1662
        %1750 = vmatpush.msra.mxu0 %v1661
        %1751 = vmatpush.msra.mxu0 %v1660
        %1752 = vmatpush.msra.mxu0 %v1659
        %1753 = vmatpush.msra.mxu0 %v1658
        %1754 = vmatpush.msra.mxu0 %v1657
        %1755 = vmatpush.msra.mxu0 %v1656
        %1756 = vmatpush.msra.mxu0 %v1655
        %1757 = vmatpush.msra.mxu0 %v1654
        %1758 = vmatpush.msra.mxu0 %v1653
        %1759 = vmatpush.msra.mxu0 %v1652
        %1760 = vmatmul.f32.gmra.mxu0 %v1283
        %v1761 = vpop.f32.mrf.mxu0
        %v1762 = vadd.f32 %v1742, %v1761
        %1763 = vmatmul.f32.gmra.mxu0 %v1284
        %v1764 = vpop.f32.mrf.mxu0
        %v1765 = vadd.f32 %v1742, %v1764
        %1766 = vmatmul.f32.gmra.mxu0 %v1285
        %v1767 = vpop.f32.mrf.mxu0
        %v1768 = vadd.f32 %v1742, %v1767
        %1769 = vmatmul.f32.gmra.mxu0 %v1286
        %v1770 = vpop.f32.mrf.mxu0
        %v1771 = vadd.f32 %v1742, %v1770
        %1772 = vdwg.mxu0
        %v1774 = vsel %vm1440, %v1694, 0
        %v1777 = vsel %vm1440, %v1697, 0
        %v1780 = vsel %vm1440, %v1728, 0
        %v1783 = vsel %vm1440, %v1731, 0
        %1785 = vmatpush.xpose.msra.mxu0 0.0
        %1786 = vmatpush.xpose.msra.mxu0 0.0
        %1787 = vmatpush.xpose.msra.mxu0 0.0
        %1788 = vmatpush.xpose.msra.mxu0 0.0
        %1789 = vmatpush.xpose.msra.mxu0 0.0
        %1790 = vmatpush.xpose.msra.mxu0 0.0
        %1791 = vmatpush.xpose.msra.mxu0 0.0
        %1792 = vmatpush.xpose.msra.mxu0 0.0
        %1793 = vmatpush.xpose.msra.mxu0 0.0
        %1794 = vmatpush.xpose.msra.mxu0 0.0
        %1795 = vmatpush.xpose.msra.mxu0 0.0
        %1796 = vmatpush.xpose.msra.mxu0 0.0
        %1797 = vmatpush.xpose.msra.mxu0 0.0
        %1798 = vmatpush.xpose.msra.mxu0 0.0
        %1799 = vmatpush.xpose.msra.mxu0 %v1783
        %1800 = vmatpush.xpose.msra.mxu0 %v1780
        %1801 = vmatmul.f32.gmra.mxu0 %v1774
        %v1802 = vpop.f32.mrf.mxu0
        %v1803 = vadd.f32 0.0, %v1802
        %1804 = vmatmul.f32.gmra.mxu0 %v1777
        %v1805 = vpop.f32.mrf.mxu0
        %v1806 = vadd.f32 0.0, %v1805
        %1807 = vdwg.mxu0
        %v1808 = vmul.f32 %v1803, 0.25
        %v1809 = vmul.f32 %v1806, 0.25
        %v1810 = vsel %vm1440, %v1808, -inf
        %1811 = vmax.xlane.f32.xlu0 %v1810
        %v1812 = vpop.xlane.xlu0 %1811
        %v1813 = vsel %vm1440, %v1809, -inf
        %1814 = vmax.xlane.f32.xlu0 %v1813
        %v1815 = vpop.xlane.xlu0 %1814
        %v1816 = vsub.f32 %v1808, %v1812
        %v1817 = vsub.f32 %v1809, %v1815
        %v1818 = vmul.f32 %v1816, 1.442695
        %v1819 = vpow.pop %v1818
        %v1820 = vmul.f32 %v1817, 1.442695
        %v1821 = vpow.pop %v1820
        %v1822 = vsel %vm1440, %v1819, 0.0
        %1823 = vadd.xlane.f32.xlu0 %v1822
        %v1824 = vpop.xlane.xlu0 %1823
        %v1825 = vsel %vm1440, %v1821, 0.0
        %1826 = vadd.xlane.f32.xlu0 %v1825
        %v1827 = vpop.xlane.xlu0 %1826
        %v1828 = vrcp.pop %v1824
        %v1829 = vrcp.pop %v1827
        %v1830 = vmul.f32 %v1819, %v1828
        %v1831 = vmul.f32 %v1821, %v1829
        %v1833 = vsel %vm1440, %v1830, 0
        %v1836 = vsel %vm1440, %v1831, 0
        %1838 = vmatpush.msra.mxu0 0.0
        %1839 = vmatpush.msra.mxu0 0.0
        %1840 = vmatpush.msra.mxu0 0.0
        %1841 = vmatpush.msra.mxu0 0.0
        %1842 = vmatpush.msra.mxu0 0.0
        %1843 = vmatpush.msra.mxu0 0.0
        %1844 = vmatpush.msra.mxu0 0.0
        %1845 = vmatpush.msra.mxu0 0.0
        %1846 = vmatpush.msra.mxu0 0.0
        %1847 = vmatpush.msra.mxu0 0.0
        %1848 = vmatpush.msra.mxu0 0.0
        %1849 = vmatpush.msra.mxu0 0.0
        %1850 = vmatpush.msra.mxu0 0.0
        %1851 = vmatpush.msra.mxu0 0.0
        %1852 = vmatpush.msra.mxu0 %v1765
        %1853 = vmatpush.msra.mxu0 %v1762
        %1854 = vmatmul.f32.gmra.mxu0 %v1833
        %v1855 = vpop.f32.mrf.mxu0
        %v1856 = vadd.f32 0.0, %v1855
        %1857 = vmatmul.f32.gmra.mxu0 %v1836
        %v1858 = vpop.f32.mrf.mxu0
        %v1859 = vadd.f32 0.0, %v1858
        %1860 = vdwg.mxu0
        %v1862 = vsel %vm1440, %v1856, 0
        %v1865 = vsel %vm1440, %v1859, 0
        %1867 = vmatpush.msra.mxu0 0.0
        %1868 = vmatpush.msra.mxu0 0.0
        %1869 = vmatpush.msra.mxu0 0.0
        %1870 = vmatpush.msra.mxu0 0.0
        %1871 = vmatpush.msra.mxu0 0.0
        %1872 = vmatpush.msra.mxu0 0.0
        %1873 = vmatpush.msra.mxu0 0.0
        %1874 = vmatpush.msra.mxu0 0.0
        %1875 = vmatpush.msra.mxu0 0.0
        %1876 = vmatpush.msra.mxu0 0.0
        %1877 = vmatpush.msra.mxu0 0.0
        %1878 = vmatpush.msra.mxu0 0.0
        %1879 = vmatpush.msra.mxu0 0.0
        %1880 = vmatpush.msra.mxu0 0.0
        %1881 = vmatpush.msra.mxu0 %v1670
        %1882 = vmatpush.msra.mxu0 %v1669
        %1883 = vmatmul.f32.gmra.mxu0 %v1862
        %v1884 = vpop.f32.mrf.mxu0
        %v1885 = vadd.f32 0.0, %v1884
        %1886 = vmatmul.f32.gmra.mxu0 %v1865
        %v1887 = vpop.f32.mrf.mxu0
        %v1888 = vadd.f32 0.0, %v1887
        %1889 = vdwg.mxu0
        %v1891 = vsel %vm1440, %v1524, 0
        %v1894 = vsel %vm1440, %v1527, 0
        %1896 = vmatpush.msra.mxu0 0.0
        %1897 = vmatpush.msra.mxu0 0.0
        %1898 = vmatpush.msra.mxu0 0.0
        %1899 = vmatpush.msra.mxu0 0.0
        %1900 = vmatpush.msra.mxu0 0.0
        %1901 = vmatpush.msra.mxu0 0.0
        %1902 = vmatpush.msra.mxu0 0.0
        %1903 = vmatpush.msra.mxu0 0.0
        %1904 = vmatpush.msra.mxu0 0.0
        %1905 = vmatpush.msra.mxu0 0.0
        %1906 = vmatpush.msra.mxu0 0.0
        %1907 = vmatpush.msra.mxu0 0.0
        %1908 = vmatpush.msra.mxu0 0.0
        %1909 = vmatpush.msra.mxu0 0.0
        %1910 = vmatpush.msra.mxu0 %v1338
        %1911 = vmatpush.msra.mxu0 %v1337
        %1912 = vmatmul.f32.gmra.mxu0 %v1891
        %v1913 = vpop.f32.mrf.mxu0
        %v1914 = vadd.f32 %v1885, %v1913
        %1915 = vmatmul.f32.gmra.mxu0 %v1894
        %v1916 = vpop.f32.mrf.mxu0
        %v1917 = vadd.f32 %v1888, %v1916
        %1918 = vdwg.mxu0
        %v1920 = vsel %vm1440, %v1700, 0
        %v1923 = vsel %vm1440, %v1703, 0
        %v1926 = vsel %vm1440, %v1734, 0
        %v1929 = vsel %vm1440, %v1737, 0
        %1931 = vmatpush.xpose.msra.mxu0 0.0
        %1932 = vmatpush.xpose.msra.mxu0 0.0
        %1933 = vmatpush.xpose.msra.mxu0 0.0
        %1934 = vmatpush.xpose.msra.mxu0 0.0
        %1935 = vmatpush.xpose.msra.mxu0 0.0
        %1936 = vmatpush.xpose.msra.mxu0 0.0
        %1937 = vmatpush.xpose.msra.mxu0 0.0
        %1938 = vmatpush.xpose.msra.mxu0 0.0
        %1939 = vmatpush.xpose.msra.mxu0 0.0
        %1940 = vmatpush.xpose.msra.mxu0 0.0
        %1941 = vmatpush.xpose.msra.mxu0 0.0
        %1942 = vmatpush.xpose.msra.mxu0 0.0
        %1943 = vmatpush.xpose.msra.mxu0 0.0
        %1944 = vmatpush.xpose.msra.mxu0 0.0
        %1945 = vmatpush.xpose.msra.mxu0 %v1929
        %1946 = vmatpush.xpose.msra.mxu0 %v1926
        %1947 = vmatmul.f32.gmra.mxu0 %v1920
        %v1948 = vpop.f32.mrf.mxu0
        %v1949 = vadd.f32 0.0, %v1948
        %1950 = vmatmul.f32.gmra.mxu0 %v1923
        %v1951 = vpop.f32.mrf.mxu0
        %v1952 = vadd.f32 0.0, %v1951
        %1953 = vdwg.mxu0
        %v1954 = vmul.f32 %v1949, 0.25
        %v1955 = vmul.f32 %v1952, 0.25
        %v1956 = vsel %vm1440, %v1954, -inf
        %1957 = vmax.xlane.f32.xlu0 %v1956
        %v1958 = vpop.xlane.xlu0 %1957
        %v1959 = vsel %vm1440, %v1955, -inf
        %1960 = vmax.xlane.f32.xlu0 %v1959
        %v1961 = vpop.xlane.xlu0 %1960
        %v1962 = vsub.f32 %v1954, %v1958
        %v1963 = vsub.f32 %v1955, %v1961
        %v1964 = vmul.f32 %v1962, 1.442695
        %v1965 = vpow.pop %v1964
        %v1966 = vmul.f32 %v1963, 1.442695
        %v1967 = vpow.pop %v1966
        %v1968 = vsel %vm1440, %v1965, 0.0
        %1969 = vadd.xlane.f32.xlu0 %v1968
        %v1970 = vpop.xlane.xlu0 %1969
        %v1971 = vsel %vm1440, %v1967, 0.0
        %1972 = vadd.xlane.f32.xlu0 %v1971
        %v1973 = vpop.xlane.xlu0 %1972
        %v1974 = vrcp.pop %v1970
        %v1975 = vrcp.pop %v1973
        %v1976 = vmul.f32 %v1965, %v1974
        %v1977 = vmul.f32 %v1967, %v1975
        %v1979 = vsel %vm1440, %v1976, 0
        %v1982 = vsel %vm1440, %v1977, 0
        %1984 = vmatpush.msra.mxu0 0.0
        %1985 = vmatpush.msra.mxu0 0.0
        %1986 = vmatpush.msra.mxu0 0.0
        %1987 = vmatpush.msra.mxu0 0.0
        %1988 = vmatpush.msra.mxu0 0.0
        %1989 = vmatpush.msra.mxu0 0.0
        %1990 = vmatpush.msra.mxu0 0.0
        %1991 = vmatpush.msra.mxu0 0.0
        %1992 = vmatpush.msra.mxu0 0.0
        %1993 = vmatpush.msra.mxu0 0.0
        %1994 = vmatpush.msra.mxu0 0.0
        %1995 = vmatpush.msra.mxu0 0.0
        %1996 = vmatpush.msra.mxu0 0.0
        %1997 = vmatpush.msra.mxu0 0.0
        %1998 = vmatpush.msra.mxu0 %v1771
        %1999 = vmatpush.msra.mxu0 %v1768
        %2000 = vmatmul.f32.gmra.mxu0 %v1979
        %v2001 = vpop.f32.mrf.mxu0
        %v2002 = vadd.f32 0.0, %v2001
        %2003 = vmatmul.f32.gmra.mxu0 %v1982
        %v2004 = vpop.f32.mrf.mxu0
        %v2005 = vadd.f32 0.0, %v2004
        %2006 = vdwg.mxu0
        %v2008 = vsel %vm1440, %v2002, 0
        %v2011 = vsel %vm1440, %v2005, 0
        %2013 = vmatpush.msra.mxu0 0.0
        %2014 = vmatpush.msra.mxu0 0.0
        %2015 = vmatpush.msra.mxu0 0.0
        %2016 = vmatpush.msra.mxu0 0.0
        %2017 = vmatpush.msra.mxu0 0.0
        %2018 = vmatpush.msra.mxu0 0.0
        %2019 = vmatpush.msra.mxu0 0.0
        %2020 = vmatpush.msra.mxu0 0.0
        %2021 = vmatpush.msra.mxu0 0.0
        %2022 = vmatpush.msra.mxu0 0.0
        %2023 = vmatpush.msra.mxu0 0.0
        %2024 = vmatpush.msra.mxu0 0.0
        %2025 = vmatpush.msra.mxu0 0.0
        %2026 = vmatpush.msra.mxu0 0.0
        %2027 = vmatpush.msra.mxu0 %v1670
        %2028 = vmatpush.msra.mxu0 %v1669
        %2029 = vmatmul.f32.gmra.mxu0 %v2008
        %v2030 = vpop.f32.mrf.mxu0
        %v2031 = vadd.f32 0.0, %v2030
        %2032 = vmatmul.f32.gmra.mxu0 %v2011
        %v2033 = vpop.f32.mrf.mxu0
        %v2034 = vadd.f32 0.0, %v2033
        %2035 = vdwg.mxu0
        %v2037 = vsel %vm1440, %v1612, 0
        %v2040 = vsel %vm1440, %v1615, 0
        %2042 = vmatpush.msra.mxu0 0.0
        %2043 = vmatpush.msra.mxu0 0.0
        %2044 = vmatpush.msra.mxu0 0.0
        %2045 = vmatpush.msra.mxu0 0.0
        %2046 = vmatpush.msra.mxu0 0.0
        %2047 = vmatpush.msra.mxu0 0.0
        %2048 = vmatpush.msra.mxu0 0.0
        %2049 = vmatpush.msra.mxu0 0.0
        %2050 = vmatpush.msra.mxu0 0.0
        %2051 = vmatpush.msra.mxu0 0.0
        %2052 = vmatpush.msra.mxu0 0.0
        %2053 = vmatpush.msra.mxu0 0.0
        %2054 = vmatpush.msra.mxu0 0.0
        %2055 = vmatpush.msra.mxu0 0.0
        %2056 = vmatpush.msra.mxu0 %v1338
        %2057 = vmatpush.msra.mxu0 %v1337
        %2058 = vmatmul.f32.gmra.mxu0 %v2037
        %v2059 = vpop.f32.mrf.mxu0
        %v2060 = vadd.f32 %v2031, %v2059
        %2061 = vmatmul.f32.gmra.mxu0 %v2040
        %v2062 = vpop.f32.mrf.mxu0
        %v2063 = vadd.f32 %v2034, %v2062
        %2064 = vdwg.mxu0
        %s2065 = scalar_lea.vmem %s7, 256
        %v2066 = vld [vmem:[%s2065] sm:$0xff]
        %v2067 = vld [vmem:[%s2065 + $0x8] sm:$0xff]
        %v2068 = vld [vmem:[%s2065 + $0x10] sm:$0xff]
        %v2069 = vld [vmem:[%s2065 + $0x18] sm:$0xff]
        %v2070 = vld [vmem:[%s2065 + $0x20] sm:$0xff]
        %v2071 = vld [vmem:[%s2065 + $0x28] sm:$0xff]
        %v2072 = vld [vmem:[%s2065 + $0x30] sm:$0xff]
        %v2073 = vld [vmem:[%s2065 + $0x38] sm:$0xff]
        %v2074 = vld [vmem:[%s2065 + $0x40] sm:$0xff]
        %v2075 = vld [vmem:[%s2065 + $0x48] sm:$0xff]
        %v2076 = vld [vmem:[%s2065 + $0x50] sm:$0xff]
        %v2077 = vld [vmem:[%s2065 + $0x58] sm:$0xff]
        %v2078 = vld [vmem:[%s2065 + $0x60] sm:$0xff]
        %v2079 = vld [vmem:[%s2065 + $0x68] sm:$0xff]
        %v2080 = vld [vmem:[%s2065 + $0x70] sm:$0xff]
        %v2081 = vld [vmem:[%s2065 + $0x78] sm:$0xff]
        %s2082 = scalar_lea.vmem %s7, 1280
        %v2083 = vld [vmem:[%s2082] sm:$0xff]
        %v2084 = vld [vmem:[%s2082 + $0x8] sm:$0xff]
        %v2085 = vld [vmem:[%s2082 + $0x10] sm:$0xff]
        %v2086 = vld [vmem:[%s2082 + $0x18] sm:$0xff]
        %v2087 = vld [vmem:[%s2082 + $0x20] sm:$0xff]
        %v2088 = vld [vmem:[%s2082 + $0x28] sm:$0xff]
        %v2089 = vld [vmem:[%s2082 + $0x30] sm:$0xff]
        %v2090 = vld [vmem:[%s2082 + $0x38] sm:$0xff]
        %v2091 = vld [vmem:[%s2082 + $0x40] sm:$0xff]
        %v2092 = vld [vmem:[%s2082 + $0x48] sm:$0xff]
        %v2093 = vld [vmem:[%s2082 + $0x50] sm:$0xff]
        %v2094 = vld [vmem:[%s2082 + $0x58] sm:$0xff]
        %v2095 = vld [vmem:[%s2082 + $0x60] sm:$0xff]
        %v2096 = vld [vmem:[%s2082 + $0x68] sm:$0xff]
        %v2097 = vld [vmem:[%s2082 + $0x70] sm:$0xff]
        %v2098 = vld [vmem:[%s2082 + $0x78] sm:$0xff]
        %s2099 = scalar_lea.vmem %s7, 2304
        %v2100 = vld [vmem:[%s2099] sm:$0xff]
        %v2101 = vld [vmem:[%s2099 + $0x8] sm:$0xff]
        %v2102 = vld [vmem:[%s2099 + $0x10] sm:$0xff]
        %v2103 = vld [vmem:[%s2099 + $0x18] sm:$0xff]
        %v2104 = vld [vmem:[%s2099 + $0x20] sm:$0xff]
        %v2105 = vld [vmem:[%s2099 + $0x28] sm:$0xff]
        %v2106 = vld [vmem:[%s2099 + $0x30] sm:$0xff]
        %v2107 = vld [vmem:[%s2099 + $0x38] sm:$0xff]
        %v2108 = vld [vmem:[%s2099 + $0x40] sm:$0xff]
        %v2109 = vld [vmem:[%s2099 + $0x48] sm:$0xff]
        %v2110 = vld [vmem:[%s2099 + $0x50] sm:$0xff]
        %v2111 = vld [vmem:[%s2099 + $0x58] sm:$0xff]
        %v2112 = vld [vmem:[%s2099 + $0x60] sm:$0xff]
        %v2113 = vld [vmem:[%s2099 + $0x68] sm:$0xff]
        %v2114 = vld [vmem:[%s2099 + $0x70] sm:$0xff]
        %v2115 = vld [vmem:[%s2099 + $0x78] sm:$0xff]
        %s2116 = scalar_lea.vmem %s9, 32
        %v2117 = vld [vmem:[%s2116] sm:$0xff]
        %v2118 = vld [vmem:[%s2116 + $0x8] sm:$0xff]
        %s2119 = scalar_lea.vmem %s8, 2
        %v2120 = vld [vmem:[%s2119] sm:$0x1]
        %v2122 = vperm.slane %v2120, 0
        %2124 = vmatpush.msra.mxu0 %v2081
        %2125 = vmatpush.msra.mxu0 %v2080
        %2126 = vmatpush.msra.mxu0 %v2079
        %2127 = vmatpush.msra.mxu0 %v2078
        %2128 = vmatpush.msra.mxu0 %v2077
        %2129 = vmatpush.msra.mxu0 %v2076
        %2130 = vmatpush.msra.mxu0 %v2075
        %2131 = vmatpush.msra.mxu0 %v2074
        %2132 = vmatpush.msra.mxu0 %v2073
        %2133 = vmatpush.msra.mxu0 %v2072
        %2134 = vmatpush.msra.mxu0 %v2071
        %2135 = vmatpush.msra.mxu0 %v2070
        %2136 = vmatpush.msra.mxu0 %v2069
        %2137 = vmatpush.msra.mxu0 %v2068
        %2138 = vmatpush.msra.mxu0 %v2067
        %2139 = vmatpush.msra.mxu0 %v2066
        %2140 = vmatmul.f32.gmra.mxu0 %v1283
        %v2141 = vpop.f32.mrf.mxu0
        %v2142 = vadd.f32 %v2122, %v2141
        %2143 = vmatmul.f32.gmra.mxu0 %v1284
        %v2144 = vpop.f32.mrf.mxu0
        %v2145 = vadd.f32 %v2122, %v2144
        %2146 = vmatmul.f32.gmra.mxu0 %v1285
        %v2147 = vpop.f32.mrf.mxu0
        %v2148 = vadd.f32 %v2122, %v2147
        %2149 = vmatmul.f32.gmra.mxu0 %v1286
        %v2150 = vpop.f32.mrf.mxu0
        %v2151 = vadd.f32 %v2122, %v2150
        %2152 = vdwg.mxu0
        %s2153 = scalar_lea.vmem %s8, 10
        %v2154 = vld [vmem:[%s2153] sm:$0x1]
        %v2156 = vperm.slane %v2154, 0
        %2158 = vmatpush.msra.mxu0 %v2098
        %2159 = vmatpush.msra.mxu0 %v2097
        %2160 = vmatpush.msra.mxu0 %v2096
        %2161 = vmatpush.msra.mxu0 %v2095
        %2162 = vmatpush.msra.mxu0 %v2094
        %2163 = vmatpush.msra.mxu0 %v2093
        %2164 = vmatpush.msra.mxu0 %v2092
        %2165 = vmatpush.msra.mxu0 %v2091
        %2166 = vmatpush.msra.mxu0 %v2090
        %2167 = vmatpush.msra.mxu0 %v2089
        %2168 = vmatpush.msra.mxu0 %v2088
        %2169 = vmatpush.msra.mxu0 %v2087
        %2170 = vmatpush.msra.mxu0 %v2086
        %2171 = vmatpush.msra.mxu0 %v2085
        %2172 = vmatpush.msra.mxu0 %v2084
        %2173 = vmatpush.msra.mxu0 %v2083
        %2174 = vmatmul.f32.gmra.mxu0 %v1283
        %v2175 = vpop.f32.mrf.mxu0
        %v2176 = vadd.f32 %v2156, %v2175
        %2177 = vmatmul.f32.gmra.mxu0 %v1284
        %v2178 = vpop.f32.mrf.mxu0
        %v2179 = vadd.f32 %v2156, %v2178
        %2180 = vmatmul.f32.gmra.mxu0 %v1285
        %v2181 = vpop.f32.mrf.mxu0
        %v2182 = vadd.f32 %v2156, %v2181
        %2183 = vmatmul.f32.gmra.mxu0 %v1286
        %v2184 = vpop.f32.mrf.mxu0
        %v2185 = vadd.f32 %v2156, %v2184
        %2186 = vdwg.mxu0
        %s2187 = scalar_lea.vmem %s8, 18
        %v2188 = vld [vmem:[%s2187] sm:$0x1]
        %v2190 = vperm.slane %v2188, 0
        %2192 = vmatpush.msra.mxu0 %v2115
        %2193 = vmatpush.msra.mxu0 %v2114
        %2194 = vmatpush.msra.mxu0 %v2113
        %2195 = vmatpush.msra.mxu0 %v2112
        %2196 = vmatpush.msra.mxu0 %v2111
        %2197 = vmatpush.msra.mxu0 %v2110
        %2198 = vmatpush.msra.mxu0 %v2109
        %2199 = vmatpush.msra.mxu0 %v2108
        %2200 = vmatpush.msra.mxu0 %v2107
        %2201 = vmatpush.msra.mxu0 %v2106
        %2202 = vmatpush.msra.mxu0 %v2105
        %2203 = vmatpush.msra.mxu0 %v2104
        %2204 = vmatpush.msra.mxu0 %v2103
        %2205 = vmatpush.msra.mxu0 %v2102
        %2206 = vmatpush.msra.mxu0 %v2101
        %2207 = vmatpush.msra.mxu0 %v2100
        %2208 = vmatmul.f32.gmra.mxu0 %v1283
        %v2209 = vpop.f32.mrf.mxu0
        %v2210 = vadd.f32 %v2190, %v2209
        %2211 = vmatmul.f32.gmra.mxu0 %v1284
        %v2212 = vpop.f32.mrf.mxu0
        %v2213 = vadd.f32 %v2190, %v2212
        %2214 = vmatmul.f32.gmra.mxu0 %v1285
        %v2215 = vpop.f32.mrf.mxu0
        %v2216 = vadd.f32 %v2190, %v2215
        %2217 = vmatmul.f32.gmra.mxu0 %v1286
        %v2218 = vpop.f32.mrf.mxu0
        %v2219 = vadd.f32 %v2190, %v2218
        %2220 = vdwg.mxu0
        %v2222 = vsel %vm1440, %v2142, 0
        %v2225 = vsel %vm1440, %v2145, 0
        %v2228 = vsel %vm1440, %v2176, 0
        %v2231 = vsel %vm1440, %v2179, 0
        %2233 = vmatpush.xpose.msra.mxu0 0.0
        %2234 = vmatpush.xpose.msra.mxu0 0.0
        %2235 = vmatpush.xpose.msra.mxu0 0.0
        %2236 = vmatpush.xpose.msra.mxu0 0.0
        %2237 = vmatpush.xpose.msra.mxu0 0.0
        %2238 = vmatpush.xpose.msra.mxu0 0.0
        %2239 = vmatpush.xpose.msra.mxu0 0.0
        %2240 = vmatpush.xpose.msra.mxu0 0.0
        %2241 = vmatpush.xpose.msra.mxu0 0.0
        %2242 = vmatpush.xpose.msra.mxu0 0.0
        %2243 = vmatpush.xpose.msra.mxu0 0.0
        %2244 = vmatpush.xpose.msra.mxu0 0.0
        %2245 = vmatpush.xpose.msra.mxu0 0.0
        %2246 = vmatpush.xpose.msra.mxu0 0.0
        %2247 = vmatpush.xpose.msra.mxu0 %v2231
        %2248 = vmatpush.xpose.msra.mxu0 %v2228
        %2249 = vmatmul.f32.gmra.mxu0 %v2222
        %v2250 = vpop.f32.mrf.mxu0
        %v2251 = vadd.f32 0.0, %v2250
        %2252 = vmatmul.f32.gmra.mxu0 %v2225
        %v2253 = vpop.f32.mrf.mxu0
        %v2254 = vadd.f32 0.0, %v2253
        %2255 = vdwg.mxu0
        %v2256 = vmul.f32 %v2251, 0.25
        %v2257 = vmul.f32 %v2254, 0.25
        %v2258 = vsel %vm1440, %v2256, -inf
        %2259 = vmax.xlane.f32.xlu0 %v2258
        %v2260 = vpop.xlane.xlu0 %2259
        %v2261 = vsel %vm1440, %v2257, -inf
        %2262 = vmax.xlane.f32.xlu0 %v2261
        %v2263 = vpop.xlane.xlu0 %2262
        %v2264 = vsub.f32 %v2256, %v2260
        %v2265 = vsub.f32 %v2257, %v2263
        %v2266 = vmul.f32 %v2264, 1.442695
        %v2267 = vpow.pop %v2266
        %v2268 = vmul.f32 %v2265, 1.442695
        %v2269 = vpow.pop %v2268
        %v2270 = vsel %vm1440, %v2267, 0.0
        %2271 = vadd.xlane.f32.xlu0 %v2270
        %v2272 = vpop.xlane.xlu0 %2271
        %v2273 = vsel %vm1440, %v2269, 0.0
        %2274 = vadd.xlane.f32.xlu0 %v2273
        %v2275 = vpop.xlane.xlu0 %2274
        %v2276 = vrcp.pop %v2272
        %v2277 = vrcp.pop %v2275
        %v2278 = vmul.f32 %v2267, %v2276
        %v2279 = vmul.f32 %v2269, %v2277
        %v2281 = vsel %vm1440, %v2278, 0
        %v2284 = vsel %vm1440, %v2279, 0
        %2286 = vmatpush.msra.mxu0 0.0
        %2287 = vmatpush.msra.mxu0 0.0
        %2288 = vmatpush.msra.mxu0 0.0
        %2289 = vmatpush.msra.mxu0 0.0
        %2290 = vmatpush.msra.mxu0 0.0
        %2291 = vmatpush.msra.mxu0 0.0
        %2292 = vmatpush.msra.mxu0 0.0
        %2293 = vmatpush.msra.mxu0 0.0
        %2294 = vmatpush.msra.mxu0 0.0
        %2295 = vmatpush.msra.mxu0 0.0
        %2296 = vmatpush.msra.mxu0 0.0
        %2297 = vmatpush.msra.mxu0 0.0
        %2298 = vmatpush.msra.mxu0 0.0
        %2299 = vmatpush.msra.mxu0 0.0
        %2300 = vmatpush.msra.mxu0 %v2213
        %2301 = vmatpush.msra.mxu0 %v2210
        %2302 = vmatmul.f32.gmra.mxu0 %v2281
        %v2303 = vpop.f32.mrf.mxu0
        %v2304 = vadd.f32 0.0, %v2303
        %2305 = vmatmul.f32.gmra.mxu0 %v2284
        %v2306 = vpop.f32.mrf.mxu0
        %v2307 = vadd.f32 0.0, %v2306
        %2308 = vdwg.mxu0
        %v2310 = vsel %vm1440, %v2304, 0
        %v2313 = vsel %vm1440, %v2307, 0
        %2315 = vmatpush.msra.mxu0 0.0
        %2316 = vmatpush.msra.mxu0 0.0
        %2317 = vmatpush.msra.mxu0 0.0
        %2318 = vmatpush.msra.mxu0 0.0
        %2319 = vmatpush.msra.mxu0 0.0
        %2320 = vmatpush.msra.mxu0 0.0
        %2321 = vmatpush.msra.mxu0 0.0
        %2322 = vmatpush.msra.mxu0 0.0
        %2323 = vmatpush.msra.mxu0 0.0
        %2324 = vmatpush.msra.mxu0 0.0
        %2325 = vmatpush.msra.mxu0 0.0
        %2326 = vmatpush.msra.mxu0 0.0
        %2327 = vmatpush.msra.mxu0 0.0
        %2328 = vmatpush.msra.mxu0 0.0
        %2329 = vmatpush.msra.mxu0 %v2118
        %2330 = vmatpush.msra.mxu0 %v2117
        %2331 = vmatmul.f32.gmra.mxu0 %v2310
        %v2332 = vpop.f32.mrf.mxu0
        %v2333 = vadd.f32 0.0, %v2332
        %2334 = vmatmul.f32.gmra.mxu0 %v2313
        %v2335 = vpop.f32.mrf.mxu0
        %v2336 = vadd.f32 0.0, %v2335
        %2337 = vdwg.mxu0
        %v2338 = vadd.f32 %v1914, %v2333
        %v2339 = vadd.f32 %v1917, %v2336
        %v2341 = vsel %vm1440, %v2148, 0
        %v2344 = vsel %vm1440, %v2151, 0
        %v2347 = vsel %vm1440, %v2182, 0
        %v2350 = vsel %vm1440, %v2185, 0
        %2352 = vmatpush.xpose.msra.mxu0 0.0
        %2353 = vmatpush.xpose.msra.mxu0 0.0
        %2354 = vmatpush.xpose.msra.mxu0 0.0
        %2355 = vmatpush.xpose.msra.mxu0 0.0
        %2356 = vmatpush.xpose.msra.mxu0 0.0
        %2357 = vmatpush.xpose.msra.mxu0 0.0
        %2358 = vmatpush.xpose.msra.mxu0 0.0
        %2359 = vmatpush.xpose.msra.mxu0 0.0
        %2360 = vmatpush.xpose.msra.mxu0 0.0
        %2361 = vmatpush.xpose.msra.mxu0 0.0
        %2362 = vmatpush.xpose.msra.mxu0 0.0
        %2363 = vmatpush.xpose.msra.mxu0 0.0
        %2364 = vmatpush.xpose.msra.mxu0 0.0
        %2365 = vmatpush.xpose.msra.mxu0 0.0
        %2366 = vmatpush.xpose.msra.mxu0 %v2350
        %2367 = vmatpush.xpose.msra.mxu0 %v2347
        %2368 = vmatmul.f32.gmra.mxu0 %v2341
        %v2369 = vpop.f32.mrf.mxu0
        %v2370 = vadd.f32 0.0, %v2369
        %2371 = vmatmul.f32.gmra.mxu0 %v2344
        %v2372 = vpop.f32.mrf.mxu0
        %v2373 = vadd.f32 0.0, %v2372
        %2374 = vdwg.mxu0
        %v2375 = vmul.f32 %v2370, 0.25
        %v2376 = vmul.f32 %v2373, 0.25
        %v2377 = vsel %vm1440, %v2375, -inf
        %2378 = vmax.xlane.f32.xlu0 %v2377
        %v2379 = vpop.xlane.xlu0 %2378
        %v2380 = vsel %vm1440, %v2376, -inf
        %2381 = vmax.xlane.f32.xlu0 %v2380
        %v2382 = vpop.xlane.xlu0 %2381
        %v2383 = vsub.f32 %v2375, %v2379
        %v2384 = vsub.f32 %v2376, %v2382
        %v2385 = vmul.f32 %v2383, 1.442695
        %v2386 = vpow.pop %v2385
        %v2387 = vmul.f32 %v2384, 1.442695
        %v2388 = vpow.pop %v2387
        %v2389 = vsel %vm1440, %v2386, 0.0
        %2390 = vadd.xlane.f32.xlu0 %v2389
        %v2391 = vpop.xlane.xlu0 %2390
        %v2392 = vsel %vm1440, %v2388, 0.0
        %2393 = vadd.xlane.f32.xlu0 %v2392
        %v2394 = vpop.xlane.xlu0 %2393
        %v2395 = vrcp.pop %v2391
        %v2396 = vrcp.pop %v2394
        %v2397 = vmul.f32 %v2386, %v2395
        %v2398 = vmul.f32 %v2388, %v2396
        %v2400 = vsel %vm1440, %v2397, 0
        %v2403 = vsel %vm1440, %v2398, 0
        %2405 = vmatpush.msra.mxu0 0.0
        %2406 = vmatpush.msra.mxu0 0.0
        %2407 = vmatpush.msra.mxu0 0.0
        %2408 = vmatpush.msra.mxu0 0.0
        %2409 = vmatpush.msra.mxu0 0.0
        %2410 = vmatpush.msra.mxu0 0.0
        %2411 = vmatpush.msra.mxu0 0.0
        %2412 = vmatpush.msra.mxu0 0.0
        %2413 = vmatpush.msra.mxu0 0.0
        %2414 = vmatpush.msra.mxu0 0.0
        %2415 = vmatpush.msra.mxu0 0.0
        %2416 = vmatpush.msra.mxu0 0.0
        %2417 = vmatpush.msra.mxu0 0.0
        %2418 = vmatpush.msra.mxu0 0.0
        %2419 = vmatpush.msra.mxu0 %v2219
        %2420 = vmatpush.msra.mxu0 %v2216
        %2421 = vmatmul.f32.gmra.mxu0 %v2400
        %v2422 = vpop.f32.mrf.mxu0
        %v2423 = vadd.f32 0.0, %v2422
        %2424 = vmatmul.f32.gmra.mxu0 %v2403
        %v2425 = vpop.f32.mrf.mxu0
        %v2426 = vadd.f32 0.0, %v2425
        %2427 = vdwg.mxu0
        %v2429 = vsel %vm1440, %v2423, 0
        %v2432 = vsel %vm1440, %v2426, 0
        %2434 = vmatpush.msra.mxu0 0.0
        %2435 = vmatpush.msra.mxu0 0.0
        %2436 = vmatpush.msra.mxu0 0.0
        %2437 = vmatpush.msra.mxu0 0.0
        %2438 = vmatpush.msra.mxu0 0.0
        %2439 = vmatpush.msra.mxu0 0.0
        %2440 = vmatpush.msra.mxu0 0.0
        %2441 = vmatpush.msra.mxu0 0.0
        %2442 = vmatpush.msra.mxu0 0.0
        %2443 = vmatpush.msra.mxu0 0.0
        %2444 = vmatpush.msra.mxu0 0.0
        %2445 = vmatpush.msra.mxu0 0.0
        %2446 = vmatpush.msra.mxu0 0.0
        %2447 = vmatpush.msra.mxu0 0.0
        %2448 = vmatpush.msra.mxu0 %v2118
        %2449 = vmatpush.msra.mxu0 %v2117
        %2450 = vmatmul.f32.gmra.mxu0 %v2429
        %v2451 = vpop.f32.mrf.mxu0
        %v2452 = vadd.f32 0.0, %v2451
        %2453 = vmatmul.f32.gmra.mxu0 %v2432
        %v2454 = vpop.f32.mrf.mxu0
        %v2455 = vadd.f32 0.0, %v2454
        %2456 = vdwg.mxu0
        %v2457 = vadd.f32 %v2060, %v2452
        %v2458 = vadd.f32 %v2063, %v2455
        %s2459 = scalar_lea.vmem %s7, 384
        %v2460 = vld [vmem:[%s2459] sm:$0xff]
        %v2461 = vld [vmem:[%s2459 + $0x8] sm:$0xff]
        %v2462 = vld [vmem:[%s2459 + $0x10] sm:$0xff]
        %v2463 = vld [vmem:[%s2459 + $0x18] sm:$0xff]
        %v2464 = vld [vmem:[%s2459 + $0x20] sm:$0xff]
        %v2465 = vld [vmem:[%s2459 + $0x28] sm:$0xff]
        %v2466 = vld [vmem:[%s2459 + $0x30] sm:$0xff]
        %v2467 = vld [vmem:[%s2459 + $0x38] sm:$0xff]
        %v2468 = vld [vmem:[%s2459 + $0x40] sm:$0xff]
        %v2469 = vld [vmem:[%s2459 + $0x48] sm:$0xff]
        %v2470 = vld [vmem:[%s2459 + $0x50] sm:$0xff]
        %v2471 = vld [vmem:[%s2459 + $0x58] sm:$0xff]
        %v2472 = vld [vmem:[%s2459 + $0x60] sm:$0xff]
        %v2473 = vld [vmem:[%s2459 + $0x68] sm:$0xff]
        %v2474 = vld [vmem:[%s2459 + $0x70] sm:$0xff]
        %v2475 = vld [vmem:[%s2459 + $0x78] sm:$0xff]
        %s2476 = scalar_lea.vmem %s7, 1408
        %v2477 = vld [vmem:[%s2476] sm:$0xff]
        %v2478 = vld [vmem:[%s2476 + $0x8] sm:$0xff]
        %v2479 = vld [vmem:[%s2476 + $0x10] sm:$0xff]
        %v2480 = vld [vmem:[%s2476 + $0x18] sm:$0xff]
        %v2481 = vld [vmem:[%s2476 + $0x20] sm:$0xff]
        %v2482 = vld [vmem:[%s2476 + $0x28] sm:$0xff]
        %v2483 = vld [vmem:[%s2476 + $0x30] sm:$0xff]
        %v2484 = vld [vmem:[%s2476 + $0x38] sm:$0xff]
        %v2485 = vld [vmem:[%s2476 + $0x40] sm:$0xff]
        %v2486 = vld [vmem:[%s2476 + $0x48] sm:$0xff]
        %v2487 = vld [vmem:[%s2476 + $0x50] sm:$0xff]
        %v2488 = vld [vmem:[%s2476 + $0x58] sm:$0xff]
        %v2489 = vld [vmem:[%s2476 + $0x60] sm:$0xff]
        %v2490 = vld [vmem:[%s2476 + $0x68] sm:$0xff]
        %v2491 = vld [vmem:[%s2476 + $0x70] sm:$0xff]
        %v2492 = vld [vmem:[%s2476 + $0x78] sm:$0xff]
        %s2493 = scalar_lea.vmem %s7, 2432
        %v2494 = vld [vmem:[%s2493] sm:$0xff]
        %v2495 = vld [vmem:[%s2493 + $0x8] sm:$0xff]
        %v2496 = vld [vmem:[%s2493 + $0x10] sm:$0xff]
        %v2497 = vld [vmem:[%s2493 + $0x18] sm:$0xff]
        %v2498 = vld [vmem:[%s2493 + $0x20] sm:$0xff]
        %v2499 = vld [vmem:[%s2493 + $0x28] sm:$0xff]
        %v2500 = vld [vmem:[%s2493 + $0x30] sm:$0xff]
        %v2501 = vld [vmem:[%s2493 + $0x38] sm:$0xff]
        %v2502 = vld [vmem:[%s2493 + $0x40] sm:$0xff]
        %v2503 = vld [vmem:[%s2493 + $0x48] sm:$0xff]
        %v2504 = vld [vmem:[%s2493 + $0x50] sm:$0xff]
        %v2505 = vld [vmem:[%s2493 + $0x58] sm:$0xff]
        %v2506 = vld [vmem:[%s2493 + $0x60] sm:$0xff]
        %v2507 = vld [vmem:[%s2493 + $0x68] sm:$0xff]
        %v2508 = vld [vmem:[%s2493 + $0x70] sm:$0xff]
        %v2509 = vld [vmem:[%s2493 + $0x78] sm:$0xff]
        %s2510 = scalar_lea.vmem %s9, 48
        %v2511 = vld [vmem:[%s2510] sm:$0xff]
        %v2512 = vld [vmem:[%s2510 + $0x8] sm:$0xff]
        %s2513 = scalar_lea.vmem %s8, 3
        %v2514 = vld [vmem:[%s2513] sm:$0x1]
        %v2516 = vperm.slane %v2514, 0
        %2518 = vmatpush.msra.mxu0 %v2475
        %2519 = vmatpush.msra.mxu0 %v2474
        %2520 = vmatpush.msra.mxu0 %v2473
        %2521 = vmatpush.msra.mxu0 %v2472
        %2522 = vmatpush.msra.mxu0 %v2471
        %2523 = vmatpush.msra.mxu0 %v2470
        %2524 = vmatpush.msra.mxu0 %v2469
        %2525 = vmatpush.msra.mxu0 %v2468
        %2526 = vmatpush.msra.mxu0 %v2467
        %2527 = vmatpush.msra.mxu0 %v2466
        %2528 = vmatpush.msra.mxu0 %v2465
        %2529 = vmatpush.msra.mxu0 %v2464
        %2530 = vmatpush.msra.mxu0 %v2463
        %2531 = vmatpush.msra.mxu0 %v2462
        %2532 = vmatpush.msra.mxu0 %v2461
        %2533 = vmatpush.msra.mxu0 %v2460
        %2534 = vmatmul.f32.gmra.mxu0 %v1283
        %v2535 = vpop.f32.mrf.mxu0
        %v2536 = vadd.f32 %v2516, %v2535
        %2537 = vmatmul.f32.gmra.mxu0 %v1284
        %v2538 = vpop.f32.mrf.mxu0
        %v2539 = vadd.f32 %v2516, %v2538
        %2540 = vmatmul.f32.gmra.mxu0 %v1285
        %v2541 = vpop.f32.mrf.mxu0
        %v2542 = vadd.f32 %v2516, %v2541
        %2543 = vmatmul.f32.gmra.mxu0 %v1286
        %v2544 = vpop.f32.mrf.mxu0
        %v2545 = vadd.f32 %v2516, %v2544
        %2546 = vdwg.mxu0
        %s2547 = scalar_lea.vmem %s8, 11
        %v2548 = vld [vmem:[%s2547] sm:$0x1]
        %v2550 = vperm.slane %v2548, 0
        %2552 = vmatpush.msra.mxu0 %v2492
        %2553 = vmatpush.msra.mxu0 %v2491
        %2554 = vmatpush.msra.mxu0 %v2490
        %2555 = vmatpush.msra.mxu0 %v2489
        %2556 = vmatpush.msra.mxu0 %v2488
        %2557 = vmatpush.msra.mxu0 %v2487
        %2558 = vmatpush.msra.mxu0 %v2486
        %2559 = vmatpush.msra.mxu0 %v2485
        %2560 = vmatpush.msra.mxu0 %v2484
        %2561 = vmatpush.msra.mxu0 %v2483
        %2562 = vmatpush.msra.mxu0 %v2482
        %2563 = vmatpush.msra.mxu0 %v2481
        %2564 = vmatpush.msra.mxu0 %v2480
        %2565 = vmatpush.msra.mxu0 %v2479
        %2566 = vmatpush.msra.mxu0 %v2478
        %2567 = vmatpush.msra.mxu0 %v2477
        %2568 = vmatmul.f32.gmra.mxu0 %v1283
        %v2569 = vpop.f32.mrf.mxu0
        %v2570 = vadd.f32 %v2550, %v2569
        %2571 = vmatmul.f32.gmra.mxu0 %v1284
        %v2572 = vpop.f32.mrf.mxu0
        %v2573 = vadd.f32 %v2550, %v2572
        %2574 = vmatmul.f32.gmra.mxu0 %v1285
        %v2575 = vpop.f32.mrf.mxu0
        %v2576 = vadd.f32 %v2550, %v2575
        %2577 = vmatmul.f32.gmra.mxu0 %v1286
        %v2578 = vpop.f32.mrf.mxu0
        %v2579 = vadd.f32 %v2550, %v2578
        %2580 = vdwg.mxu0
        %s2581 = scalar_lea.vmem %s8, 19
        %v2582 = vld [vmem:[%s2581] sm:$0x1]
        %v2584 = vperm.slane %v2582, 0
        %2586 = vmatpush.msra.mxu0 %v2509
        %2587 = vmatpush.msra.mxu0 %v2508
        %2588 = vmatpush.msra.mxu0 %v2507
        %2589 = vmatpush.msra.mxu0 %v2506
        %2590 = vmatpush.msra.mxu0 %v2505
        %2591 = vmatpush.msra.mxu0 %v2504
        %2592 = vmatpush.msra.mxu0 %v2503
        %2593 = vmatpush.msra.mxu0 %v2502
        %2594 = vmatpush.msra.mxu0 %v2501
        %2595 = vmatpush.msra.mxu0 %v2500
        %2596 = vmatpush.msra.mxu0 %v2499
        %2597 = vmatpush.msra.mxu0 %v2498
        %2598 = vmatpush.msra.mxu0 %v2497
        %2599 = vmatpush.msra.mxu0 %v2496
        %2600 = vmatpush.msra.mxu0 %v2495
        %2601 = vmatpush.msra.mxu0 %v2494
        %2602 = vmatmul.f32.gmra.mxu0 %v1283
        %v2603 = vpop.f32.mrf.mxu0
        %v2604 = vadd.f32 %v2584, %v2603
        %2605 = vmatmul.f32.gmra.mxu0 %v1284
        %v2606 = vpop.f32.mrf.mxu0
        %v2607 = vadd.f32 %v2584, %v2606
        %2608 = vmatmul.f32.gmra.mxu0 %v1285
        %v2609 = vpop.f32.mrf.mxu0
        %v2610 = vadd.f32 %v2584, %v2609
        %2611 = vmatmul.f32.gmra.mxu0 %v1286
        %v2612 = vpop.f32.mrf.mxu0
        %v2613 = vadd.f32 %v2584, %v2612
        %2614 = vdwg.mxu0
        %v2616 = vsel %vm1440, %v2536, 0
        %v2619 = vsel %vm1440, %v2539, 0
        %v2622 = vsel %vm1440, %v2570, 0
        %v2625 = vsel %vm1440, %v2573, 0
        %2627 = vmatpush.xpose.msra.mxu0 0.0
        %2628 = vmatpush.xpose.msra.mxu0 0.0
        %2629 = vmatpush.xpose.msra.mxu0 0.0
        %2630 = vmatpush.xpose.msra.mxu0 0.0
        %2631 = vmatpush.xpose.msra.mxu0 0.0
        %2632 = vmatpush.xpose.msra.mxu0 0.0
        %2633 = vmatpush.xpose.msra.mxu0 0.0
        %2634 = vmatpush.xpose.msra.mxu0 0.0
        %2635 = vmatpush.xpose.msra.mxu0 0.0
        %2636 = vmatpush.xpose.msra.mxu0 0.0
        %2637 = vmatpush.xpose.msra.mxu0 0.0
        %2638 = vmatpush.xpose.msra.mxu0 0.0
        %2639 = vmatpush.xpose.msra.mxu0 0.0
        %2640 = vmatpush.xpose.msra.mxu0 0.0
        %2641 = vmatpush.xpose.msra.mxu0 %v2625
        %2642 = vmatpush.xpose.msra.mxu0 %v2622
        %2643 = vmatmul.f32.gmra.mxu0 %v2616
        %v2644 = vpop.f32.mrf.mxu0
        %v2645 = vadd.f32 0.0, %v2644
        %2646 = vmatmul.f32.gmra.mxu0 %v2619
        %v2647 = vpop.f32.mrf.mxu0
        %v2648 = vadd.f32 0.0, %v2647
        %2649 = vdwg.mxu0
        %v2650 = vmul.f32 %v2645, 0.25
        %v2651 = vmul.f32 %v2648, 0.25
        %v2652 = vsel %vm1440, %v2650, -inf
        %2653 = vmax.xlane.f32.xlu0 %v2652
        %v2654 = vpop.xlane.xlu0 %2653
        %v2655 = vsel %vm1440, %v2651, -inf
        %2656 = vmax.xlane.f32.xlu0 %v2655
        %v2657 = vpop.xlane.xlu0 %2656
        %v2658 = vsub.f32 %v2650, %v2654
        %v2659 = vsub.f32 %v2651, %v2657
        %v2660 = vmul.f32 %v2658, 1.442695
        %v2661 = vpow.pop %v2660
        %v2662 = vmul.f32 %v2659, 1.442695
        %v2663 = vpow.pop %v2662
        %v2664 = vsel %vm1440, %v2661, 0.0
        %2665 = vadd.xlane.f32.xlu0 %v2664
        %v2666 = vpop.xlane.xlu0 %2665
        %v2667 = vsel %vm1440, %v2663, 0.0
        %2668 = vadd.xlane.f32.xlu0 %v2667
        %v2669 = vpop.xlane.xlu0 %2668
        %v2670 = vrcp.pop %v2666
        %v2671 = vrcp.pop %v2669
        %v2672 = vmul.f32 %v2661, %v2670
        %v2673 = vmul.f32 %v2663, %v2671
        %v2675 = vsel %vm1440, %v2672, 0
        %v2678 = vsel %vm1440, %v2673, 0
        %2680 = vmatpush.msra.mxu0 0.0
        %2681 = vmatpush.msra.mxu0 0.0
        %2682 = vmatpush.msra.mxu0 0.0
        %2683 = vmatpush.msra.mxu0 0.0
        %2684 = vmatpush.msra.mxu0 0.0
        %2685 = vmatpush.msra.mxu0 0.0
        %2686 = vmatpush.msra.mxu0 0.0
        %2687 = vmatpush.msra.mxu0 0.0
        %2688 = vmatpush.msra.mxu0 0.0
        %2689 = vmatpush.msra.mxu0 0.0
        %2690 = vmatpush.msra.mxu0 0.0
        %2691 = vmatpush.msra.mxu0 0.0
        %2692 = vmatpush.msra.mxu0 0.0
        %2693 = vmatpush.msra.mxu0 0.0
        %2694 = vmatpush.msra.mxu0 %v2607
        %2695 = vmatpush.msra.mxu0 %v2604
        %2696 = vmatmul.f32.gmra.mxu0 %v2675
        %v2697 = vpop.f32.mrf.mxu0
        %v2698 = vadd.f32 0.0, %v2697
        %2699 = vmatmul.f32.gmra.mxu0 %v2678
        %v2700 = vpop.f32.mrf.mxu0
        %v2701 = vadd.f32 0.0, %v2700
        %2702 = vdwg.mxu0
        %v2704 = vsel %vm1440, %v2698, 0
        %v2707 = vsel %vm1440, %v2701, 0
        %2709 = vmatpush.msra.mxu0 0.0
        %2710 = vmatpush.msra.mxu0 0.0
        %2711 = vmatpush.msra.mxu0 0.0
        %2712 = vmatpush.msra.mxu0 0.0
        %2713 = vmatpush.msra.mxu0 0.0
        %2714 = vmatpush.msra.mxu0 0.0
        %2715 = vmatpush.msra.mxu0 0.0
        %2716 = vmatpush.msra.mxu0 0.0
        %2717 = vmatpush.msra.mxu0 0.0
        %2718 = vmatpush.msra.mxu0 0.0
        %2719 = vmatpush.msra.mxu0 0.0
        %2720 = vmatpush.msra.mxu0 0.0
        %2721 = vmatpush.msra.mxu0 0.0
        %2722 = vmatpush.msra.mxu0 0.0
        %2723 = vmatpush.msra.mxu0 %v2512
        %2724 = vmatpush.msra.mxu0 %v2511
        %2725 = vmatmul.f32.gmra.mxu0 %v2704
        %v2726 = vpop.f32.mrf.mxu0
        %v2727 = vadd.f32 0.0, %v2726
        %2728 = vmatmul.f32.gmra.mxu0 %v2707
        %v2729 = vpop.f32.mrf.mxu0
        %v2730 = vadd.f32 0.0, %v2729
        %2731 = vdwg.mxu0
        %v2732 = vadd.f32 %v2338, %v2727
        %v2733 = vadd.f32 %v2339, %v2730
        %v2735 = vsel %vm1440, %v2542, 0
        %v2738 = vsel %vm1440, %v2545, 0
        %v2741 = vsel %vm1440, %v2576, 0
        %v2744 = vsel %vm1440, %v2579, 0
        %2746 = vmatpush.xpose.msra.mxu0 0.0
        %2747 = vmatpush.xpose.msra.mxu0 0.0
        %2748 = vmatpush.xpose.msra.mxu0 0.0
        %2749 = vmatpush.xpose.msra.mxu0 0.0
        %2750 = vmatpush.xpose.msra.mxu0 0.0
        %2751 = vmatpush.xpose.msra.mxu0 0.0
        %2752 = vmatpush.xpose.msra.mxu0 0.0
        %2753 = vmatpush.xpose.msra.mxu0 0.0
        %2754 = vmatpush.xpose.msra.mxu0 0.0
        %2755 = vmatpush.xpose.msra.mxu0 0.0
        %2756 = vmatpush.xpose.msra.mxu0 0.0
        %2757 = vmatpush.xpose.msra.mxu0 0.0
        %2758 = vmatpush.xpose.msra.mxu0 0.0
        %2759 = vmatpush.xpose.msra.mxu0 0.0
        %2760 = vmatpush.xpose.msra.mxu0 %v2744
        %2761 = vmatpush.xpose.msra.mxu0 %v2741
        %2762 = vmatmul.f32.gmra.mxu0 %v2735
        %v2763 = vpop.f32.mrf.mxu0
        %v2764 = vadd.f32 0.0, %v2763
        %2765 = vmatmul.f32.gmra.mxu0 %v2738
        %v2766 = vpop.f32.mrf.mxu0
        %v2767 = vadd.f32 0.0, %v2766
        %2768 = vdwg.mxu0
        %v2769 = vmul.f32 %v2764, 0.25
        %v2770 = vmul.f32 %v2767, 0.25
        %v2771 = vsel %vm1440, %v2769, -inf
        %2772 = vmax.xlane.f32.xlu0 %v2771
        %v2773 = vpop.xlane.xlu0 %2772
        %v2774 = vsel %vm1440, %v2770, -inf
        %2775 = vmax.xlane.f32.xlu0 %v2774
        %v2776 = vpop.xlane.xlu0 %2775
        %v2777 = vsub.f32 %v2769, %v2773
        %v2778 = vsub.f32 %v2770, %v2776
        %v2779 = vmul.f32 %v2777, 1.442695
        %v2780 = vpow.pop %v2779
        %v2781 = vmul.f32 %v2778, 1.442695
        %v2782 = vpow.pop %v2781
        %v2783 = vsel %vm1440, %v2780, 0.0
        %2784 = vadd.xlane.f32.xlu0 %v2783
        %v2785 = vpop.xlane.xlu0 %2784
        %v2786 = vsel %vm1440, %v2782, 0.0
        %2787 = vadd.xlane.f32.xlu0 %v2786
        %v2788 = vpop.xlane.xlu0 %2787
        %v2789 = vrcp.pop %v2785
        %v2790 = vrcp.pop %v2788
        %v2791 = vmul.f32 %v2780, %v2789
        %v2792 = vmul.f32 %v2782, %v2790
        %v2794 = vsel %vm1440, %v2791, 0
        %v2797 = vsel %vm1440, %v2792, 0
        %2799 = vmatpush.msra.mxu0 0.0
        %2800 = vmatpush.msra.mxu0 0.0
        %2801 = vmatpush.msra.mxu0 0.0
        %2802 = vmatpush.msra.mxu0 0.0
        %2803 = vmatpush.msra.mxu0 0.0
        %2804 = vmatpush.msra.mxu0 0.0
        %2805 = vmatpush.msra.mxu0 0.0
        %2806 = vmatpush.msra.mxu0 0.0
        %2807 = vmatpush.msra.mxu0 0.0
        %2808 = vmatpush.msra.mxu0 0.0
        %2809 = vmatpush.msra.mxu0 0.0
        %2810 = vmatpush.msra.mxu0 0.0
        %2811 = vmatpush.msra.mxu0 0.0
        %2812 = vmatpush.msra.mxu0 0.0
        %2813 = vmatpush.msra.mxu0 %v2613
        %2814 = vmatpush.msra.mxu0 %v2610
        %2815 = vmatmul.f32.gmra.mxu0 %v2794
        %v2816 = vpop.f32.mrf.mxu0
        %v2817 = vadd.f32 0.0, %v2816
        %2818 = vmatmul.f32.gmra.mxu0 %v2797
        %v2819 = vpop.f32.mrf.mxu0
        %v2820 = vadd.f32 0.0, %v2819
        %2821 = vdwg.mxu0
        %v2823 = vsel %vm1440, %v2817, 0
        %v2826 = vsel %vm1440, %v2820, 0
        %2828 = vmatpush.msra.mxu0 0.0
        %2829 = vmatpush.msra.mxu0 0.0
        %2830 = vmatpush.msra.mxu0 0.0
        %2831 = vmatpush.msra.mxu0 0.0
        %2832 = vmatpush.msra.mxu0 0.0
        %2833 = vmatpush.msra.mxu0 0.0
        %2834 = vmatpush.msra.mxu0 0.0
        %2835 = vmatpush.msra.mxu0 0.0
        %2836 = vmatpush.msra.mxu0 0.0
        %2837 = vmatpush.msra.mxu0 0.0
        %2838 = vmatpush.msra.mxu0 0.0
        %2839 = vmatpush.msra.mxu0 0.0
        %2840 = vmatpush.msra.mxu0 0.0
        %2841 = vmatpush.msra.mxu0 0.0
        %2842 = vmatpush.msra.mxu0 %v2512
        %2843 = vmatpush.msra.mxu0 %v2511
        %2844 = vmatmul.f32.gmra.mxu0 %v2823
        %v2845 = vpop.f32.mrf.mxu0
        %v2846 = vadd.f32 0.0, %v2845
        %2847 = vmatmul.f32.gmra.mxu0 %v2826
        %v2848 = vpop.f32.mrf.mxu0
        %v2849 = vadd.f32 0.0, %v2848
        %2850 = vdwg.mxu0
        %v2851 = vadd.f32 %v2457, %v2846
        %v2852 = vadd.f32 %v2458, %v2849
        %s2853 = scalar_lea.vmem %s7, 512
        %v2854 = vld [vmem:[%s2853] sm:$0xff]
        %v2855 = vld [vmem:[%s2853 + $0x8] sm:$0xff]
        %v2856 = vld [vmem:[%s2853 + $0x10] sm:$0xff]
        %v2857 = vld [vmem:[%s2853 + $0x18] sm:$0xff]
        %v2858 = vld [vmem:[%s2853 + $0x20] sm:$0xff]
        %v2859 = vld [vmem:[%s2853 + $0x28] sm:$0xff]
        %v2860 = vld [vmem:[%s2853 + $0x30] sm:$0xff]
        %v2861 = vld [vmem:[%s2853 + $0x38] sm:$0xff]
        %v2862 = vld [vmem:[%s2853 + $0x40] sm:$0xff]
        %v2863 = vld [vmem:[%s2853 + $0x48] sm:$0xff]
        %v2864 = vld [vmem:[%s2853 + $0x50] sm:$0xff]
        %v2865 = vld [vmem:[%s2853 + $0x58] sm:$0xff]
        %v2866 = vld [vmem:[%s2853 + $0x60] sm:$0xff]
        %v2867 = vld [vmem:[%s2853 + $0x68] sm:$0xff]
        %v2868 = vld [vmem:[%s2853 + $0x70] sm:$0xff]
        %v2869 = vld [vmem:[%s2853 + $0x78] sm:$0xff]
        %s2870 = scalar_lea.vmem %s7, 1536
        %v2871 = vld [vmem:[%s2870] sm:$0xff]
        %v2872 = vld [vmem:[%s2870 + $0x8] sm:$0xff]
        %v2873 = vld [vmem:[%s2870 + $0x10] sm:$0xff]
        %v2874 = vld [vmem:[%s2870 + $0x18] sm:$0xff]
        %v2875 = vld [vmem:[%s2870 + $0x20] sm:$0xff]
        %v2876 = vld [vmem:[%s2870 + $0x28] sm:$0xff]
        %v2877 = vld [vmem:[%s2870 + $0x30] sm:$0xff]
        %v2878 = vld [vmem:[%s2870 + $0x38] sm:$0xff]
        %v2879 = vld [vmem:[%s2870 + $0x40] sm:$0xff]
        %v2880 = vld [vmem:[%s2870 + $0x48] sm:$0xff]
        %v2881 = vld [vmem:[%s2870 + $0x50] sm:$0xff]
        %v2882 = vld [vmem:[%s2870 + $0x58] sm:$0xff]
        %v2883 = vld [vmem:[%s2870 + $0x60] sm:$0xff]
        %v2884 = vld [vmem:[%s2870 + $0x68] sm:$0xff]
        %v2885 = vld [vmem:[%s2870 + $0x70] sm:$0xff]
        %v2886 = vld [vmem:[%s2870 + $0x78] sm:$0xff]
        %s2887 = scalar_lea.vmem %s7, 2560
        %v2888 = vld [vmem:[%s2887] sm:$0xff]
        %v2889 = vld [vmem:[%s2887 + $0x8] sm:$0xff]
        %v2890 = vld [vmem:[%s2887 + $0x10] sm:$0xff]
        %v2891 = vld [vmem:[%s2887 + $0x18] sm:$0xff]
        %v2892 = vld [vmem:[%s2887 + $0x20] sm:$0xff]
        %v2893 = vld [vmem:[%s2887 + $0x28] sm:$0xff]
        %v2894 = vld [vmem:[%s2887 + $0x30] sm:$0xff]
        %v2895 = vld [vmem:[%s2887 + $0x38] sm:$0xff]
        %v2896 = vld [vmem:[%s2887 + $0x40] sm:$0xff]
        %v2897 = vld [vmem:[%s2887 + $0x48] sm:$0xff]
        %v2898 = vld [vmem:[%s2887 + $0x50] sm:$0xff]
        %v2899 = vld [vmem:[%s2887 + $0x58] sm:$0xff]
        %v2900 = vld [vmem:[%s2887 + $0x60] sm:$0xff]
        %v2901 = vld [vmem:[%s2887 + $0x68] sm:$0xff]
        %v2902 = vld [vmem:[%s2887 + $0x70] sm:$0xff]
        %v2903 = vld [vmem:[%s2887 + $0x78] sm:$0xff]
        %s2904 = scalar_lea.vmem %s9, 64
        %v2905 = vld [vmem:[%s2904] sm:$0xff]
        %v2906 = vld [vmem:[%s2904 + $0x8] sm:$0xff]
        %s2907 = scalar_lea.vmem %s8, 4
        %v2908 = vld [vmem:[%s2907] sm:$0x1]
        %v2910 = vperm.slane %v2908, 0
        %2912 = vmatpush.msra.mxu0 %v2869
        %2913 = vmatpush.msra.mxu0 %v2868
        %2914 = vmatpush.msra.mxu0 %v2867
        %2915 = vmatpush.msra.mxu0 %v2866
        %2916 = vmatpush.msra.mxu0 %v2865
        %2917 = vmatpush.msra.mxu0 %v2864
        %2918 = vmatpush.msra.mxu0 %v2863
        %2919 = vmatpush.msra.mxu0 %v2862
        %2920 = vmatpush.msra.mxu0 %v2861
        %2921 = vmatpush.msra.mxu0 %v2860
        %2922 = vmatpush.msra.mxu0 %v2859
        %2923 = vmatpush.msra.mxu0 %v2858
        %2924 = vmatpush.msra.mxu0 %v2857
        %2925 = vmatpush.msra.mxu0 %v2856
        %2926 = vmatpush.msra.mxu0 %v2855
        %2927 = vmatpush.msra.mxu0 %v2854
        %2928 = vmatmul.f32.gmra.mxu0 %v1283
        %v2929 = vpop.f32.mrf.mxu0
        %v2930 = vadd.f32 %v2910, %v2929
        %2931 = vmatmul.f32.gmra.mxu0 %v1284
        %v2932 = vpop.f32.mrf.mxu0
        %v2933 = vadd.f32 %v2910, %v2932
        %2934 = vmatmul.f32.gmra.mxu0 %v1285
        %v2935 = vpop.f32.mrf.mxu0
        %v2936 = vadd.f32 %v2910, %v2935
        %2937 = vmatmul.f32.gmra.mxu0 %v1286
        %v2938 = vpop.f32.mrf.mxu0
        %v2939 = vadd.f32 %v2910, %v2938
        %2940 = vdwg.mxu0
        %s2941 = scalar_lea.vmem %s8, 12
        %v2942 = vld [vmem:[%s2941] sm:$0x1]
        %v2944 = vperm.slane %v2942, 0
        %2946 = vmatpush.msra.mxu0 %v2886
        %2947 = vmatpush.msra.mxu0 %v2885
        %2948 = vmatpush.msra.mxu0 %v2884
        %2949 = vmatpush.msra.mxu0 %v2883
        %2950 = vmatpush.msra.mxu0 %v2882
        %2951 = vmatpush.msra.mxu0 %v2881
        %2952 = vmatpush.msra.mxu0 %v2880
        %2953 = vmatpush.msra.mxu0 %v2879
        %2954 = vmatpush.msra.mxu0 %v2878
        %2955 = vmatpush.msra.mxu0 %v2877
        %2956 = vmatpush.msra.mxu0 %v2876
        %2957 = vmatpush.msra.mxu0 %v2875
        %2958 = vmatpush.msra.mxu0 %v2874
        %2959 = vmatpush.msra.mxu0 %v2873
        %2960 = vmatpush.msra.mxu0 %v2872
        %2961 = vmatpush.msra.mxu0 %v2871
        %2962 = vmatmul.f32.gmra.mxu0 %v1283
        %v2963 = vpop.f32.mrf.mxu0
        %v2964 = vadd.f32 %v2944, %v2963
        %2965 = vmatmul.f32.gmra.mxu0 %v1284
        %v2966 = vpop.f32.mrf.mxu0
        %v2967 = vadd.f32 %v2944, %v2966
        %2968 = vmatmul.f32.gmra.mxu0 %v1285
        %v2969 = vpop.f32.mrf.mxu0
        %v2970 = vadd.f32 %v2944, %v2969
        %2971 = vmatmul.f32.gmra.mxu0 %v1286
        %v2972 = vpop.f32.mrf.mxu0
        %v2973 = vadd.f32 %v2944, %v2972
        %2974 = vdwg.mxu0
        %s2975 = scalar_lea.vmem %s8, 20
        %v2976 = vld [vmem:[%s2975] sm:$0x1]
        %v2978 = vperm.slane %v2976, 0
        %2980 = vmatpush.msra.mxu0 %v2903
        %2981 = vmatpush.msra.mxu0 %v2902
        %2982 = vmatpush.msra.mxu0 %v2901
        %2983 = vmatpush.msra.mxu0 %v2900
        %2984 = vmatpush.msra.mxu0 %v2899
        %2985 = vmatpush.msra.mxu0 %v2898
        %2986 = vmatpush.msra.mxu0 %v2897
        %2987 = vmatpush.msra.mxu0 %v2896
        %2988 = vmatpush.msra.mxu0 %v2895
        %2989 = vmatpush.msra.mxu0 %v2894
        %2990 = vmatpush.msra.mxu0 %v2893
        %2991 = vmatpush.msra.mxu0 %v2892
        %2992 = vmatpush.msra.mxu0 %v2891
        %2993 = vmatpush.msra.mxu0 %v2890
        %2994 = vmatpush.msra.mxu0 %v2889
        %2995 = vmatpush.msra.mxu0 %v2888
        %2996 = vmatmul.f32.gmra.mxu0 %v1283
        %v2997 = vpop.f32.mrf.mxu0
        %v2998 = vadd.f32 %v2978, %v2997
        %2999 = vmatmul.f32.gmra.mxu0 %v1284
        %v3000 = vpop.f32.mrf.mxu0
        %v3001 = vadd.f32 %v2978, %v3000
        %3002 = vmatmul.f32.gmra.mxu0 %v1285
        %v3003 = vpop.f32.mrf.mxu0
        %v3004 = vadd.f32 %v2978, %v3003
        %3005 = vmatmul.f32.gmra.mxu0 %v1286
        %v3006 = vpop.f32.mrf.mxu0
        %v3007 = vadd.f32 %v2978, %v3006
        %3008 = vdwg.mxu0
        %v3010 = vsel %vm1440, %v2930, 0
        %v3013 = vsel %vm1440, %v2933, 0
        %v3016 = vsel %vm1440, %v2964, 0
        %v3019 = vsel %vm1440, %v2967, 0
        %3021 = vmatpush.xpose.msra.mxu0 0.0
        %3022 = vmatpush.xpose.msra.mxu0 0.0
        %3023 = vmatpush.xpose.msra.mxu0 0.0
        %3024 = vmatpush.xpose.msra.mxu0 0.0
        %3025 = vmatpush.xpose.msra.mxu0 0.0
        %3026 = vmatpush.xpose.msra.mxu0 0.0
        %3027 = vmatpush.xpose.msra.mxu0 0.0
        %3028 = vmatpush.xpose.msra.mxu0 0.0
        %3029 = vmatpush.xpose.msra.mxu0 0.0
        %3030 = vmatpush.xpose.msra.mxu0 0.0
        %3031 = vmatpush.xpose.msra.mxu0 0.0
        %3032 = vmatpush.xpose.msra.mxu0 0.0
        %3033 = vmatpush.xpose.msra.mxu0 0.0
        %3034 = vmatpush.xpose.msra.mxu0 0.0
        %3035 = vmatpush.xpose.msra.mxu0 %v3019
        %3036 = vmatpush.xpose.msra.mxu0 %v3016
        %3037 = vmatmul.f32.gmra.mxu0 %v3010
        %v3038 = vpop.f32.mrf.mxu0
        %v3039 = vadd.f32 0.0, %v3038
        %3040 = vmatmul.f32.gmra.mxu0 %v3013
        %v3041 = vpop.f32.mrf.mxu0
        %v3042 = vadd.f32 0.0, %v3041
        %3043 = vdwg.mxu0
        %v3044 = vmul.f32 %v3039, 0.25
        %v3045 = vmul.f32 %v3042, 0.25
        %v3046 = vsel %vm1440, %v3044, -inf
        %3047 = vmax.xlane.f32.xlu0 %v3046
        %v3048 = vpop.xlane.xlu0 %3047
        %v3049 = vsel %vm1440, %v3045, -inf
        %3050 = vmax.xlane.f32.xlu0 %v3049
        %v3051 = vpop.xlane.xlu0 %3050
        %v3052 = vsub.f32 %v3044, %v3048
        %v3053 = vsub.f32 %v3045, %v3051
        %v3054 = vmul.f32 %v3052, 1.442695
        %v3055 = vpow.pop %v3054
        %v3056 = vmul.f32 %v3053, 1.442695
        %v3057 = vpow.pop %v3056
        %v3058 = vsel %vm1440, %v3055, 0.0
        %3059 = vadd.xlane.f32.xlu0 %v3058
        %v3060 = vpop.xlane.xlu0 %3059
        %v3061 = vsel %vm1440, %v3057, 0.0
        %3062 = vadd.xlane.f32.xlu0 %v3061
        %v3063 = vpop.xlane.xlu0 %3062
        %v3064 = vrcp.pop %v3060
        %v3065 = vrcp.pop %v3063
        %v3066 = vmul.f32 %v3055, %v3064
        %v3067 = vmul.f32 %v3057, %v3065
        %v3069 = vsel %vm1440, %v3066, 0
        %v3072 = vsel %vm1440, %v3067, 0
        %3074 = vmatpush.msra.mxu0 0.0
        %3075 = vmatpush.msra.mxu0 0.0
        %3076 = vmatpush.msra.mxu0 0.0
        %3077 = vmatpush.msra.mxu0 0.0
        %3078 = vmatpush.msra.mxu0 0.0
        %3079 = vmatpush.msra.mxu0 0.0
        %3080 = vmatpush.msra.mxu0 0.0
        %3081 = vmatpush.msra.mxu0 0.0
        %3082 = vmatpush.msra.mxu0 0.0
        %3083 = vmatpush.msra.mxu0 0.0
        %3084 = vmatpush.msra.mxu0 0.0
        %3085 = vmatpush.msra.mxu0 0.0
        %3086 = vmatpush.msra.mxu0 0.0
        %3087 = vmatpush.msra.mxu0 0.0
        %3088 = vmatpush.msra.mxu0 %v3001
        %3089 = vmatpush.msra.mxu0 %v2998
        %3090 = vmatmul.f32.gmra.mxu0 %v3069
        %v3091 = vpop.f32.mrf.mxu0
        %v3092 = vadd.f32 0.0, %v3091
        %3093 = vmatmul.f32.gmra.mxu0 %v3072
        %v3094 = vpop.f32.mrf.mxu0
        %v3095 = vadd.f32 0.0, %v3094
        %3096 = vdwg.mxu0
        %v3098 = vsel %vm1440, %v3092, 0
        %v3101 = vsel %vm1440, %v3095, 0
        %3103 = vmatpush.msra.mxu0 0.0
        %3104 = vmatpush.msra.mxu0 0.0
        %3105 = vmatpush.msra.mxu0 0.0
        %3106 = vmatpush.msra.mxu0 0.0
        %3107 = vmatpush.msra.mxu0 0.0
        %3108 = vmatpush.msra.mxu0 0.0
        %3109 = vmatpush.msra.mxu0 0.0
        %3110 = vmatpush.msra.mxu0 0.0
        %3111 = vmatpush.msra.mxu0 0.0
        %3112 = vmatpush.msra.mxu0 0.0
        %3113 = vmatpush.msra.mxu0 0.0
        %3114 = vmatpush.msra.mxu0 0.0
        %3115 = vmatpush.msra.mxu0 0.0
        %3116 = vmatpush.msra.mxu0 0.0
        %3117 = vmatpush.msra.mxu0 %v2906
        %3118 = vmatpush.msra.mxu0 %v2905
        %3119 = vmatmul.f32.gmra.mxu0 %v3098
        %v3120 = vpop.f32.mrf.mxu0
        %v3121 = vadd.f32 0.0, %v3120
        %3122 = vmatmul.f32.gmra.mxu0 %v3101
        %v3123 = vpop.f32.mrf.mxu0
        %v3124 = vadd.f32 0.0, %v3123
        %3125 = vdwg.mxu0
        %v3126 = vadd.f32 %v2732, %v3121
        %v3127 = vadd.f32 %v2733, %v3124
        %v3129 = vsel %vm1440, %v2936, 0
        %v3132 = vsel %vm1440, %v2939, 0
        %v3135 = vsel %vm1440, %v2970, 0
        %v3138 = vsel %vm1440, %v2973, 0
        %3140 = vmatpush.xpose.msra.mxu0 0.0
        %3141 = vmatpush.xpose.msra.mxu0 0.0
        %3142 = vmatpush.xpose.msra.mxu0 0.0
        %3143 = vmatpush.xpose.msra.mxu0 0.0
        %3144 = vmatpush.xpose.msra.mxu0 0.0
        %3145 = vmatpush.xpose.msra.mxu0 0.0
        %3146 = vmatpush.xpose.msra.mxu0 0.0
        %3147 = vmatpush.xpose.msra.mxu0 0.0
        %3148 = vmatpush.xpose.msra.mxu0 0.0
        %3149 = vmatpush.xpose.msra.mxu0 0.0
        %3150 = vmatpush.xpose.msra.mxu0 0.0
        %3151 = vmatpush.xpose.msra.mxu0 0.0
        %3152 = vmatpush.xpose.msra.mxu0 0.0
        %3153 = vmatpush.xpose.msra.mxu0 0.0
        %3154 = vmatpush.xpose.msra.mxu0 %v3138
        %3155 = vmatpush.xpose.msra.mxu0 %v3135
        %3156 = vmatmul.f32.gmra.mxu0 %v3129
        %v3157 = vpop.f32.mrf.mxu0
        %v3158 = vadd.f32 0.0, %v3157
        %3159 = vmatmul.f32.gmra.mxu0 %v3132
        %v3160 = vpop.f32.mrf.mxu0
        %v3161 = vadd.f32 0.0, %v3160
        %3162 = vdwg.mxu0
        %v3163 = vmul.f32 %v3158, 0.25
        %v3164 = vmul.f32 %v3161, 0.25
        %v3165 = vsel %vm1440, %v3163, -inf
        %3166 = vmax.xlane.f32.xlu0 %v3165
        %v3167 = vpop.xlane.xlu0 %3166
        %v3168 = vsel %vm1440, %v3164, -inf
        %3169 = vmax.xlane.f32.xlu0 %v3168
        %v3170 = vpop.xlane.xlu0 %3169
        %v3171 = vsub.f32 %v3163, %v3167
        %v3172 = vsub.f32 %v3164, %v3170
        %v3173 = vmul.f32 %v3171, 1.442695
        %v3174 = vpow.pop %v3173
        %v3175 = vmul.f32 %v3172, 1.442695
        %v3176 = vpow.pop %v3175
        %v3177 = vsel %vm1440, %v3174, 0.0
        %3178 = vadd.xlane.f32.xlu0 %v3177
        %v3179 = vpop.xlane.xlu0 %3178
        %v3180 = vsel %vm1440, %v3176, 0.0
        %3181 = vadd.xlane.f32.xlu0 %v3180
        %v3182 = vpop.xlane.xlu0 %3181
        %v3183 = vrcp.pop %v3179
        %v3184 = vrcp.pop %v3182
        %v3185 = vmul.f32 %v3174, %v3183
        %v3186 = vmul.f32 %v3176, %v3184
        %v3188 = vsel %vm1440, %v3185, 0
        %v3191 = vsel %vm1440, %v3186, 0
        %3193 = vmatpush.msra.mxu0 0.0
        %3194 = vmatpush.msra.mxu0 0.0
        %3195 = vmatpush.msra.mxu0 0.0
        %3196 = vmatpush.msra.mxu0 0.0
        %3197 = vmatpush.msra.mxu0 0.0
        %3198 = vmatpush.msra.mxu0 0.0
        %3199 = vmatpush.msra.mxu0 0.0
        %3200 = vmatpush.msra.mxu0 0.0
        %3201 = vmatpush.msra.mxu0 0.0
        %3202 = vmatpush.msra.mxu0 0.0
        %3203 = vmatpush.msra.mxu0 0.0
        %3204 = vmatpush.msra.mxu0 0.0
        %3205 = vmatpush.msra.mxu0 0.0
        %3206 = vmatpush.msra.mxu0 0.0
        %3207 = vmatpush.msra.mxu0 %v3007
        %3208 = vmatpush.msra.mxu0 %v3004
        %3209 = vmatmul.f32.gmra.mxu0 %v3188
        %v3210 = vpop.f32.mrf.mxu0
        %v3211 = vadd.f32 0.0, %v3210
        %3212 = vmatmul.f32.gmra.mxu0 %v3191
        %v3213 = vpop.f32.mrf.mxu0
        %v3214 = vadd.f32 0.0, %v3213
        %3215 = vdwg.mxu0
        %v3217 = vsel %vm1440, %v3211, 0
        %v3220 = vsel %vm1440, %v3214, 0
        %3222 = vmatpush.msra.mxu0 0.0
        %3223 = vmatpush.msra.mxu0 0.0
        %3224 = vmatpush.msra.mxu0 0.0
        %3225 = vmatpush.msra.mxu0 0.0
        %3226 = vmatpush.msra.mxu0 0.0
        %3227 = vmatpush.msra.mxu0 0.0
        %3228 = vmatpush.msra.mxu0 0.0
        %3229 = vmatpush.msra.mxu0 0.0
        %3230 = vmatpush.msra.mxu0 0.0
        %3231 = vmatpush.msra.mxu0 0.0
        %3232 = vmatpush.msra.mxu0 0.0
        %3233 = vmatpush.msra.mxu0 0.0
        %3234 = vmatpush.msra.mxu0 0.0
        %3235 = vmatpush.msra.mxu0 0.0
        %3236 = vmatpush.msra.mxu0 %v2906
        %3237 = vmatpush.msra.mxu0 %v2905
        %3238 = vmatmul.f32.gmra.mxu0 %v3217
        %v3239 = vpop.f32.mrf.mxu0
        %v3240 = vadd.f32 0.0, %v3239
        %3241 = vmatmul.f32.gmra.mxu0 %v3220
        %v3242 = vpop.f32.mrf.mxu0
        %v3243 = vadd.f32 0.0, %v3242
        %3244 = vdwg.mxu0
        %v3245 = vadd.f32 %v2851, %v3240
        %v3246 = vadd.f32 %v2852, %v3243
        %s3247 = scalar_lea.vmem %s7, 640
        %v3248 = vld [vmem:[%s3247] sm:$0xff]
        %v3249 = vld [vmem:[%s3247 + $0x8] sm:$0xff]
        %v3250 = vld [vmem:[%s3247 + $0x10] sm:$0xff]
        %v3251 = vld [vmem:[%s3247 + $0x18] sm:$0xff]
        %v3252 = vld [vmem:[%s3247 + $0x20] sm:$0xff]
        %v3253 = vld [vmem:[%s3247 + $0x28] sm:$0xff]
        %v3254 = vld [vmem:[%s3247 + $0x30] sm:$0xff]
        %v3255 = vld [vmem:[%s3247 + $0x38] sm:$0xff]
        %v3256 = vld [vmem:[%s3247 + $0x40] sm:$0xff]
        %v3257 = vld [vmem:[%s3247 + $0x48] sm:$0xff]
        %v3258 = vld [vmem:[%s3247 + $0x50] sm:$0xff]
        %v3259 = vld [vmem:[%s3247 + $0x58] sm:$0xff]
        %v3260 = vld [vmem:[%s3247 + $0x60] sm:$0xff]
        %v3261 = vld [vmem:[%s3247 + $0x68] sm:$0xff]
        %v3262 = vld [vmem:[%s3247 + $0x70] sm:$0xff]
        %v3263 = vld [vmem:[%s3247 + $0x78] sm:$0xff]
        %s3264 = scalar_lea.vmem %s7, 1664
        %v3265 = vld [vmem:[%s3264] sm:$0xff]
        %v3266 = vld [vmem:[%s3264 + $0x8] sm:$0xff]
        %v3267 = vld [vmem:[%s3264 + $0x10] sm:$0xff]
        %v3268 = vld [vmem:[%s3264 + $0x18] sm:$0xff]
        %v3269 = vld [vmem:[%s3264 + $0x20] sm:$0xff]
        %v3270 = vld [vmem:[%s3264 + $0x28] sm:$0xff]
        %v3271 = vld [vmem:[%s3264 + $0x30] sm:$0xff]
        %v3272 = vld [vmem:[%s3264 + $0x38] sm:$0xff]
        %v3273 = vld [vmem:[%s3264 + $0x40] sm:$0xff]
        %v3274 = vld [vmem:[%s3264 + $0x48] sm:$0xff]
        %v3275 = vld [vmem:[%s3264 + $0x50] sm:$0xff]
        %v3276 = vld [vmem:[%s3264 + $0x58] sm:$0xff]
        %v3277 = vld [vmem:[%s3264 + $0x60] sm:$0xff]
        %v3278 = vld [vmem:[%s3264 + $0x68] sm:$0xff]
        %v3279 = vld [vmem:[%s3264 + $0x70] sm:$0xff]
        %v3280 = vld [vmem:[%s3264 + $0x78] sm:$0xff]
        %s3281 = scalar_lea.vmem %s7, 2688
        %v3282 = vld [vmem:[%s3281] sm:$0xff]
        %v3283 = vld [vmem:[%s3281 + $0x8] sm:$0xff]
        %v3284 = vld [vmem:[%s3281 + $0x10] sm:$0xff]
        %v3285 = vld [vmem:[%s3281 + $0x18] sm:$0xff]
        %v3286 = vld [vmem:[%s3281 + $0x20] sm:$0xff]
        %v3287 = vld [vmem:[%s3281 + $0x28] sm:$0xff]
        %v3288 = vld [vmem:[%s3281 + $0x30] sm:$0xff]
        %v3289 = vld [vmem:[%s3281 + $0x38] sm:$0xff]
        %v3290 = vld [vmem:[%s3281 + $0x40] sm:$0xff]
        %v3291 = vld [vmem:[%s3281 + $0x48] sm:$0xff]
        %v3292 = vld [vmem:[%s3281 + $0x50] sm:$0xff]
        %v3293 = vld [vmem:[%s3281 + $0x58] sm:$0xff]
        %v3294 = vld [vmem:[%s3281 + $0x60] sm:$0xff]
        %v3295 = vld [vmem:[%s3281 + $0x68] sm:$0xff]
        %v3296 = vld [vmem:[%s3281 + $0x70] sm:$0xff]
        %v3297 = vld [vmem:[%s3281 + $0x78] sm:$0xff]
        %s3298 = scalar_lea.vmem %s9, 80
        %v3299 = vld [vmem:[%s3298] sm:$0xff]
        %v3300 = vld [vmem:[%s3298 + $0x8] sm:$0xff]
        %s3301 = scalar_lea.vmem %s8, 5
        %v3302 = vld [vmem:[%s3301] sm:$0x1]
        %v3304 = vperm.slane %v3302, 0
        %3306 = vmatpush.msra.mxu0 %v3263
        %3307 = vmatpush.msra.mxu0 %v3262
        %3308 = vmatpush.msra.mxu0 %v3261
        %3309 = vmatpush.msra.mxu0 %v3260
        %3310 = vmatpush.msra.mxu0 %v3259
        %3311 = vmatpush.msra.mxu0 %v3258
        %3312 = vmatpush.msra.mxu0 %v3257
        %3313 = vmatpush.msra.mxu0 %v3256
        %3314 = vmatpush.msra.mxu0 %v3255
        %3315 = vmatpush.msra.mxu0 %v3254
        %3316 = vmatpush.msra.mxu0 %v3253
        %3317 = vmatpush.msra.mxu0 %v3252
        %3318 = vmatpush.msra.mxu0 %v3251
        %3319 = vmatpush.msra.mxu0 %v3250
        %3320 = vmatpush.msra.mxu0 %v3249
        %3321 = vmatpush.msra.mxu0 %v3248
        %3322 = vmatmul.f32.gmra.mxu0 %v1283
        %v3323 = vpop.f32.mrf.mxu0
        %v3324 = vadd.f32 %v3304, %v3323
        %3325 = vmatmul.f32.gmra.mxu0 %v1284
        %v3326 = vpop.f32.mrf.mxu0
        %v3327 = vadd.f32 %v3304, %v3326
        %3328 = vmatmul.f32.gmra.mxu0 %v1285
        %v3329 = vpop.f32.mrf.mxu0
        %v3330 = vadd.f32 %v3304, %v3329
        %3331 = vmatmul.f32.gmra.mxu0 %v1286
        %v3332 = vpop.f32.mrf.mxu0
        %v3333 = vadd.f32 %v3304, %v3332
        %3334 = vdwg.mxu0
        %s3335 = scalar_lea.vmem %s8, 13
        %v3336 = vld [vmem:[%s3335] sm:$0x1]
        %v3338 = vperm.slane %v3336, 0
        %3340 = vmatpush.msra.mxu0 %v3280
        %3341 = vmatpush.msra.mxu0 %v3279
        %3342 = vmatpush.msra.mxu0 %v3278
        %3343 = vmatpush.msra.mxu0 %v3277
        %3344 = vmatpush.msra.mxu0 %v3276
        %3345 = vmatpush.msra.mxu0 %v3275
        %3346 = vmatpush.msra.mxu0 %v3274
        %3347 = vmatpush.msra.mxu0 %v3273
        %3348 = vmatpush.msra.mxu0 %v3272
        %3349 = vmatpush.msra.mxu0 %v3271
        %3350 = vmatpush.msra.mxu0 %v3270
        %3351 = vmatpush.msra.mxu0 %v3269
        %3352 = vmatpush.msra.mxu0 %v3268
        %3353 = vmatpush.msra.mxu0 %v3267
        %3354 = vmatpush.msra.mxu0 %v3266
        %3355 = vmatpush.msra.mxu0 %v3265
        %3356 = vmatmul.f32.gmra.mxu0 %v1283
        %v3357 = vpop.f32.mrf.mxu0
        %v3358 = vadd.f32 %v3338, %v3357
        %3359 = vmatmul.f32.gmra.mxu0 %v1284
        %v3360 = vpop.f32.mrf.mxu0
        %v3361 = vadd.f32 %v3338, %v3360
        %3362 = vmatmul.f32.gmra.mxu0 %v1285
        %v3363 = vpop.f32.mrf.mxu0
        %v3364 = vadd.f32 %v3338, %v3363
        %3365 = vmatmul.f32.gmra.mxu0 %v1286
        %v3366 = vpop.f32.mrf.mxu0
        %v3367 = vadd.f32 %v3338, %v3366
        %3368 = vdwg.mxu0
        %s3369 = scalar_lea.vmem %s8, 21
        %v3370 = vld [vmem:[%s3369] sm:$0x1]
        %v3372 = vperm.slane %v3370, 0
        %3374 = vmatpush.msra.mxu0 %v3297
        %3375 = vmatpush.msra.mxu0 %v3296
        %3376 = vmatpush.msra.mxu0 %v3295
        %3377 = vmatpush.msra.mxu0 %v3294
        %3378 = vmatpush.msra.mxu0 %v3293
        %3379 = vmatpush.msra.mxu0 %v3292
        %3380 = vmatpush.msra.mxu0 %v3291
        %3381 = vmatpush.msra.mxu0 %v3290
        %3382 = vmatpush.msra.mxu0 %v3289
        %3383 = vmatpush.msra.mxu0 %v3288
        %3384 = vmatpush.msra.mxu0 %v3287
        %3385 = vmatpush.msra.mxu0 %v3286
        %3386 = vmatpush.msra.mxu0 %v3285
        %3387 = vmatpush.msra.mxu0 %v3284
        %3388 = vmatpush.msra.mxu0 %v3283
        %3389 = vmatpush.msra.mxu0 %v3282
        %3390 = vmatmul.f32.gmra.mxu0 %v1283
        %v3391 = vpop.f32.mrf.mxu0
        %v3392 = vadd.f32 %v3372, %v3391
        %3393 = vmatmul.f32.gmra.mxu0 %v1284
        %v3394 = vpop.f32.mrf.mxu0
        %v3395 = vadd.f32 %v3372, %v3394
        %3396 = vmatmul.f32.gmra.mxu0 %v1285
        %v3397 = vpop.f32.mrf.mxu0
        %v3398 = vadd.f32 %v3372, %v3397
        %3399 = vmatmul.f32.gmra.mxu0 %v1286
        %v3400 = vpop.f32.mrf.mxu0
        %v3401 = vadd.f32 %v3372, %v3400
        %3402 = vdwg.mxu0
        %v3404 = vsel %vm1440, %v3324, 0
        %v3407 = vsel %vm1440, %v3327, 0
        %v3410 = vsel %vm1440, %v3358, 0
        %v3413 = vsel %vm1440, %v3361, 0
        %3415 = vmatpush.xpose.msra.mxu0 0.0
        %3416 = vmatpush.xpose.msra.mxu0 0.0
        %3417 = vmatpush.xpose.msra.mxu0 0.0
        %3418 = vmatpush.xpose.msra.mxu0 0.0
        %3419 = vmatpush.xpose.msra.mxu0 0.0
        %3420 = vmatpush.xpose.msra.mxu0 0.0
        %3421 = vmatpush.xpose.msra.mxu0 0.0
        %3422 = vmatpush.xpose.msra.mxu0 0.0
        %3423 = vmatpush.xpose.msra.mxu0 0.0
        %3424 = vmatpush.xpose.msra.mxu0 0.0
        %3425 = vmatpush.xpose.msra.mxu0 0.0
        %3426 = vmatpush.xpose.msra.mxu0 0.0
        %3427 = vmatpush.xpose.msra.mxu0 0.0
        %3428 = vmatpush.xpose.msra.mxu0 0.0
        %3429 = vmatpush.xpose.msra.mxu0 %v3413
        %3430 = vmatpush.xpose.msra.mxu0 %v3410
        %3431 = vmatmul.f32.gmra.mxu0 %v3404
        %v3432 = vpop.f32.mrf.mxu0
        %v3433 = vadd.f32 0.0, %v3432
        %3434 = vmatmul.f32.gmra.mxu0 %v3407
        %v3435 = vpop.f32.mrf.mxu0
        %v3436 = vadd.f32 0.0, %v3435
        %3437 = vdwg.mxu0
        %v3438 = vmul.f32 %v3433, 0.25
        %v3439 = vmul.f32 %v3436, 0.25
        %v3440 = vsel %vm1440, %v3438, -inf
        %3441 = vmax.xlane.f32.xlu0 %v3440
        %v3442 = vpop.xlane.xlu0 %3441
        %v3443 = vsel %vm1440, %v3439, -inf
        %3444 = vmax.xlane.f32.xlu0 %v3443
        %v3445 = vpop.xlane.xlu0 %3444
        %v3446 = vsub.f32 %v3438, %v3442
        %v3447 = vsub.f32 %v3439, %v3445
        %v3448 = vmul.f32 %v3446, 1.442695
        %v3449 = vpow.pop %v3448
        %v3450 = vmul.f32 %v3447, 1.442695
        %v3451 = vpow.pop %v3450
        %v3452 = vsel %vm1440, %v3449, 0.0
        %3453 = vadd.xlane.f32.xlu0 %v3452
        %v3454 = vpop.xlane.xlu0 %3453
        %v3455 = vsel %vm1440, %v3451, 0.0
        %3456 = vadd.xlane.f32.xlu0 %v3455
        %v3457 = vpop.xlane.xlu0 %3456
        %v3458 = vrcp.pop %v3454
        %v3459 = vrcp.pop %v3457
        %v3460 = vmul.f32 %v3449, %v3458
        %v3461 = vmul.f32 %v3451, %v3459
        %v3463 = vsel %vm1440, %v3460, 0
        %v3466 = vsel %vm1440, %v3461, 0
        %3468 = vmatpush.msra.mxu0 0.0
        %3469 = vmatpush.msra.mxu0 0.0
        %3470 = vmatpush.msra.mxu0 0.0
        %3471 = vmatpush.msra.mxu0 0.0
        %3472 = vmatpush.msra.mxu0 0.0
        %3473 = vmatpush.msra.mxu0 0.0
        %3474 = vmatpush.msra.mxu0 0.0
        %3475 = vmatpush.msra.mxu0 0.0
        %3476 = vmatpush.msra.mxu0 0.0
        %3477 = vmatpush.msra.mxu0 0.0
        %3478 = vmatpush.msra.mxu0 0.0
        %3479 = vmatpush.msra.mxu0 0.0
        %3480 = vmatpush.msra.mxu0 0.0
        %3481 = vmatpush.msra.mxu0 0.0
        %3482 = vmatpush.msra.mxu0 %v3395
        %3483 = vmatpush.msra.mxu0 %v3392
        %3484 = vmatmul.f32.gmra.mxu0 %v3463
        %v3485 = vpop.f32.mrf.mxu0
        %v3486 = vadd.f32 0.0, %v3485
        %3487 = vmatmul.f32.gmra.mxu0 %v3466
        %v3488 = vpop.f32.mrf.mxu0
        %v3489 = vadd.f32 0.0, %v3488
        %3490 = vdwg.mxu0
        %v3492 = vsel %vm1440, %v3486, 0
        %v3495 = vsel %vm1440, %v3489, 0
        %3497 = vmatpush.msra.mxu0 0.0
        %3498 = vmatpush.msra.mxu0 0.0
        %3499 = vmatpush.msra.mxu0 0.0
        %3500 = vmatpush.msra.mxu0 0.0
        %3501 = vmatpush.msra.mxu0 0.0
        %3502 = vmatpush.msra.mxu0 0.0
        %3503 = vmatpush.msra.mxu0 0.0
        %3504 = vmatpush.msra.mxu0 0.0
        %3505 = vmatpush.msra.mxu0 0.0
        %3506 = vmatpush.msra.mxu0 0.0
        %3507 = vmatpush.msra.mxu0 0.0
        %3508 = vmatpush.msra.mxu0 0.0
        %3509 = vmatpush.msra.mxu0 0.0
        %3510 = vmatpush.msra.mxu0 0.0
        %3511 = vmatpush.msra.mxu0 %v3300
        %3512 = vmatpush.msra.mxu0 %v3299
        %3513 = vmatmul.f32.gmra.mxu0 %v3492
        %v3514 = vpop.f32.mrf.mxu0
        %v3515 = vadd.f32 0.0, %v3514
        %3516 = vmatmul.f32.gmra.mxu0 %v3495
        %v3517 = vpop.f32.mrf.mxu0
        %v3518 = vadd.f32 0.0, %v3517
        %3519 = vdwg.mxu0
        %v3520 = vadd.f32 %v3126, %v3515
        %v3521 = vadd.f32 %v3127, %v3518
        %v3523 = vsel %vm1440, %v3330, 0
        %v3526 = vsel %vm1440, %v3333, 0
        %v3529 = vsel %vm1440, %v3364, 0
        %v3532 = vsel %vm1440, %v3367, 0
        %3534 = vmatpush.xpose.msra.mxu0 0.0
        %3535 = vmatpush.xpose.msra.mxu0 0.0
        %3536 = vmatpush.xpose.msra.mxu0 0.0
        %3537 = vmatpush.xpose.msra.mxu0 0.0
        %3538 = vmatpush.xpose.msra.mxu0 0.0
        %3539 = vmatpush.xpose.msra.mxu0 0.0
        %3540 = vmatpush.xpose.msra.mxu0 0.0
        %3541 = vmatpush.xpose.msra.mxu0 0.0
        %3542 = vmatpush.xpose.msra.mxu0 0.0
        %3543 = vmatpush.xpose.msra.mxu0 0.0
        %3544 = vmatpush.xpose.msra.mxu0 0.0
        %3545 = vmatpush.xpose.msra.mxu0 0.0
        %3546 = vmatpush.xpose.msra.mxu0 0.0
        %3547 = vmatpush.xpose.msra.mxu0 0.0
        %3548 = vmatpush.xpose.msra.mxu0 %v3532
        %3549 = vmatpush.xpose.msra.mxu0 %v3529
        %3550 = vmatmul.f32.gmra.mxu0 %v3523
        %v3551 = vpop.f32.mrf.mxu0
        %v3552 = vadd.f32 0.0, %v3551
        %3553 = vmatmul.f32.gmra.mxu0 %v3526
        %v3554 = vpop.f32.mrf.mxu0
        %v3555 = vadd.f32 0.0, %v3554
        %3556 = vdwg.mxu0
        %v3557 = vmul.f32 %v3552, 0.25
        %v3558 = vmul.f32 %v3555, 0.25
        %v3559 = vsel %vm1440, %v3557, -inf
        %3560 = vmax.xlane.f32.xlu0 %v3559
        %v3561 = vpop.xlane.xlu0 %3560
        %v3562 = vsel %vm1440, %v3558, -inf
        %3563 = vmax.xlane.f32.xlu0 %v3562
        %v3564 = vpop.xlane.xlu0 %3563
        %v3565 = vsub.f32 %v3557, %v3561
        %v3566 = vsub.f32 %v3558, %v3564
        %v3567 = vmul.f32 %v3565, 1.442695
        %v3568 = vpow.pop %v3567
        %v3569 = vmul.f32 %v3566, 1.442695
        %v3570 = vpow.pop %v3569
        %v3571 = vsel %vm1440, %v3568, 0.0
        %3572 = vadd.xlane.f32.xlu0 %v3571
        %v3573 = vpop.xlane.xlu0 %3572
        %v3574 = vsel %vm1440, %v3570, 0.0
        %3575 = vadd.xlane.f32.xlu0 %v3574
        %v3576 = vpop.xlane.xlu0 %3575
        %v3577 = vrcp.pop %v3573
        %v3578 = vrcp.pop %v3576
        %v3579 = vmul.f32 %v3568, %v3577
        %v3580 = vmul.f32 %v3570, %v3578
        %v3582 = vsel %vm1440, %v3579, 0
        %v3585 = vsel %vm1440, %v3580, 0
        %3587 = vmatpush.msra.mxu0 0.0
        %3588 = vmatpush.msra.mxu0 0.0
        %3589 = vmatpush.msra.mxu0 0.0
        %3590 = vmatpush.msra.mxu0 0.0
        %3591 = vmatpush.msra.mxu0 0.0
        %3592 = vmatpush.msra.mxu0 0.0
        %3593 = vmatpush.msra.mxu0 0.0
        %3594 = vmatpush.msra.mxu0 0.0
        %3595 = vmatpush.msra.mxu0 0.0
        %3596 = vmatpush.msra.mxu0 0.0
        %3597 = vmatpush.msra.mxu0 0.0
        %3598 = vmatpush.msra.mxu0 0.0
        %3599 = vmatpush.msra.mxu0 0.0
        %3600 = vmatpush.msra.mxu0 0.0
        %3601 = vmatpush.msra.mxu0 %v3401
        %3602 = vmatpush.msra.mxu0 %v3398
        %3603 = vmatmul.f32.gmra.mxu0 %v3582
        %v3604 = vpop.f32.mrf.mxu0
        %v3605 = vadd.f32 0.0, %v3604
        %3606 = vmatmul.f32.gmra.mxu0 %v3585
        %v3607 = vpop.f32.mrf.mxu0
        %v3608 = vadd.f32 0.0, %v3607
        %3609 = vdwg.mxu0
        %v3611 = vsel %vm1440, %v3605, 0
        %v3614 = vsel %vm1440, %v3608, 0
        %3616 = vmatpush.msra.mxu0 0.0
        %3617 = vmatpush.msra.mxu0 0.0
        %3618 = vmatpush.msra.mxu0 0.0
        %3619 = vmatpush.msra.mxu0 0.0
        %3620 = vmatpush.msra.mxu0 0.0
        %3621 = vmatpush.msra.mxu0 0.0
        %3622 = vmatpush.msra.mxu0 0.0
        %3623 = vmatpush.msra.mxu0 0.0
        %3624 = vmatpush.msra.mxu0 0.0
        %3625 = vmatpush.msra.mxu0 0.0
        %3626 = vmatpush.msra.mxu0 0.0
        %3627 = vmatpush.msra.mxu0 0.0
        %3628 = vmatpush.msra.mxu0 0.0
        %3629 = vmatpush.msra.mxu0 0.0
        %3630 = vmatpush.msra.mxu0 %v3300
        %3631 = vmatpush.msra.mxu0 %v3299
        %3632 = vmatmul.f32.gmra.mxu0 %v3611
        %v3633 = vpop.f32.mrf.mxu0
        %v3634 = vadd.f32 0.0, %v3633
        %3635 = vmatmul.f32.gmra.mxu0 %v3614
        %v3636 = vpop.f32.mrf.mxu0
        %v3637 = vadd.f32 0.0, %v3636
        %3638 = vdwg.mxu0
        %v3639 = vadd.f32 %v3245, %v3634
        %v3640 = vadd.f32 %v3246, %v3637
        %s3641 = scalar_lea.vmem %s7, 768
        %v3642 = vld [vmem:[%s3641] sm:$0xff]
        %v3643 = vld [vmem:[%s3641 + $0x8] sm:$0xff]
        %v3644 = vld [vmem:[%s3641 + $0x10] sm:$0xff]
        %v3645 = vld [vmem:[%s3641 + $0x18] sm:$0xff]
        %v3646 = vld [vmem:[%s3641 + $0x20] sm:$0xff]
        %v3647 = vld [vmem:[%s3641 + $0x28] sm:$0xff]
        %v3648 = vld [vmem:[%s3641 + $0x30] sm:$0xff]
        %v3649 = vld [vmem:[%s3641 + $0x38] sm:$0xff]
        %v3650 = vld [vmem:[%s3641 + $0x40] sm:$0xff]
        %v3651 = vld [vmem:[%s3641 + $0x48] sm:$0xff]
        %v3652 = vld [vmem:[%s3641 + $0x50] sm:$0xff]
        %v3653 = vld [vmem:[%s3641 + $0x58] sm:$0xff]
        %v3654 = vld [vmem:[%s3641 + $0x60] sm:$0xff]
        %v3655 = vld [vmem:[%s3641 + $0x68] sm:$0xff]
        %v3656 = vld [vmem:[%s3641 + $0x70] sm:$0xff]
        %v3657 = vld [vmem:[%s3641 + $0x78] sm:$0xff]
        %s3658 = scalar_lea.vmem %s7, 1792
        %v3659 = vld [vmem:[%s3658] sm:$0xff]
        %v3660 = vld [vmem:[%s3658 + $0x8] sm:$0xff]
        %v3661 = vld [vmem:[%s3658 + $0x10] sm:$0xff]
        %v3662 = vld [vmem:[%s3658 + $0x18] sm:$0xff]
        %v3663 = vld [vmem:[%s3658 + $0x20] sm:$0xff]
        %v3664 = vld [vmem:[%s3658 + $0x28] sm:$0xff]
        %v3665 = vld [vmem:[%s3658 + $0x30] sm:$0xff]
        %v3666 = vld [vmem:[%s3658 + $0x38] sm:$0xff]
        %v3667 = vld [vmem:[%s3658 + $0x40] sm:$0xff]
        %v3668 = vld [vmem:[%s3658 + $0x48] sm:$0xff]
        %v3669 = vld [vmem:[%s3658 + $0x50] sm:$0xff]
        %v3670 = vld [vmem:[%s3658 + $0x58] sm:$0xff]
        %v3671 = vld [vmem:[%s3658 + $0x60] sm:$0xff]
        %v3672 = vld [vmem:[%s3658 + $0x68] sm:$0xff]
        %v3673 = vld [vmem:[%s3658 + $0x70] sm:$0xff]
        %v3674 = vld [vmem:[%s3658 + $0x78] sm:$0xff]
        %s3675 = scalar_lea.vmem %s7, 2816
        %v3676 = vld [vmem:[%s3675] sm:$0xff]
        %v3677 = vld [vmem:[%s3675 + $0x8] sm:$0xff]
        %v3678 = vld [vmem:[%s3675 + $0x10] sm:$0xff]
        %v3679 = vld [vmem:[%s3675 + $0x18] sm:$0xff]
        %v3680 = vld [vmem:[%s3675 + $0x20] sm:$0xff]
        %v3681 = vld [vmem:[%s3675 + $0x28] sm:$0xff]
        %v3682 = vld [vmem:[%s3675 + $0x30] sm:$0xff]
        %v3683 = vld [vmem:[%s3675 + $0x38] sm:$0xff]
        %v3684 = vld [vmem:[%s3675 + $0x40] sm:$0xff]
        %v3685 = vld [vmem:[%s3675 + $0x48] sm:$0xff]
        %v3686 = vld [vmem:[%s3675 + $0x50] sm:$0xff]
        %v3687 = vld [vmem:[%s3675 + $0x58] sm:$0xff]
        %v3688 = vld [vmem:[%s3675 + $0x60] sm:$0xff]
        %v3689 = vld [vmem:[%s3675 + $0x68] sm:$0xff]
        %v3690 = vld [vmem:[%s3675 + $0x70] sm:$0xff]
        %v3691 = vld [vmem:[%s3675 + $0x78] sm:$0xff]
        %s3692 = scalar_lea.vmem %s9, 96
        %v3693 = vld [vmem:[%s3692] sm:$0xff]
        %v3694 = vld [vmem:[%s3692 + $0x8] sm:$0xff]
        %s3695 = scalar_lea.vmem %s8, 6
        %v3696 = vld [vmem:[%s3695] sm:$0x1]
        %v3698 = vperm.slane %v3696, 0
        %3700 = vmatpush.msra.mxu0 %v3657
        %3701 = vmatpush.msra.mxu0 %v3656
        %3702 = vmatpush.msra.mxu0 %v3655
        %3703 = vmatpush.msra.mxu0 %v3654
        %3704 = vmatpush.msra.mxu0 %v3653
        %3705 = vmatpush.msra.mxu0 %v3652
        %3706 = vmatpush.msra.mxu0 %v3651
        %3707 = vmatpush.msra.mxu0 %v3650
        %3708 = vmatpush.msra.mxu0 %v3649
        %3709 = vmatpush.msra.mxu0 %v3648
        %3710 = vmatpush.msra.mxu0 %v3647
        %3711 = vmatpush.msra.mxu0 %v3646
        %3712 = vmatpush.msra.mxu0 %v3645
        %3713 = vmatpush.msra.mxu0 %v3644
        %3714 = vmatpush.msra.mxu0 %v3643
        %3715 = vmatpush.msra.mxu0 %v3642
        %3716 = vmatmul.f32.gmra.mxu0 %v1283
        %v3717 = vpop.f32.mrf.mxu0
        %v3718 = vadd.f32 %v3698, %v3717
        %3719 = vmatmul.f32.gmra.mxu0 %v1284
        %v3720 = vpop.f32.mrf.mxu0
        %v3721 = vadd.f32 %v3698, %v3720
        %3722 = vmatmul.f32.gmra.mxu0 %v1285
        %v3723 = vpop.f32.mrf.mxu0
        %v3724 = vadd.f32 %v3698, %v3723
        %3725 = vmatmul.f32.gmra.mxu0 %v1286
        %v3726 = vpop.f32.mrf.mxu0
        %v3727 = vadd.f32 %v3698, %v3726
        %3728 = vdwg.mxu0
        %s3729 = scalar_lea.vmem %s8, 14
        %v3730 = vld [vmem:[%s3729] sm:$0x1]
        %v3732 = vperm.slane %v3730, 0
        %3734 = vmatpush.msra.mxu0 %v3674
        %3735 = vmatpush.msra.mxu0 %v3673
        %3736 = vmatpush.msra.mxu0 %v3672
        %3737 = vmatpush.msra.mxu0 %v3671
        %3738 = vmatpush.msra.mxu0 %v3670
        %3739 = vmatpush.msra.mxu0 %v3669
        %3740 = vmatpush.msra.mxu0 %v3668
        %3741 = vmatpush.msra.mxu0 %v3667
        %3742 = vmatpush.msra.mxu0 %v3666
        %3743 = vmatpush.msra.mxu0 %v3665
        %3744 = vmatpush.msra.mxu0 %v3664
        %3745 = vmatpush.msra.mxu0 %v3663
        %3746 = vmatpush.msra.mxu0 %v3662
        %3747 = vmatpush.msra.mxu0 %v3661
        %3748 = vmatpush.msra.mxu0 %v3660
        %3749 = vmatpush.msra.mxu0 %v3659
        %3750 = vmatmul.f32.gmra.mxu0 %v1283
        %v3751 = vpop.f32.mrf.mxu0
        %v3752 = vadd.f32 %v3732, %v3751
        %3753 = vmatmul.f32.gmra.mxu0 %v1284
        %v3754 = vpop.f32.mrf.mxu0
        %v3755 = vadd.f32 %v3732, %v3754
        %3756 = vmatmul.f32.gmra.mxu0 %v1285
        %v3757 = vpop.f32.mrf.mxu0
        %v3758 = vadd.f32 %v3732, %v3757
        %3759 = vmatmul.f32.gmra.mxu0 %v1286
        %v3760 = vpop.f32.mrf.mxu0
        %v3761 = vadd.f32 %v3732, %v3760
        %3762 = vdwg.mxu0
        %s3763 = scalar_lea.vmem %s8, 22
        %v3764 = vld [vmem:[%s3763] sm:$0x1]
        %v3766 = vperm.slane %v3764, 0
        %3768 = vmatpush.msra.mxu0 %v3691
        %3769 = vmatpush.msra.mxu0 %v3690
        %3770 = vmatpush.msra.mxu0 %v3689
        %3771 = vmatpush.msra.mxu0 %v3688
        %3772 = vmatpush.msra.mxu0 %v3687
        %3773 = vmatpush.msra.mxu0 %v3686
        %3774 = vmatpush.msra.mxu0 %v3685
        %3775 = vmatpush.msra.mxu0 %v3684
        %3776 = vmatpush.msra.mxu0 %v3683
        %3777 = vmatpush.msra.mxu0 %v3682
        %3778 = vmatpush.msra.mxu0 %v3681
        %3779 = vmatpush.msra.mxu0 %v3680
        %3780 = vmatpush.msra.mxu0 %v3679
        %3781 = vmatpush.msra.mxu0 %v3678
        %3782 = vmatpush.msra.mxu0 %v3677
        %3783 = vmatpush.msra.mxu0 %v3676
        %3784 = vmatmul.f32.gmra.mxu0 %v1283
        %v3785 = vpop.f32.mrf.mxu0
        %v3786 = vadd.f32 %v3766, %v3785
        %3787 = vmatmul.f32.gmra.mxu0 %v1284
        %v3788 = vpop.f32.mrf.mxu0
        %v3789 = vadd.f32 %v3766, %v3788
        %3790 = vmatmul.f32.gmra.mxu0 %v1285
        %v3791 = vpop.f32.mrf.mxu0
        %v3792 = vadd.f32 %v3766, %v3791
        %3793 = vmatmul.f32.gmra.mxu0 %v1286
        %v3794 = vpop.f32.mrf.mxu0
        %v3795 = vadd.f32 %v3766, %v3794
        %3796 = vdwg.mxu0
        %v3798 = vsel %vm1440, %v3718, 0
        %v3801 = vsel %vm1440, %v3721, 0
        %v3804 = vsel %vm1440, %v3752, 0
        %v3807 = vsel %vm1440, %v3755, 0
        %3809 = vmatpush.xpose.msra.mxu0 0.0
        %3810 = vmatpush.xpose.msra.mxu0 0.0
        %3811 = vmatpush.xpose.msra.mxu0 0.0
        %3812 = vmatpush.xpose.msra.mxu0 0.0
        %3813 = vmatpush.xpose.msra.mxu0 0.0
        %3814 = vmatpush.xpose.msra.mxu0 0.0
        %3815 = vmatpush.xpose.msra.mxu0 0.0
        %3816 = vmatpush.xpose.msra.mxu0 0.0
        %3817 = vmatpush.xpose.msra.mxu0 0.0
        %3818 = vmatpush.xpose.msra.mxu0 0.0
        %3819 = vmatpush.xpose.msra.mxu0 0.0
        %3820 = vmatpush.xpose.msra.mxu0 0.0
        %3821 = vmatpush.xpose.msra.mxu0 0.0
        %3822 = vmatpush.xpose.msra.mxu0 0.0
        %3823 = vmatpush.xpose.msra.mxu0 %v3807
        %3824 = vmatpush.xpose.msra.mxu0 %v3804
        %3825 = vmatmul.f32.gmra.mxu0 %v3798
        %v3826 = vpop.f32.mrf.mxu0
        %v3827 = vadd.f32 0.0, %v3826
        %3828 = vmatmul.f32.gmra.mxu0 %v3801
        %v3829 = vpop.f32.mrf.mxu0
        %v3830 = vadd.f32 0.0, %v3829
        %3831 = vdwg.mxu0
        %v3832 = vmul.f32 %v3827, 0.25
        %v3833 = vmul.f32 %v3830, 0.25
        %v3834 = vsel %vm1440, %v3832, -inf
        %3835 = vmax.xlane.f32.xlu0 %v3834
        %v3836 = vpop.xlane.xlu0 %3835
        %v3837 = vsel %vm1440, %v3833, -inf
        %3838 = vmax.xlane.f32.xlu0 %v3837
        %v3839 = vpop.xlane.xlu0 %3838
        %v3840 = vsub.f32 %v3832, %v3836
        %v3841 = vsub.f32 %v3833, %v3839
        %v3842 = vmul.f32 %v3840, 1.442695
        %v3843 = vpow.pop %v3842
        %v3844 = vmul.f32 %v3841, 1.442695
        %v3845 = vpow.pop %v3844
        %v3846 = vsel %vm1440, %v3843, 0.0
        %3847 = vadd.xlane.f32.xlu0 %v3846
        %v3848 = vpop.xlane.xlu0 %3847
        %v3849 = vsel %vm1440, %v3845, 0.0
        %3850 = vadd.xlane.f32.xlu0 %v3849
        %v3851 = vpop.xlane.xlu0 %3850
        %v3852 = vrcp.pop %v3848
        %v3853 = vrcp.pop %v3851
        %v3854 = vmul.f32 %v3843, %v3852
        %v3855 = vmul.f32 %v3845, %v3853
        %v3857 = vsel %vm1440, %v3854, 0
        %v3860 = vsel %vm1440, %v3855, 0
        %3862 = vmatpush.msra.mxu0 0.0
        %3863 = vmatpush.msra.mxu0 0.0
        %3864 = vmatpush.msra.mxu0 0.0
        %3865 = vmatpush.msra.mxu0 0.0
        %3866 = vmatpush.msra.mxu0 0.0
        %3867 = vmatpush.msra.mxu0 0.0
        %3868 = vmatpush.msra.mxu0 0.0
        %3869 = vmatpush.msra.mxu0 0.0
        %3870 = vmatpush.msra.mxu0 0.0
        %3871 = vmatpush.msra.mxu0 0.0
        %3872 = vmatpush.msra.mxu0 0.0
        %3873 = vmatpush.msra.mxu0 0.0
        %3874 = vmatpush.msra.mxu0 0.0
        %3875 = vmatpush.msra.mxu0 0.0
        %3876 = vmatpush.msra.mxu0 %v3789
        %3877 = vmatpush.msra.mxu0 %v3786
        %3878 = vmatmul.f32.gmra.mxu0 %v3857
        %v3879 = vpop.f32.mrf.mxu0
        %v3880 = vadd.f32 0.0, %v3879
        %3881 = vmatmul.f32.gmra.mxu0 %v3860
        %v3882 = vpop.f32.mrf.mxu0
        %v3883 = vadd.f32 0.0, %v3882
        %3884 = vdwg.mxu0
        %v3886 = vsel %vm1440, %v3880, 0
        %v3889 = vsel %vm1440, %v3883, 0
        %3891 = vmatpush.msra.mxu0 0.0
        %3892 = vmatpush.msra.mxu0 0.0
        %3893 = vmatpush.msra.mxu0 0.0
        %3894 = vmatpush.msra.mxu0 0.0
        %3895 = vmatpush.msra.mxu0 0.0
        %3896 = vmatpush.msra.mxu0 0.0
        %3897 = vmatpush.msra.mxu0 0.0
        %3898 = vmatpush.msra.mxu0 0.0
        %3899 = vmatpush.msra.mxu0 0.0
        %3900 = vmatpush.msra.mxu0 0.0
        %3901 = vmatpush.msra.mxu0 0.0
        %3902 = vmatpush.msra.mxu0 0.0
        %3903 = vmatpush.msra.mxu0 0.0
        %3904 = vmatpush.msra.mxu0 0.0
        %3905 = vmatpush.msra.mxu0 %v3694
        %3906 = vmatpush.msra.mxu0 %v3693
        %3907 = vmatmul.f32.gmra.mxu0 %v3886
        %v3908 = vpop.f32.mrf.mxu0
        %v3909 = vadd.f32 0.0, %v3908
        %3910 = vmatmul.f32.gmra.mxu0 %v3889
        %v3911 = vpop.f32.mrf.mxu0
        %v3912 = vadd.f32 0.0, %v3911
        %3913 = vdwg.mxu0
        %v3914 = vadd.f32 %v3520, %v3909
        %v3915 = vadd.f32 %v3521, %v3912
        %v3917 = vsel %vm1440, %v3724, 0
        %v3920 = vsel %vm1440, %v3727, 0
        %v3923 = vsel %vm1440, %v3758, 0
        %v3926 = vsel %vm1440, %v3761, 0
        %3928 = vmatpush.xpose.msra.mxu0 0.0
        %3929 = vmatpush.xpose.msra.mxu0 0.0
        %3930 = vmatpush.xpose.msra.mxu0 0.0
        %3931 = vmatpush.xpose.msra.mxu0 0.0
        %3932 = vmatpush.xpose.msra.mxu0 0.0
        %3933 = vmatpush.xpose.msra.mxu0 0.0
        %3934 = vmatpush.xpose.msra.mxu0 0.0
        %3935 = vmatpush.xpose.msra.mxu0 0.0
        %3936 = vmatpush.xpose.msra.mxu0 0.0
        %3937 = vmatpush.xpose.msra.mxu0 0.0
        %3938 = vmatpush.xpose.msra.mxu0 0.0
        %3939 = vmatpush.xpose.msra.mxu0 0.0
        %3940 = vmatpush.xpose.msra.mxu0 0.0
        %3941 = vmatpush.xpose.msra.mxu0 0.0
        %3942 = vmatpush.xpose.msra.mxu0 %v3926
        %3943 = vmatpush.xpose.msra.mxu0 %v3923
        %3944 = vmatmul.f32.gmra.mxu0 %v3917
        %v3945 = vpop.f32.mrf.mxu0
        %v3946 = vadd.f32 0.0, %v3945
        %3947 = vmatmul.f32.gmra.mxu0 %v3920
        %v3948 = vpop.f32.mrf.mxu0
        %v3949 = vadd.f32 0.0, %v3948
        %3950 = vdwg.mxu0
        %v3951 = vmul.f32 %v3946, 0.25
        %v3952 = vmul.f32 %v3949, 0.25
        %v3953 = vsel %vm1440, %v3951, -inf
        %3954 = vmax.xlane.f32.xlu0 %v3953
        %v3955 = vpop.xlane.xlu0 %3954
        %v3956 = vsel %vm1440, %v3952, -inf
        %3957 = vmax.xlane.f32.xlu0 %v3956
        %v3958 = vpop.xlane.xlu0 %3957
        %v3959 = vsub.f32 %v3951, %v3955
        %v3960 = vsub.f32 %v3952, %v3958
        %v3961 = vmul.f32 %v3959, 1.442695
        %v3962 = vpow.pop %v3961
        %v3963 = vmul.f32 %v3960, 1.442695
        %v3964 = vpow.pop %v3963
        %v3965 = vsel %vm1440, %v3962, 0.0
        %3966 = vadd.xlane.f32.xlu0 %v3965
        %v3967 = vpop.xlane.xlu0 %3966
        %v3968 = vsel %vm1440, %v3964, 0.0
        %3969 = vadd.xlane.f32.xlu0 %v3968
        %v3970 = vpop.xlane.xlu0 %3969
        %v3971 = vrcp.pop %v3967
        %v3972 = vrcp.pop %v3970
        %v3973 = vmul.f32 %v3962, %v3971
        %v3974 = vmul.f32 %v3964, %v3972
        %v3976 = vsel %vm1440, %v3973, 0
        %v3979 = vsel %vm1440, %v3974, 0
        %3981 = vmatpush.msra.mxu0 0.0
        %3982 = vmatpush.msra.mxu0 0.0
        %3983 = vmatpush.msra.mxu0 0.0
        %3984 = vmatpush.msra.mxu0 0.0
        %3985 = vmatpush.msra.mxu0 0.0
        %3986 = vmatpush.msra.mxu0 0.0
        %3987 = vmatpush.msra.mxu0 0.0
        %3988 = vmatpush.msra.mxu0 0.0
        %3989 = vmatpush.msra.mxu0 0.0
        %3990 = vmatpush.msra.mxu0 0.0
        %3991 = vmatpush.msra.mxu0 0.0
        %3992 = vmatpush.msra.mxu0 0.0
        %3993 = vmatpush.msra.mxu0 0.0
        %3994 = vmatpush.msra.mxu0 0.0
        %3995 = vmatpush.msra.mxu0 %v3795
        %3996 = vmatpush.msra.mxu0 %v3792
        %3997 = vmatmul.f32.gmra.mxu0 %v3976
        %v3998 = vpop.f32.mrf.mxu0
        %v3999 = vadd.f32 0.0, %v3998
        %4000 = vmatmul.f32.gmra.mxu0 %v3979
        %v4001 = vpop.f32.mrf.mxu0
        %v4002 = vadd.f32 0.0, %v4001
        %4003 = vdwg.mxu0
        %v4005 = vsel %vm1440, %v3999, 0
        %v4008 = vsel %vm1440, %v4002, 0
        %4010 = vmatpush.msra.mxu0 0.0
        %4011 = vmatpush.msra.mxu0 0.0
        %4012 = vmatpush.msra.mxu0 0.0
        %4013 = vmatpush.msra.mxu0 0.0
        %4014 = vmatpush.msra.mxu0 0.0
        %4015 = vmatpush.msra.mxu0 0.0
        %4016 = vmatpush.msra.mxu0 0.0
        %4017 = vmatpush.msra.mxu0 0.0
        %4018 = vmatpush.msra.mxu0 0.0
        %4019 = vmatpush.msra.mxu0 0.0
        %4020 = vmatpush.msra.mxu0 0.0
        %4021 = vmatpush.msra.mxu0 0.0
        %4022 = vmatpush.msra.mxu0 0.0
        %4023 = vmatpush.msra.mxu0 0.0
        %4024 = vmatpush.msra.mxu0 %v3694
        %4025 = vmatpush.msra.mxu0 %v3693
        %4026 = vmatmul.f32.gmra.mxu0 %v4005
        %v4027 = vpop.f32.mrf.mxu0
        %v4028 = vadd.f32 0.0, %v4027
        %4029 = vmatmul.f32.gmra.mxu0 %v4008
        %v4030 = vpop.f32.mrf.mxu0
        %v4031 = vadd.f32 0.0, %v4030
        %4032 = vdwg.mxu0
        %v4033 = vadd.f32 %v3639, %v4028
        %v4034 = vadd.f32 %v3640, %v4031
        %s4035 = scalar_lea.vmem %s7, 896
        %v4036 = vld [vmem:[%s4035] sm:$0xff]
        %v4037 = vld [vmem:[%s4035 + $0x8] sm:$0xff]
        %v4038 = vld [vmem:[%s4035 + $0x10] sm:$0xff]
        %v4039 = vld [vmem:[%s4035 + $0x18] sm:$0xff]
        %v4040 = vld [vmem:[%s4035 + $0x20] sm:$0xff]
        %v4041 = vld [vmem:[%s4035 + $0x28] sm:$0xff]
        %v4042 = vld [vmem:[%s4035 + $0x30] sm:$0xff]
        %v4043 = vld [vmem:[%s4035 + $0x38] sm:$0xff]
        %v4044 = vld [vmem:[%s4035 + $0x40] sm:$0xff]
        %v4045 = vld [vmem:[%s4035 + $0x48] sm:$0xff]
        %v4046 = vld [vmem:[%s4035 + $0x50] sm:$0xff]
        %v4047 = vld [vmem:[%s4035 + $0x58] sm:$0xff]
        %v4048 = vld [vmem:[%s4035 + $0x60] sm:$0xff]
        %v4049 = vld [vmem:[%s4035 + $0x68] sm:$0xff]
        %v4050 = vld [vmem:[%s4035 + $0x70] sm:$0xff]
        %v4051 = vld [vmem:[%s4035 + $0x78] sm:$0xff]
        %s4052 = scalar_lea.vmem %s7, 1920
        %v4053 = vld [vmem:[%s4052] sm:$0xff]
        %v4054 = vld [vmem:[%s4052 + $0x8] sm:$0xff]
        %v4055 = vld [vmem:[%s4052 + $0x10] sm:$0xff]
        %v4056 = vld [vmem:[%s4052 + $0x18] sm:$0xff]
        %v4057 = vld [vmem:[%s4052 + $0x20] sm:$0xff]
        %v4058 = vld [vmem:[%s4052 + $0x28] sm:$0xff]
        %v4059 = vld [vmem:[%s4052 + $0x30] sm:$0xff]
        %v4060 = vld [vmem:[%s4052 + $0x38] sm:$0xff]
        %v4061 = vld [vmem:[%s4052 + $0x40] sm:$0xff]
        %v4062 = vld [vmem:[%s4052 + $0x48] sm:$0xff]
        %v4063 = vld [vmem:[%s4052 + $0x50] sm:$0xff]
        %v4064 = vld [vmem:[%s4052 + $0x58] sm:$0xff]
        %v4065 = vld [vmem:[%s4052 + $0x60] sm:$0xff]
        %v4066 = vld [vmem:[%s4052 + $0x68] sm:$0xff]
        %v4067 = vld [vmem:[%s4052 + $0x70] sm:$0xff]
        %v4068 = vld [vmem:[%s4052 + $0x78] sm:$0xff]
        %s4069 = scalar_lea.vmem %s7, 2944
        %v4070 = vld [vmem:[%s4069] sm:$0xff]
        %v4071 = vld [vmem:[%s4069 + $0x8] sm:$0xff]
        %v4072 = vld [vmem:[%s4069 + $0x10] sm:$0xff]
        %v4073 = vld [vmem:[%s4069 + $0x18] sm:$0xff]
        %v4074 = vld [vmem:[%s4069 + $0x20] sm:$0xff]
        %v4075 = vld [vmem:[%s4069 + $0x28] sm:$0xff]
        %v4076 = vld [vmem:[%s4069 + $0x30] sm:$0xff]
        %v4077 = vld [vmem:[%s4069 + $0x38] sm:$0xff]
        %v4078 = vld [vmem:[%s4069 + $0x40] sm:$0xff]
        %v4079 = vld [vmem:[%s4069 + $0x48] sm:$0xff]
        %v4080 = vld [vmem:[%s4069 + $0x50] sm:$0xff]
        %v4081 = vld [vmem:[%s4069 + $0x58] sm:$0xff]
        %v4082 = vld [vmem:[%s4069 + $0x60] sm:$0xff]
        %v4083 = vld [vmem:[%s4069 + $0x68] sm:$0xff]
        %v4084 = vld [vmem:[%s4069 + $0x70] sm:$0xff]
        %v4085 = vld [vmem:[%s4069 + $0x78] sm:$0xff]
        %s4086 = scalar_lea.vmem %s9, 112
        %v4087 = vld [vmem:[%s4086] sm:$0xff]
        %v4088 = vld [vmem:[%s4086 + $0x8] sm:$0xff]
        %s4089 = scalar_lea.vmem %s8, 7
        %v4090 = vld [vmem:[%s4089] sm:$0x1]
        %v4092 = vperm.slane %v4090, 0
        %4094 = vmatpush.msra.mxu0 %v4051
        %4095 = vmatpush.msra.mxu0 %v4050
        %4096 = vmatpush.msra.mxu0 %v4049
        %4097 = vmatpush.msra.mxu0 %v4048
        %4098 = vmatpush.msra.mxu0 %v4047
        %4099 = vmatpush.msra.mxu0 %v4046
        %4100 = vmatpush.msra.mxu0 %v4045
        %4101 = vmatpush.msra.mxu0 %v4044
        %4102 = vmatpush.msra.mxu0 %v4043
        %4103 = vmatpush.msra.mxu0 %v4042
        %4104 = vmatpush.msra.mxu0 %v4041
        %4105 = vmatpush.msra.mxu0 %v4040
        %4106 = vmatpush.msra.mxu0 %v4039
        %4107 = vmatpush.msra.mxu0 %v4038
        %4108 = vmatpush.msra.mxu0 %v4037
        %4109 = vmatpush.msra.mxu0 %v4036
        %4110 = vmatmul.f32.gmra.mxu0 %v1283
        %v4111 = vpop.f32.mrf.mxu0
        %v4112 = vadd.f32 %v4092, %v4111
        %4113 = vmatmul.f32.gmra.mxu0 %v1284
        %v4114 = vpop.f32.mrf.mxu0
        %v4115 = vadd.f32 %v4092, %v4114
        %4116 = vmatmul.f32.gmra.mxu0 %v1285
        %v4117 = vpop.f32.mrf.mxu0
        %v4118 = vadd.f32 %v4092, %v4117
        %4119 = vmatmul.f32.gmra.mxu0 %v1286
        %v4120 = vpop.f32.mrf.mxu0
        %v4121 = vadd.f32 %v4092, %v4120
        %4122 = vdwg.mxu0
        %s4123 = scalar_lea.vmem %s8, 15
        %v4124 = vld [vmem:[%s4123] sm:$0x1]
        %v4126 = vperm.slane %v4124, 0
        %4128 = vmatpush.msra.mxu0 %v4068
        %4129 = vmatpush.msra.mxu0 %v4067
        %4130 = vmatpush.msra.mxu0 %v4066
        %4131 = vmatpush.msra.mxu0 %v4065
        %4132 = vmatpush.msra.mxu0 %v4064
        %4133 = vmatpush.msra.mxu0 %v4063
        %4134 = vmatpush.msra.mxu0 %v4062
        %4135 = vmatpush.msra.mxu0 %v4061
        %4136 = vmatpush.msra.mxu0 %v4060
        %4137 = vmatpush.msra.mxu0 %v4059
        %4138 = vmatpush.msra.mxu0 %v4058
        %4139 = vmatpush.msra.mxu0 %v4057
        %4140 = vmatpush.msra.mxu0 %v4056
        %4141 = vmatpush.msra.mxu0 %v4055
        %4142 = vmatpush.msra.mxu0 %v4054
        %4143 = vmatpush.msra.mxu0 %v4053
        %4144 = vmatmul.f32.gmra.mxu0 %v1283
        %v4145 = vpop.f32.mrf.mxu0
        %v4146 = vadd.f32 %v4126, %v4145
        %4147 = vmatmul.f32.gmra.mxu0 %v1284
        %v4148 = vpop.f32.mrf.mxu0
        %v4149 = vadd.f32 %v4126, %v4148
        %4150 = vmatmul.f32.gmra.mxu0 %v1285
        %v4151 = vpop.f32.mrf.mxu0
        %v4152 = vadd.f32 %v4126, %v4151
        %4153 = vmatmul.f32.gmra.mxu0 %v1286
        %v4154 = vpop.f32.mrf.mxu0
        %v4155 = vadd.f32 %v4126, %v4154
        %4156 = vdwg.mxu0
        %s4157 = scalar_lea.vmem %s8, 23
        %v4158 = vld [vmem:[%s4157] sm:$0x1]
        %v4160 = vperm.slane %v4158, 0
        %4162 = vmatpush.msra.mxu0 %v4085
        %4163 = vmatpush.msra.mxu0 %v4084
        %4164 = vmatpush.msra.mxu0 %v4083
        %4165 = vmatpush.msra.mxu0 %v4082
        %4166 = vmatpush.msra.mxu0 %v4081
        %4167 = vmatpush.msra.mxu0 %v4080
        %4168 = vmatpush.msra.mxu0 %v4079
        %4169 = vmatpush.msra.mxu0 %v4078
        %4170 = vmatpush.msra.mxu0 %v4077
        %4171 = vmatpush.msra.mxu0 %v4076
        %4172 = vmatpush.msra.mxu0 %v4075
        %4173 = vmatpush.msra.mxu0 %v4074
        %4174 = vmatpush.msra.mxu0 %v4073
        %4175 = vmatpush.msra.mxu0 %v4072
        %4176 = vmatpush.msra.mxu0 %v4071
        %4177 = vmatpush.msra.mxu0 %v4070
        %4178 = vmatmul.f32.gmra.mxu0 %v1283
        %v4179 = vpop.f32.mrf.mxu0
        %v4180 = vadd.f32 %v4160, %v4179
        %4181 = vmatmul.f32.gmra.mxu0 %v1284
        %v4182 = vpop.f32.mrf.mxu0
        %v4183 = vadd.f32 %v4160, %v4182
        %4184 = vmatmul.f32.gmra.mxu0 %v1285
        %v4185 = vpop.f32.mrf.mxu0
        %v4186 = vadd.f32 %v4160, %v4185
        %4187 = vmatmul.f32.gmra.mxu0 %v1286
        %v4188 = vpop.f32.mrf.mxu0
        %v4189 = vadd.f32 %v4160, %v4188
        %4190 = vdwg.mxu0
        %v4192 = vsel %vm1440, %v4112, 0
        %v4195 = vsel %vm1440, %v4115, 0
        %v4198 = vsel %vm1440, %v4146, 0
        %v4201 = vsel %vm1440, %v4149, 0
        %4203 = vmatpush.xpose.msra.mxu0 0.0
        %4204 = vmatpush.xpose.msra.mxu0 0.0
        %4205 = vmatpush.xpose.msra.mxu0 0.0
        %4206 = vmatpush.xpose.msra.mxu0 0.0
        %4207 = vmatpush.xpose.msra.mxu0 0.0
        %4208 = vmatpush.xpose.msra.mxu0 0.0
        %4209 = vmatpush.xpose.msra.mxu0 0.0
        %4210 = vmatpush.xpose.msra.mxu0 0.0
        %4211 = vmatpush.xpose.msra.mxu0 0.0
        %4212 = vmatpush.xpose.msra.mxu0 0.0
        %4213 = vmatpush.xpose.msra.mxu0 0.0
        %4214 = vmatpush.xpose.msra.mxu0 0.0
        %4215 = vmatpush.xpose.msra.mxu0 0.0
        %4216 = vmatpush.xpose.msra.mxu0 0.0
        %4217 = vmatpush.xpose.msra.mxu0 %v4201
        %4218 = vmatpush.xpose.msra.mxu0 %v4198
        %4219 = vmatmul.f32.gmra.mxu0 %v4192
        %v4220 = vpop.f32.mrf.mxu0
        %v4221 = vadd.f32 0.0, %v4220
        %4222 = vmatmul.f32.gmra.mxu0 %v4195
        %v4223 = vpop.f32.mrf.mxu0
        %v4224 = vadd.f32 0.0, %v4223
        %4225 = vdwg.mxu0
        %v4226 = vmul.f32 %v4221, 0.25
        %v4227 = vmul.f32 %v4224, 0.25
        %v4228 = vsel %vm1440, %v4226, -inf
        %4229 = vmax.xlane.f32.xlu0 %v4228
        %v4230 = vpop.xlane.xlu0 %4229
        %v4231 = vsel %vm1440, %v4227, -inf
        %4232 = vmax.xlane.f32.xlu0 %v4231
        %v4233 = vpop.xlane.xlu0 %4232
        %v4234 = vsub.f32 %v4226, %v4230
        %v4235 = vsub.f32 %v4227, %v4233
        %v4236 = vmul.f32 %v4234, 1.442695
        %v4237 = vpow.pop %v4236
        %v4238 = vmul.f32 %v4235, 1.442695
        %v4239 = vpow.pop %v4238
        %v4240 = vsel %vm1440, %v4237, 0.0
        %4241 = vadd.xlane.f32.xlu0 %v4240
        %v4242 = vpop.xlane.xlu0 %4241
        %v4243 = vsel %vm1440, %v4239, 0.0
        %4244 = vadd.xlane.f32.xlu0 %v4243
        %v4245 = vpop.xlane.xlu0 %4244
        %v4246 = vrcp.pop %v4242
        %v4247 = vrcp.pop %v4245
        %v4248 = vmul.f32 %v4237, %v4246
        %v4249 = vmul.f32 %v4239, %v4247
        %v4251 = vsel %vm1440, %v4248, 0
        %v4254 = vsel %vm1440, %v4249, 0
        %4256 = vmatpush.msra.mxu0 0.0
        %4257 = vmatpush.msra.mxu0 0.0
        %4258 = vmatpush.msra.mxu0 0.0
        %4259 = vmatpush.msra.mxu0 0.0
        %4260 = vmatpush.msra.mxu0 0.0
        %4261 = vmatpush.msra.mxu0 0.0
        %4262 = vmatpush.msra.mxu0 0.0
        %4263 = vmatpush.msra.mxu0 0.0
        %4264 = vmatpush.msra.mxu0 0.0
        %4265 = vmatpush.msra.mxu0 0.0
        %4266 = vmatpush.msra.mxu0 0.0
        %4267 = vmatpush.msra.mxu0 0.0
        %4268 = vmatpush.msra.mxu0 0.0
        %4269 = vmatpush.msra.mxu0 0.0
        %4270 = vmatpush.msra.mxu0 %v4183
        %4271 = vmatpush.msra.mxu0 %v4180
        %4272 = vmatmul.f32.gmra.mxu0 %v4251
        %v4273 = vpop.f32.mrf.mxu0
        %v4274 = vadd.f32 0.0, %v4273
        %4275 = vmatmul.f32.gmra.mxu0 %v4254
        %v4276 = vpop.f32.mrf.mxu0
        %v4277 = vadd.f32 0.0, %v4276
        %4278 = vdwg.mxu0
        %v4280 = vsel %vm1440, %v4274, 0
        %v4283 = vsel %vm1440, %v4277, 0
        %4285 = vmatpush.msra.mxu0 0.0
        %4286 = vmatpush.msra.mxu0 0.0
        %4287 = vmatpush.msra.mxu0 0.0
        %4288 = vmatpush.msra.mxu0 0.0
        %4289 = vmatpush.msra.mxu0 0.0
        %4290 = vmatpush.msra.mxu0 0.0
        %4291 = vmatpush.msra.mxu0 0.0
        %4292 = vmatpush.msra.mxu0 0.0
        %4293 = vmatpush.msra.mxu0 0.0
        %4294 = vmatpush.msra.mxu0 0.0
        %4295 = vmatpush.msra.mxu0 0.0
        %4296 = vmatpush.msra.mxu0 0.0
        %4297 = vmatpush.msra.mxu0 0.0
        %4298 = vmatpush.msra.mxu0 0.0
        %4299 = vmatpush.msra.mxu0 %v4088
        %4300 = vmatpush.msra.mxu0 %v4087
        %4301 = vmatmul.f32.gmra.mxu0 %v4280
        %v4302 = vpop.f32.mrf.mxu0
        %v4303 = vadd.f32 0.0, %v4302
        %4304 = vmatmul.f32.gmra.mxu0 %v4283
        %v4305 = vpop.f32.mrf.mxu0
        %v4306 = vadd.f32 0.0, %v4305
        %4307 = vdwg.mxu0
        %v4308 = vadd.f32 %v3914, %v4303
        %v4309 = vadd.f32 %v3915, %v4306
        %v4311 = vsel %vm1440, %v4118, 0
        %v4314 = vsel %vm1440, %v4121, 0
        %v4317 = vsel %vm1440, %v4152, 0
        %v4320 = vsel %vm1440, %v4155, 0
        %4322 = vmatpush.xpose.msra.mxu0 0.0
        %4323 = vmatpush.xpose.msra.mxu0 0.0
        %4324 = vmatpush.xpose.msra.mxu0 0.0
        %4325 = vmatpush.xpose.msra.mxu0 0.0
        %4326 = vmatpush.xpose.msra.mxu0 0.0
        %4327 = vmatpush.xpose.msra.mxu0 0.0
        %4328 = vmatpush.xpose.msra.mxu0 0.0
        %4329 = vmatpush.xpose.msra.mxu0 0.0
        %4330 = vmatpush.xpose.msra.mxu0 0.0
        %4331 = vmatpush.xpose.msra.mxu0 0.0
        %4332 = vmatpush.xpose.msra.mxu0 0.0
        %4333 = vmatpush.xpose.msra.mxu0 0.0
        %4334 = vmatpush.xpose.msra.mxu0 0.0
        %4335 = vmatpush.xpose.msra.mxu0 0.0
        %4336 = vmatpush.xpose.msra.mxu0 %v4320
        %4337 = vmatpush.xpose.msra.mxu0 %v4317
        %4338 = vmatmul.f32.gmra.mxu0 %v4311
        %v4339 = vpop.f32.mrf.mxu0
        %v4340 = vadd.f32 0.0, %v4339
        %4341 = vmatmul.f32.gmra.mxu0 %v4314
        %v4342 = vpop.f32.mrf.mxu0
        %v4343 = vadd.f32 0.0, %v4342
        %4344 = vdwg.mxu0
        %v4345 = vmul.f32 %v4340, 0.25
        %v4346 = vmul.f32 %v4343, 0.25
        %v4347 = vsel %vm1440, %v4345, -inf
        %4348 = vmax.xlane.f32.xlu0 %v4347
        %v4349 = vpop.xlane.xlu0 %4348
        %v4350 = vsel %vm1440, %v4346, -inf
        %4351 = vmax.xlane.f32.xlu0 %v4350
        %v4352 = vpop.xlane.xlu0 %4351
        %v4353 = vsub.f32 %v4345, %v4349
        %v4354 = vsub.f32 %v4346, %v4352
        %v4355 = vmul.f32 %v4353, 1.442695
        %v4356 = vpow.pop %v4355
        %v4357 = vmul.f32 %v4354, 1.442695
        %v4358 = vpow.pop %v4357
        %v4359 = vsel %vm1440, %v4356, 0.0
        %4360 = vadd.xlane.f32.xlu0 %v4359
        %v4361 = vpop.xlane.xlu0 %4360
        %v4362 = vsel %vm1440, %v4358, 0.0
        %4363 = vadd.xlane.f32.xlu0 %v4362
        %v4364 = vpop.xlane.xlu0 %4363
        %v4365 = vrcp.pop %v4361
        %v4366 = vrcp.pop %v4364
        %v4367 = vmul.f32 %v4356, %v4365
        %v4368 = vmul.f32 %v4358, %v4366
        %v4370 = vsel %vm1440, %v4367, 0
        %v4373 = vsel %vm1440, %v4368, 0
        %4375 = vmatpush.msra.mxu0 0.0
        %4376 = vmatpush.msra.mxu0 0.0
        %4377 = vmatpush.msra.mxu0 0.0
        %4378 = vmatpush.msra.mxu0 0.0
        %4379 = vmatpush.msra.mxu0 0.0
        %4380 = vmatpush.msra.mxu0 0.0
        %4381 = vmatpush.msra.mxu0 0.0
        %4382 = vmatpush.msra.mxu0 0.0
        %4383 = vmatpush.msra.mxu0 0.0
        %4384 = vmatpush.msra.mxu0 0.0
        %4385 = vmatpush.msra.mxu0 0.0
        %4386 = vmatpush.msra.mxu0 0.0
        %4387 = vmatpush.msra.mxu0 0.0
        %4388 = vmatpush.msra.mxu0 0.0
        %4389 = vmatpush.msra.mxu0 %v4189
        %4390 = vmatpush.msra.mxu0 %v4186
        %4391 = vmatmul.f32.gmra.mxu0 %v4370
        %v4392 = vpop.f32.mrf.mxu0
        %v4393 = vadd.f32 0.0, %v4392
        %4394 = vmatmul.f32.gmra.mxu0 %v4373
        %v4395 = vpop.f32.mrf.mxu0
        %v4396 = vadd.f32 0.0, %v4395
        %4397 = vdwg.mxu0
        %v4399 = vsel %vm1440, %v4393, 0
        %v4402 = vsel %vm1440, %v4396, 0
        %4404 = vmatpush.msra.mxu0 0.0
        %4405 = vmatpush.msra.mxu0 0.0
        %4406 = vmatpush.msra.mxu0 0.0
        %4407 = vmatpush.msra.mxu0 0.0
        %4408 = vmatpush.msra.mxu0 0.0
        %4409 = vmatpush.msra.mxu0 0.0
        %4410 = vmatpush.msra.mxu0 0.0
        %4411 = vmatpush.msra.mxu0 0.0
        %4412 = vmatpush.msra.mxu0 0.0
        %4413 = vmatpush.msra.mxu0 0.0
        %4414 = vmatpush.msra.mxu0 0.0
        %4415 = vmatpush.msra.mxu0 0.0
        %4416 = vmatpush.msra.mxu0 0.0
        %4417 = vmatpush.msra.mxu0 0.0
        %4418 = vmatpush.msra.mxu0 %v4088
        %4419 = vmatpush.msra.mxu0 %v4087
        %4420 = vmatmul.f32.gmra.mxu0 %v4399
        %v4421 = vpop.f32.mrf.mxu0
        %v4422 = vadd.f32 0.0, %v4421
        %4423 = vmatmul.f32.gmra.mxu0 %v4402
        %v4424 = vpop.f32.mrf.mxu0
        %v4425 = vadd.f32 0.0, %v4424
        %4426 = vdwg.mxu0
        %v4427 = vadd.f32 %v4033, %v4422
        %v4428 = vadd.f32 %v4034, %v4425
        %v4429 = vld [vmem:[%s2 + $0x5] sm:$0x1]
        %v4430 = vperm.slane %v4429, 0
        %v4431 = vadd.f32 %v4308, %v4430
        %v4432 = vadd.f32 %v4309, %v4430
        %v4433 = vadd.f32 %v4427, %v4430
        %v4434 = vadd.f32 %v4428, %v4430
        %v4435 = vadd.f32 %v4431, %v1183
        %v4436 = vadd.f32 %v4432, %v1184
        %v4437 = vadd.f32 %v4433, %v1185
        %v4438 = vadd.f32 %v4434, %v1186
        %4439 = vadd.xlane.f32.xlu0 %v4435
        %v4440 = vpop.xlane.xlu0 %4439
        %4441 = vadd.xlane.f32.xlu0 %v4436
        %v4442 = vpop.xlane.xlu0 %4441
        %4443 = vadd.xlane.f32.xlu0 %v4437
        %v4444 = vpop.xlane.xlu0 %4443
        %4445 = vadd.xlane.f32.xlu0 %v4438
        %v4446 = vpop.xlane.xlu0 %4445
        %v4447 = vmul.f32 %v4440, %v406
        %v4448 = vmul.f32 %v4442, %v406
        %v4449 = vmul.f32 %v4444, %v406
        %v4450 = vmul.f32 %v4446, %v406
        %v4451 = vsub.f32 %v4435, %v4447
        %v4452 = vsub.f32 %v4436, %v4448
        %v4453 = vsub.f32 %v4437, %v4449
        %v4454 = vsub.f32 %v4438, %v4450
        %v4455 = vmul.f32 %v4451, %v4451
        %v4456 = vmul.f32 %v4452, %v4452
        %v4457 = vmul.f32 %v4453, %v4453
        %v4458 = vmul.f32 %v4454, %v4454
        %4459 = vadd.xlane.f32.xlu0 %v4455
        %v4460 = vpop.xlane.xlu0 %4459
        %4461 = vadd.xlane.f32.xlu0 %v4456
        %v4462 = vpop.xlane.xlu0 %4461
        %4463 = vadd.xlane.f32.xlu0 %v4457
        %v4464 = vpop.xlane.xlu0 %4463
        %4465 = vadd.xlane.f32.xlu0 %v4458
        %v4466 = vpop.xlane.xlu0 %4465
        %v4467 = vmul.f32 %v4460, %v406
        %v4468 = vmul.f32 %v4462, %v406
        %v4469 = vmul.f32 %v4464, %v406
        %v4470 = vmul.f32 %v4466, %v406
        %v4471 = vadd.f32 %v4467, 1e-05
        %v4472 = vadd.f32 %v4468, 1e-05
        %v4473 = vadd.f32 %v4469, 1e-05
        %v4474 = vadd.f32 %v4470, 1e-05
        %v4475 = vrsqrt.pop %v4471
        %v4476 = vmul.f32 %v4475, %v4471
        %v4477 = vmul.f32 %v4476, %v4475
        %v4478 = vmul.f32 0.5, %v4477
        %v4479 = vsub.f32 1.5, %v4478
        %v4480 = vmul.f32 %v4475, %v4479
        %vm4481 = vweird.f32 %v4471
        %vm4482 = vweird.f32 %v4475
        %vm4483 = vmor %vm4481, %vm4482
        %v4484 = vsel %vm4483, %v4475, %v4480
        %v4485 = vrsqrt.pop %v4472
        %v4486 = vmul.f32 %v4485, %v4472
        %v4487 = vmul.f32 %v4486, %v4485
        %v4488 = vmul.f32 0.5, %v4487
        %v4489 = vsub.f32 1.5, %v4488
        %v4490 = vmul.f32 %v4485, %v4489
        %vm4491 = vweird.f32 %v4472
        %vm4492 = vweird.f32 %v4485
        %vm4493 = vmor %vm4491, %vm4492
        %v4494 = vsel %vm4493, %v4485, %v4490
        %v4495 = vrsqrt.pop %v4473
        %v4496 = vmul.f32 %v4495, %v4473
        %v4497 = vmul.f32 %v4496, %v4495
        %v4498 = vmul.f32 0.5, %v4497
        %v4499 = vsub.f32 1.5, %v4498
        %v4500 = vmul.f32 %v4495, %v4499
        %vm4501 = vweird.f32 %v4473
        %vm4502 = vweird.f32 %v4495
        %vm4503 = vmor %vm4501, %vm4502
        %v4504 = vsel %vm4503, %v4495, %v4500
        %v4505 = vrsqrt.pop %v4474
        %v4506 = vmul.f32 %v4505, %v4474
        %v4507 = vmul.f32 %v4506, %v4505
        %v4508 = vmul.f32 0.5, %v4507
        %v4509 = vsub.f32 1.5, %v4508
        %v4510 = vmul.f32 %v4505, %v4509
        %vm4511 = vweird.f32 %v4474
        %vm4512 = vweird.f32 %v4505
        %vm4513 = vmor %vm4511, %vm4512
        %v4514 = vsel %vm4513, %v4505, %v4510
        %v4515 = vmul.f32 %v4451, %v4484
        %v4516 = vmul.f32 %v4452, %v4494
        %v4517 = vmul.f32 %v4453, %v4504
        %v4518 = vmul.f32 %v4454, %v4514
        %v4519 = vld [vmem:[%s2 + $0x6] sm:$0x1]
        %v4520 = vperm.slane %v4519, 0
        %v4521 = vmul.f32 %v4515, %v4520
        %v4522 = vmul.f32 %v4516, %v4520
        %v4523 = vmul.f32 %v4517, %v4520
        %v4524 = vmul.f32 %v4518, %v4520
        %v4525 = vld [vmem:[%s2 + $0x7] sm:$0x1]
        %v4526 = vperm.slane %v4525, 0
        %v4527 = vadd.f32 %v4521, %v4526
        %v4528 = vadd.f32 %v4522, %v4526
        %v4529 = vadd.f32 %v4523, %v4526
        %v4530 = vadd.f32 %v4524, %v4526
        %v4531 = vld [vmem:[%s6] sm:$0xff]
        %v4532 = vld [vmem:[%s6 + $0x8] sm:$0xff]
        %v4533 = vld [vmem:[%s6 + $0x10] sm:$0xff]
        %v4534 = vld [vmem:[%s6 + $0x18] sm:$0xff]
        %v4535 = vld [vmem:[%s6 + $0x20] sm:$0xff]
        %v4536 = vld [vmem:[%s6 + $0x28] sm:$0xff]
        %v4537 = vld [vmem:[%s6 + $0x30] sm:$0xff]
        %v4538 = vld [vmem:[%s6 + $0x38] sm:$0xff]
        %v4539 = vld [vmem:[%s6 + $0x40] sm:$0xff]
        %v4540 = vld [vmem:[%s6 + $0x48] sm:$0xff]
        %v4541 = vld [vmem:[%s6 + $0x50] sm:$0xff]
        %v4542 = vld [vmem:[%s6 + $0x58] sm:$0xff]
        %v4543 = vld [vmem:[%s6 + $0x60] sm:$0xff]
        %v4544 = vld [vmem:[%s6 + $0x68] sm:$0xff]
        %v4545 = vld [vmem:[%s6 + $0x70] sm:$0xff]
        %v4546 = vld [vmem:[%s6 + $0x78] sm:$0xff]
        %v4547 = vld [vmem:[%s2 + $0x8] sm:$0x1]
        %v4548 = vperm.slane %v4547, 0
        %4549 = vmatpush.msra.mxu0 %v4546
        %4550 = vmatpush.msra.mxu0 %v4545
        %4551 = vmatpush.msra.mxu0 %v4544
        %4552 = vmatpush.msra.mxu0 %v4543
        %4553 = vmatpush.msra.mxu0 %v4542
        %4554 = vmatpush.msra.mxu0 %v4541
        %4555 = vmatpush.msra.mxu0 %v4540
        %4556 = vmatpush.msra.mxu0 %v4539
        %4557 = vmatpush.msra.mxu0 %v4538
        %4558 = vmatpush.msra.mxu0 %v4537
        %4559 = vmatpush.msra.mxu0 %v4536
        %4560 = vmatpush.msra.mxu0 %v4535
        %4561 = vmatpush.msra.mxu0 %v4534
        %4562 = vmatpush.msra.mxu0 %v4533
        %4563 = vmatpush.msra.mxu0 %v4532
        %4564 = vmatpush.msra.mxu0 %v4531
        %4565 = vmatmul.f32.gmra.mxu0 %v4527
        %v4566 = vpop.f32.mrf.mxu0
        %v4567 = vadd.f32 %v4548, %v4566
        %4568 = vmatmul.f32.gmra.mxu0 %v4528
        %v4569 = vpop.f32.mrf.mxu0
        %v4570 = vadd.f32 %v4548, %v4569
        %4571 = vmatmul.f32.gmra.mxu0 %v4529
        %v4572 = vpop.f32.mrf.mxu0
        %v4573 = vadd.f32 %v4548, %v4572
        %4574 = vmatmul.f32.gmra.mxu0 %v4530
        %v4575 = vpop.f32.mrf.mxu0
        %v4576 = vadd.f32 %v4548, %v4575
        %4577 = vdwg.mxu0
        %s4578 = scalar_lea.vmem %s6, 128
        %v4579 = vld [vmem:[%s4578] sm:$0xff]
        %v4580 = vld [vmem:[%s4578 + $0x8] sm:$0xff]
        %v4581 = vld [vmem:[%s4578 + $0x10] sm:$0xff]
        %v4582 = vld [vmem:[%s4578 + $0x18] sm:$0xff]
        %v4583 = vld [vmem:[%s4578 + $0x20] sm:$0xff]
        %v4584 = vld [vmem:[%s4578 + $0x28] sm:$0xff]
        %v4585 = vld [vmem:[%s4578 + $0x30] sm:$0xff]
        %v4586 = vld [vmem:[%s4578 + $0x38] sm:$0xff]
        %v4587 = vld [vmem:[%s4578 + $0x40] sm:$0xff]
        %v4588 = vld [vmem:[%s4578 + $0x48] sm:$0xff]
        %v4589 = vld [vmem:[%s4578 + $0x50] sm:$0xff]
        %v4590 = vld [vmem:[%s4578 + $0x58] sm:$0xff]
        %v4591 = vld [vmem:[%s4578 + $0x60] sm:$0xff]
        %v4592 = vld [vmem:[%s4578 + $0x68] sm:$0xff]
        %v4593 = vld [vmem:[%s4578 + $0x70] sm:$0xff]
        %v4594 = vld [vmem:[%s4578 + $0x78] sm:$0xff]
        %v4595 = vld [vmem:[%s2 + $0x9] sm:$0x1]
        %v4596 = vperm.slane %v4595, 0
        %4597 = vmatpush.msra.mxu0 %v4594
        %4598 = vmatpush.msra.mxu0 %v4593
        %4599 = vmatpush.msra.mxu0 %v4592
        %4600 = vmatpush.msra.mxu0 %v4591
        %4601 = vmatpush.msra.mxu0 %v4590
        %4602 = vmatpush.msra.mxu0 %v4589
        %4603 = vmatpush.msra.mxu0 %v4588
        %4604 = vmatpush.msra.mxu0 %v4587
        %4605 = vmatpush.msra.mxu0 %v4586
        %4606 = vmatpush.msra.mxu0 %v4585
        %4607 = vmatpush.msra.mxu0 %v4584
        %4608 = vmatpush.msra.mxu0 %v4583
        %4609 = vmatpush.msra.mxu0 %v4582
        %4610 = vmatpush.msra.mxu0 %v4581
        %4611 = vmatpush.msra.mxu0 %v4580
        %4612 = vmatpush.msra.mxu0 %v4579
        %4613 = vmatmul.f32.gmra.mxu0 %v4527
        %v4614 = vpop.f32.mrf.mxu0
        %v4615 = vadd.f32 %v4596, %v4614
        %4616 = vmatmul.f32.gmra.mxu0 %v4528
        %v4617 = vpop.f32.mrf.mxu0
        %v4618 = vadd.f32 %v4596, %v4617
        %4619 = vmatmul.f32.gmra.mxu0 %v4529
        %v4620 = vpop.f32.mrf.mxu0
        %v4621 = vadd.f32 %v4596, %v4620
        %4622 = vmatmul.f32.gmra.mxu0 %v4530
        %v4623 = vpop.f32.mrf.mxu0
        %v4624 = vadd.f32 %v4596, %v4623
        %4625 = vdwg.mxu0
        %v4626 = vxor.u32 %v4615, 2147483648
        %v4627 = vxor.u32 %v4618, 2147483648
        %v4628 = vxor.u32 %v4621, 2147483648
        %v4629 = vxor.u32 %v4624, 2147483648
        %v4630 = vmul.f32 %v4626, 1.442695
        %v4631 = vpow.pop %v4630
        %v4632 = vmul.f32 %v4627, 1.442695
        %v4633 = vpow.pop %v4632
        %v4634 = vmul.f32 %v4628, 1.442695
        %v4635 = vpow.pop %v4634
        %v4636 = vmul.f32 %v4629, 1.442695
        %v4637 = vpow.pop %v4636
        %v4638 = vadd.f32 %v4631, 1.0
        %v4639 = vadd.f32 %v4633, 1.0
        %v4640 = vadd.f32 %v4635, 1.0
        %v4641 = vadd.f32 %v4637, 1.0
        %v4642 = vrcp.pop %v4638
        %v4643 = vmul.f32 %v4638, %v4642
        %v4644 = vsub.f32 1.0, %v4643
        %v4645 = vmul.f32 %v4642, %v4644
        %v4646 = vadd.f32 %v4642, %v4645
        %vm4647 = vweird.f32 %v4638
        %vm4648 = vweird.f32 %v4642
        %vm4649 = vmor %vm4647, %vm4648
        %v4650 = vsel %vm4649, %v4642, %v4646
        %v4651 = vand.u32 2147483647, %v4638
        %vm4652 = vcmp.eq.f32.partialorder %v4651, 8.507059e+37
        %v4653 = vand.u32 %v4638, 2147483648
        %v4654 = vor.u32 1.1754944e-38, %v4653
        %v4655 = vsel %vm4652, %v4654, %v4650
        %v4656 = vmul.f32 1.0, %v4655
        %v4657 = vrcp.pop %v4639
        %v4658 = vmul.f32 %v4639, %v4657
        %v4659 = vsub.f32 1.0, %v4658
        %v4660 = vmul.f32 %v4657, %v4659
        %v4661 = vadd.f32 %v4657, %v4660
        %vm4662 = vweird.f32 %v4639
        %vm4663 = vweird.f32 %v4657
        %vm4664 = vmor %vm4662, %vm4663
        %v4665 = vsel %vm4664, %v4657, %v4661
        %v4666 = vand.u32 2147483647, %v4639
        %vm4667 = vcmp.eq.f32.partialorder %v4666, 8.507059e+37
        %v4668 = vand.u32 %v4639, 2147483648
        %v4669 = vor.u32 1.1754944e-38, %v4668
        %v4670 = vsel %vm4667, %v4669, %v4665
        %v4671 = vmul.f32 1.0, %v4670
        %v4672 = vrcp.pop %v4640
        %v4673 = vmul.f32 %v4640, %v4672
        %v4674 = vsub.f32 1.0, %v4673
        %v4675 = vmul.f32 %v4672, %v4674
        %v4676 = vadd.f32 %v4672, %v4675
        %vm4677 = vweird.f32 %v4640
        %vm4678 = vweird.f32 %v4672
        %vm4679 = vmor %vm4677, %vm4678
        %v4680 = vsel %vm4679, %v4672, %v4676
        %v4681 = vand.u32 2147483647, %v4640
        %vm4682 = vcmp.eq.f32.partialorder %v4681, 8.507059e+37
        %v4683 = vand.u32 %v4640, 2147483648
        %v4684 = vor.u32 1.1754944e-38, %v4683
        %v4685 = vsel %vm4682, %v4684, %v4680
        %v4686 = vmul.f32 1.0, %v4685
        %v4687 = vrcp.pop %v4641
        %v4688 = vmul.f32 %v4641, %v4687
        %v4689 = vsub.f32 1.0, %v4688
        %v4690 = vmul.f32 %v4687, %v4689
        %v4691 = vadd.f32 %v4687, %v4690
        %vm4692 = vweird.f32 %v4641
        %vm4693 = vweird.f32 %v4687
        %vm4694 = vmor %vm4692, %vm4693
        %v4695 = vsel %vm4694, %v4687, %v4691
        %v4696 = vand.u32 2147483647, %v4641
        %vm4697 = vcmp.eq.f32.partialorder %v4696, 8.507059e+37
        %v4698 = vand.u32 %v4641, 2147483648
        %v4699 = vor.u32 1.1754944e-38, %v4698
        %v4700 = vsel %vm4697, %v4699, %v4695
        %v4701 = vmul.f32 1.0, %v4700
        %v4702 = vmul.f32 %v4567, %v4656
        %v4703 = vmul.f32 %v4570, %v4671
        %v4704 = vmul.f32 %v4573, %v4686
        %v4705 = vmul.f32 %v4576, %v4701
        %v4706 = vld [vmem:[%s10] sm:$0xff]
        %v4707 = vld [vmem:[%s10 + $0x8] sm:$0xff]
        %v4708 = vld [vmem:[%s10 + $0x10] sm:$0xff]
        %v4709 = vld [vmem:[%s10 + $0x18] sm:$0x7f]
        %v4710 = vrot.slane %v4702, 1
        %v4711 = vrot.slane %v4704, 1
        %v4712 = vlaneseq
        %v4713 = vshrl.u32 %v4712, 7
        %vm4714 = vcmp.lt.s32.totalorder %v4713, 7
        %v4715 = vsel %vm4714, 0.0, %v4711
        %v4716 = vsel %vm4714, 0.0, %v4710
        %v4717 = vperm.slane %v4706, 0
        %v4718 = vmul.f32 0.0, %v4717
        %v4719 = vmul.f32 %v4716, %v4717
        %v4720 = vmul.f32 %v4715, %v4717
        %v4721 = vadd.f32 %v4718, 0.0
        %v4722 = vadd.f32 %v4719, 0.0
        %v4723 = vadd.f32 %v4720, 0.0
        %v4724 = vrot.slane %v4702, 2
        %v4725 = vrot.slane %v4704, 2
        %vm4726 = vcmp.lt.s32.totalorder %v4713, 6
        %v4727 = vsel %vm4726, 0.0, %v4725
        %v4728 = vsel %vm4726, 0.0, %v4724
        %v4729 = vperm.slane %v4706, 1
        %v4730 = vmul.f32 0.0, %v4729
        %v4731 = vmul.f32 %v4728, %v4729
        %v4732 = vmul.f32 %v4727, %v4729
        %v4733 = vadd.f32 %v4721, %v4730
        %v4734 = vadd.f32 %v4722, %v4731
        %v4735 = vadd.f32 %v4723, %v4732
        %v4736 = vrot.slane %v4702, 3
        %v4737 = vrot.slane %v4704, 3
        %vm4738 = vcmp.lt.s32.totalorder %v4713, 5
        %v4739 = vsel %vm4738, 0.0, %v4737
        %v4740 = vsel %vm4738, 0.0, %v4736
        %v4741 = vperm.slane %v4706, 2
        %v4742 = vmul.f32 0.0, %v4741
        %v4743 = vmul.f32 %v4740, %v4741
        %v4744 = vmul.f32 %v4739, %v4741
        %v4745 = vadd.f32 %v4733, %v4742
        %v4746 = vadd.f32 %v4734, %v4743
        %v4747 = vadd.f32 %v4735, %v4744
        %v4748 = vrot.slane %v4702, 4
        %v4749 = vrot.slane %v4704, 4
        %vm4750 = vcmp.lt.s32.totalorder %v4713, 4
        %v4751 = vsel %vm4750, 0.0, %v4749
        %v4752 = vsel %vm4750, 0.0, %v4748
        %v4753 = vperm.slane %v4706, 3
        %v4754 = vmul.f32 0.0, %v4753
        %v4755 = vmul.f32 %v4752, %v4753
        %v4756 = vmul.f32 %v4751, %v4753
        %v4757 = vadd.f32 %v4745, %v4754
        %v4758 = vadd.f32 %v4746, %v4755
        %v4759 = vadd.f32 %v4747, %v4756
        %v4760 = vrot.slane %v4702, 5
        %v4761 = vrot.slane %v4704, 5
        %vm4762 = vcmp.lt.s32.totalorder %v4713, 3
        %v4763 = vsel %vm4762, 0.0, %v4761
        %v4764 = vsel %vm4762, 0.0, %v4760
        %v4765 = vperm.slane %v4706, 4
        %v4766 = vmul.f32 0.0, %v4765
        %v4767 = vmul.f32 %v4764, %v4765
        %v4768 = vmul.f32 %v4763, %v4765
        %v4769 = vadd.f32 %v4757, %v4766
        %v4770 = vadd.f32 %v4758, %v4767
        %v4771 = vadd.f32 %v4759, %v4768
        %v4772 = vrot.slane %v4702, 6
        %v4773 = vrot.slane %v4704, 6
        %vm4774 = vcmp.lt.s32.totalorder %v4713, 2
        %v4775 = vsel %vm4774, 0.0, %v4773
        %v4776 = vsel %vm4774, 0.0, %v4772
        %v4777 = vperm.slane %v4706, 5
        %v4778 = vmul.f32 0.0, %v4777
        %v4779 = vmul.f32 %v4776, %v4777
        %v4780 = vmul.f32 %v4775, %v4777
        %v4781 = vadd.f32 %v4769, %v4778
        %v4782 = vadd.f32 %v4770, %v4779
        %v4783 = vadd.f32 %v4771, %v4780
        %v4784 = vrot.slane %v4702, 7
        %v4785 = vrot.slane %v4704, 7
        %vm4786 = vcmp.lt.s32.totalorder %v4713, 1
        %v4787 = vsel %vm4786, 0.0, %v4785
        %v4788 = vsel %vm4786, 0.0, %v4784
        %v4789 = vperm.slane %v4706, 6
        %v4790 = vmul.f32 0.0, %v4789
        %v4791 = vmul.f32 %v4788, %v4789
        %v4792 = vmul.f32 %v4787, %v4789
        %v4793 = vadd.f32 %v4781, %v4790
        %v4794 = vadd.f32 %v4782, %v4791
        %v4795 = vadd.f32 %v4783, %v4792
        %v4796 = vperm.slane %v4706, 7
        %v4797 = vmul.f32 %v4796, 0.0
        %v4798 = vmul.f32 %v4702, %v4796
        %v4799 = vmul.f32 %v4704, %v4796
        %v4800 = vadd.f32 %v4793, %v4797
        %v4801 = vadd.f32 %v4794, %v4798
        %v4802 = vadd.f32 %v4795, %v4799
        %v4803 = vrot.slane %v4703, 1
        %v4804 = vrot.slane %v4705, 1
        %v4805 = vsel %vm4714, %v4711, %v4804
        %v4806 = vsel %vm4714, %v4710, %v4803
        %v4807 = vperm.slane %v4707, 0
        %v4808 = vmul.f32 %v4716, %v4807
        %v4809 = vmul.f32 %v4806, %v4807
        %v4810 = vmul.f32 %v4715, %v4807
        %v4811 = vmul.f32 %v4805, %v4807
        %v4812 = vadd.f32 %v4800, %v4808
        %v4813 = vadd.f32 %v4801, %v4809
        %v4814 = vadd.f32 %v4800, %v4810
        %v4815 = vadd.f32 %v4802, %v4811
        %v4816 = vrot.slane %v4703, 2
        %v4817 = vrot.slane %v4705, 2
        %v4818 = vsel %vm4726, %v4725, %v4817
        %v4819 = vsel %vm4726, %v4724, %v4816
        %v4820 = vperm.slane %v4707, 1
        %v4821 = vmul.f32 %v4728, %v4820
        %v4822 = vmul.f32 %v4819, %v4820
        %v4823 = vmul.f32 %v4727, %v4820
        %v4824 = vmul.f32 %v4818, %v4820
        %v4825 = vadd.f32 %v4812, %v4821
        %v4826 = vadd.f32 %v4813, %v4822
        %v4827 = vadd.f32 %v4814, %v4823
        %v4828 = vadd.f32 %v4815, %v4824
        %v4829 = vrot.slane %v4703, 3
        %v4830 = vrot.slane %v4705, 3
        %v4831 = vsel %vm4738, %v4737, %v4830
        %v4832 = vsel %vm4738, %v4736, %v4829
        %v4833 = vperm.slane %v4707, 2
        %v4834 = vmul.f32 %v4740, %v4833
        %v4835 = vmul.f32 %v4832, %v4833
        %v4836 = vmul.f32 %v4739, %v4833
        %v4837 = vmul.f32 %v4831, %v4833
        %v4838 = vadd.f32 %v4825, %v4834
        %v4839 = vadd.f32 %v4826, %v4835
        %v4840 = vadd.f32 %v4827, %v4836
        %v4841 = vadd.f32 %v4828, %v4837
        %v4842 = vrot.slane %v4703, 4
        %v4843 = vrot.slane %v4705, 4
        %v4844 = vsel %vm4750, %v4749, %v4843
        %v4845 = vsel %vm4750, %v4748, %v4842
        %v4846 = vperm.slane %v4707, 3
        %v4847 = vmul.f32 %v4752, %v4846
        %v4848 = vmul.f32 %v4845, %v4846
        %v4849 = vmul.f32 %v4751, %v4846
        %v4850 = vmul.f32 %v4844, %v4846
        %v4851 = vadd.f32 %v4838, %v4847
        %v4852 = vadd.f32 %v4839, %v4848
        %v4853 = vadd.f32 %v4840, %v4849
        %v4854 = vadd.f32 %v4841, %v4850
        %v4855 = vrot.slane %v4703, 5
        %v4856 = vrot.slane %v4705, 5
        %v4857 = vsel %vm4762, %v4761, %v4856
        %v4858 = vsel %vm4762, %v4760, %v4855
        %v4859 = vperm.slane %v4707, 4
        %v4860 = vmul.f32 %v4764, %v4859
        %v4861 = vmul.f32 %v4858, %v4859
        %v4862 = vmul.f32 %v4763, %v4859
        %v4863 = vmul.f32 %v4857, %v4859
        %v4864 = vadd.f32 %v4851, %v4860
        %v4865 = vadd.f32 %v4852, %v4861
        %v4866 = vadd.f32 %v4853, %v4862
        %v4867 = vadd.f32 %v4854, %v4863
        %v4868 = vrot.slane %v4703, 6
        %v4869 = vrot.slane %v4705, 6
        %v4870 = vsel %vm4774, %v4773, %v4869
        %v4871 = vsel %vm4774, %v4772, %v4868
        %v4872 = vperm.slane %v4707, 5
        %v4873 = vmul.f32 %v4776, %v4872
        %v4874 = vmul.f32 %v4871, %v4872
        %v4875 = vmul.f32 %v4775, %v4872
        %v4876 = vmul.f32 %v4870, %v4872
        %v4877 = vadd.f32 %v4864, %v4873
        %v4878 = vadd.f32 %v4865, %v4874
        %v4879 = vadd.f32 %v4866, %v4875
        %v4880 = vadd.f32 %v4867, %v4876
        %v4881 = vrot.slane %v4703, 7
        %v4882 = vrot.slane %v4705, 7
        %v4883 = vsel %vm4786, %v4785, %v4882
        %v4884 = vsel %vm4786, %v4784, %v4881
        %v4885 = vperm.slane %v4707, 6
        %v4886 = vmul.f32 %v4788, %v4885
        %v4887 = vmul.f32 %v4884, %v4885
        %v4888 = vmul.f32 %v4787, %v4885
        %v4889 = vmul.f32 %v4883, %v4885
        %v4890 = vadd.f32 %v4877, %v4886
        %v4891 = vadd.f32 %v4878, %v4887
        %v4892 = vadd.f32 %v4879, %v4888
        %v4893 = vadd.f32 %v4880, %v4889
        %v4894 = vperm.slane %v4707, 7
        %v4895 = vmul.f32 %v4702, %v4894
        %v4896 = vmul.f32 %v4703, %v4894
        %v4897 = vmul.f32 %v4704, %v4894
        %v4898 = vmul.f32 %v4705, %v4894
        %v4899 = vadd.f32 %v4890, %v4895
        %v4900 = vadd.f32 %v4891, %v4896
        %v4901 = vadd.f32 %v4892, %v4897
        %v4902 = vadd.f32 %v4893, %v4898
        %v4903 = vsel %vm4714, %v4804, 0.0
        %v4904 = vsel %vm4714, %v4803, 0.0
        %v4905 = vperm.slane %v4708, 0
        %v4906 = vmul.f32 %v4806, %v4905
        %v4907 = vmul.f32 %v4904, %v4905
        %v4908 = vmul.f32 %v4805, %v4905
        %v4909 = vmul.f32 %v4903, %v4905
        %v4910 = vadd.f32 %v4899, %v4906
        %v4911 = vadd.f32 %v4900, %v4907
        %v4912 = vadd.f32 %v4901, %v4908
        %v4913 = vadd.f32 %v4902, %v4909
        %v4914 = vsel %vm4726, %v4817, 0.0
        %v4915 = vsel %vm4726, %v4816, 0.0
        %v4916 = vperm.slane %v4708, 1
        %v4917 = vmul.f32 %v4819, %v4916
        %v4918 = vmul.f32 %v4915, %v4916
        %v4919 = vmul.f32 %v4818, %v4916
        %v4920 = vmul.f32 %v4914, %v4916
        %v4921 = vadd.f32 %v4910, %v4917
        %v4922 = vadd.f32 %v4911, %v4918
        %v4923 = vadd.f32 %v4912, %v4919
        %v4924 = vadd.f32 %v4913, %v4920
        %v4925 = vsel %vm4738, %v4830, 0.0
        %v4926 = vsel %vm4738, %v4829, 0.0
        %v4927 = vperm.slane %v4708, 2
        %v4928 = vmul.f32 %v4832, %v4927
        %v4929 = vmul.f32 %v4926, %v4927
        %v4930 = vmul.f32 %v4831, %v4927
        %v4931 = vmul.f32 %v4925, %v4927
        %v4932 = vadd.f32 %v4921, %v4928
        %v4933 = vadd.f32 %v4922, %v4929
        %v4934 = vadd.f32 %v4923, %v4930
        %v4935 = vadd.f32 %v4924, %v4931
        %v4936 = vsel %vm4750, %v4843, 0.0
        %v4937 = vsel %vm4750, %v4842, 0.0
        %v4938 = vperm.slane %v4708, 3
        %v4939 = vmul.f32 %v4845, %v4938
        %v4940 = vmul.f32 %v4937, %v4938
        %v4941 = vmul.f32 %v4844, %v4938
        %v4942 = vmul.f32 %v4936, %v4938
        %v4943 = vadd.f32 %v4932, %v4939
        %v4944 = vadd.f32 %v4933, %v4940
        %v4945 = vadd.f32 %v4934, %v4941
        %v4946 = vadd.f32 %v4935, %v4942
        %v4947 = vsel %vm4762, %v4856, 0.0
        %v4948 = vsel %vm4762, %v4855, 0.0
        %v4949 = vperm.slane %v4708, 4
        %v4950 = vmul.f32 %v4858, %v4949
        %v4951 = vmul.f32 %v4948, %v4949
        %v4952 = vmul.f32 %v4857, %v4949
        %v4953 = vmul.f32 %v4947, %v4949
        %v4954 = vadd.f32 %v4943, %v4950
        %v4955 = vadd.f32 %v4944, %v4951
        %v4956 = vadd.f32 %v4945, %v4952
        %v4957 = vadd.f32 %v4946, %v4953
        %v4958 = vsel %vm4774, %v4869, 0.0
        %v4959 = vsel %vm4774, %v4868, 0.0
        %v4960 = vperm.slane %v4708, 5
        %v4961 = vmul.f32 %v4871, %v4960
        %v4962 = vmul.f32 %v4959, %v4960
        %v4963 = vmul.f32 %v4870, %v4960
        %v4964 = vmul.f32 %v4958, %v4960
        %v4965 = vadd.f32 %v4954, %v4961
        %v4966 = vadd.f32 %v4955, %v4962
        %v4967 = vadd.f32 %v4956, %v4963
        %v4968 = vadd.f32 %v4957, %v4964
        %v4969 = vsel %vm4786, %v4882, 0.0
        %v4970 = vsel %vm4786, %v4881, 0.0
        %v4971 = vperm.slane %v4708, 6
        %v4972 = vmul.f32 %v4884, %v4971
        %v4973 = vmul.f32 %v4970, %v4971
        %v4974 = vmul.f32 %v4883, %v4971
        %v4975 = vmul.f32 %v4969, %v4971
        %v4976 = vadd.f32 %v4965, %v4972
        %v4977 = vadd.f32 %v4966, %v4973
        %v4978 = vadd.f32 %v4967, %v4974
        %v4979 = vadd.f32 %v4968, %v4975
        %v4980 = vperm.slane %v4708, 7
        %v4981 = vmul.f32 %v4703, %v4980
        %v4982 = vmul.f32 %v4980, 0.0
        %v4983 = vmul.f32 %v4705, %v4980
        %v4984 = vadd.f32 %v4976, %v4981
        %v4985 = vadd.f32 %v4977, %v4982
        %v4986 = vadd.f32 %v4978, %v4983
        %v4987 = vadd.f32 %v4979, %v4982
        %v4988 = vperm.slane %v4709, 0
        %v4989 = vmul.f32 %v4904, %v4988
        %v4990 = vmul.f32 0.0, %v4988
        %v4991 = vmul.f32 %v4903, %v4988
        %v4992 = vadd.f32 %v4984, %v4989
        %v4993 = vadd.f32 %v4985, %v4990
        %v4994 = vadd.f32 %v4986, %v4991
        %v4995 = vadd.f32 %v4987, %v4990
        %v4996 = vperm.slane %v4709, 1
        %v4997 = vmul.f32 %v4915, %v4996
        %v4998 = vmul.f32 0.0, %v4996
        %v4999 = vmul.f32 %v4914, %v4996
        %v5000 = vadd.f32 %v4992, %v4997
        %v5001 = vadd.f32 %v4993, %v4998
        %v5002 = vadd.f32 %v4994, %v4999
        %v5003 = vadd.f32 %v4995, %v4998
        %v5004 = vperm.slane %v4709, 2
        %v5005 = vmul.f32 %v4926, %v5004
        %v5006 = vmul.f32 0.0, %v5004
        %v5007 = vmul.f32 %v4925, %v5004
        %v5008 = vadd.f32 %v5000, %v5005
        %v5009 = vadd.f32 %v5001, %v5006
        %v5010 = vadd.f32 %v5002, %v5007
        %v5011 = vadd.f32 %v5003, %v5006
        %v5012 = vperm.slane %v4709, 3
        %v5013 = vmul.f32 %v4937, %v5012
        %v5014 = vmul.f32 0.0, %v5012
        %v5015 = vmul.f32 %v4936, %v5012
        %v5016 = vadd.f32 %v5008, %v5013
        %v5017 = vadd.f32 %v5009, %v5014
        %v5018 = vadd.f32 %v5010, %v5015
        %v5019 = vadd.f32 %v5011, %v5014
        %v5020 = vperm.slane %v4709, 4
        %v5021 = vmul.f32 %v4948, %v5020
        %v5022 = vmul.f32 0.0, %v5020
        %v5023 = vmul.f32 %v4947, %v5020
        %v5024 = vadd.f32 %v5016, %v5021
        %v5025 = vadd.f32 %v5017, %v5022
        %v5026 = vadd.f32 %v5018, %v5023
        %v5027 = vadd.f32 %v5019, %v5022
        %v5028 = vperm.slane %v4709, 5
        %v5029 = vmul.f32 %v4959, %v5028
        %v5030 = vmul.f32 0.0, %v5028
        %v5031 = vmul.f32 %v4958, %v5028
        %v5032 = vadd.f32 %v5024, %v5029
        %v5033 = vadd.f32 %v5025, %v5030
        %v5034 = vadd.f32 %v5026, %v5031
        %v5035 = vadd.f32 %v5027, %v5030
        %v5036 = vperm.slane %v4709, 6
        %v5037 = vmul.f32 %v4970, %v5036
        %v5038 = vmul.f32 0.0, %v5036
        %v5039 = vmul.f32 %v4969, %v5036
        %v5040 = vadd.f32 %v5032, %v5037
        %v5041 = vadd.f32 %v5033, %v5038
        %v5042 = vadd.f32 %v5034, %v5039
        %v5043 = vadd.f32 %v5035, %v5038
        %v5044 = vld [vmem:[%s2 + $0xa] sm:$0x1]
        %v5045 = vperm.slane %v5044, 0
        %v5046 = vadd.f32 %v5040, %v5045
        %v5047 = vadd.f32 %v5041, %v5045
        %v5048 = vadd.f32 %v5042, %v5045
        %v5049 = vadd.f32 %v5043, %v5045
        %v5050 = vld [vmem:[%s2 + $0xb] sm:$0x1]
        %v5051 = vperm.slane %v5050, 0
        %v5052 = vmul.f32 %v5046, %v5051
        %v5053 = vmul.f32 %v5047, %v5051
        %v5054 = vmul.f32 %v5048, %v5051
        %v5055 = vmul.f32 %v5049, %v5051
        %v5056 = vld [vmem:[%s2 + $0xc] sm:$0x1]
        %v5057 = vperm.slane %v5056, 0
        %v5058 = vadd.f32 %v5052, %v5057
        %v5059 = vadd.f32 %v5053, %v5057
        %v5060 = vadd.f32 %v5054, %v5057
        %v5061 = vadd.f32 %v5055, %v5057
        %v5062 = vxor.u32 %v5058, 2147483648
        %v5063 = vxor.u32 %v5059, 2147483648
        %v5064 = vxor.u32 %v5060, 2147483648
        %v5065 = vxor.u32 %v5061, 2147483648
        %v5066 = vmul.f32 %v5062, 1.442695
        %v5067 = vpow.pop %v5066
        %v5068 = vmul.f32 %v5063, 1.442695
        %v5069 = vpow.pop %v5068
        %v5070 = vmul.f32 %v5064, 1.442695
        %v5071 = vpow.pop %v5070
        %v5072 = vmul.f32 %v5065, 1.442695
        %v5073 = vpow.pop %v5072
        %v5074 = vadd.f32 %v5067, 1.0
        %v5075 = vadd.f32 %v5069, 1.0
        %v5076 = vadd.f32 %v5071, 1.0
        %v5077 = vadd.f32 %v5073, 1.0
        %v5078 = vrcp.pop %v5074
        %v5079 = vmul.f32 %v5074, %v5078
        %v5080 = vsub.f32 1.0, %v5079
        %v5081 = vmul.f32 %v5078, %v5080
        %v5082 = vadd.f32 %v5078, %v5081
        %vm5083 = vweird.f32 %v5074
        %vm5084 = vweird.f32 %v5078
        %vm5085 = vmor %vm5083, %vm5084
        %v5086 = vsel %vm5085, %v5078, %v5082
        %v5087 = vand.u32 2147483647, %v5074
        %vm5088 = vcmp.eq.f32.partialorder %v5087, 8.507059e+37
        %v5089 = vand.u32 %v5074, 2147483648
        %v5090 = vor.u32 1.1754944e-38, %v5089
        %v5091 = vsel %vm5088, %v5090, %v5086
        %v5092 = vmul.f32 1.0, %v5091
        %v5093 = vrcp.pop %v5075
        %v5094 = vmul.f32 %v5075, %v5093
        %v5095 = vsub.f32 1.0, %v5094
        %v5096 = vmul.f32 %v5093, %v5095
        %v5097 = vadd.f32 %v5093, %v5096
        %vm5098 = vweird.f32 %v5075
        %vm5099 = vweird.f32 %v5093
        %vm5100 = vmor %vm5098, %vm5099
        %v5101 = vsel %vm5100, %v5093, %v5097
        %v5102 = vand.u32 2147483647, %v5075
        %vm5103 = vcmp.eq.f32.partialorder %v5102, 8.507059e+37
        %v5104 = vand.u32 %v5075, 2147483648
        %v5105 = vor.u32 1.1754944e-38, %v5104
        %v5106 = vsel %vm5103, %v5105, %v5101
        %v5107 = vmul.f32 1.0, %v5106
        %v5108 = vrcp.pop %v5076
        %v5109 = vmul.f32 %v5076, %v5108
        %v5110 = vsub.f32 1.0, %v5109
        %v5111 = vmul.f32 %v5108, %v5110
        %v5112 = vadd.f32 %v5108, %v5111
        %vm5113 = vweird.f32 %v5076
        %vm5114 = vweird.f32 %v5108
        %vm5115 = vmor %vm5113, %vm5114
        %v5116 = vsel %vm5115, %v5108, %v5112
        %v5117 = vand.u32 2147483647, %v5076
        %vm5118 = vcmp.eq.f32.partialorder %v5117, 8.507059e+37
        %v5119 = vand.u32 %v5076, 2147483648
        %v5120 = vor.u32 1.1754944e-38, %v5119
        %v5121 = vsel %vm5118, %v5120, %v5116
        %v5122 = vmul.f32 1.0, %v5121
        %v5123 = vrcp.pop %v5077
        %v5124 = vmul.f32 %v5077, %v5123
        %v5125 = vsub.f32 1.0, %v5124
        %v5126 = vmul.f32 %v5123, %v5125
        %v5127 = vadd.f32 %v5123, %v5126
        %vm5128 = vweird.f32 %v5077
        %vm5129 = vweird.f32 %v5123
        %vm5130 = vmor %vm5128, %vm5129
        %v5131 = vsel %vm5130, %v5123, %v5127
        %v5132 = vand.u32 2147483647, %v5077
        %vm5133 = vcmp.eq.f32.partialorder %v5132, 8.507059e+37
        %v5134 = vand.u32 %v5077, 2147483648
        %v5135 = vor.u32 1.1754944e-38, %v5134
        %v5136 = vsel %vm5133, %v5135, %v5131
        %v5137 = vmul.f32 1.0, %v5136
        %v5138 = vmul.f32 %v5058, %v5092
        %v5139 = vmul.f32 %v5059, %v5107
        %v5140 = vmul.f32 %v5060, %v5122
        %v5141 = vmul.f32 %v5061, %v5137
        %s5142 = scalar_lea.vmem %s6, 256
        %v5143 = vld [vmem:[%s5142] sm:$0xff]
        %v5144 = vld [vmem:[%s5142 + $0x8] sm:$0xff]
        %v5145 = vld [vmem:[%s5142 + $0x10] sm:$0xff]
        %v5146 = vld [vmem:[%s5142 + $0x18] sm:$0xff]
        %v5147 = vld [vmem:[%s5142 + $0x20] sm:$0xff]
        %v5148 = vld [vmem:[%s5142 + $0x28] sm:$0xff]
        %v5149 = vld [vmem:[%s5142 + $0x30] sm:$0xff]
        %v5150 = vld [vmem:[%s5142 + $0x38] sm:$0xff]
        %v5151 = vld [vmem:[%s5142 + $0x40] sm:$0xff]
        %v5152 = vld [vmem:[%s5142 + $0x48] sm:$0xff]
        %v5153 = vld [vmem:[%s5142 + $0x50] sm:$0xff]
        %v5154 = vld [vmem:[%s5142 + $0x58] sm:$0xff]
        %v5155 = vld [vmem:[%s5142 + $0x60] sm:$0xff]
        %v5156 = vld [vmem:[%s5142 + $0x68] sm:$0xff]
        %v5157 = vld [vmem:[%s5142 + $0x70] sm:$0xff]
        %v5158 = vld [vmem:[%s5142 + $0x78] sm:$0xff]
        %v5159 = vld [vmem:[%s2 + $0xd] sm:$0x1]
        %v5160 = vperm.slane %v5159, 0
        %5161 = vmatpush.msra.mxu0 %v5158
        %5162 = vmatpush.msra.mxu0 %v5157
        %5163 = vmatpush.msra.mxu0 %v5156
        %5164 = vmatpush.msra.mxu0 %v5155
        %5165 = vmatpush.msra.mxu0 %v5154
        %5166 = vmatpush.msra.mxu0 %v5153
        %5167 = vmatpush.msra.mxu0 %v5152
        %5168 = vmatpush.msra.mxu0 %v5151
        %5169 = vmatpush.msra.mxu0 %v5150
        %5170 = vmatpush.msra.mxu0 %v5149
        %5171 = vmatpush.msra.mxu0 %v5148
        %5172 = vmatpush.msra.mxu0 %v5147
        %5173 = vmatpush.msra.mxu0 %v5146
        %5174 = vmatpush.msra.mxu0 %v5145
        %5175 = vmatpush.msra.mxu0 %v5144
        %5176 = vmatpush.msra.mxu0 %v5143
        %5177 = vmatmul.f32.gmra.mxu0 %v5138
        %v5178 = vpop.f32.mrf.mxu0
        %v5179 = vadd.f32 %v5160, %v5178
        %5180 = vmatmul.f32.gmra.mxu0 %v5139
        %v5181 = vpop.f32.mrf.mxu0
        %v5182 = vadd.f32 %v5160, %v5181
        %5183 = vmatmul.f32.gmra.mxu0 %v5140
        %v5184 = vpop.f32.mrf.mxu0
        %v5185 = vadd.f32 %v5160, %v5184
        %5186 = vmatmul.f32.gmra.mxu0 %v5141
        %v5187 = vpop.f32.mrf.mxu0
        %v5188 = vadd.f32 %v5160, %v5187
        %5189 = vdwg.mxu0
        %v5190 = vadd.f32 %v5179, %v4435
        %v5191 = vadd.f32 %v5182, %v4436
        %v5192 = vadd.f32 %v5185, %v4437
        %v5193 = vadd.f32 %v5188, %v4438
        %5194 = vadd.xlane.f32.xlu0 %v5190
        %v5195 = vpop.xlane.xlu0 %5194
        %5196 = vadd.xlane.f32.xlu0 %v5191
        %v5197 = vpop.xlane.xlu0 %5196
        %5198 = vadd.xlane.f32.xlu0 %v5192
        %v5199 = vpop.xlane.xlu0 %5198
        %5200 = vadd.xlane.f32.xlu0 %v5193
        %v5201 = vpop.xlane.xlu0 %5200
        %v5202 = vmul.f32 %v5195, %v406
        %v5203 = vmul.f32 %v5197, %v406
        %v5204 = vmul.f32 %v5199, %v406
        %v5205 = vmul.f32 %v5201, %v406
        %v5206 = vsub.f32 %v5190, %v5202
        %v5207 = vsub.f32 %v5191, %v5203
        %v5208 = vsub.f32 %v5192, %v5204
        %v5209 = vsub.f32 %v5193, %v5205
        %v5210 = vmul.f32 %v5206, %v5206
        %v5211 = vmul.f32 %v5207, %v5207
        %v5212 = vmul.f32 %v5208, %v5208
        %v5213 = vmul.f32 %v5209, %v5209
        %5214 = vadd.xlane.f32.xlu0 %v5210
        %v5215 = vpop.xlane.xlu0 %5214
        %5216 = vadd.xlane.f32.xlu0 %v5211
        %v5217 = vpop.xlane.xlu0 %5216
        %5218 = vadd.xlane.f32.xlu0 %v5212
        %v5219 = vpop.xlane.xlu0 %5218
        %5220 = vadd.xlane.f32.xlu0 %v5213
        %v5221 = vpop.xlane.xlu0 %5220
        %v5222 = vmul.f32 %v5215, %v406
        %v5223 = vmul.f32 %v5217, %v406
        %v5224 = vmul.f32 %v5219, %v406
        %v5225 = vmul.f32 %v5221, %v406
        %v5226 = vadd.f32 %v5222, 1e-05
        %v5227 = vadd.f32 %v5223, 1e-05
        %v5228 = vadd.f32 %v5224, 1e-05
        %v5229 = vadd.f32 %v5225, 1e-05
        %v5230 = vrsqrt.pop %v5226
        %v5231 = vmul.f32 %v5230, %v5226
        %v5232 = vmul.f32 %v5231, %v5230
        %v5233 = vmul.f32 0.5, %v5232
        %v5234 = vsub.f32 1.5, %v5233
        %v5235 = vmul.f32 %v5230, %v5234
        %vm5236 = vweird.f32 %v5226
        %vm5237 = vweird.f32 %v5230
        %vm5238 = vmor %vm5236, %vm5237
        %v5239 = vsel %vm5238, %v5230, %v5235
        %v5240 = vrsqrt.pop %v5227
        %v5241 = vmul.f32 %v5240, %v5227
        %v5242 = vmul.f32 %v5241, %v5240
        %v5243 = vmul.f32 0.5, %v5242
        %v5244 = vsub.f32 1.5, %v5243
        %v5245 = vmul.f32 %v5240, %v5244
        %vm5246 = vweird.f32 %v5227
        %vm5247 = vweird.f32 %v5240
        %vm5248 = vmor %vm5246, %vm5247
        %v5249 = vsel %vm5248, %v5240, %v5245
        %v5250 = vrsqrt.pop %v5228
        %v5251 = vmul.f32 %v5250, %v5228
        %v5252 = vmul.f32 %v5251, %v5250
        %v5253 = vmul.f32 0.5, %v5252
        %v5254 = vsub.f32 1.5, %v5253
        %v5255 = vmul.f32 %v5250, %v5254
        %vm5256 = vweird.f32 %v5228
        %vm5257 = vweird.f32 %v5250
        %vm5258 = vmor %vm5256, %vm5257
        %v5259 = vsel %vm5258, %v5250, %v5255
        %v5260 = vrsqrt.pop %v5229
        %v5261 = vmul.f32 %v5260, %v5229
        %v5262 = vmul.f32 %v5261, %v5260
        %v5263 = vmul.f32 0.5, %v5262
        %v5264 = vsub.f32 1.5, %v5263
        %v5265 = vmul.f32 %v5260, %v5264
        %vm5266 = vweird.f32 %v5229
        %vm5267 = vweird.f32 %v5260
        %vm5268 = vmor %vm5266, %vm5267
        %v5269 = vsel %vm5268, %v5260, %v5265
        %v5270 = vmul.f32 %v5206, %v5239
        %v5271 = vmul.f32 %v5207, %v5249
        %v5272 = vmul.f32 %v5208, %v5259
        %v5273 = vmul.f32 %v5209, %v5269
        %v5274 = vld [vmem:[%s2 + $0xe] sm:$0x1]
        %v5275 = vperm.slane %v5274, 0
        %v5276 = vmul.f32 %v5270, %v5275
        %v5277 = vmul.f32 %v5271, %v5275
        %v5278 = vmul.f32 %v5272, %v5275
        %v5279 = vmul.f32 %v5273, %v5275
        %v5280 = vld [vmem:[%s2 + $0xf] sm:$0x1]
        %v5281 = vperm.slane %v5280, 0
        %v5282 = vadd.f32 %v5276, %v5281
        %v5283 = vadd.f32 %v5277, %v5281
        %v5284 = vadd.f32 %v5278, %v5281
        %v5285 = vadd.f32 %v5279, %v5281
        %s5286 = scalar_lea.vmem %s4, 512
        %v5287 = vld [vmem:[%s5286] sm:$0xff]
        %v5288 = vld [vmem:[%s5286 + $0x8] sm:$0xff]
        %v5289 = vld [vmem:[%s5286 + $0x10] sm:$0xff]
        %v5290 = vld [vmem:[%s5286 + $0x18] sm:$0xff]
        %v5291 = vld [vmem:[%s5286 + $0x20] sm:$0xff]
        %v5292 = vld [vmem:[%s5286 + $0x28] sm:$0xff]
        %v5293 = vld [vmem:[%s5286 + $0x30] sm:$0xff]
        %v5294 = vld [vmem:[%s5286 + $0x38] sm:$0xff]
        %v5295 = vld [vmem:[%s5286 + $0x40] sm:$0xff]
        %v5296 = vld [vmem:[%s5286 + $0x48] sm:$0xff]
        %v5297 = vld [vmem:[%s5286 + $0x50] sm:$0xff]
        %v5298 = vld [vmem:[%s5286 + $0x58] sm:$0xff]
        %v5299 = vld [vmem:[%s5286 + $0x60] sm:$0xff]
        %v5300 = vld [vmem:[%s5286 + $0x68] sm:$0xff]
        %v5301 = vld [vmem:[%s5286 + $0x70] sm:$0xff]
        %v5302 = vld [vmem:[%s5286 + $0x78] sm:$0xff]
        %v5303 = vld [vmem:[%s5286 + $0x80] sm:$0xff]
        %v5304 = vld [vmem:[%s5286 + $0x88] sm:$0xff]
        %v5305 = vld [vmem:[%s5286 + $0x90] sm:$0xff]
        %v5306 = vld [vmem:[%s5286 + $0x98] sm:$0xff]
        %v5307 = vld [vmem:[%s5286 + $0xa0] sm:$0xff]
        %v5308 = vld [vmem:[%s5286 + $0xa8] sm:$0xff]
        %v5309 = vld [vmem:[%s5286 + $0xb0] sm:$0xff]
        %v5310 = vld [vmem:[%s5286 + $0xb8] sm:$0xff]
        %v5311 = vld [vmem:[%s5286 + $0xc0] sm:$0xff]
        %v5312 = vld [vmem:[%s5286 + $0xc8] sm:$0xff]
        %v5313 = vld [vmem:[%s5286 + $0xd0] sm:$0xff]
        %v5314 = vld [vmem:[%s5286 + $0xd8] sm:$0xff]
        %v5315 = vld [vmem:[%s5286 + $0xe0] sm:$0xff]
        %v5316 = vld [vmem:[%s5286 + $0xe8] sm:$0xff]
        %v5317 = vld [vmem:[%s5286 + $0xf0] sm:$0xff]
        %v5318 = vld [vmem:[%s5286 + $0xf8] sm:$0xff]
        %v5319 = vld [vmem:[%s5286 + $0x100] sm:$0xff]
        %v5320 = vld [vmem:[%s5286 + $0x108] sm:$0xff]
        %v5321 = vld [vmem:[%s5286 + $0x110] sm:$0xff]
        %v5322 = vld [vmem:[%s5286 + $0x118] sm:$0xff]
        %v5323 = vld [vmem:[%s5286 + $0x120] sm:$0xff]
        %v5324 = vld [vmem:[%s5286 + $0x128] sm:$0xff]
        %v5325 = vld [vmem:[%s5286 + $0x130] sm:$0xff]
        %v5326 = vld [vmem:[%s5286 + $0x138] sm:$0xff]
        %v5327 = vld [vmem:[%s5286 + $0x140] sm:$0xff]
        %v5328 = vld [vmem:[%s5286 + $0x148] sm:$0xff]
        %v5329 = vld [vmem:[%s5286 + $0x150] sm:$0xff]
        %v5330 = vld [vmem:[%s5286 + $0x158] sm:$0xff]
        %v5331 = vld [vmem:[%s5286 + $0x160] sm:$0xff]
        %v5332 = vld [vmem:[%s5286 + $0x168] sm:$0xff]
        %v5333 = vld [vmem:[%s5286 + $0x170] sm:$0xff]
        %v5334 = vld [vmem:[%s5286 + $0x178] sm:$0xff]
        %v5335 = vld [vmem:[%s5286 + $0x180] sm:$0xff]
        %v5336 = vld [vmem:[%s5286 + $0x188] sm:$0xff]
        %v5337 = vld [vmem:[%s5286 + $0x190] sm:$0xff]
        %v5338 = vld [vmem:[%s5286 + $0x198] sm:$0xff]
        %v5339 = vld [vmem:[%s5286 + $0x1a0] sm:$0xff]
        %v5340 = vld [vmem:[%s5286 + $0x1a8] sm:$0xff]
        %v5341 = vld [vmem:[%s5286 + $0x1b0] sm:$0xff]
        %v5342 = vld [vmem:[%s5286 + $0x1b8] sm:$0xff]
        %v5343 = vld [vmem:[%s5286 + $0x1c0] sm:$0xff]
        %v5344 = vld [vmem:[%s5286 + $0x1c8] sm:$0xff]
        %v5345 = vld [vmem:[%s5286 + $0x1d0] sm:$0xff]
        %v5346 = vld [vmem:[%s5286 + $0x1d8] sm:$0xff]
        %v5347 = vld [vmem:[%s5286 + $0x1e0] sm:$0xff]
        %v5348 = vld [vmem:[%s5286 + $0x1e8] sm:$0xff]
        %v5349 = vld [vmem:[%s5286 + $0x1f0] sm:$0xff]
        %v5350 = vld [vmem:[%s5286 + $0x1f8] sm:$0xff]
        %s5351 = scalar_lea.vmem %s3, 1
        %v5352 = vld [vmem:[%s5351] ss:$2 sm:$0xf]
        %v5354 = vperm.slane %v5352, 0
        %v5355 = vperm.slane %v5352, 1
        %v5356 = vperm.slane %v5352, 2
        %v5357 = vperm.slane %v5352, 3
        %5362 = vmatpush.msra.mxu0 %v5347
        %5363 = vmatpush.msra.mxu0 %v5343
        %5364 = vmatpush.msra.mxu0 %v5339
        %5365 = vmatpush.msra.mxu0 %v5335
        %5366 = vmatpush.msra.mxu0 %v5331
        %5367 = vmatpush.msra.mxu0 %v5327
        %5368 = vmatpush.msra.mxu0 %v5323
        %5369 = vmatpush.msra.mxu0 %v5319
        %5370 = vmatpush.msra.mxu0 %v5315
        %5371 = vmatpush.msra.mxu0 %v5311
        %5372 = vmatpush.msra.mxu0 %v5307
        %5373 = vmatpush.msra.mxu0 %v5303
        %5374 = vmatpush.msra.mxu0 %v5299
        %5375 = vmatpush.msra.mxu0 %v5295
        %5376 = vmatpush.msra.mxu0 %v5291
        %5377 = vmatpush.msra.mxu0 %v5287
        %5378 = vmatmul.f32.gmra.mxu0 %v5282
        %v5379 = vpop.f32.mrf.mxu0
        %v5380 = vadd.f32 %v5354, %v5379
        %5381 = vmatmul.f32.gmra.mxu0 %v5283
        %v5382 = vpop.f32.mrf.mxu0
        %v5383 = vadd.f32 %v5354, %v5382
        %5384 = vmatmul.f32.gmra.mxu0 %v5284
        %v5385 = vpop.f32.mrf.mxu0
        %v5386 = vadd.f32 %v5354, %v5385
        %5387 = vmatmul.f32.gmra.mxu0 %v5285
        %v5388 = vpop.f32.mrf.mxu0
        %v5389 = vadd.f32 %v5354, %v5388
        %5390 = vdwg.mxu0
        %5391 = vmatpush.msra.mxu0 %v5348
        %5392 = vmatpush.msra.mxu0 %v5344
        %5393 = vmatpush.msra.mxu0 %v5340
        %5394 = vmatpush.msra.mxu0 %v5336
        %5395 = vmatpush.msra.mxu0 %v5332
        %5396 = vmatpush.msra.mxu0 %v5328
        %5397 = vmatpush.msra.mxu0 %v5324
        %5398 = vmatpush.msra.mxu0 %v5320
        %5399 = vmatpush.msra.mxu0 %v5316
        %5400 = vmatpush.msra.mxu0 %v5312
        %5401 = vmatpush.msra.mxu0 %v5308
        %5402 = vmatpush.msra.mxu0 %v5304
        %5403 = vmatpush.msra.mxu0 %v5300
        %5404 = vmatpush.msra.mxu0 %v5296
        %5405 = vmatpush.msra.mxu0 %v5292
        %5406 = vmatpush.msra.mxu0 %v5288
        %5407 = vmatmul.f32.gmra.mxu0 %v5282
        %v5408 = vpop.f32.mrf.mxu0
        %v5409 = vadd.f32 %v5355, %v5408
        %5410 = vmatmul.f32.gmra.mxu0 %v5283
        %v5411 = vpop.f32.mrf.mxu0
        %v5412 = vadd.f32 %v5355, %v5411
        %5413 = vmatmul.f32.gmra.mxu0 %v5284
        %v5414 = vpop.f32.mrf.mxu0
        %v5415 = vadd.f32 %v5355, %v5414
        %5416 = vmatmul.f32.gmra.mxu0 %v5285
        %v5417 = vpop.f32.mrf.mxu0
        %v5418 = vadd.f32 %v5355, %v5417
        %5419 = vdwg.mxu0
        %5420 = vmatpush.msra.mxu0 %v5349
        %5421 = vmatpush.msra.mxu0 %v5345
        %5422 = vmatpush.msra.mxu0 %v5341
        %5423 = vmatpush.msra.mxu0 %v5337
        %5424 = vmatpush.msra.mxu0 %v5333
        %5425 = vmatpush.msra.mxu0 %v5329
        %5426 = vmatpush.msra.mxu0 %v5325
        %5427 = vmatpush.msra.mxu0 %v5321
        %5428 = vmatpush.msra.mxu0 %v5317
        %5429 = vmatpush.msra.mxu0 %v5313
        %5430 = vmatpush.msra.mxu0 %v5309
        %5431 = vmatpush.msra.mxu0 %v5305
        %5432 = vmatpush.msra.mxu0 %v5301
        %5433 = vmatpush.msra.mxu0 %v5297
        %5434 = vmatpush.msra.mxu0 %v5293
        %5435 = vmatpush.msra.mxu0 %v5289
        %5436 = vmatmul.f32.gmra.mxu0 %v5282
        %v5437 = vpop.f32.mrf.mxu0
        %v5438 = vadd.f32 %v5356, %v5437
        %5439 = vmatmul.f32.gmra.mxu0 %v5283
        %v5440 = vpop.f32.mrf.mxu0
        %v5441 = vadd.f32 %v5356, %v5440
        %5442 = vmatmul.f32.gmra.mxu0 %v5284
        %v5443 = vpop.f32.mrf.mxu0
        %v5444 = vadd.f32 %v5356, %v5443
        %5445 = vmatmul.f32.gmra.mxu0 %v5285
        %v5446 = vpop.f32.mrf.mxu0
        %v5447 = vadd.f32 %v5356, %v5446
        %5448 = vdwg.mxu0
        %5449 = vmatpush.msra.mxu0 %v5350
        %5450 = vmatpush.msra.mxu0 %v5346
        %5451 = vmatpush.msra.mxu0 %v5342
        %5452 = vmatpush.msra.mxu0 %v5338
        %5453 = vmatpush.msra.mxu0 %v5334
        %5454 = vmatpush.msra.mxu0 %v5330
        %5455 = vmatpush.msra.mxu0 %v5326
        %5456 = vmatpush.msra.mxu0 %v5322
        %5457 = vmatpush.msra.mxu0 %v5318
        %5458 = vmatpush.msra.mxu0 %v5314
        %5459 = vmatpush.msra.mxu0 %v5310
        %5460 = vmatpush.msra.mxu0 %v5306
        %5461 = vmatpush.msra.mxu0 %v5302
        %5462 = vmatpush.msra.mxu0 %v5298
        %5463 = vmatpush.msra.mxu0 %v5294
        %5464 = vmatpush.msra.mxu0 %v5290
        %5465 = vmatmul.f32.gmra.mxu0 %v5282
        %v5466 = vpop.f32.mrf.mxu0
        %v5467 = vadd.f32 %v5357, %v5466
        %5468 = vmatmul.f32.gmra.mxu0 %v5283
        %v5469 = vpop.f32.mrf.mxu0
        %v5470 = vadd.f32 %v5357, %v5469
        %5471 = vmatmul.f32.gmra.mxu0 %v5284
        %v5472 = vpop.f32.mrf.mxu0
        %v5473 = vadd.f32 %v5357, %v5472
        %5474 = vmatmul.f32.gmra.mxu0 %v5285
        %v5475 = vpop.f32.mrf.mxu0
        %v5476 = vadd.f32 %v5357, %v5475
        %5477 = vdwg.mxu0
        %v5478 = vxor.u32 %v5380, 2147483648
        %v5479 = vxor.u32 %v5409, 2147483648
        %v5480 = vxor.u32 %v5438, 2147483648
        %v5481 = vxor.u32 %v5467, 2147483648
        %v5482 = vxor.u32 %v5383, 2147483648
        %v5483 = vxor.u32 %v5412, 2147483648
        %v5484 = vxor.u32 %v5441, 2147483648
        %v5485 = vxor.u32 %v5470, 2147483648
        %v5486 = vxor.u32 %v5386, 2147483648
        %v5487 = vxor.u32 %v5415, 2147483648
        %v5488 = vxor.u32 %v5444, 2147483648
        %v5489 = vxor.u32 %v5473, 2147483648
        %v5490 = vxor.u32 %v5389, 2147483648
        %v5491 = vxor.u32 %v5418, 2147483648
        %v5492 = vxor.u32 %v5447, 2147483648
        %v5493 = vxor.u32 %v5476, 2147483648
        %v5494 = vmul.f32 %v5478, 1.442695
        %v5495 = vpow.pop %v5494
        %v5496 = vmul.f32 %v5479, 1.442695
        %v5497 = vpow.pop %v5496
        %v5498 = vmul.f32 %v5480, 1.442695
        %v5499 = vpow.pop %v5498
        %v5500 = vmul.f32 %v5481, 1.442695
        %v5501 = vpow.pop %v5500
        %v5502 = vmul.f32 %v5482, 1.442695
        %v5503 = vpow.pop %v5502
        %v5504 = vmul.f32 %v5483, 1.442695
        %v5505 = vpow.pop %v5504
        %v5506 = vmul.f32 %v5484, 1.442695
        %v5507 = vpow.pop %v5506
        %v5508 = vmul.f32 %v5485, 1.442695
        %v5509 = vpow.pop %v5508
        %v5510 = vmul.f32 %v5486, 1.442695
        %v5511 = vpow.pop %v5510
        %v5512 = vmul.f32 %v5487, 1.442695
        %v5513 = vpow.pop %v5512
        %v5514 = vmul.f32 %v5488, 1.442695
        %v5515 = vpow.pop %v5514
        %v5516 = vmul.f32 %v5489, 1.442695
        %v5517 = vpow.pop %v5516
        %v5518 = vmul.f32 %v5490, 1.442695
        %v5519 = vpow.pop %v5518
        %v5520 = vmul.f32 %v5491, 1.442695
        %v5521 = vpow.pop %v5520
        %v5522 = vmul.f32 %v5492, 1.442695
        %v5523 = vpow.pop %v5522
        %v5524 = vmul.f32 %v5493, 1.442695
        %v5525 = vpow.pop %v5524
        %v5526 = vadd.f32 %v5495, 1.0
        %v5527 = vadd.f32 %v5497, 1.0
        %v5528 = vadd.f32 %v5499, 1.0
        %v5529 = vadd.f32 %v5501, 1.0
        %v5530 = vadd.f32 %v5503, 1.0
        %v5531 = vadd.f32 %v5505, 1.0
        %v5532 = vadd.f32 %v5507, 1.0
        %v5533 = vadd.f32 %v5509, 1.0
        %v5534 = vadd.f32 %v5511, 1.0
        %v5535 = vadd.f32 %v5513, 1.0
        %v5536 = vadd.f32 %v5515, 1.0
        %v5537 = vadd.f32 %v5517, 1.0
        %v5538 = vadd.f32 %v5519, 1.0
        %v5539 = vadd.f32 %v5521, 1.0
        %v5540 = vadd.f32 %v5523, 1.0
        %v5541 = vadd.f32 %v5525, 1.0
        %v5542 = vrcp.pop %v5526
        %v5543 = vmul.f32 %v5526, %v5542
        %v5544 = vsub.f32 1.0, %v5543
        %v5545 = vmul.f32 %v5542, %v5544
        %v5546 = vadd.f32 %v5542, %v5545
        %vm5547 = vweird.f32 %v5526
        %vm5548 = vweird.f32 %v5542
        %vm5549 = vmor %vm5547, %vm5548
        %v5550 = vsel %vm5549, %v5542, %v5546
        %v5551 = vand.u32 2147483647, %v5526
        %vm5552 = vcmp.eq.f32.partialorder %v5551, 8.507059e+37
        %v5553 = vand.u32 %v5526, 2147483648
        %v5554 = vor.u32 1.1754944e-38, %v5553
        %v5555 = vsel %vm5552, %v5554, %v5550
        %v5556 = vmul.f32 1.0, %v5555
        %v5557 = vrcp.pop %v5527
        %v5558 = vmul.f32 %v5527, %v5557
        %v5559 = vsub.f32 1.0, %v5558
        %v5560 = vmul.f32 %v5557, %v5559
        %v5561 = vadd.f32 %v5557, %v5560
        %vm5562 = vweird.f32 %v5527
        %vm5563 = vweird.f32 %v5557
        %vm5564 = vmor %vm5562, %vm5563
        %v5565 = vsel %vm5564, %v5557, %v5561
        %v5566 = vand.u32 2147483647, %v5527
        %vm5567 = vcmp.eq.f32.partialorder %v5566, 8.507059e+37
        %v5568 = vand.u32 %v5527, 2147483648
        %v5569 = vor.u32 1.1754944e-38, %v5568
        %v5570 = vsel %vm5567, %v5569, %v5565
        %v5571 = vmul.f32 1.0, %v5570
        %v5572 = vrcp.pop %v5528
        %v5573 = vmul.f32 %v5528, %v5572
        %v5574 = vsub.f32 1.0, %v5573
        %v5575 = vmul.f32 %v5572, %v5574
        %v5576 = vadd.f32 %v5572, %v5575
        %vm5577 = vweird.f32 %v5528
        %vm5578 = vweird.f32 %v5572
        %vm5579 = vmor %vm5577, %vm5578
        %v5580 = vsel %vm5579, %v5572, %v5576
        %v5581 = vand.u32 2147483647, %v5528
        %vm5582 = vcmp.eq.f32.partialorder %v5581, 8.507059e+37
        %v5583 = vand.u32 %v5528, 2147483648
        %v5584 = vor.u32 1.1754944e-38, %v5583
        %v5585 = vsel %vm5582, %v5584, %v5580
        %v5586 = vmul.f32 1.0, %v5585
        %v5587 = vrcp.pop %v5529
        %v5588 = vmul.f32 %v5529, %v5587
        %v5589 = vsub.f32 1.0, %v5588
        %v5590 = vmul.f32 %v5587, %v5589
        %v5591 = vadd.f32 %v5587, %v5590
        %vm5592 = vweird.f32 %v5529
        %vm5593 = vweird.f32 %v5587
        %vm5594 = vmor %vm5592, %vm5593
        %v5595 = vsel %vm5594, %v5587, %v5591
        %v5596 = vand.u32 2147483647, %v5529
        %vm5597 = vcmp.eq.f32.partialorder %v5596, 8.507059e+37
        %v5598 = vand.u32 %v5529, 2147483648
        %v5599 = vor.u32 1.1754944e-38, %v5598
        %v5600 = vsel %vm5597, %v5599, %v5595
        %v5601 = vmul.f32 1.0, %v5600
        %v5602 = vrcp.pop %v5530
        %v5603 = vmul.f32 %v5530, %v5602
        %v5604 = vsub.f32 1.0, %v5603
        %v5605 = vmul.f32 %v5602, %v5604
        %v5606 = vadd.f32 %v5602, %v5605
        %vm5607 = vweird.f32 %v5530
        %vm5608 = vweird.f32 %v5602
        %vm5609 = vmor %vm5607, %vm5608
        %v5610 = vsel %vm5609, %v5602, %v5606
        %v5611 = vand.u32 2147483647, %v5530
        %vm5612 = vcmp.eq.f32.partialorder %v5611, 8.507059e+37
        %v5613 = vand.u32 %v5530, 2147483648
        %v5614 = vor.u32 1.1754944e-38, %v5613
        %v5615 = vsel %vm5612, %v5614, %v5610
        %v5616 = vmul.f32 1.0, %v5615
        %v5617 = vrcp.pop %v5531
        %v5618 = vmul.f32 %v5531, %v5617
        %v5619 = vsub.f32 1.0, %v5618
        %v5620 = vmul.f32 %v5617, %v5619
        %v5621 = vadd.f32 %v5617, %v5620
        %vm5622 = vweird.f32 %v5531
        %vm5623 = vweird.f32 %v5617
        %vm5624 = vmor %vm5622, %vm5623
        %v5625 = vsel %vm5624, %v5617, %v5621
        %v5626 = vand.u32 2147483647, %v5531
        %vm5627 = vcmp.eq.f32.partialorder %v5626, 8.507059e+37
        %v5628 = vand.u32 %v5531, 2147483648
        %v5629 = vor.u32 1.1754944e-38, %v5628
        %v5630 = vsel %vm5627, %v5629, %v5625
        %v5631 = vmul.f32 1.0, %v5630
        %v5632 = vrcp.pop %v5532
        %v5633 = vmul.f32 %v5532, %v5632
        %v5634 = vsub.f32 1.0, %v5633
        %v5635 = vmul.f32 %v5632, %v5634
        %v5636 = vadd.f32 %v5632, %v5635
        %vm5637 = vweird.f32 %v5532
        %vm5638 = vweird.f32 %v5632
        %vm5639 = vmor %vm5637, %vm5638
        %v5640 = vsel %vm5639, %v5632, %v5636
        %v5641 = vand.u32 2147483647, %v5532
        %vm5642 = vcmp.eq.f32.partialorder %v5641, 8.507059e+37
        %v5643 = vand.u32 %v5532, 2147483648
        %v5644 = vor.u32 1.1754944e-38, %v5643
        %v5645 = vsel %vm5642, %v5644, %v5640
        %v5646 = vmul.f32 1.0, %v5645
        %v5647 = vrcp.pop %v5533
        %v5648 = vmul.f32 %v5533, %v5647
        %v5649 = vsub.f32 1.0, %v5648
        %v5650 = vmul.f32 %v5647, %v5649
        %v5651 = vadd.f32 %v5647, %v5650
        %vm5652 = vweird.f32 %v5533
        %vm5653 = vweird.f32 %v5647
        %vm5654 = vmor %vm5652, %vm5653
        %v5655 = vsel %vm5654, %v5647, %v5651
        %v5656 = vand.u32 2147483647, %v5533
        %vm5657 = vcmp.eq.f32.partialorder %v5656, 8.507059e+37
        %v5658 = vand.u32 %v5533, 2147483648
        %v5659 = vor.u32 1.1754944e-38, %v5658
        %v5660 = vsel %vm5657, %v5659, %v5655
        %v5661 = vmul.f32 1.0, %v5660
        %v5662 = vrcp.pop %v5534
        %v5663 = vmul.f32 %v5534, %v5662
        %v5664 = vsub.f32 1.0, %v5663
        %v5665 = vmul.f32 %v5662, %v5664
        %v5666 = vadd.f32 %v5662, %v5665
        %vm5667 = vweird.f32 %v5534
        %vm5668 = vweird.f32 %v5662
        %vm5669 = vmor %vm5667, %vm5668
        %v5670 = vsel %vm5669, %v5662, %v5666
        %v5671 = vand.u32 2147483647, %v5534
        %vm5672 = vcmp.eq.f32.partialorder %v5671, 8.507059e+37
        %v5673 = vand.u32 %v5534, 2147483648
        %v5674 = vor.u32 1.1754944e-38, %v5673
        %v5675 = vsel %vm5672, %v5674, %v5670
        %v5676 = vmul.f32 1.0, %v5675
        %v5677 = vrcp.pop %v5535
        %v5678 = vmul.f32 %v5535, %v5677
        %v5679 = vsub.f32 1.0, %v5678
        %v5680 = vmul.f32 %v5677, %v5679
        %v5681 = vadd.f32 %v5677, %v5680
        %vm5682 = vweird.f32 %v5535
        %vm5683 = vweird.f32 %v5677
        %vm5684 = vmor %vm5682, %vm5683
        %v5685 = vsel %vm5684, %v5677, %v5681
        %v5686 = vand.u32 2147483647, %v5535
        %vm5687 = vcmp.eq.f32.partialorder %v5686, 8.507059e+37
        %v5688 = vand.u32 %v5535, 2147483648
        %v5689 = vor.u32 1.1754944e-38, %v5688
        %v5690 = vsel %vm5687, %v5689, %v5685
        %v5691 = vmul.f32 1.0, %v5690
        %v5692 = vrcp.pop %v5536
        %v5693 = vmul.f32 %v5536, %v5692
        %v5694 = vsub.f32 1.0, %v5693
        %v5695 = vmul.f32 %v5692, %v5694
        %v5696 = vadd.f32 %v5692, %v5695
        %vm5697 = vweird.f32 %v5536
        %vm5698 = vweird.f32 %v5692
        %vm5699 = vmor %vm5697, %vm5698
        %v5700 = vsel %vm5699, %v5692, %v5696
        %v5701 = vand.u32 2147483647, %v5536
        %vm5702 = vcmp.eq.f32.partialorder %v5701, 8.507059e+37
        %v5703 = vand.u32 %v5536, 2147483648
        %v5704 = vor.u32 1.1754944e-38, %v5703
        %v5705 = vsel %vm5702, %v5704, %v5700
        %v5706 = vmul.f32 1.0, %v5705
        %v5707 = vrcp.pop %v5537
        %v5708 = vmul.f32 %v5537, %v5707
        %v5709 = vsub.f32 1.0, %v5708
        %v5710 = vmul.f32 %v5707, %v5709
        %v5711 = vadd.f32 %v5707, %v5710
        %vm5712 = vweird.f32 %v5537
        %vm5713 = vweird.f32 %v5707
        %vm5714 = vmor %vm5712, %vm5713
        %v5715 = vsel %vm5714, %v5707, %v5711
        %v5716 = vand.u32 2147483647, %v5537
        %vm5717 = vcmp.eq.f32.partialorder %v5716, 8.507059e+37
        %v5718 = vand.u32 %v5537, 2147483648
        %v5719 = vor.u32 1.1754944e-38, %v5718
        %v5720 = vsel %vm5717, %v5719, %v5715
        %v5721 = vmul.f32 1.0, %v5720
        %v5722 = vrcp.pop %v5538
        %v5723 = vmul.f32 %v5538, %v5722
        %v5724 = vsub.f32 1.0, %v5723
        %v5725 = vmul.f32 %v5722, %v5724
        %v5726 = vadd.f32 %v5722, %v5725
        %vm5727 = vweird.f32 %v5538
        %vm5728 = vweird.f32 %v5722
        %vm5729 = vmor %vm5727, %vm5728
        %v5730 = vsel %vm5729, %v5722, %v5726
        %v5731 = vand.u32 2147483647, %v5538
        %vm5732 = vcmp.eq.f32.partialorder %v5731, 8.507059e+37
        %v5733 = vand.u32 %v5538, 2147483648
        %v5734 = vor.u32 1.1754944e-38, %v5733
        %v5735 = vsel %vm5732, %v5734, %v5730
        %v5736 = vmul.f32 1.0, %v5735
        %v5737 = vrcp.pop %v5539
        %v5738 = vmul.f32 %v5539, %v5737
        %v5739 = vsub.f32 1.0, %v5738
        %v5740 = vmul.f32 %v5737, %v5739
        %v5741 = vadd.f32 %v5737, %v5740
        %vm5742 = vweird.f32 %v5539
        %vm5743 = vweird.f32 %v5737
        %vm5744 = vmor %vm5742, %vm5743
        %v5745 = vsel %vm5744, %v5737, %v5741
        %v5746 = vand.u32 2147483647, %v5539
        %vm5747 = vcmp.eq.f32.partialorder %v5746, 8.507059e+37
        %v5748 = vand.u32 %v5539, 2147483648
        %v5749 = vor.u32 1.1754944e-38, %v5748
        %v5750 = vsel %vm5747, %v5749, %v5745
        %v5751 = vmul.f32 1.0, %v5750
        %v5752 = vrcp.pop %v5540
        %v5753 = vmul.f32 %v5540, %v5752
        %v5754 = vsub.f32 1.0, %v5753
        %v5755 = vmul.f32 %v5752, %v5754
        %v5756 = vadd.f32 %v5752, %v5755
        %vm5757 = vweird.f32 %v5540
        %vm5758 = vweird.f32 %v5752
        %vm5759 = vmor %vm5757, %vm5758
        %v5760 = vsel %vm5759, %v5752, %v5756
        %v5761 = vand.u32 2147483647, %v5540
        %vm5762 = vcmp.eq.f32.partialorder %v5761, 8.507059e+37
        %v5763 = vand.u32 %v5540, 2147483648
        %v5764 = vor.u32 1.1754944e-38, %v5763
        %v5765 = vsel %vm5762, %v5764, %v5760
        %v5766 = vmul.f32 1.0, %v5765
        %v5767 = vrcp.pop %v5541
        %v5768 = vmul.f32 %v5541, %v5767
        %v5769 = vsub.f32 1.0, %v5768
        %v5770 = vmul.f32 %v5767, %v5769
        %v5771 = vadd.f32 %v5767, %v5770
        %vm5772 = vweird.f32 %v5541
        %vm5773 = vweird.f32 %v5767
        %vm5774 = vmor %vm5772, %vm5773
        %v5775 = vsel %vm5774, %v5767, %v5771
        %v5776 = vand.u32 2147483647, %v5541
        %vm5777 = vcmp.eq.f32.partialorder %v5776, 8.507059e+37
        %v5778 = vand.u32 %v5541, 2147483648
        %v5779 = vor.u32 1.1754944e-38, %v5778
        %v5780 = vsel %vm5777, %v5779, %v5775
        %v5781 = vmul.f32 1.0, %v5780
        %v5782 = vmul.f32 %v5380, %v5556
        %v5783 = vmul.f32 %v5409, %v5571
        %v5784 = vmul.f32 %v5438, %v5586
        %v5785 = vmul.f32 %v5467, %v5601
        %v5786 = vmul.f32 %v5383, %v5616
        %v5787 = vmul.f32 %v5412, %v5631
        %v5788 = vmul.f32 %v5441, %v5646
        %v5789 = vmul.f32 %v5470, %v5661
        %v5790 = vmul.f32 %v5386, %v5676
        %v5791 = vmul.f32 %v5415, %v5691
        %v5792 = vmul.f32 %v5444, %v5706
        %v5793 = vmul.f32 %v5473, %v5721
        %v5794 = vmul.f32 %v5389, %v5736
        %v5795 = vmul.f32 %v5418, %v5751
        %v5796 = vmul.f32 %v5447, %v5766
        %v5797 = vmul.f32 %v5476, %v5781
        %s5798 = scalar_lea.vmem %s5, 512
        %v5799 = vld [vmem:[%s5798] sm:$0xff]
        %v5800 = vld [vmem:[%s5798 + $0x8] sm:$0xff]
        %v5801 = vld [vmem:[%s5798 + $0x10] sm:$0xff]
        %v5802 = vld [vmem:[%s5798 + $0x18] sm:$0xff]
        %v5803 = vld [vmem:[%s5798 + $0x20] sm:$0xff]
        %v5804 = vld [vmem:[%s5798 + $0x28] sm:$0xff]
        %v5805 = vld [vmem:[%s5798 + $0x30] sm:$0xff]
        %v5806 = vld [vmem:[%s5798 + $0x38] sm:$0xff]
        %v5807 = vld [vmem:[%s5798 + $0x40] sm:$0xff]
        %v5808 = vld [vmem:[%s5798 + $0x48] sm:$0xff]
        %v5809 = vld [vmem:[%s5798 + $0x50] sm:$0xff]
        %v5810 = vld [vmem:[%s5798 + $0x58] sm:$0xff]
        %v5811 = vld [vmem:[%s5798 + $0x60] sm:$0xff]
        %v5812 = vld [vmem:[%s5798 + $0x68] sm:$0xff]
        %v5813 = vld [vmem:[%s5798 + $0x70] sm:$0xff]
        %v5814 = vld [vmem:[%s5798 + $0x78] sm:$0xff]
        %v5815 = vld [vmem:[%s5798 + $0x80] sm:$0xff]
        %v5816 = vld [vmem:[%s5798 + $0x88] sm:$0xff]
        %v5817 = vld [vmem:[%s5798 + $0x90] sm:$0xff]
        %v5818 = vld [vmem:[%s5798 + $0x98] sm:$0xff]
        %v5819 = vld [vmem:[%s5798 + $0xa0] sm:$0xff]
        %v5820 = vld [vmem:[%s5798 + $0xa8] sm:$0xff]
        %v5821 = vld [vmem:[%s5798 + $0xb0] sm:$0xff]
        %v5822 = vld [vmem:[%s5798 + $0xb8] sm:$0xff]
        %v5823 = vld [vmem:[%s5798 + $0xc0] sm:$0xff]
        %v5824 = vld [vmem:[%s5798 + $0xc8] sm:$0xff]
        %v5825 = vld [vmem:[%s5798 + $0xd0] sm:$0xff]
        %v5826 = vld [vmem:[%s5798 + $0xd8] sm:$0xff]
        %v5827 = vld [vmem:[%s5798 + $0xe0] sm:$0xff]
        %v5828 = vld [vmem:[%s5798 + $0xe8] sm:$0xff]
        %v5829 = vld [vmem:[%s5798 + $0xf0] sm:$0xff]
        %v5830 = vld [vmem:[%s5798 + $0xf8] sm:$0xff]
        %v5831 = vld [vmem:[%s5798 + $0x100] sm:$0xff]
        %v5832 = vld [vmem:[%s5798 + $0x108] sm:$0xff]
        %v5833 = vld [vmem:[%s5798 + $0x110] sm:$0xff]
        %v5834 = vld [vmem:[%s5798 + $0x118] sm:$0xff]
        %v5835 = vld [vmem:[%s5798 + $0x120] sm:$0xff]
        %v5836 = vld [vmem:[%s5798 + $0x128] sm:$0xff]
        %v5837 = vld [vmem:[%s5798 + $0x130] sm:$0xff]
        %v5838 = vld [vmem:[%s5798 + $0x138] sm:$0xff]
        %v5839 = vld [vmem:[%s5798 + $0x140] sm:$0xff]
        %v5840 = vld [vmem:[%s5798 + $0x148] sm:$0xff]
        %v5841 = vld [vmem:[%s5798 + $0x150] sm:$0xff]
        %v5842 = vld [vmem:[%s5798 + $0x158] sm:$0xff]
        %v5843 = vld [vmem:[%s5798 + $0x160] sm:$0xff]
        %v5844 = vld [vmem:[%s5798 + $0x168] sm:$0xff]
        %v5845 = vld [vmem:[%s5798 + $0x170] sm:$0xff]
        %v5846 = vld [vmem:[%s5798 + $0x178] sm:$0xff]
        %v5847 = vld [vmem:[%s5798 + $0x180] sm:$0xff]
        %v5848 = vld [vmem:[%s5798 + $0x188] sm:$0xff]
        %v5849 = vld [vmem:[%s5798 + $0x190] sm:$0xff]
        %v5850 = vld [vmem:[%s5798 + $0x198] sm:$0xff]
        %v5851 = vld [vmem:[%s5798 + $0x1a0] sm:$0xff]
        %v5852 = vld [vmem:[%s5798 + $0x1a8] sm:$0xff]
        %v5853 = vld [vmem:[%s5798 + $0x1b0] sm:$0xff]
        %v5854 = vld [vmem:[%s5798 + $0x1b8] sm:$0xff]
        %v5855 = vld [vmem:[%s5798 + $0x1c0] sm:$0xff]
        %v5856 = vld [vmem:[%s5798 + $0x1c8] sm:$0xff]
        %v5857 = vld [vmem:[%s5798 + $0x1d0] sm:$0xff]
        %v5858 = vld [vmem:[%s5798 + $0x1d8] sm:$0xff]
        %v5859 = vld [vmem:[%s5798 + $0x1e0] sm:$0xff]
        %v5860 = vld [vmem:[%s5798 + $0x1e8] sm:$0xff]
        %v5861 = vld [vmem:[%s5798 + $0x1f0] sm:$0xff]
        %v5862 = vld [vmem:[%s5798 + $0x1f8] sm:$0xff]
        %v5863 = vld [vmem:[%s2 + $0x10] sm:$0x1]
        %v5864 = vperm.slane %v5863, 0
        %5865 = vmatpush.msra.mxu0 %v5814
        %5866 = vmatpush.msra.mxu0 %v5813
        %5867 = vmatpush.msra.mxu0 %v5812
        %5868 = vmatpush.msra.mxu0 %v5811
        %5869 = vmatpush.msra.mxu0 %v5810
        %5870 = vmatpush.msra.mxu0 %v5809
        %5871 = vmatpush.msra.mxu0 %v5808
        %5872 = vmatpush.msra.mxu0 %v5807
        %5873 = vmatpush.msra.mxu0 %v5806
        %5874 = vmatpush.msra.mxu0 %v5805
        %5875 = vmatpush.msra.mxu0 %v5804
        %5876 = vmatpush.msra.mxu0 %v5803
        %5877 = vmatpush.msra.mxu0 %v5802
        %5878 = vmatpush.msra.mxu0 %v5801
        %5879 = vmatpush.msra.mxu0 %v5800
        %5880 = vmatpush.msra.mxu0 %v5799
        %5881 = vmatmul.f32.gmra.mxu0 %v5782
        %v5882 = vpop.f32.mrf.mxu0
        %v5883 = vadd.f32 %v5864, %v5882
        %5884 = vmatmul.f32.gmra.mxu0 %v5786
        %v5885 = vpop.f32.mrf.mxu0
        %v5886 = vadd.f32 %v5864, %v5885
        %5887 = vmatmul.f32.gmra.mxu0 %v5790
        %v5888 = vpop.f32.mrf.mxu0
        %v5889 = vadd.f32 %v5864, %v5888
        %5890 = vmatmul.f32.gmra.mxu0 %v5794
        %v5891 = vpop.f32.mrf.mxu0
        %v5892 = vadd.f32 %v5864, %v5891
        %5893 = vdwg.mxu0
        %5894 = vmatpush.msra.mxu0 %v5830
        %5895 = vmatpush.msra.mxu0 %v5829
        %5896 = vmatpush.msra.mxu0 %v5828
        %5897 = vmatpush.msra.mxu0 %v5827
        %5898 = vmatpush.msra.mxu0 %v5826
        %5899 = vmatpush.msra.mxu0 %v5825
        %5900 = vmatpush.msra.mxu0 %v5824
        %5901 = vmatpush.msra.mxu0 %v5823
        %5902 = vmatpush.msra.mxu0 %v5822
        %5903 = vmatpush.msra.mxu0 %v5821
        %5904 = vmatpush.msra.mxu0 %v5820
        %5905 = vmatpush.msra.mxu0 %v5819
        %5906 = vmatpush.msra.mxu0 %v5818
        %5907 = vmatpush.msra.mxu0 %v5817
        %5908 = vmatpush.msra.mxu0 %v5816
        %5909 = vmatpush.msra.mxu0 %v5815
        %5910 = vmatmul.f32.gmra.mxu0 %v5783
        %v5911 = vpop.f32.mrf.mxu0
        %v5912 = vadd.f32 %v5883, %v5911
        %5913 = vmatmul.f32.gmra.mxu0 %v5787
        %v5914 = vpop.f32.mrf.mxu0
        %v5915 = vadd.f32 %v5886, %v5914
        %5916 = vmatmul.f32.gmra.mxu0 %v5791
        %v5917 = vpop.f32.mrf.mxu0
        %v5918 = vadd.f32 %v5889, %v5917
        %5919 = vmatmul.f32.gmra.mxu0 %v5795
        %v5920 = vpop.f32.mrf.mxu0
        %v5921 = vadd.f32 %v5892, %v5920
        %5922 = vdwg.mxu0
        %5923 = vmatpush.msra.mxu0 %v5846
        %5924 = vmatpush.msra.mxu0 %v5845
        %5925 = vmatpush.msra.mxu0 %v5844
        %5926 = vmatpush.msra.mxu0 %v5843
        %5927 = vmatpush.msra.mxu0 %v5842
        %5928 = vmatpush.msra.mxu0 %v5841
        %5929 = vmatpush.msra.mxu0 %v5840
        %5930 = vmatpush.msra.mxu0 %v5839
        %5931 = vmatpush.msra.mxu0 %v5838
        %5932 = vmatpush.msra.mxu0 %v5837
        %5933 = vmatpush.msra.mxu0 %v5836
        %5934 = vmatpush.msra.mxu0 %v5835
        %5935 = vmatpush.msra.mxu0 %v5834
        %5936 = vmatpush.msra.mxu0 %v5833
        %5937 = vmatpush.msra.mxu0 %v5832
        %5938 = vmatpush.msra.mxu0 %v5831
        %5939 = vmatmul.f32.gmra.mxu0 %v5784
        %v5940 = vpop.f32.mrf.mxu0
        %v5941 = vadd.f32 %v5912, %v5940
        %5942 = vmatmul.f32.gmra.mxu0 %v5788
        %v5943 = vpop.f32.mrf.mxu0
        %v5944 = vadd.f32 %v5915, %v5943
        %5945 = vmatmul.f32.gmra.mxu0 %v5792
        %v5946 = vpop.f32.mrf.mxu0
        %v5947 = vadd.f32 %v5918, %v5946
        %5948 = vmatmul.f32.gmra.mxu0 %v5796
        %v5949 = vpop.f32.mrf.mxu0
        %v5950 = vadd.f32 %v5921, %v5949
        %5951 = vdwg.mxu0
        %5952 = vmatpush.msra.mxu0 %v5862
        %5953 = vmatpush.msra.mxu0 %v5861
        %5954 = vmatpush.msra.mxu0 %v5860
        %5955 = vmatpush.msra.mxu0 %v5859
        %5956 = vmatpush.msra.mxu0 %v5858
        %5957 = vmatpush.msra.mxu0 %v5857
        %5958 = vmatpush.msra.mxu0 %v5856
        %5959 = vmatpush.msra.mxu0 %v5855
        %5960 = vmatpush.msra.mxu0 %v5854
        %5961 = vmatpush.msra.mxu0 %v5853
        %5962 = vmatpush.msra.mxu0 %v5852
        %5963 = vmatpush.msra.mxu0 %v5851
        %5964 = vmatpush.msra.mxu0 %v5850
        %5965 = vmatpush.msra.mxu0 %v5849
        %5966 = vmatpush.msra.mxu0 %v5848
        %5967 = vmatpush.msra.mxu0 %v5847
        %5968 = vmatmul.f32.gmra.mxu0 %v5785
        %v5969 = vpop.f32.mrf.mxu0
        %v5970 = vadd.f32 %v5941, %v5969
        %5971 = vmatmul.f32.gmra.mxu0 %v5789
        %v5972 = vpop.f32.mrf.mxu0
        %v5973 = vadd.f32 %v5944, %v5972
        %5974 = vmatmul.f32.gmra.mxu0 %v5793
        %v5975 = vpop.f32.mrf.mxu0
        %v5976 = vadd.f32 %v5947, %v5975
        %5977 = vmatmul.f32.gmra.mxu0 %v5797
        %v5978 = vpop.f32.mrf.mxu0
        %v5979 = vadd.f32 %v5950, %v5978
        %5980 = vdwg.mxu0
        %v5981 = vadd.f32 %v5970, %v5190
        %v5982 = vadd.f32 %v5973, %v5191
        %v5983 = vadd.f32 %v5976, %v5192
        %v5984 = vadd.f32 %v5979, %v5193
        %5985 = vadd.xlane.f32.xlu0 %v5981
        %v5986 = vpop.xlane.xlu0 %5985
        %5987 = vadd.xlane.f32.xlu0 %v5982
        %v5988 = vpop.xlane.xlu0 %5987
        %5989 = vadd.xlane.f32.xlu0 %v5983
        %v5990 = vpop.xlane.xlu0 %5989
        %5991 = vadd.xlane.f32.xlu0 %v5984
        %v5992 = vpop.xlane.xlu0 %5991
        %v5993 = vmul.f32 %v5986, %v406
        %v5994 = vmul.f32 %v5988, %v406
        %v5995 = vmul.f32 %v5990, %v406
        %v5996 = vmul.f32 %v5992, %v406
        %v5997 = vsub.f32 %v5981, %v5993
        %v5998 = vsub.f32 %v5982, %v5994
        %v5999 = vsub.f32 %v5983, %v5995
        %v6000 = vsub.f32 %v5984, %v5996
        %v6001 = vmul.f32 %v5997, %v5997
        %v6002 = vmul.f32 %v5998, %v5998
        %v6003 = vmul.f32 %v5999, %v5999
        %v6004 = vmul.f32 %v6000, %v6000
        %6005 = vadd.xlane.f32.xlu0 %v6001
        %v6006 = vpop.xlane.xlu0 %6005
        %6007 = vadd.xlane.f32.xlu0 %v6002
        %v6008 = vpop.xlane.xlu0 %6007
        %6009 = vadd.xlane.f32.xlu0 %v6003
        %v6010 = vpop.xlane.xlu0 %6009
        %6011 = vadd.xlane.f32.xlu0 %v6004
        %v6012 = vpop.xlane.xlu0 %6011
        %v6013 = vmul.f32 %v6006, %v406
        %v6014 = vmul.f32 %v6008, %v406
        %v6015 = vmul.f32 %v6010, %v406
        %v6016 = vmul.f32 %v6012, %v406
        %v6017 = vadd.f32 %v6013, 1e-05
        %v6018 = vadd.f32 %v6014, 1e-05
        %v6019 = vadd.f32 %v6015, 1e-05
        %v6020 = vadd.f32 %v6016, 1e-05
        %v6021 = vrsqrt.pop %v6017
        %v6022 = vmul.f32 %v6021, %v6017
        %v6023 = vmul.f32 %v6022, %v6021
        %v6024 = vmul.f32 0.5, %v6023
        %v6025 = vsub.f32 1.5, %v6024
        %v6026 = vmul.f32 %v6021, %v6025
        %vm6027 = vweird.f32 %v6017
        %vm6028 = vweird.f32 %v6021
        %vm6029 = vmor %vm6027, %vm6028
        %v6030 = vsel %vm6029, %v6021, %v6026
        %v6031 = vrsqrt.pop %v6018
        %v6032 = vmul.f32 %v6031, %v6018
        %v6033 = vmul.f32 %v6032, %v6031
        %v6034 = vmul.f32 0.5, %v6033
        %v6035 = vsub.f32 1.5, %v6034
        %v6036 = vmul.f32 %v6031, %v6035
        %vm6037 = vweird.f32 %v6018
        %vm6038 = vweird.f32 %v6031
        %vm6039 = vmor %vm6037, %vm6038
        %v6040 = vsel %vm6039, %v6031, %v6036
        %v6041 = vrsqrt.pop %v6019
        %v6042 = vmul.f32 %v6041, %v6019
        %v6043 = vmul.f32 %v6042, %v6041
        %v6044 = vmul.f32 0.5, %v6043
        %v6045 = vsub.f32 1.5, %v6044
        %v6046 = vmul.f32 %v6041, %v6045
        %vm6047 = vweird.f32 %v6019
        %vm6048 = vweird.f32 %v6041
        %vm6049 = vmor %vm6047, %vm6048
        %v6050 = vsel %vm6049, %v6041, %v6046
        %v6051 = vrsqrt.pop %v6020
        %v6052 = vmul.f32 %v6051, %v6020
        %v6053 = vmul.f32 %v6052, %v6051
        %v6054 = vmul.f32 0.5, %v6053
        %v6055 = vsub.f32 1.5, %v6054
        %v6056 = vmul.f32 %v6051, %v6055
        %vm6057 = vweird.f32 %v6020
        %vm6058 = vweird.f32 %v6051
        %vm6059 = vmor %vm6057, %vm6058
        %v6060 = vsel %vm6059, %v6051, %v6056
        %v6061 = vmul.f32 %v5997, %v6030
        %v6062 = vmul.f32 %v5998, %v6040
        %v6063 = vmul.f32 %v5999, %v6050
        %v6064 = vmul.f32 %v6000, %v6060
        %v6065 = vld [vmem:[%s2 + $0x11] sm:$0x1]
        %v6066 = vperm.slane %v6065, 0
        %v6067 = vmul.f32 %v6061, %v6066
        %v6068 = vmul.f32 %v6062, %v6066
        %v6069 = vmul.f32 %v6063, %v6066
        %v6070 = vmul.f32 %v6064, %v6066
        %v6071 = vld [vmem:[%s2 + $0x12] sm:$0x1]
        %v6072 = vperm.slane %v6071, 0
        %v6073 = vadd.f32 %v6067, %v6072
        %v6074 = vadd.f32 %v6068, %v6072
        %v6075 = vadd.f32 %v6069, %v6072
        %v6076 = vadd.f32 %v6070, %v6072
        %6077 = vst [vmem:[%s380] sm:$0xff] %v6073
        %6078 = vst [vmem:[%s380 + $0x8] sm:$0xff] %v6074
        %6079 = vst [vmem:[%s380 + $0x10] sm:$0xff] %v6075
        %6080 = vst [vmem:[%s380 + $0x18] sm:$0xff] %v6076
        %s6081 = sand.u32 %s269, 1
        %s6082 = scalar_lea.sflag [#allocation3], %s6081
        %s6083 = sand.u32 %s269, 1
        %s6084 = smul.addr %s6083, 32
        %s6085 = scalar_lea.vmem [#allocation2], %s6084
        // Predicated region
        $region65: #{conformer_block.1} parent=63 // pred_check
          %p6086 = pneg %p279
        $region66: #{conformer_block.1} parent=63 // pred_check_branch
          %6088 = sbr.rel (%p6086) target = $region68
        $region67: #{conformer_block.1} parent=63 // pred_region
          %s6089 = smul.u32 4, %s25
          %6091 = vsyncadd %s6082, 0
          %s6092 = smul.addr %s6089, 8
          %s6093 = scalar_lea.hbm %s11, %s6092
          %s6094 = sshll.u32 %s6085, 4
          %s6095 = int_to_ptr.vmem [resolvable:$true] %s6094
          %s6096 = sshll.u32 %s6093, 4
          %s6097 = int_to_ptr.hbm [resolvable:$true] %s6096
          %6102 = dma.vmem_to_hbm [thread:$0]  %s6095, 512, %s6097, %s6082, 128, 128, 8
        $region68: #{conformer_block.1} parent=63 // pred_fallthru
          _
      $region64: #{conformer_block.1} parent=5 // pred_fallthru
        _
      %p6103 = scmp.le.s32.totalorder 2, %s20
      // Predicated region
      $region69: #{conformer_block.1} parent=5 // pred_check
        %p6104 = pneg %p6103
      $region70: #{conformer_block.1} parent=5 // pred_check_branch
        %6106 = sbr.rel (%p6104) target = $region72
      $region71: #{conformer_block.1} parent=5 // pred_region
        %s6107 = ssub.s32 %s20, 2
        // Predicated region
        $region73: #{conformer_block.1} parent=71 // pred_check
          %p6108 = pneg %p285
        $region74: #{conformer_block.1} parent=71 // pred_check_branch
          %6110 = sbr.rel (%p6108) target = $region76
        $region75: #{conformer_block.1} parent=71 // pred_region
          %s6111 = sand.u32 %s270, 1
          %s6112 = scalar_lea.sflag [#allocation3], %s6111
          %s6113 = sand.u32 %s270, 1
          %s6114 = smul.addr %s6113, 32
          %s6115 = scalar_lea.vmem [#allocation2], %s6114
          %6117 = dma.done %s6112, 512
        $region76: #{conformer_block.1} parent=71 // pred_fallthru
          _
      $region72: #{conformer_block.1} parent=5 // pred_fallthru
        _
    $region6: #{conformer_block.1} parent=1 // loop_footer
      %s24 = sadd.s32 1, %s20
    $region7: #{conformer_block.1} parent=1 // loop_footer_branch
      %19 = sbr.rel target = $region3
    $region8: #{conformer_block.1} parent=1 // loop_exit
      _
    %6118 = vsyncpa [#allocation3], 1
    %s6119 = scalar_lea.sflag [#allocation3], 1
    %6120 = vsyncpa %s6119, 1

</llo_original>
